<compile_context>
chip_gen: v6e
topology: v6e:2x2x1
jax: 0.10.0
libtpu: 0.0.40
codegen_flags: <defaults>
</compile_context>

<pallas_src>
import functools

import jax
import jax.numpy as jnp
from jax.experimental import pallas as pl
from jax.experimental.pallas import tpu as pltpu


NEG_SLOPE = 0.1


# ----------------------------------------------------------------------------
# Fused Pallas kernel: head conv + lrelu -> n_res ResBlocks -> tail conv
# ----------------------------------------------------------------------------
def _fused_kernel(x_ref, m_ref, b_ref, o_ref, s0, s1, s2, im_ref,
                  *, N, D, H, F, n_res):
    """x_ref : (N, D, H, F)      f32   lane-dense activations, F = W*16 = 128
       m_ref : (L, 9*F, F)       bf16  im2col-stacked banded conv weights
       b_ref : (L, F)            f32   fused per-lane biases (tile(bias, W))
       o_ref : (N, D, H, F)      f32
       s0/s1/s2: (N, D+2, H, F)  f32   VMEM scratch: kh = 0/1/2 H-shifted
                                        activations, zero rows at d'=0, D+1
                                        implement the D-axis conv padding.
       im_ref: (N*D*H, 9*F)      bf16  VMEM scratch: im2col buffer.
    """
    M = N * D * H

    # Zero once per call: only the d'=0 / d'=D+1 border slabs must stay zero;
    # the interior is fully overwritten every layer.
    s0[...] = jnp.zeros_like(s0)
    s1[...] = jnp.zeros_like(s1)
    s2[...] = jnp.zeros_like(s2)

    # Boundary masks for the sublane rolls, hoisted (JAX does not CSE
    # broadcast_in_dim) and kept 2D (iota over the flattened M rows).
    hpos = jax.lax.broadcasted_iota(jnp.int32, (M, F), 0) % H
    is_top = hpos == 0
    is_bot = hpos == H - 1

    shifted = (s0, s1, s2)

    def write_act(y):
        """y: (M, F) f32 -> the three kh-shifted, D-padded scratch buffers.

        The H shift is an XLU sublane roll on the flattened (M, F) slab with
        the wrapped boundary rows masked to zero; all stores land on full
        (8,128) tiles (offset only along the untiled D axis).
        """
        s1[:, 1:D + 1, :, :] = y.reshape(N, D, H, F)
        dn = jnp.where(is_top, 0.0, pltpu.roll(y, shift=1, axis=0))
        s0[:, 1:D + 1, :, :] = dn.reshape(N, D, H, F)
        up = jnp.where(is_bot, 0.0, pltpu.roll(y, shift=M - 1, axis=0))
        s2[:, 1:D + 1, :, :] = up.reshape(N, D, H, F)

    def conv(layer):
        """One 3x3x3 conv = im2col assembly + a single K=9*F MXU matmul."""
        for kd in range(3):
            for kh in range(3):
                t = kd * 3 + kh
                # Free view: slice along the untiled D axis, reshape merges
                # leading dims only (inner (H,F)=(8,128) tile untouched).
                tap = shifted[kh][:, kd:kd + D, :, :].reshape(M, F)
                # Lane-aligned store of one full 128-lane block of im2col.
                im_ref[:, t * F:(t + 1) * F] = tap.astype(jnp.bfloat16)
        acc = jnp.dot(im_ref[...], m_ref[layer],
                      preferred_element_type=jnp.float32)
        return acc + b_ref[layer:layer + 1, :]

    def lrelu(v):
        return jnp.where(v >= 0.0, v, v * NEG_SLOPE)

    # headConv (bias-free -> b_all[0] is zeros) + LeakyReLU
    write_act(x_ref[...].reshape(M, F))
    y = lrelu(conv(0))
    write_act(y)

    layer = 1
    for _ in range(n_res):
        # TODO(synk): ResBlock_3d source not provided; implemented as the
        # standard conv -> LeakyReLU -> conv + identity residual block.
        r = y                                  # residual carried in f32 vregs
        t = lrelu(conv(layer)); layer += 1
        write_act(t)
        y = conv(layer) + r; layer += 1
        write_act(y)

    # tailConv (no activation)
    o_ref[...] = conv(layer).reshape(N, D, H, F).astype(o_ref.dtype)


# ----------------------------------------------------------------------------
# Host-side weight folding: (Cout, Cin, 3,3,3) -> im2col-stacked banded mats
# ----------------------------------------------------------------------------
def _banded_weights(w_torch, W, c_pad):
    """w_torch: (Cout, Cin, 3,3,3) -> (9, W*c_pad, W*Cout) banded matrices.

    M[kd*3+kh][w_in*c_pad + ci, w_out*Cout + co] = w[co, ci, kd, kh, w_in-w_out+1]
    (zero outside the band), so the W-axis taps and the channel contraction
    fold into dense (F, F) matmuls; W zero-padding is implicit in the band.
    """
    cout, cin = w_torch.shape[0], w_torch.shape[1]
    if cin < c_pad:
        w_torch = jnp.pad(w_torch, ((0, 0), (0, c_pad - cin), (0, 0), (0, 0), (0, 0)))
    w = jnp.transpose(w_torch, (2, 3, 4, 1, 0))                 # (3,3,3,c_pad,cout)
    idx = jnp.arange(W)
    kw = idx[:, None] - idx[None, :] + 1                        # (w_in, w_out)
    valid = ((kw >= 0) & (kw <= 2)).astype(w.dtype)
    blk = w[:, :, jnp.clip(kw, 0, 2)]                           # (3,3,W,W,c_pad,cout)
    blk = blk * valid[None, None, :, :, None, None]
    m = jnp.transpose(blk, (0, 1, 2, 4, 3, 5)).reshape(9, W * c_pad, W * cout)
    return m


def prepare_kernel_weights(params, W, n_feats=16):
    """Fold all conv weights/biases into the kernel's (L, 9F, F) im2col form."""
    mats, biases = [], []

    def add(w, b):
        m9 = _banded_weights(w, W, n_feats)                       # (9, F, F)
        mats.append(m9.reshape(9 * W * n_feats, W * w.shape[0]))  # (9F, F): K rows t*F+lane
        if b is None:
            biases.append(jnp.zeros((W * w.shape[0],), jnp.float32))
        else:
            biases.append(jnp.tile(b, W).astype(jnp.float32))

    add(params["head_w"], None)                                   # bias=False
    for (w0, b0, w1, b1) in params["body"]:
        add(w0, b0)
        add(w1, b1)
    add(params["tail_w"], params["tail_b"])

    m_all = jnp.stack(mats, axis=0).astype(jnp.bfloat16)          # (L, 9F, F)
    b_all = jnp.stack(biases, axis=0)                             # (L, F)
    return m_all, b_all


# ----------------------------------------------------------------------------
# Forward pass wrapper
# ----------------------------------------------------------------------------
@functools.partial(jax.jit, static_argnames=("n_res",))
def d3drir_forward(m_all, b_all, x_ncdhw, *, n_res):
    N, C, D, H, W = x_ncdhw.shape
    nf = 16
    F = W * nf  # 128 for W=8

    # One-time input repack: pad channels 12 -> 16, NCDHW -> lane-dense (N,D,H,W*16)
    xp = jnp.pad(x_ncdhw.astype(jnp.float32),
                 ((0, 0), (0, nf - C), (0, 0), (0, 0), (0, 0)))
    xf = jnp.transpose(xp, (0, 2, 3, 4, 1)).reshape(N, D, H, F)

    L = b_all.shape[0]
    kernel = functools.partial(_fused_kernel, N=N, D=D, H=H, F=F, n_res=n_res)

    # Batch is folded into the matmul M dimension, so the grid is a single
    # step (single-TC v5e/v6e see one tall matmul; on v7x one could re-split
    # the batch over a "parallel" grid axis if N grows).
    out = pl.pallas_call(
        kernel,
        out_shape=jax.ShapeDtypeStruct((N, D, H, F), jnp.float32),
        grid=(1,),
        in_specs=[
            pl.BlockSpec((N, D, H, F), lambda i: (0, 0, 0, 0)),
            pl.BlockSpec((L, 9 * F, F), lambda i: (0, 0, 0)),   # weights resident
            pl.BlockSpec((L, F), lambda i: (0, 0)),
        ],
        out_specs=pl.BlockSpec((N, D, H, F), lambda i: (0, 0, 0, 0)),
        scratch_shapes=[
            pltpu.VMEM((N, D + 2, H, F), jnp.float32),      # kh = 0 shifted acts
            pltpu.VMEM((N, D + 2, H, F), jnp.float32),      # kh = 1 (center)
            pltpu.VMEM((N, D + 2, H, F), jnp.float32),      # kh = 2 shifted acts
            pltpu.VMEM((N * D * H, 9 * F), jnp.bfloat16),   # im2col buffer
        ],
        compiler_params=pltpu.CompilerParams(
            dimension_semantics=("arbitrary",)),
    )(xf, m_all, b_all)

    # lane-dense -> PyTorch NCDHW
    return jnp.transpose(out.reshape(N, D, H, W, nf), (0, 4, 1, 2, 3))


# ----------------------------------------------------------------------------
# Deterministic parameter init (PyTorch-layout weights) + pure-JAX reference
# ----------------------------------------------------------------------------
def init_params(key, n_basemodules, in_ch=12, n_feats=16):
    def conv_init(k, cout, cin, bias):
        kw, kb = jax.random.split(k)
        w = jax.random.normal(kw, (cout, cin, 3, 3, 3), jnp.float32) / jnp.sqrt(cin * 27.0)
        b = (jax.random.normal(kb, (cout,), jnp.float32) * 0.01) if bias else None
        return w, b

    keys = jax.random.split(key, 2 + 2 * n_basemodules)
    head_w, _ = conv_init(keys[0], n_feats, in_ch, bias=False)
    body = []
    for i in range(n_basemodules):
        w0, b0 = conv_init(keys[1 + 2 * i], n_feats, n_feats, bias=True)
        w1, b1 = conv_init(keys[2 + 2 * i], n_feats, n_feats, bias=True)
        body.append((w0, b0, w1, b1))
    tail_w, tail_b = conv_init(keys[-1], n_feats, n_feats, bias=True)
    return dict(head_w=head_w, body=body, tail_w=tail_w, tail_b=tail_b)


def reference_forward(params, x):
    def conv(v, w, b):
        y = jax.lax.conv_general_dilated(
            v, w, window_strides=(1, 1, 1),
            padding=((1, 1), (1, 1), (1, 1)),
            dimension_numbers=("NCDHW", "OIDHW", "NCDHW"))
        return y if b is None else y + b[None, :, None, None, None]

    def lrelu(v):
        return jnp.where(v >= 0.0, v, v * NEG_SLOPE)

    y = lrelu(conv(x, params["head_w"], None))
    for (w0, b0, w1, b1) in params["body"]:
        t = conv(lrelu(conv(y, w0, b0)), w1, b1)
        y = y + t
    return conv(y, params["tail_w"], params["tail_b"])


if __name__ == "__main__":
    key = jax.random.PRNGKey(0)
    k_param, k_x = jax.random.split(key)

    n_basemodules = 2
    n_feats = 16
    N, C, D, H, W = 2, 12, 4, 8, 8          # PyTorch NCDHW input, C = 3*2*2

    x = jax.random.normal(k_x, (N, C, D, H, W), jnp.float32)
    params = init_params(k_param, n_basemodules, in_ch=C, n_feats=n_feats)

    m_all, b_all = prepare_kernel_weights(params, W, n_feats=n_feats)
    out = d3drir_forward(m_all, b_all, x, n_res=n_basemodules)
    out = jax.block_until_ready(out)
    assert out.shape == (N, n_feats, D, H, W), out.shape

    # correctness vs pure-JAX f32 reference (loose tol: matmul operands are bf16)
    ref = reference_forward(params, x)
    err = float(jnp.max(jnp.abs(out - ref)))
    scale = float(jnp.max(jnp.abs(ref)))
    assert err <= 0.08 * scale + 1e-3, (err, scale)

    print("KERNEL_OK")
</pallas_src>

<mosaic_0001>
module attributes {stable_mosaic.version = 11 : i64} {
  func.func @_fused_kernel(%arg0: i32, %arg1: memref<2x4x8x128xf32, #tpu.memory_space<vmem>>, %arg2: memref<6x1152x128xbf16, #tpu.memory_space<vmem>>, %arg3: memref<6x128xf32, #tpu.memory_space<vmem>>, %arg4: memref<2x4x8x128xf32, #tpu.memory_space<vmem>>, %arg5: memref<2x6x8x128xf32, #tpu.memory_space<vmem>>, %arg6: memref<2x6x8x128xf32, #tpu.memory_space<vmem>>, %arg7: memref<2x6x8x128xf32, #tpu.memory_space<vmem>>, %arg8: memref<64x1152xbf16, #tpu.memory_space<vmem>>) attributes {dimension_semantics = [#tpu.dimension_semantics<arbitrary>], iteration_bounds = array<i64: 1>, scalar_prefetch = 0 : i64, scratch_operands = 4 : i64, tpu.core_type = #tpu.core_type<tc>, window_params = [{pipeline_mode = #tpu.pipeline_mode<synchronous>, transform_indices = @transform_0, window_bounds = array<i64: 2, 4, 8, 128>}, {pipeline_mode = #tpu.pipeline_mode<synchronous>, transform_indices = @transform_1, window_bounds = array<i64: 6, 1152, 128>}, {pipeline_mode = #tpu.pipeline_mode<synchronous>, transform_indices = @transform_2, window_bounds = array<i64: 6, 128>}, {pipeline_mode = #tpu.pipeline_mode<synchronous>, transform_indices = @transform_3, window_bounds = array<i64: 2, 4, 8, 128>}]} {
    %cst = arith.constant 0.000000e+00 : f32
    %0 = vector.broadcast %cst : f32 to vector<2x6x8x128xf32>
    %c0 = arith.constant 0 : index
    %c0_0 = arith.constant 0 : index
    %c0_1 = arith.constant 0 : index
    %c0_2 = arith.constant 0 : index
    %1 = vector.load %arg5[%c0, %c0_0, %c0_1, %c0_2] : memref<2x6x8x128xf32, #tpu.memory_space<vmem>>, vector<2x6x8x128xf32>
    tpu.vector_store %arg5[%c0, %c0_0, %c0_1, %c0_2], %0 {strides = array<i32>} : memref<2x6x8x128xf32, #tpu.memory_space<vmem>>, vector<2x6x8x128xf32>,
    %cst_3 = arith.constant 0.000000e+00 : f32
    %2 = vector.broadcast %cst_3 : f32 to vector<2x6x8x128xf32>
    %c0_4 = arith.constant 0 : index
    %c0_5 = arith.constant 0 : index
    %c0_6 = arith.constant 0 : index
    %c0_7 = arith.constant 0 : index
    %3 = vector.load %arg6[%c0_4, %c0_5, %c0_6, %c0_7] : memref<2x6x8x128xf32, #tpu.memory_space<vmem>>, vector<2x6x8x128xf32>
    tpu.vector_store %arg6[%c0_4, %c0_5, %c0_6, %c0_7], %2 {strides = array<i32>} : memref<2x6x8x128xf32, #tpu.memory_space<vmem>>, vector<2x6x8x128xf32>,
    %cst_8 = arith.constant 0.000000e+00 : f32
    %4 = vector.broadcast %cst_8 : f32 to vector<2x6x8x128xf32>
    %c0_9 = arith.constant 0 : index
    %c0_10 = arith.constant 0 : index
    %c0_11 = arith.constant 0 : index
    %c0_12 = arith.constant 0 : index
    %5 = vector.load %arg7[%c0_9, %c0_10, %c0_11, %c0_12] : memref<2x6x8x128xf32, #tpu.memory_space<vmem>>, vector<2x6x8x128xf32>
    tpu.vector_store %arg7[%c0_9, %c0_10, %c0_11, %c0_12], %4 {strides = array<i32>} : memref<2x6x8x128xf32, #tpu.memory_space<vmem>>, vector<2x6x8x128xf32>,
    %6 = tpu.iota {dimensions = array<i32: 0>} : vector<64x128xi32>
    %c8_i32 = arith.constant 8 : i32
    %c0_i32 = arith.constant 0 : i32
    %7 = arith.cmpi eq, %c8_i32, %c0_i32 : i32
    %c1_i32 = arith.constant 1 : i32
    %8 = arith.select %7, %c1_i32, %c8_i32 : i32
    %9 = vector.broadcast %8 : i32 to vector<64x128xi32>
    %10 = arith.remsi %6, %9 : vector<64x128xi32>
    %c0_i32_13 = arith.constant 0 : i32
    %11 = vector.broadcast %c0_i32_13 : i32 to vector<64x128xi32>
    %12 = arith.cmpi ne, %10, %11 : vector<64x128xi32>
    %c0_i32_14 = arith.constant 0 : i32
    %13 = vector.broadcast %c0_i32_14 : i32 to vector<64x128xi32>
    %14 = arith.cmpi slt, %10, %13 : vector<64x128xi32>
    %c0_i32_15 = arith.constant 0 : i32
    %15 = arith.cmpi slt, %8, %c0_i32_15 : i32
    %16 = vector.broadcast %15 : i1 to vector<64x128xi1>
    %17 = vector.broadcast %16 : vector<64x128xi1> to vector<64x128xi1>
    %18 = arith.xori %14, %17 : vector<64x128xi1>
    %19 = arith.andi %18, %12 : vector<64x128xi1>
    %20 = vector.broadcast %8 : i32 to vector<64x128xi32>
    %21 = arith.addi %10, %20 : vector<64x128xi32>
    %22 = arith.select %19, %21, %10 : vector<64x128xi1>, vector<64x128xi32>
    %c0_i32_16 = arith.constant 0 : i32
    %23 = vector.broadcast %c0_i32_16 : i32 to vector<64x128xi32>
    %24 = arith.cmpi eq, %22, %23 : vector<64x128xi32>
    %c7_i32 = arith.constant 7 : i32
    %25 = vector.broadcast %c7_i32 : i32 to vector<64x128xi32>
    %26 = arith.cmpi eq, %22, %25 : vector<64x128xi32>
    %c0_17 = arith.constant 0 : index
    %c0_18 = arith.constant 0 : index
    %c0_19 = arith.constant 0 : index
    %c0_20 = arith.constant 0 : index
    %27 = vector.load %arg1[%c0_17, %c0_18, %c0_19, %c0_20] : memref<2x4x8x128xf32, #tpu.memory_space<vmem>>, vector<2x4x8x128xf32>
    %28 = vector.shape_cast %27 : vector<2x4x8x128xf32> to vector<64x128xf32>
    %29 = vector.shape_cast %28 : vector<64x128xf32> to vector<2x4x8x128xf32>
    %c0_21 = arith.constant 0 : index
    %c1 = arith.constant 1 : index
    %c0_22 = arith.constant 0 : index
    %c0_23 = arith.constant 0 : index
    %30 = vector.load %arg6[%c0_21, %c1, %c0_22, %c0_23] : memref<2x6x8x128xf32, #tpu.memory_space<vmem>>, vector<2x4x8x128xf32>
    tpu.vector_store %arg6[%c0_21, %c1, %c0_22, %c0_23], %29 {strides = array<i32>} : memref<2x6x8x128xf32, #tpu.memory_space<vmem>>, vector<2x4x8x128xf32>,
    %c1_i32_24 = arith.constant 1 : i32
    %31 = tpu.dynamic_rotate %28 by %c1_i32_24 dim 0 : vector<64x128xf32>, i32 -> vector<64x128xf32>
    %cst_25 = arith.constant 0.000000e+00 : f32
    %32 = vector.broadcast %cst_25 : f32 to vector<64x128xf32>
    %33 = arith.select %24, %32, %31 : vector<64x128xi1>, vector<64x128xf32>
    %34 = vector.shape_cast %33 : vector<64x128xf32> to vector<2x4x8x128xf32>
    %c0_26 = arith.constant 0 : index
    %c1_27 = arith.constant 1 : index
    %c0_28 = arith.constant 0 : index
    %c0_29 = arith.constant 0 : index
    %35 = vector.load %arg5[%c0_26, %c1_27, %c0_28, %c0_29] : memref<2x6x8x128xf32, #tpu.memory_space<vmem>>, vector<2x4x8x128xf32>
    tpu.vector_store %arg5[%c0_26, %c1_27, %c0_28, %c0_29], %34 {strides = array<i32>} : memref<2x6x8x128xf32, #tpu.memory_space<vmem>>, vector<2x4x8x128xf32>,
    %c63_i32 = arith.constant 63 : i32
    %36 = tpu.dynamic_rotate %28 by %c63_i32 dim 0 : vector<64x128xf32>, i32 -> vector<64x128xf32>
    %cst_30 = arith.constant 0.000000e+00 : f32
    %37 = vector.broadcast %cst_30 : f32 to vector<64x128xf32>
    %38 = arith.select %26, %37, %36 : vector<64x128xi1>, vector<64x128xf32>
    %39 = vector.shape_cast %38 : vector<64x128xf32> to vector<2x4x8x128xf32>
    %c0_31 = arith.constant 0 : index
    %c1_32 = arith.constant 1 : index
    %c0_33 = arith.constant 0 : index
    %c0_34 = arith.constant 0 : index
    %40 = vector.load %arg7[%c0_31, %c1_32, %c0_33, %c0_34] : memref<2x6x8x128xf32, #tpu.memory_space<vmem>>, vector<2x4x8x128xf32>
    tpu.vector_store %arg7[%c0_31, %c1_32, %c0_33, %c0_34], %39 {strides = array<i32>} : memref<2x6x8x128xf32, #tpu.memory_space<vmem>>, vector<2x4x8x128xf32>,
    %c0_35 = arith.constant 0 : index
    %c0_36 = arith.constant 0 : index
    %c0_37 = arith.constant 0 : index
    %c0_38 = arith.constant 0 : index
    %41 = vector.load %arg5[%c0_35, %c0_36, %c0_37, %c0_38] : memref<2x6x8x128xf32, #tpu.memory_space<vmem>>, vector<2x4x8x128xf32>
    %42 = vector.shape_cast %41 : vector<2x4x8x128xf32> to vector<64x128xf32>
    %43 = arith.truncf %42 : vector<64x128xf32> to vector<64x128xbf16>
    %c0_39 = arith.constant 0 : index
    %c0_40 = arith.constant 0 : index
    %44 = vector.load %arg8[%c0_39, %c0_40] : memref<64x1152xbf16, #tpu.memory_space<vmem>>, vector<64x128xbf16>
    tpu.vector_store %arg8[%c0_39, %c0_40], %43 {strides = array<i32>} : memref<64x1152xbf16, #tpu.memory_space<vmem>>, vector<64x128xbf16>,
    %c0_41 = arith.constant 0 : index
    %c0_42 = arith.constant 0 : index
    %c0_43 = arith.constant 0 : index
    %c0_44 = arith.constant 0 : index
    %45 = vector.load %arg6[%c0_41, %c0_42, %c0_43, %c0_44] : memref<2x6x8x128xf32, #tpu.memory_space<vmem>>, vector<2x4x8x128xf32>
    %46 = vector.shape_cast %45 : vector<2x4x8x128xf32> to vector<64x128xf32>
    %47 = arith.truncf %46 : vector<64x128xf32> to vector<64x128xbf16>
    %c0_45 = arith.constant 0 : index
    %c128 = arith.constant 128 : index
    %48 = vector.load %arg8[%c0_45, %c128] : memref<64x1152xbf16, #tpu.memory_space<vmem>>, vector<64x128xbf16>
    tpu.vector_store %arg8[%c0_45, %c128], %47 {strides = array<i32>} : memref<64x1152xbf16, #tpu.memory_space<vmem>>, vector<64x128xbf16>,
    %c0_46 = arith.constant 0 : index
    %c0_47 = arith.constant 0 : index
    %c0_48 = arith.constant 0 : index
    %c0_49 = arith.constant 0 : index
    %49 = vector.load %arg7[%c0_46, %c0_47, %c0_48, %c0_49] : memref<2x6x8x128xf32, #tpu.memory_space<vmem>>, vector<2x4x8x128xf32>
    %50 = vector.shape_cast %49 : vector<2x4x8x128xf32> to vector<64x128xf32>
    %51 = arith.truncf %50 : vector<64x128xf32> to vector<64x128xbf16>
    %c0_50 = arith.constant 0 : index
    %c256 = arith.constant 256 : index
    %52 = vector.load %arg8[%c0_50, %c256] : memref<64x1152xbf16, #tpu.memory_space<vmem>>, vector<64x128xbf16>
    tpu.vector_store %arg8[%c0_50, %c256], %51 {strides = array<i32>} : memref<64x1152xbf16, #tpu.memory_space<vmem>>, vector<64x128xbf16>,
    %c0_51 = arith.constant 0 : index
    %c1_52 = arith.constant 1 : index
    %c0_53 = arith.constant 0 : index
    %c0_54 = arith.constant 0 : index
    %53 = vector.load %arg5[%c0_51, %c1_52, %c0_53, %c0_54] : memref<2x6x8x128xf32, #tpu.memory_space<vmem>>, vector<2x4x8x128xf32>
    %54 = vector.shape_cast %53 : vector<2x4x8x128xf32> to vector<64x128xf32>
    %55 = arith.truncf %54 : vector<64x128xf32> to vector<64x128xbf16>
    %c0_55 = arith.constant 0 : index
    %c384 = arith.constant 384 : index
    %56 = vector.load %arg8[%c0_55, %c384] : memref<64x1152xbf16, #tpu.memory_space<vmem>>, vector<64x128xbf16>
    tpu.vector_store %arg8[%c0_55, %c384], %55 {strides = array<i32>} : memref<64x1152xbf16, #tpu.memory_space<vmem>>, vector<64x128xbf16>,
    %c0_56 = arith.constant 0 : index
    %c1_57 = arith.constant 1 : index
    %c0_58 = arith.constant 0 : index
    %c0_59 = arith.constant 0 : index
    %57 = vector.load %arg6[%c0_56, %c1_57, %c0_58, %c0_59] : memref<2x6x8x128xf32, #tpu.memory_space<vmem>>, vector<2x4x8x128xf32>
    %58 = vector.shape_cast %57 : vector<2x4x8x128xf32> to vector<64x128xf32>
    %59 = arith.truncf %58 : vector<64x128xf32> to vector<64x128xbf16>
    %c0_60 = arith.constant 0 : index
    %c512 = arith.constant 512 : index
    %60 = vector.load %arg8[%c0_60, %c512] : memref<64x1152xbf16, #tpu.memory_space<vmem>>, vector<64x128xbf16>
    tpu.vector_store %arg8[%c0_60, %c512], %59 {strides = array<i32>} : memref<64x1152xbf16, #tpu.memory_space<vmem>>, vector<64x128xbf16>,
    %c0_61 = arith.constant 0 : index
    %c1_62 = arith.constant 1 : index
    %c0_63 = arith.constant 0 : index
    %c0_64 = arith.constant 0 : index
    %61 = vector.load %arg7[%c0_61, %c1_62, %c0_63, %c0_64] : memref<2x6x8x128xf32, #tpu.memory_space<vmem>>, vector<2x4x8x128xf32>
    %62 = vector.shape_cast %61 : vector<2x4x8x128xf32> to vector<64x128xf32>
    %63 = arith.truncf %62 : vector<64x128xf32> to vector<64x128xbf16>
    %c0_65 = arith.constant 0 : index
    %c640 = arith.constant 640 : index
    %64 = vector.load %arg8[%c0_65, %c640] : memref<64x1152xbf16, #tpu.memory_space<vmem>>, vector<64x128xbf16>
    tpu.vector_store %arg8[%c0_65, %c640], %63 {strides = array<i32>} : memref<64x1152xbf16, #tpu.memory_space<vmem>>, vector<64x128xbf16>,
    %c0_66 = arith.constant 0 : index
    %c2 = arith.constant 2 : index
    %c0_67 = arith.constant 0 : index
    %c0_68 = arith.constant 0 : index
    %65 = vector.load %arg5[%c0_66, %c2, %c0_67, %c0_68] : memref<2x6x8x128xf32, #tpu.memory_space<vmem>>, vector<2x4x8x128xf32>
    %66 = vector.shape_cast %65 : vector<2x4x8x128xf32> to vector<64x128xf32>
    %67 = arith.truncf %66 : vector<64x128xf32> to vector<64x128xbf16>
    %c0_69 = arith.constant 0 : index
    %c768 = arith.constant 768 : index
    %68 = vector.load %arg8[%c0_69, %c768] : memref<64x1152xbf16, #tpu.memory_space<vmem>>, vector<64x128xbf16>
    tpu.vector_store %arg8[%c0_69, %c768], %67 {strides = array<i32>} : memref<64x1152xbf16, #tpu.memory_space<vmem>>, vector<64x128xbf16>,
    %c0_70 = arith.constant 0 : index
    %c2_71 = arith.constant 2 : index
    %c0_72 = arith.constant 0 : index
    %c0_73 = arith.constant 0 : index
    %69 = vector.load %arg6[%c0_70, %c2_71, %c0_72, %c0_73] : memref<2x6x8x128xf32, #tpu.memory_space<vmem>>, vector<2x4x8x128xf32>
    %70 = vector.shape_cast %69 : vector<2x4x8x128xf32> to vector<64x128xf32>
    %71 = arith.truncf %70 : vector<64x128xf32> to vector<64x128xbf16>
    %c0_74 = arith.constant 0 : index
    %c896 = arith.constant 896 : index
    %72 = vector.load %arg8[%c0_74, %c896] : memref<64x1152xbf16, #tpu.memory_space<vmem>>, vector<64x128xbf16>
    tpu.vector_store %arg8[%c0_74, %c896], %71 {strides = array<i32>} : memref<64x1152xbf16, #tpu.memory_space<vmem>>, vector<64x128xbf16>,
    %c0_75 = arith.constant 0 : index
    %c2_76 = arith.constant 2 : index
    %c0_77 = arith.constant 0 : index
    %c0_78 = arith.constant 0 : index
    %73 = vector.load %arg7[%c0_75, %c2_76, %c0_77, %c0_78] : memref<2x6x8x128xf32, #tpu.memory_space<vmem>>, vector<2x4x8x128xf32>
    %74 = vector.shape_cast %73 : vector<2x4x8x128xf32> to vector<64x128xf32>
    %75 = arith.truncf %74 : vector<64x128xf32> to vector<64x128xbf16>
    %c0_79 = arith.constant 0 : index
    %c1024 = arith.constant 1024 : index
    %76 = vector.load %arg8[%c0_79, %c1024] : memref<64x1152xbf16, #tpu.memory_space<vmem>>, vector<64x128xbf16>
    tpu.vector_store %arg8[%c0_79, %c1024], %75 {strides = array<i32>} : memref<64x1152xbf16, #tpu.memory_space<vmem>>, vector<64x128xbf16>,
    %c0_80 = arith.constant 0 : index
    %c0_81 = arith.constant 0 : index
    %77 = vector.load %arg8[%c0_80, %c0_81] : memref<64x1152xbf16, #tpu.memory_space<vmem>>, vector<64x1152xbf16>
    %c0_82 = arith.constant 0 : index
    %c0_83 = arith.constant 0 : index
    %c0_84 = arith.constant 0 : index
    %78 = vector.load %arg2[%c0_82, %c0_83, %c0_84] : memref<6x1152x128xbf16, #tpu.memory_space<vmem>>, vector<1x1152x128xbf16>
    %79 = vector.shape_cast %78 : vector<1x1152x128xbf16> to vector<1152x128xbf16>
    %cst_85 = arith.constant dense<0.000000e+00> : vector<64x128xf32>
    %80 = tpu.matmul %77, %79, %cst_85 {dimension_numbers = #tpu.dot_dimension_numbers<[1], [0], [0], [1], [0, 0, 1, 1], [], []>} : vector<64x1152xbf16>, vector<1152x128xbf16>, vector<64x128xf32> -> vector<64x128xf32>
    %c0_86 = arith.constant 0 : index
    %c0_87 = arith.constant 0 : index
    %81 = vector.load %arg3[%c0_86, %c0_87] : memref<6x128xf32, #tpu.memory_space<vmem>>, vector<1x128xf32>
    %82 = vector.broadcast %81 : vector<1x128xf32> to vector<64x128xf32>
    %83 = arith.addf %80, %82 : vector<64x128xf32>
    %cst_88 = arith.constant 0.000000e+00 : f32
    %84 = vector.broadcast %cst_88 : f32 to vector<64x128xf32>
    %85 = arith.cmpf oge, %83, %84 : vector<64x128xf32>
    %cst_89 = arith.constant 1.000000e-01 : f32
    %86 = vector.broadcast %cst_89 : f32 to vector<64x128xf32>
    %87 = arith.mulf %83, %86 : vector<64x128xf32>
    %88 = arith.select %85, %83, %87 : vector<64x128xi1>, vector<64x128xf32>
    %89 = vector.shape_cast %88 : vector<64x128xf32> to vector<2x4x8x128xf32>
    %c0_90 = arith.constant 0 : index
    %c1_91 = arith.constant 1 : index
    %c0_92 = arith.constant 0 : index
    %c0_93 = arith.constant 0 : index
    %90 = vector.load %arg6[%c0_90, %c1_91, %c0_92, %c0_93] : memref<2x6x8x128xf32, #tpu.memory_space<vmem>>, vector<2x4x8x128xf32>
    tpu.vector_store %arg6[%c0_90, %c1_91, %c0_92, %c0_93], %89 {strides = array<i32>} : memref<2x6x8x128xf32, #tpu.memory_space<vmem>>, vector<2x4x8x128xf32>,
    %c1_i32_94 = arith.constant 1 : i32
    %91 = tpu.dynamic_rotate %88 by %c1_i32_94 dim 0 : vector<64x128xf32>, i32 -> vector<64x128xf32>
    %cst_95 = arith.constant 0.000000e+00 : f32
    %92 = vector.broadcast %cst_95 : f32 to vector<64x128xf32>
    %93 = arith.select %24, %92, %91 : vector<64x128xi1>, vector<64x128xf32>
    %94 = vector.shape_cast %93 : vector<64x128xf32> to vector<2x4x8x128xf32>
    %c0_96 = arith.constant 0 : index
    %c1_97 = arith.constant 1 : index
    %c0_98 = arith.constant 0 : index
    %c0_99 = arith.constant 0 : index
    %95 = vector.load %arg5[%c0_96, %c1_97, %c0_98, %c0_99] : memref<2x6x8x128xf32, #tpu.memory_space<vmem>>, vector<2x4x8x128xf32>
    tpu.vector_store %arg5[%c0_96, %c1_97, %c0_98, %c0_99], %94 {strides = array<i32>} : memref<2x6x8x128xf32, #tpu.memory_space<vmem>>, vector<2x4x8x128xf32>,
    %c63_i32_100 = arith.constant 63 : i32
    %96 = tpu.dynamic_rotate %88 by %c63_i32_100 dim 0 : vector<64x128xf32>, i32 -> vector<64x128xf32>
    %cst_101 = arith.constant 0.000000e+00 : f32
    %97 = vector.broadcast %cst_101 : f32 to vector<64x128xf32>
    %98 = arith.select %26, %97, %96 : vector<64x128xi1>, vector<64x128xf32>
    %99 = vector.shape_cast %98 : vector<64x128xf32> to vector<2x4x8x128xf32>
    %c0_102 = arith.constant 0 : index
    %c1_103 = arith.constant 1 : index
    %c0_104 = arith.constant 0 : index
    %c0_105 = arith.constant 0 : index
    %100 = vector.load %arg7[%c0_102, %c1_103, %c0_104, %c0_105] : memref<2x6x8x128xf32, #tpu.memory_space<vmem>>, vector<2x4x8x128xf32>
    tpu.vector_store %arg7[%c0_102, %c1_103, %c0_104, %c0_105], %99 {strides = array<i32>} : memref<2x6x8x128xf32, #tpu.memory_space<vmem>>, vector<2x4x8x128xf32>,
    %c0_106 = arith.constant 0 : index
    %c0_107 = arith.constant 0 : index
    %c0_108 = arith.constant 0 : index
    %c0_109 = arith.constant 0 : index
    %101 = vector.load %arg5[%c0_106, %c0_107, %c0_108, %c0_109] : memref<2x6x8x128xf32, #tpu.memory_space<vmem>>, vector<2x4x8x128xf32>
    %102 = vector.shape_cast %101 : vector<2x4x8x128xf32> to vector<64x128xf32>
    %103 = arith.truncf %102 : vector<64x128xf32> to vector<64x128xbf16>
    %c0_110 = arith.constant 0 : index
    %c0_111 = arith.constant 0 : index
    %104 = vector.load %arg8[%c0_110, %c0_111] : memref<64x1152xbf16, #tpu.memory_space<vmem>>, vector<64x128xbf16>
    tpu.vector_store %arg8[%c0_110, %c0_111], %103 {strides = array<i32>} : memref<64x1152xbf16, #tpu.memory_space<vmem>>, vector<64x128xbf16>,
    %c0_112 = arith.constant 0 : index
    %c0_113 = arith.constant 0 : index
    %c0_114 = arith.constant 0 : index
    %c0_115 = arith.constant 0 : index
    %105 = vector.load %arg6[%c0_112, %c0_113, %c0_114, %c0_115] : memref<2x6x8x128xf32, #tpu.memory_space<vmem>>, vector<2x4x8x128xf32>
    %106 = vector.shape_cast %105 : vector<2x4x8x128xf32> to vector<64x128xf32>
    %107 = arith.truncf %106 : vector<64x128xf32> to vector<64x128xbf16>
    %c0_116 = arith.constant 0 : index
    %c128_117 = arith.constant 128 : index
    %108 = vector.load %arg8[%c0_116, %c128_117] : memref<64x1152xbf16, #tpu.memory_space<vmem>>, vector<64x128xbf16>
    tpu.vector_store %arg8[%c0_116, %c128_117], %107 {strides = array<i32>} : memref<64x1152xbf16, #tpu.memory_space<vmem>>, vector<64x128xbf16>,
    %c0_118 = arith.constant 0 : index
    %c0_119 = arith.constant 0 : index
    %c0_120 = arith.constant 0 : index
    %c0_121 = arith.constant 0 : index
    %109 = vector.load %arg7[%c0_118, %c0_119, %c0_120, %c0_121] : memref<2x6x8x128xf32, #tpu.memory_space<vmem>>, vector<2x4x8x128xf32>
    %110 = vector.shape_cast %109 : vector<2x4x8x128xf32> to vector<64x128xf32>
    %111 = arith.truncf %110 : vector<64x128xf32> to vector<64x128xbf16>
    %c0_122 = arith.constant 0 : index
    %c256_123 = arith.constant 256 : index
    %112 = vector.load %arg8[%c0_122, %c256_123] : memref<64x1152xbf16, #tpu.memory_space<vmem>>, vector<64x128xbf16>
    tpu.vector_store %arg8[%c0_122, %c256_123], %111 {strides = array<i32>} : memref<64x1152xbf16, #tpu.memory_space<vmem>>, vector<64x128xbf16>,
    %c0_124 = arith.constant 0 : index
    %c1_125 = arith.constant 1 : index
    %c0_126 = arith.constant 0 : index
    %c0_127 = arith.constant 0 : index
    %113 = vector.load %arg5[%c0_124, %c1_125, %c0_126, %c0_127] : memref<2x6x8x128xf32, #tpu.memory_space<vmem>>, vector<2x4x8x128xf32>
    %114 = vector.shape_cast %113 : vector<2x4x8x128xf32> to vector<64x128xf32>
    %115 = arith.truncf %114 : vector<64x128xf32> to vector<64x128xbf16>
    %c0_128 = arith.constant 0 : index
    %c384_129 = arith.constant 384 : index
    %116 = vector.load %arg8[%c0_128, %c384_129] : memref<64x1152xbf16, #tpu.memory_space<vmem>>, vector<64x128xbf16>
    tpu.vector_store %arg8[%c0_128, %c384_129], %115 {strides = array<i32>} : memref<64x1152xbf16, #tpu.memory_space<vmem>>, vector<64x128xbf16>,
    %c0_130 = arith.constant 0 : index
    %c1_131 = arith.constant 1 : index
    %c0_132 = arith.constant 0 : index
    %c0_133 = arith.constant 0 : index
    %117 = vector.load %arg6[%c0_130, %c1_131, %c0_132, %c0_133] : memref<2x6x8x128xf32, #tpu.memory_space<vmem>>, vector<2x4x8x128xf32>
    %118 = vector.shape_cast %117 : vector<2x4x8x128xf32> to vector<64x128xf32>
    %119 = arith.truncf %118 : vector<64x128xf32> to vector<64x128xbf16>
    %c0_134 = arith.constant 0 : index
    %c512_135 = arith.constant 512 : index
    %120 = vector.load %arg8[%c0_134, %c512_135] : memref<64x1152xbf16, #tpu.memory_space<vmem>>, vector<64x128xbf16>
    tpu.vector_store %arg8[%c0_134, %c512_135], %119 {strides = array<i32>} : memref<64x1152xbf16, #tpu.memory_space<vmem>>, vector<64x128xbf16>,
    %c0_136 = arith.constant 0 : index
    %c1_137 = arith.constant 1 : index
    %c0_138 = arith.constant 0 : index
    %c0_139 = arith.constant 0 : index
    %121 = vector.load %arg7[%c0_136, %c1_137, %c0_138, %c0_139] : memref<2x6x8x128xf32, #tpu.memory_space<vmem>>, vector<2x4x8x128xf32>
    %122 = vector.shape_cast %121 : vector<2x4x8x128xf32> to vector<64x128xf32>
    %123 = arith.truncf %122 : vector<64x128xf32> to vector<64x128xbf16>
    %c0_140 = arith.constant 0 : index
    %c640_141 = arith.constant 640 : index
    %124 = vector.load %arg8[%c0_140, %c640_141] : memref<64x1152xbf16, #tpu.memory_space<vmem>>, vector<64x128xbf16>
    tpu.vector_store %arg8[%c0_140, %c640_141], %123 {strides = array<i32>} : memref<64x1152xbf16, #tpu.memory_space<vmem>>, vector<64x128xbf16>,
    %c0_142 = arith.constant 0 : index
    %c2_143 = arith.constant 2 : index
    %c0_144 = arith.constant 0 : index
    %c0_145 = arith.constant 0 : index
    %125 = vector.load %arg5[%c0_142, %c2_143, %c0_144, %c0_145] : memref<2x6x8x128xf32, #tpu.memory_space<vmem>>, vector<2x4x8x128xf32>
    %126 = vector.shape_cast %125 : vector<2x4x8x128xf32> to vector<64x128xf32>
    %127 = arith.truncf %126 : vector<64x128xf32> to vector<64x128xbf16>
    %c0_146 = arith.constant 0 : index
    %c768_147 = arith.constant 768 : index
    %128 = vector.load %arg8[%c0_146, %c768_147] : memref<64x1152xbf16, #tpu.memory_space<vmem>>, vector<64x128xbf16>
    tpu.vector_store %arg8[%c0_146, %c768_147], %127 {strides = array<i32>} : memref<64x1152xbf16, #tpu.memory_space<vmem>>, vector<64x128xbf16>,
    %c0_148 = arith.constant 0 : index
    %c2_149 = arith.constant 2 : index
    %c0_150 = arith.constant 0 : index
    %c0_151 = arith.constant 0 : index
    %129 = vector.load %arg6[%c0_148, %c2_149, %c0_150, %c0_151] : memref<2x6x8x128xf32, #tpu.memory_space<vmem>>, vector<2x4x8x128xf32>
    %130 = vector.shape_cast %129 : vector<2x4x8x128xf32> to vector<64x128xf32>
    %131 = arith.truncf %130 : vector<64x128xf32> to vector<64x128xbf16>
    %c0_152 = arith.constant 0 : index
    %c896_153 = arith.constant 896 : index
    %132 = vector.load %arg8[%c0_152, %c896_153] : memref<64x1152xbf16, #tpu.memory_space<vmem>>, vector<64x128xbf16>
    tpu.vector_store %arg8[%c0_152, %c896_153], %131 {strides = array<i32>} : memref<64x1152xbf16, #tpu.memory_space<vmem>>, vector<64x128xbf16>,
    %c0_154 = arith.constant 0 : index
    %c2_155 = arith.constant 2 : index
    %c0_156 = arith.constant 0 : index
    %c0_157 = arith.constant 0 : index
    %133 = vector.load %arg7[%c0_154, %c2_155, %c0_156, %c0_157] : memref<2x6x8x128xf32, #tpu.memory_space<vmem>>, vector<2x4x8x128xf32>
    %134 = vector.shape_cast %133 : vector<2x4x8x128xf32> to vector<64x128xf32>
    %135 = arith.truncf %134 : vector<64x128xf32> to vector<64x128xbf16>
    %c0_158 = arith.constant 0 : index
    %c1024_159 = arith.constant 1024 : index
    %136 = vector.load %arg8[%c0_158, %c1024_159] : memref<64x1152xbf16, #tpu.memory_space<vmem>>, vector<64x128xbf16>
    tpu.vector_store %arg8[%c0_158, %c1024_159], %135 {strides = array<i32>} : memref<64x1152xbf16, #tpu.memory_space<vmem>>, vector<64x128xbf16>,
    %c0_160 = arith.constant 0 : index
    %c0_161 = arith.constant 0 : index
    %137 = vector.load %arg8[%c0_160, %c0_161] : memref<64x1152xbf16, #tpu.memory_space<vmem>>, vector<64x1152xbf16>
    %c1_162 = arith.constant 1 : index
    %c0_163 = arith.constant 0 : index
    %c0_164 = arith.constant 0 : index
    %138 = vector.load %arg2[%c1_162, %c0_163, %c0_164] : memref<6x1152x128xbf16, #tpu.memory_space<vmem>>, vector<1x1152x128xbf16>
    %139 = vector.shape_cast %138 : vector<1x1152x128xbf16> to vector<1152x128xbf16>
    %cst_165 = arith.constant dense<0.000000e+00> : vector<64x128xf32>
    %140 = tpu.matmul %137, %139, %cst_165 {dimension_numbers = #tpu.dot_dimension_numbers<[1], [0], [0], [1], [0, 0, 1, 1], [], []>} : vector<64x1152xbf16>, vector<1152x128xbf16>, vector<64x128xf32> -> vector<64x128xf32>
    %c1_166 = arith.constant 1 : index
    %c0_167 = arith.constant 0 : index
    %141 = vector.load %arg3[%c1_166, %c0_167] : memref<6x128xf32, #tpu.memory_space<vmem>>, vector<1x128xf32>
    %142 = vector.broadcast %141 : vector<1x128xf32> to vector<64x128xf32>
    %143 = arith.addf %140, %142 : vector<64x128xf32>
    %cst_168 = arith.constant 0.000000e+00 : f32
    %144 = vector.broadcast %cst_168 : f32 to vector<64x128xf32>
    %145 = arith.cmpf oge, %143, %144 : vector<64x128xf32>
    %cst_169 = arith.constant 1.000000e-01 : f32
    %146 = vector.broadcast %cst_169 : f32 to vector<64x128xf32>
    %147 = arith.mulf %143, %146 : vector<64x128xf32>
    %148 = arith.select %145, %143, %147 : vector<64x128xi1>, vector<64x128xf32>
    %149 = vector.shape_cast %148 : vector<64x128xf32> to vector<2x4x8x128xf32>
    %c0_170 = arith.constant 0 : index
    %c1_171 = arith.constant 1 : index
    %c0_172 = arith.constant 0 : index
    %c0_173 = arith.constant 0 : index
    %150 = vector.load %arg6[%c0_170, %c1_171, %c0_172, %c0_173] : memref<2x6x8x128xf32, #tpu.memory_space<vmem>>, vector<2x4x8x128xf32>
    tpu.vector_store %arg6[%c0_170, %c1_171, %c0_172, %c0_173], %149 {strides = array<i32>} : memref<2x6x8x128xf32, #tpu.memory_space<vmem>>, vector<2x4x8x128xf32>,
    %c1_i32_174 = arith.constant 1 : i32
    %151 = tpu.dynamic_rotate %148 by %c1_i32_174 dim 0 : vector<64x128xf32>, i32 -> vector<64x128xf32>
    %cst_175 = arith.constant 0.000000e+00 : f32
    %152 = vector.broadcast %cst_175 : f32 to vector<64x128xf32>
    %153 = arith.select %24, %152, %151 : vector<64x128xi1>, vector<64x128xf32>
    %154 = vector.shape_cast %153 : vector<64x128xf32> to vector<2x4x8x128xf32>
    %c0_176 = arith.constant 0 : index
    %c1_177 = arith.constant 1 : index
    %c0_178 = arith.constant 0 : index
    %c0_179 = arith.constant 0 : index
    %155 = vector.load %arg5[%c0_176, %c1_177, %c0_178, %c0_179] : memref<2x6x8x128xf32, #tpu.memory_space<vmem>>, vector<2x4x8x128xf32>
    tpu.vector_store %arg5[%c0_176, %c1_177, %c0_178, %c0_179], %154 {strides = array<i32>} : memref<2x6x8x128xf32, #tpu.memory_space<vmem>>, vector<2x4x8x128xf32>,
    %c63_i32_180 = arith.constant 63 : i32
    %156 = tpu.dynamic_rotate %148 by %c63_i32_180 dim 0 : vector<64x128xf32>, i32 -> vector<64x128xf32>
    %cst_181 = arith.constant 0.000000e+00 : f32
    %157 = vector.broadcast %cst_181 : f32 to vector<64x128xf32>
    %158 = arith.select %26, %157, %156 : vector<64x128xi1>, vector<64x128xf32>
    %159 = vector.shape_cast %158 : vector<64x128xf32> to vector<2x4x8x128xf32>
    %c0_182 = arith.constant 0 : index
    %c1_183 = arith.constant 1 : index
    %c0_184 = arith.constant 0 : index
    %c0_185 = arith.constant 0 : index
    %160 = vector.load %arg7[%c0_182, %c1_183, %c0_184, %c0_185] : memref<2x6x8x128xf32, #tpu.memory_space<vmem>>, vector<2x4x8x128xf32>
    tpu.vector_store %arg7[%c0_182, %c1_183, %c0_184, %c0_185], %159 {strides = array<i32>} : memref<2x6x8x128xf32, #tpu.memory_space<vmem>>, vector<2x4x8x128xf32>,
    %c0_186 = arith.constant 0 : index
    %c0_187 = arith.constant 0 : index
    %c0_188 = arith.constant 0 : index
    %c0_189 = arith.constant 0 : index
    %161 = vector.load %arg5[%c0_186, %c0_187, %c0_188, %c0_189] : memref<2x6x8x128xf32, #tpu.memory_space<vmem>>, vector<2x4x8x128xf32>
    %162 = vector.shape_cast %161 : vector<2x4x8x128xf32> to vector<64x128xf32>
    %163 = arith.truncf %162 : vector<64x128xf32> to vector<64x128xbf16>
    %c0_190 = arith.constant 0 : index
    %c0_191 = arith.constant 0 : index
    %164 = vector.load %arg8[%c0_190, %c0_191] : memref<64x1152xbf16, #tpu.memory_space<vmem>>, vector<64x128xbf16>
    tpu.vector_store %arg8[%c0_190, %c0_191], %163 {strides = array<i32>} : memref<64x1152xbf16, #tpu.memory_space<vmem>>, vector<64x128xbf16>,
    %c0_192 = arith.constant 0 : index
    %c0_193 = arith.constant 0 : index
    %c0_194 = arith.constant 0 : index
    %c0_195 = arith.constant 0 : index
    %165 = vector.load %arg6[%c0_192, %c0_193, %c0_194, %c0_195] : memref<2x6x8x128xf32, #tpu.memory_space<vmem>>, vector<2x4x8x128xf32>
    %166 = vector.shape_cast %165 : vector<2x4x8x128xf32> to vector<64x128xf32>
    %167 = arith.truncf %166 : vector<64x128xf32> to vector<64x128xbf16>
    %c0_196 = arith.constant 0 : index
    %c128_197 = arith.constant 128 : index
    %168 = vector.load %arg8[%c0_196, %c128_197] : memref<64x1152xbf16, #tpu.memory_space<vmem>>, vector<64x128xbf16>
    tpu.vector_store %arg8[%c0_196, %c128_197], %167 {strides = array<i32>} : memref<64x1152xbf16, #tpu.memory_space<vmem>>, vector<64x128xbf16>,
    %c0_198 = arith.constant 0 : index
    %c0_199 = arith.constant 0 : index
    %c0_200 = arith.constant 0 : index
    %c0_201 = arith.constant 0 : index
    %169 = vector.load %arg7[%c0_198, %c0_199, %c0_200, %c0_201] : memref<2x6x8x128xf32, #tpu.memory_space<vmem>>, vector<2x4x8x128xf32>
    %170 = vector.shape_cast %169 : vector<2x4x8x128xf32> to vector<64x128xf32>
    %171 = arith.truncf %170 : vector<64x128xf32> to vector<64x128xbf16>
    %c0_202 = arith.constant 0 : index
    %c256_203 = arith.constant 256 : index
    %172 = vector.load %arg8[%c0_202, %c256_203] : memref<64x1152xbf16, #tpu.memory_space<vmem>>, vector<64x128xbf16>
    tpu.vector_store %arg8[%c0_202, %c256_203], %171 {strides = array<i32>} : memref<64x1152xbf16, #tpu.memory_space<vmem>>, vector<64x128xbf16>,
    %c0_204 = arith.constant 0 : index
    %c1_205 = arith.constant 1 : index
    %c0_206 = arith.constant 0 : index
    %c0_207 = arith.constant 0 : index
    %173 = vector.load %arg5[%c0_204, %c1_205, %c0_206, %c0_207] : memref<2x6x8x128xf32, #tpu.memory_space<vmem>>, vector<2x4x8x128xf32>
    %174 = vector.shape_cast %173 : vector<2x4x8x128xf32> to vector<64x128xf32>
    %175 = arith.truncf %174 : vector<64x128xf32> to vector<64x128xbf16>
    %c0_208 = arith.constant 0 : index
    %c384_209 = arith.constant 384 : index
    %176 = vector.load %arg8[%c0_208, %c384_209] : memref<64x1152xbf16, #tpu.memory_space<vmem>>, vector<64x128xbf16>
    tpu.vector_store %arg8[%c0_208, %c384_209], %175 {strides = array<i32>} : memref<64x1152xbf16, #tpu.memory_space<vmem>>, vector<64x128xbf16>,
    %c0_210 = arith.constant 0 : index
    %c1_211 = arith.constant 1 : index
    %c0_212 = arith.constant 0 : index
    %c0_213 = arith.constant 0 : index
    %177 = vector.load %arg6[%c0_210, %c1_211, %c0_212, %c0_213] : memref<2x6x8x128xf32, #tpu.memory_space<vmem>>, vector<2x4x8x128xf32>
    %178 = vector.shape_cast %177 : vector<2x4x8x128xf32> to vector<64x128xf32>
    %179 = arith.truncf %178 : vector<64x128xf32> to vector<64x128xbf16>
    %c0_214 = arith.constant 0 : index
    %c512_215 = arith.constant 512 : index
    %180 = vector.load %arg8[%c0_214, %c512_215] : memref<64x1152xbf16, #tpu.memory_space<vmem>>, vector<64x128xbf16>
    tpu.vector_store %arg8[%c0_214, %c512_215], %179 {strides = array<i32>} : memref<64x1152xbf16, #tpu.memory_space<vmem>>, vector<64x128xbf16>,
    %c0_216 = arith.constant 0 : index
    %c1_217 = arith.constant 1 : index
    %c0_218 = arith.constant 0 : index
    %c0_219 = arith.constant 0 : index
    %181 = vector.load %arg7[%c0_216, %c1_217, %c0_218, %c0_219] : memref<2x6x8x128xf32, #tpu.memory_space<vmem>>, vector<2x4x8x128xf32>
    %182 = vector.shape_cast %181 : vector<2x4x8x128xf32> to vector<64x128xf32>
    %183 = arith.truncf %182 : vector<64x128xf32> to vector<64x128xbf16>
    %c0_220 = arith.constant 0 : index
    %c640_221 = arith.constant 640 : index
    %184 = vector.load %arg8[%c0_220, %c640_221] : memref<64x1152xbf16, #tpu.memory_space<vmem>>, vector<64x128xbf16>
    tpu.vector_store %arg8[%c0_220, %c640_221], %183 {strides = array<i32>} : memref<64x1152xbf16, #tpu.memory_space<vmem>>, vector<64x128xbf16>,
    %c0_222 = arith.constant 0 : index
    %c2_223 = arith.constant 2 : index
    %c0_224 = arith.constant 0 : index
    %c0_225 = arith.constant 0 : index
    %185 = vector.load %arg5[%c0_222, %c2_223, %c0_224, %c0_225] : memref<2x6x8x128xf32, #tpu.memory_space<vmem>>, vector<2x4x8x128xf32>
    %186 = vector.shape_cast %185 : vector<2x4x8x128xf32> to vector<64x128xf32>
    %187 = arith.truncf %186 : vector<64x128xf32> to vector<64x128xbf16>
    %c0_226 = arith.constant 0 : index
    %c768_227 = arith.constant 768 : index
    %188 = vector.load %arg8[%c0_226, %c768_227] : memref<64x1152xbf16, #tpu.memory_space<vmem>>, vector<64x128xbf16>
    tpu.vector_store %arg8[%c0_226, %c768_227], %187 {strides = array<i32>} : memref<64x1152xbf16, #tpu.memory_space<vmem>>, vector<64x128xbf16>,
    %c0_228 = arith.constant 0 : index
    %c2_229 = arith.constant 2 : index
    %c0_230 = arith.constant 0 : index
    %c0_231 = arith.constant 0 : index
    %189 = vector.load %arg6[%c0_228, %c2_229, %c0_230, %c0_231] : memref<2x6x8x128xf32, #tpu.memory_space<vmem>>, vector<2x4x8x128xf32>
    %190 = vector.shape_cast %189 : vector<2x4x8x128xf32> to vector<64x128xf32>
    %191 = arith.truncf %190 : vector<64x128xf32> to vector<64x128xbf16>
    %c0_232 = arith.constant 0 : index
    %c896_233 = arith.constant 896 : index
    %192 = vector.load %arg8[%c0_232, %c896_233] : memref<64x1152xbf16, #tpu.memory_space<vmem>>, vector<64x128xbf16>
    tpu.vector_store %arg8[%c0_232, %c896_233], %191 {strides = array<i32>} : memref<64x1152xbf16, #tpu.memory_space<vmem>>, vector<64x128xbf16>,
    %c0_234 = arith.constant 0 : index
    %c2_235 = arith.constant 2 : index
    %c0_236 = arith.constant 0 : index
    %c0_237 = arith.constant 0 : index
    %193 = vector.load %arg7[%c0_234, %c2_235, %c0_236, %c0_237] : memref<2x6x8x128xf32, #tpu.memory_space<vmem>>, vector<2x4x8x128xf32>
    %194 = vector.shape_cast %193 : vector<2x4x8x128xf32> to vector<64x128xf32>
    %195 = arith.truncf %194 : vector<64x128xf32> to vector<64x128xbf16>
    %c0_238 = arith.constant 0 : index
    %c1024_239 = arith.constant 1024 : index
    %196 = vector.load %arg8[%c0_238, %c1024_239] : memref<64x1152xbf16, #tpu.memory_space<vmem>>, vector<64x128xbf16>
    tpu.vector_store %arg8[%c0_238, %c1024_239], %195 {strides = array<i32>} : memref<64x1152xbf16, #tpu.memory_space<vmem>>, vector<64x128xbf16>,
    %c0_240 = arith.constant 0 : index
    %c0_241 = arith.constant 0 : index
    %197 = vector.load %arg8[%c0_240, %c0_241] : memref<64x1152xbf16, #tpu.memory_space<vmem>>, vector<64x1152xbf16>
    %c2_242 = arith.constant 2 : index
    %c0_243 = arith.constant 0 : index
    %c0_244 = arith.constant 0 : index
    %198 = vector.load %arg2[%c2_242, %c0_243, %c0_244] : memref<6x1152x128xbf16, #tpu.memory_space<vmem>>, vector<1x1152x128xbf16>
    %199 = vector.shape_cast %198 : vector<1x1152x128xbf16> to vector<1152x128xbf16>
    %cst_245 = arith.constant dense<0.000000e+00> : vector<64x128xf32>
    %200 = tpu.matmul %197, %199, %cst_245 {dimension_numbers = #tpu.dot_dimension_numbers<[1], [0], [0], [1], [0, 0, 1, 1], [], []>} : vector<64x1152xbf16>, vector<1152x128xbf16>, vector<64x128xf32> -> vector<64x128xf32>
    %c2_246 = arith.constant 2 : index
    %c0_247 = arith.constant 0 : index
    %201 = vector.load %arg3[%c2_246, %c0_247] : memref<6x128xf32, #tpu.memory_space<vmem>>, vector<1x128xf32>
    %202 = vector.broadcast %201 : vector<1x128xf32> to vector<64x128xf32>
    %203 = arith.addf %200, %202 : vector<64x128xf32>
    %204 = arith.addf %203, %88 : vector<64x128xf32>
    %205 = vector.shape_cast %204 : vector<64x128xf32> to vector<2x4x8x128xf32>
    %c0_248 = arith.constant 0 : index
    %c1_249 = arith.constant 1 : index
    %c0_250 = arith.constant 0 : index
    %c0_251 = arith.constant 0 : index
    %206 = vector.load %arg6[%c0_248, %c1_249, %c0_250, %c0_251] : memref<2x6x8x128xf32, #tpu.memory_space<vmem>>, vector<2x4x8x128xf32>
    tpu.vector_store %arg6[%c0_248, %c1_249, %c0_250, %c0_251], %205 {strides = array<i32>} : memref<2x6x8x128xf32, #tpu.memory_space<vmem>>, vector<2x4x8x128xf32>,
    %c1_i32_252 = arith.constant 1 : i32
    %207 = tpu.dynamic_rotate %204 by %c1_i32_252 dim 0 : vector<64x128xf32>, i32 -> vector<64x128xf32>
    %cst_253 = arith.constant 0.000000e+00 : f32
    %208 = vector.broadcast %cst_253 : f32 to vector<64x128xf32>
    %209 = arith.select %24, %208, %207 : vector<64x128xi1>, vector<64x128xf32>
    %210 = vector.shape_cast %209 : vector<64x128xf32> to vector<2x4x8x128xf32>
    %c0_254 = arith.constant 0 : index
    %c1_255 = arith.constant 1 : index
    %c0_256 = arith.constant 0 : index
    %c0_257 = arith.constant 0 : index
    %211 = vector.load %arg5[%c0_254, %c1_255, %c0_256, %c0_257] : memref<2x6x8x128xf32, #tpu.memory_space<vmem>>, vector<2x4x8x128xf32>
    tpu.vector_store %arg5[%c0_254, %c1_255, %c0_256, %c0_257], %210 {strides = array<i32>} : memref<2x6x8x128xf32, #tpu.memory_space<vmem>>, vector<2x4x8x128xf32>,
    %c63_i32_258 = arith.constant 63 : i32
    %212 = tpu.dynamic_rotate %204 by %c63_i32_258 dim 0 : vector<64x128xf32>, i32 -> vector<64x128xf32>
    %cst_259 = arith.constant 0.000000e+00 : f32
    %213 = vector.broadcast %cst_259 : f32 to vector<64x128xf32>
    %214 = arith.select %26, %213, %212 : vector<64x128xi1>, vector<64x128xf32>
    %215 = vector.shape_cast %214 : vector<64x128xf32> to vector<2x4x8x128xf32>
    %c0_260 = arith.constant 0 : index
    %c1_261 = arith.constant 1 : index
    %c0_262 = arith.constant 0 : index
    %c0_263 = arith.constant 0 : index
    %216 = vector.load %arg7[%c0_260, %c1_261, %c0_262, %c0_263] : memref<2x6x8x128xf32, #tpu.memory_space<vmem>>, vector<2x4x8x128xf32>
    tpu.vector_store %arg7[%c0_260, %c1_261, %c0_262, %c0_263], %215 {strides = array<i32>} : memref<2x6x8x128xf32, #tpu.memory_space<vmem>>, vector<2x4x8x128xf32>,
    %c0_264 = arith.constant 0 : index
    %c0_265 = arith.constant 0 : index
    %c0_266 = arith.constant 0 : index
    %c0_267 = arith.constant 0 : index
    %217 = vector.load %arg5[%c0_264, %c0_265, %c0_266, %c0_267] : memref<2x6x8x128xf32, #tpu.memory_space<vmem>>, vector<2x4x8x128xf32>
    %218 = vector.shape_cast %217 : vector<2x4x8x128xf32> to vector<64x128xf32>
    %219 = arith.truncf %218 : vector<64x128xf32> to vector<64x128xbf16>
    %c0_268 = arith.constant 0 : index
    %c0_269 = arith.constant 0 : index
    %220 = vector.load %arg8[%c0_268, %c0_269] : memref<64x1152xbf16, #tpu.memory_space<vmem>>, vector<64x128xbf16>
    tpu.vector_store %arg8[%c0_268, %c0_269], %219 {strides = array<i32>} : memref<64x1152xbf16, #tpu.memory_space<vmem>>, vector<64x128xbf16>,
    %c0_270 = arith.constant 0 : index
    %c0_271 = arith.constant 0 : index
    %c0_272 = arith.constant 0 : index
    %c0_273 = arith.constant 0 : index
    %221 = vector.load %arg6[%c0_270, %c0_271, %c0_272, %c0_273] : memref<2x6x8x128xf32, #tpu.memory_space<vmem>>, vector<2x4x8x128xf32>
    %222 = vector.shape_cast %221 : vector<2x4x8x128xf32> to vector<64x128xf32>
    %223 = arith.truncf %222 : vector<64x128xf32> to vector<64x128xbf16>
    %c0_274 = arith.constant 0 : index
    %c128_275 = arith.constant 128 : index
    %224 = vector.load %arg8[%c0_274, %c128_275] : memref<64x1152xbf16, #tpu.memory_space<vmem>>, vector<64x128xbf16>
    tpu.vector_store %arg8[%c0_274, %c128_275], %223 {strides = array<i32>} : memref<64x1152xbf16, #tpu.memory_space<vmem>>, vector<64x128xbf16>,
    %c0_276 = arith.constant 0 : index
    %c0_277 = arith.constant 0 : index
    %c0_278 = arith.constant 0 : index
    %c0_279 = arith.constant 0 : index
    %225 = vector.load %arg7[%c0_276, %c0_277, %c0_278, %c0_279] : memref<2x6x8x128xf32, #tpu.memory_space<vmem>>, vector<2x4x8x128xf32>
    %226 = vector.shape_cast %225 : vector<2x4x8x128xf32> to vector<64x128xf32>
    %227 = arith.truncf %226 : vector<64x128xf32> to vector<64x128xbf16>
    %c0_280 = arith.constant 0 : index
    %c256_281 = arith.constant 256 : index
    %228 = vector.load %arg8[%c0_280, %c256_281] : memref<64x1152xbf16, #tpu.memory_space<vmem>>, vector<64x128xbf16>
    tpu.vector_store %arg8[%c0_280, %c256_281], %227 {strides = array<i32>} : memref<64x1152xbf16, #tpu.memory_space<vmem>>, vector<64x128xbf16>,
    %c0_282 = arith.constant 0 : index
    %c1_283 = arith.constant 1 : index
    %c0_284 = arith.constant 0 : index
    %c0_285 = arith.constant 0 : index
    %229 = vector.load %arg5[%c0_282, %c1_283, %c0_284, %c0_285] : memref<2x6x8x128xf32, #tpu.memory_space<vmem>>, vector<2x4x8x128xf32>
    %230 = vector.shape_cast %229 : vector<2x4x8x128xf32> to vector<64x128xf32>
    %231 = arith.truncf %230 : vector<64x128xf32> to vector<64x128xbf16>
    %c0_286 = arith.constant 0 : index
    %c384_287 = arith.constant 384 : index
    %232 = vector.load %arg8[%c0_286, %c384_287] : memref<64x1152xbf16, #tpu.memory_space<vmem>>, vector<64x128xbf16>
    tpu.vector_store %arg8[%c0_286, %c384_287], %231 {strides = array<i32>} : memref<64x1152xbf16, #tpu.memory_space<vmem>>, vector<64x128xbf16>,
    %c0_288 = arith.constant 0 : index
    %c1_289 = arith.constant 1 : index
    %c0_290 = arith.constant 0 : index
    %c0_291 = arith.constant 0 : index
    %233 = vector.load %arg6[%c0_288, %c1_289, %c0_290, %c0_291] : memref<2x6x8x128xf32, #tpu.memory_space<vmem>>, vector<2x4x8x128xf32>
    %234 = vector.shape_cast %233 : vector<2x4x8x128xf32> to vector<64x128xf32>
    %235 = arith.truncf %234 : vector<64x128xf32> to vector<64x128xbf16>
    %c0_292 = arith.constant 0 : index
    %c512_293 = arith.constant 512 : index
    %236 = vector.load %arg8[%c0_292, %c512_293] : memref<64x1152xbf16, #tpu.memory_space<vmem>>, vector<64x128xbf16>
    tpu.vector_store %arg8[%c0_292, %c512_293], %235 {strides = array<i32>} : memref<64x1152xbf16, #tpu.memory_space<vmem>>, vector<64x128xbf16>,
    %c0_294 = arith.constant 0 : index
    %c1_295 = arith.constant 1 : index
    %c0_296 = arith.constant 0 : index
    %c0_297 = arith.constant 0 : index
    %237 = vector.load %arg7[%c0_294, %c1_295, %c0_296, %c0_297] : memref<2x6x8x128xf32, #tpu.memory_space<vmem>>, vector<2x4x8x128xf32>
    %238 = vector.shape_cast %237 : vector<2x4x8x128xf32> to vector<64x128xf32>
    %239 = arith.truncf %238 : vector<64x128xf32> to vector<64x128xbf16>
    %c0_298 = arith.constant 0 : index
    %c640_299 = arith.constant 640 : index
    %240 = vector.load %arg8[%c0_298, %c640_299] : memref<64x1152xbf16, #tpu.memory_space<vmem>>, vector<64x128xbf16>
    tpu.vector_store %arg8[%c0_298, %c640_299], %239 {strides = array<i32>} : memref<64x1152xbf16, #tpu.memory_space<vmem>>, vector<64x128xbf16>,
    %c0_300 = arith.constant 0 : index
    %c2_301 = arith.constant 2 : index
    %c0_302 = arith.constant 0 : index
    %c0_303 = arith.constant 0 : index
    %241 = vector.load %arg5[%c0_300, %c2_301, %c0_302, %c0_303] : memref<2x6x8x128xf32, #tpu.memory_space<vmem>>, vector<2x4x8x128xf32>
    %242 = vector.shape_cast %241 : vector<2x4x8x128xf32> to vector<64x128xf32>
    %243 = arith.truncf %242 : vector<64x128xf32> to vector<64x128xbf16>
    %c0_304 = arith.constant 0 : index
    %c768_305 = arith.constant 768 : index
    %244 = vector.load %arg8[%c0_304, %c768_305] : memref<64x1152xbf16, #tpu.memory_space<vmem>>, vector<64x128xbf16>
    tpu.vector_store %arg8[%c0_304, %c768_305], %243 {strides = array<i32>} : memref<64x1152xbf16, #tpu.memory_space<vmem>>, vector<64x128xbf16>,
    %c0_306 = arith.constant 0 : index
    %c2_307 = arith.constant 2 : index
    %c0_308 = arith.constant 0 : index
    %c0_309 = arith.constant 0 : index
    %245 = vector.load %arg6[%c0_306, %c2_307, %c0_308, %c0_309] : memref<2x6x8x128xf32, #tpu.memory_space<vmem>>, vector<2x4x8x128xf32>
    %246 = vector.shape_cast %245 : vector<2x4x8x128xf32> to vector<64x128xf32>
    %247 = arith.truncf %246 : vector<64x128xf32> to vector<64x128xbf16>
    %c0_310 = arith.constant 0 : index
    %c896_311 = arith.constant 896 : index
    %248 = vector.load %arg8[%c0_310, %c896_311] : memref<64x1152xbf16, #tpu.memory_space<vmem>>, vector<64x128xbf16>
    tpu.vector_store %arg8[%c0_310, %c896_311], %247 {strides = array<i32>} : memref<64x1152xbf16, #tpu.memory_space<vmem>>, vector<64x128xbf16>,
    %c0_312 = arith.constant 0 : index
    %c2_313 = arith.constant 2 : index
    %c0_314 = arith.constant 0 : index
    %c0_315 = arith.constant 0 : index
    %249 = vector.load %arg7[%c0_312, %c2_313, %c0_314, %c0_315] : memref<2x6x8x128xf32, #tpu.memory_space<vmem>>, vector<2x4x8x128xf32>
    %250 = vector.shape_cast %249 : vector<2x4x8x128xf32> to vector<64x128xf32>
    %251 = arith.truncf %250 : vector<64x128xf32> to vector<64x128xbf16>
    %c0_316 = arith.constant 0 : index
    %c1024_317 = arith.constant 1024 : index
    %252 = vector.load %arg8[%c0_316, %c1024_317] : memref<64x1152xbf16, #tpu.memory_space<vmem>>, vector<64x128xbf16>
    tpu.vector_store %arg8[%c0_316, %c1024_317], %251 {strides = array<i32>} : memref<64x1152xbf16, #tpu.memory_space<vmem>>, vector<64x128xbf16>,
    %c0_318 = arith.constant 0 : index
    %c0_319 = arith.constant 0 : index
    %253 = vector.load %arg8[%c0_318, %c0_319] : memref<64x1152xbf16, #tpu.memory_space<vmem>>, vector<64x1152xbf16>
    %c3 = arith.constant 3 : index
    %c0_320 = arith.constant 0 : index
    %c0_321 = arith.constant 0 : index
    %254 = vector.load %arg2[%c3, %c0_320, %c0_321] : memref<6x1152x128xbf16, #tpu.memory_space<vmem>>, vector<1x1152x128xbf16>
    %255 = vector.shape_cast %254 : vector<1x1152x128xbf16> to vector<1152x128xbf16>
    %cst_322 = arith.constant dense<0.000000e+00> : vector<64x128xf32>
    %256 = tpu.matmul %253, %255, %cst_322 {dimension_numbers = #tpu.dot_dimension_numbers<[1], [0], [0], [1], [0, 0, 1, 1], [], []>} : vector<64x1152xbf16>, vector<1152x128xbf16>, vector<64x128xf32> -> vector<64x128xf32>
    %c3_323 = arith.constant 3 : index
    %c0_324 = arith.constant 0 : index
    %257 = vector.load %arg3[%c3_323, %c0_324] : memref<6x128xf32, #tpu.memory_space<vmem>>, vector<1x128xf32>
    %258 = vector.broadcast %257 : vector<1x128xf32> to vector<64x128xf32>
    %259 = arith.addf %256, %258 : vector<64x128xf32>
    %cst_325 = arith.constant 0.000000e+00 : f32
    %260 = vector.broadcast %cst_325 : f32 to vector<64x128xf32>
    %261 = arith.cmpf oge, %259, %260 : vector<64x128xf32>
    %cst_326 = arith.constant 1.000000e-01 : f32
    %262 = vector.broadcast %cst_326 : f32 to vector<64x128xf32>
    %263 = arith.mulf %259, %262 : vector<64x128xf32>
    %264 = arith.select %261, %259, %263 : vector<64x128xi1>, vector<64x128xf32>
    %265 = vector.shape_cast %264 : vector<64x128xf32> to vector<2x4x8x128xf32>
    %c0_327 = arith.constant 0 : index
    %c1_328 = arith.constant 1 : index
    %c0_329 = arith.constant 0 : index
    %c0_330 = arith.constant 0 : index
    %266 = vector.load %arg6[%c0_327, %c1_328, %c0_329, %c0_330] : memref<2x6x8x128xf32, #tpu.memory_space<vmem>>, vector<2x4x8x128xf32>
    tpu.vector_store %arg6[%c0_327, %c1_328, %c0_329, %c0_330], %265 {strides = array<i32>} : memref<2x6x8x128xf32, #tpu.memory_space<vmem>>, vector<2x4x8x128xf32>,
    %c1_i32_331 = arith.constant 1 : i32
    %267 = tpu.dynamic_rotate %264 by %c1_i32_331 dim 0 : vector<64x128xf32>, i32 -> vector<64x128xf32>
    %cst_332 = arith.constant 0.000000e+00 : f32
    %268 = vector.broadcast %cst_332 : f32 to vector<64x128xf32>
    %269 = arith.select %24, %268, %267 : vector<64x128xi1>, vector<64x128xf32>
    %270 = vector.shape_cast %269 : vector<64x128xf32> to vector<2x4x8x128xf32>
    %c0_333 = arith.constant 0 : index
    %c1_334 = arith.constant 1 : index
    %c0_335 = arith.constant 0 : index
    %c0_336 = arith.constant 0 : index
    %271 = vector.load %arg5[%c0_333, %c1_334, %c0_335, %c0_336] : memref<2x6x8x128xf32, #tpu.memory_space<vmem>>, vector<2x4x8x128xf32>
    tpu.vector_store %arg5[%c0_333, %c1_334, %c0_335, %c0_336], %270 {strides = array<i32>} : memref<2x6x8x128xf32, #tpu.memory_space<vmem>>, vector<2x4x8x128xf32>,
    %c63_i32_337 = arith.constant 63 : i32
    %272 = tpu.dynamic_rotate %264 by %c63_i32_337 dim 0 : vector<64x128xf32>, i32 -> vector<64x128xf32>
    %cst_338 = arith.constant 0.000000e+00 : f32
    %273 = vector.broadcast %cst_338 : f32 to vector<64x128xf32>
    %274 = arith.select %26, %273, %272 : vector<64x128xi1>, vector<64x128xf32>
    %275 = vector.shape_cast %274 : vector<64x128xf32> to vector<2x4x8x128xf32>
    %c0_339 = arith.constant 0 : index
    %c1_340 = arith.constant 1 : index
    %c0_341 = arith.constant 0 : index
    %c0_342 = arith.constant 0 : index
    %276 = vector.load %arg7[%c0_339, %c1_340, %c0_341, %c0_342] : memref<2x6x8x128xf32, #tpu.memory_space<vmem>>, vector<2x4x8x128xf32>
    tpu.vector_store %arg7[%c0_339, %c1_340, %c0_341, %c0_342], %275 {strides = array<i32>} : memref<2x6x8x128xf32, #tpu.memory_space<vmem>>, vector<2x4x8x128xf32>,
    %c0_343 = arith.constant 0 : index
    %c0_344 = arith.constant 0 : index
    %c0_345 = arith.constant 0 : index
    %c0_346 = arith.constant 0 : index
    %277 = vector.load %arg5[%c0_343, %c0_344, %c0_345, %c0_346] : memref<2x6x8x128xf32, #tpu.memory_space<vmem>>, vector<2x4x8x128xf32>
    %278 = vector.shape_cast %277 : vector<2x4x8x128xf32> to vector<64x128xf32>
    %279 = arith.truncf %278 : vector<64x128xf32> to vector<64x128xbf16>
    %c0_347 = arith.constant 0 : index
    %c0_348 = arith.constant 0 : index
    %280 = vector.load %arg8[%c0_347, %c0_348] : memref<64x1152xbf16, #tpu.memory_space<vmem>>, vector<64x128xbf16>
    tpu.vector_store %arg8[%c0_347, %c0_348], %279 {strides = array<i32>} : memref<64x1152xbf16, #tpu.memory_space<vmem>>, vector<64x128xbf16>,
    %c0_349 = arith.constant 0 : index
    %c0_350 = arith.constant 0 : index
    %c0_351 = arith.constant 0 : index
    %c0_352 = arith.constant 0 : index
    %281 = vector.load %arg6[%c0_349, %c0_350, %c0_351, %c0_352] : memref<2x6x8x128xf32, #tpu.memory_space<vmem>>, vector<2x4x8x128xf32>
    %282 = vector.shape_cast %281 : vector<2x4x8x128xf32> to vector<64x128xf32>
    %283 = arith.truncf %282 : vector<64x128xf32> to vector<64x128xbf16>
    %c0_353 = arith.constant 0 : index
    %c128_354 = arith.constant 128 : index
    %284 = vector.load %arg8[%c0_353, %c128_354] : memref<64x1152xbf16, #tpu.memory_space<vmem>>, vector<64x128xbf16>
    tpu.vector_store %arg8[%c0_353, %c128_354], %283 {strides = array<i32>} : memref<64x1152xbf16, #tpu.memory_space<vmem>>, vector<64x128xbf16>,
    %c0_355 = arith.constant 0 : index
    %c0_356 = arith.constant 0 : index
    %c0_357 = arith.constant 0 : index
    %c0_358 = arith.constant 0 : index
    %285 = vector.load %arg7[%c0_355, %c0_356, %c0_357, %c0_358] : memref<2x6x8x128xf32, #tpu.memory_space<vmem>>, vector<2x4x8x128xf32>
    %286 = vector.shape_cast %285 : vector<2x4x8x128xf32> to vector<64x128xf32>
    %287 = arith.truncf %286 : vector<64x128xf32> to vector<64x128xbf16>
    %c0_359 = arith.constant 0 : index
    %c256_360 = arith.constant 256 : index
    %288 = vector.load %arg8[%c0_359, %c256_360] : memref<64x1152xbf16, #tpu.memory_space<vmem>>, vector<64x128xbf16>
    tpu.vector_store %arg8[%c0_359, %c256_360], %287 {strides = array<i32>} : memref<64x1152xbf16, #tpu.memory_space<vmem>>, vector<64x128xbf16>,
    %c0_361 = arith.constant 0 : index
    %c1_362 = arith.constant 1 : index
    %c0_363 = arith.constant 0 : index
    %c0_364 = arith.constant 0 : index
    %289 = vector.load %arg5[%c0_361, %c1_362, %c0_363, %c0_364] : memref<2x6x8x128xf32, #tpu.memory_space<vmem>>, vector<2x4x8x128xf32>
    %290 = vector.shape_cast %289 : vector<2x4x8x128xf32> to vector<64x128xf32>
    %291 = arith.truncf %290 : vector<64x128xf32> to vector<64x128xbf16>
    %c0_365 = arith.constant 0 : index
    %c384_366 = arith.constant 384 : index
    %292 = vector.load %arg8[%c0_365, %c384_366] : memref<64x1152xbf16, #tpu.memory_space<vmem>>, vector<64x128xbf16>
    tpu.vector_store %arg8[%c0_365, %c384_366], %291 {strides = array<i32>} : memref<64x1152xbf16, #tpu.memory_space<vmem>>, vector<64x128xbf16>,
    %c0_367 = arith.constant 0 : index
    %c1_368 = arith.constant 1 : index
    %c0_369 = arith.constant 0 : index
    %c0_370 = arith.constant 0 : index
    %293 = vector.load %arg6[%c0_367, %c1_368, %c0_369, %c0_370] : memref<2x6x8x128xf32, #tpu.memory_space<vmem>>, vector<2x4x8x128xf32>
    %294 = vector.shape_cast %293 : vector<2x4x8x128xf32> to vector<64x128xf32>
    %295 = arith.truncf %294 : vector<64x128xf32> to vector<64x128xbf16>
    %c0_371 = arith.constant 0 : index
    %c512_372 = arith.constant 512 : index
    %296 = vector.load %arg8[%c0_371, %c512_372] : memref<64x1152xbf16, #tpu.memory_space<vmem>>, vector<64x128xbf16>
    tpu.vector_store %arg8[%c0_371, %c512_372], %295 {strides = array<i32>} : memref<64x1152xbf16, #tpu.memory_space<vmem>>, vector<64x128xbf16>,
    %c0_373 = arith.constant 0 : index
    %c1_374 = arith.constant 1 : index
    %c0_375 = arith.constant 0 : index
    %c0_376 = arith.constant 0 : index
    %297 = vector.load %arg7[%c0_373, %c1_374, %c0_375, %c0_376] : memref<2x6x8x128xf32, #tpu.memory_space<vmem>>, vector<2x4x8x128xf32>
    %298 = vector.shape_cast %297 : vector<2x4x8x128xf32> to vector<64x128xf32>
    %299 = arith.truncf %298 : vector<64x128xf32> to vector<64x128xbf16>
    %c0_377 = arith.constant 0 : index
    %c640_378 = arith.constant 640 : index
    %300 = vector.load %arg8[%c0_377, %c640_378] : memref<64x1152xbf16, #tpu.memory_space<vmem>>, vector<64x128xbf16>
    tpu.vector_store %arg8[%c0_377, %c640_378], %299 {strides = array<i32>} : memref<64x1152xbf16, #tpu.memory_space<vmem>>, vector<64x128xbf16>,
    %c0_379 = arith.constant 0 : index
    %c2_380 = arith.constant 2 : index
    %c0_381 = arith.constant 0 : index
    %c0_382 = arith.constant 0 : index
    %301 = vector.load %arg5[%c0_379, %c2_380, %c0_381, %c0_382] : memref<2x6x8x128xf32, #tpu.memory_space<vmem>>, vector<2x4x8x128xf32>
    %302 = vector.shape_cast %301 : vector<2x4x8x128xf32> to vector<64x128xf32>
    %303 = arith.truncf %302 : vector<64x128xf32> to vector<64x128xbf16>
    %c0_383 = arith.constant 0 : index
    %c768_384 = arith.constant 768 : index
    %304 = vector.load %arg8[%c0_383, %c768_384] : memref<64x1152xbf16, #tpu.memory_space<vmem>>, vector<64x128xbf16>
    tpu.vector_store %arg8[%c0_383, %c768_384], %303 {strides = array<i32>} : memref<64x1152xbf16, #tpu.memory_space<vmem>>, vector<64x128xbf16>,
    %c0_385 = arith.constant 0 : index
    %c2_386 = arith.constant 2 : index
    %c0_387 = arith.constant 0 : index
    %c0_388 = arith.constant 0 : index
    %305 = vector.load %arg6[%c0_385, %c2_386, %c0_387, %c0_388] : memref<2x6x8x128xf32, #tpu.memory_space<vmem>>, vector<2x4x8x128xf32>
    %306 = vector.shape_cast %305 : vector<2x4x8x128xf32> to vector<64x128xf32>
    %307 = arith.truncf %306 : vector<64x128xf32> to vector<64x128xbf16>
    %c0_389 = arith.constant 0 : index
    %c896_390 = arith.constant 896 : index
    %308 = vector.load %arg8[%c0_389, %c896_390] : memref<64x1152xbf16, #tpu.memory_space<vmem>>, vector<64x128xbf16>
    tpu.vector_store %arg8[%c0_389, %c896_390], %307 {strides = array<i32>} : memref<64x1152xbf16, #tpu.memory_space<vmem>>, vector<64x128xbf16>,
    %c0_391 = arith.constant 0 : index
    %c2_392 = arith.constant 2 : index
    %c0_393 = arith.constant 0 : index
    %c0_394 = arith.constant 0 : index
    %309 = vector.load %arg7[%c0_391, %c2_392, %c0_393, %c0_394] : memref<2x6x8x128xf32, #tpu.memory_space<vmem>>, vector<2x4x8x128xf32>
    %310 = vector.shape_cast %309 : vector<2x4x8x128xf32> to vector<64x128xf32>
    %311 = arith.truncf %310 : vector<64x128xf32> to vector<64x128xbf16>
    %c0_395 = arith.constant 0 : index
    %c1024_396 = arith.constant 1024 : index
    %312 = vector.load %arg8[%c0_395, %c1024_396] : memref<64x1152xbf16, #tpu.memory_space<vmem>>, vector<64x128xbf16>
    tpu.vector_store %arg8[%c0_395, %c1024_396], %311 {strides = array<i32>} : memref<64x1152xbf16, #tpu.memory_space<vmem>>, vector<64x128xbf16>,
    %c0_397 = arith.constant 0 : index
    %c0_398 = arith.constant 0 : index
    %313 = vector.load %arg8[%c0_397, %c0_398] : memref<64x1152xbf16, #tpu.memory_space<vmem>>, vector<64x1152xbf16>
    %c4 = arith.constant 4 : index
    %c0_399 = arith.constant 0 : index
    %c0_400 = arith.constant 0 : index
    %314 = vector.load %arg2[%c4, %c0_399, %c0_400] : memref<6x1152x128xbf16, #tpu.memory_space<vmem>>, vector<1x1152x128xbf16>
    %315 = vector.shape_cast %314 : vector<1x1152x128xbf16> to vector<1152x128xbf16>
    %cst_401 = arith.constant dense<0.000000e+00> : vector<64x128xf32>
    %316 = tpu.matmul %313, %315, %cst_401 {dimension_numbers = #tpu.dot_dimension_numbers<[1], [0], [0], [1], [0, 0, 1, 1], [], []>} : vector<64x1152xbf16>, vector<1152x128xbf16>, vector<64x128xf32> -> vector<64x128xf32>
    %c4_402 = arith.constant 4 : index
    %c0_403 = arith.constant 0 : index
    %317 = vector.load %arg3[%c4_402, %c0_403] : memref<6x128xf32, #tpu.memory_space<vmem>>, vector<1x128xf32>
    %318 = vector.broadcast %317 : vector<1x128xf32> to vector<64x128xf32>
    %319 = arith.addf %316, %318 : vector<64x128xf32>
    %320 = arith.addf %319, %204 : vector<64x128xf32>
    %321 = vector.shape_cast %320 : vector<64x128xf32> to vector<2x4x8x128xf32>
    %c0_404 = arith.constant 0 : index
    %c1_405 = arith.constant 1 : index
    %c0_406 = arith.constant 0 : index
    %c0_407 = arith.constant 0 : index
    %322 = vector.load %arg6[%c0_404, %c1_405, %c0_406, %c0_407] : memref<2x6x8x128xf32, #tpu.memory_space<vmem>>, vector<2x4x8x128xf32>
    tpu.vector_store %arg6[%c0_404, %c1_405, %c0_406, %c0_407], %321 {strides = array<i32>} : memref<2x6x8x128xf32, #tpu.memory_space<vmem>>, vector<2x4x8x128xf32>,
    %c1_i32_408 = arith.constant 1 : i32
    %323 = tpu.dynamic_rotate %320 by %c1_i32_408 dim 0 : vector<64x128xf32>, i32 -> vector<64x128xf32>
    %cst_409 = arith.constant 0.000000e+00 : f32
    %324 = vector.broadcast %cst_409 : f32 to vector<64x128xf32>
    %325 = arith.select %24, %324, %323 : vector<64x128xi1>, vector<64x128xf32>
    %326 = vector.shape_cast %325 : vector<64x128xf32> to vector<2x4x8x128xf32>
    %c0_410 = arith.constant 0 : index
    %c1_411 = arith.constant 1 : index
    %c0_412 = arith.constant 0 : index
    %c0_413 = arith.constant 0 : index
    %327 = vector.load %arg5[%c0_410, %c1_411, %c0_412, %c0_413] : memref<2x6x8x128xf32, #tpu.memory_space<vmem>>, vector<2x4x8x128xf32>
    tpu.vector_store %arg5[%c0_410, %c1_411, %c0_412, %c0_413], %326 {strides = array<i32>} : memref<2x6x8x128xf32, #tpu.memory_space<vmem>>, vector<2x4x8x128xf32>,
    %c63_i32_414 = arith.constant 63 : i32
    %328 = tpu.dynamic_rotate %320 by %c63_i32_414 dim 0 : vector<64x128xf32>, i32 -> vector<64x128xf32>
    %cst_415 = arith.constant 0.000000e+00 : f32
    %329 = vector.broadcast %cst_415 : f32 to vector<64x128xf32>
    %330 = arith.select %26, %329, %328 : vector<64x128xi1>, vector<64x128xf32>
    %331 = vector.shape_cast %330 : vector<64x128xf32> to vector<2x4x8x128xf32>
    %c0_416 = arith.constant 0 : index
    %c1_417 = arith.constant 1 : index
    %c0_418 = arith.constant 0 : index
    %c0_419 = arith.constant 0 : index
    %332 = vector.load %arg7[%c0_416, %c1_417, %c0_418, %c0_419] : memref<2x6x8x128xf32, #tpu.memory_space<vmem>>, vector<2x4x8x128xf32>
    tpu.vector_store %arg7[%c0_416, %c1_417, %c0_418, %c0_419], %331 {strides = array<i32>} : memref<2x6x8x128xf32, #tpu.memory_space<vmem>>, vector<2x4x8x128xf32>,
    %c0_420 = arith.constant 0 : index
    %c0_421 = arith.constant 0 : index
    %c0_422 = arith.constant 0 : index
    %c0_423 = arith.constant 0 : index
    %333 = vector.load %arg5[%c0_420, %c0_421, %c0_422, %c0_423] : memref<2x6x8x128xf32, #tpu.memory_space<vmem>>, vector<2x4x8x128xf32>
    %334 = vector.shape_cast %333 : vector<2x4x8x128xf32> to vector<64x128xf32>
    %335 = arith.truncf %334 : vector<64x128xf32> to vector<64x128xbf16>
    %c0_424 = arith.constant 0 : index
    %c0_425 = arith.constant 0 : index
    %336 = vector.load %arg8[%c0_424, %c0_425] : memref<64x1152xbf16, #tpu.memory_space<vmem>>, vector<64x128xbf16>
    tpu.vector_store %arg8[%c0_424, %c0_425], %335 {strides = array<i32>} : memref<64x1152xbf16, #tpu.memory_space<vmem>>, vector<64x128xbf16>,
    %c0_426 = arith.constant 0 : index
    %c0_427 = arith.constant 0 : index
    %c0_428 = arith.constant 0 : index
    %c0_429 = arith.constant 0 : index
    %337 = vector.load %arg6[%c0_426, %c0_427, %c0_428, %c0_429] : memref<2x6x8x128xf32, #tpu.memory_space<vmem>>, vector<2x4x8x128xf32>
    %338 = vector.shape_cast %337 : vector<2x4x8x128xf32> to vector<64x128xf32>
    %339 = arith.truncf %338 : vector<64x128xf32> to vector<64x128xbf16>
    %c0_430 = arith.constant 0 : index
    %c128_431 = arith.constant 128 : index
    %340 = vector.load %arg8[%c0_430, %c128_431] : memref<64x1152xbf16, #tpu.memory_space<vmem>>, vector<64x128xbf16>
    tpu.vector_store %arg8[%c0_430, %c128_431], %339 {strides = array<i32>} : memref<64x1152xbf16, #tpu.memory_space<vmem>>, vector<64x128xbf16>,
    %c0_432 = arith.constant 0 : index
    %c0_433 = arith.constant 0 : index
    %c0_434 = arith.constant 0 : index
    %c0_435 = arith.constant 0 : index
    %341 = vector.load %arg7[%c0_432, %c0_433, %c0_434, %c0_435] : memref<2x6x8x128xf32, #tpu.memory_space<vmem>>, vector<2x4x8x128xf32>
    %342 = vector.shape_cast %341 : vector<2x4x8x128xf32> to vector<64x128xf32>
    %343 = arith.truncf %342 : vector<64x128xf32> to vector<64x128xbf16>
    %c0_436 = arith.constant 0 : index
    %c256_437 = arith.constant 256 : index
    %344 = vector.load %arg8[%c0_436, %c256_437] : memref<64x1152xbf16, #tpu.memory_space<vmem>>, vector<64x128xbf16>
    tpu.vector_store %arg8[%c0_436, %c256_437], %343 {strides = array<i32>} : memref<64x1152xbf16, #tpu.memory_space<vmem>>, vector<64x128xbf16>,
    %c0_438 = arith.constant 0 : index
    %c1_439 = arith.constant 1 : index
    %c0_440 = arith.constant 0 : index
    %c0_441 = arith.constant 0 : index
    %345 = vector.load %arg5[%c0_438, %c1_439, %c0_440, %c0_441] : memref<2x6x8x128xf32, #tpu.memory_space<vmem>>, vector<2x4x8x128xf32>
    %346 = vector.shape_cast %345 : vector<2x4x8x128xf32> to vector<64x128xf32>
    %347 = arith.truncf %346 : vector<64x128xf32> to vector<64x128xbf16>
    %c0_442 = arith.constant 0 : index
    %c384_443 = arith.constant 384 : index
    %348 = vector.load %arg8[%c0_442, %c384_443] : memref<64x1152xbf16, #tpu.memory_space<vmem>>, vector<64x128xbf16>
    tpu.vector_store %arg8[%c0_442, %c384_443], %347 {strides = array<i32>} : memref<64x1152xbf16, #tpu.memory_space<vmem>>, vector<64x128xbf16>,
    %c0_444 = arith.constant 0 : index
    %c1_445 = arith.constant 1 : index
    %c0_446 = arith.constant 0 : index
    %c0_447 = arith.constant 0 : index
    %349 = vector.load %arg6[%c0_444, %c1_445, %c0_446, %c0_447] : memref<2x6x8x128xf32, #tpu.memory_space<vmem>>, vector<2x4x8x128xf32>
    %350 = vector.shape_cast %349 : vector<2x4x8x128xf32> to vector<64x128xf32>
    %351 = arith.truncf %350 : vector<64x128xf32> to vector<64x128xbf16>
    %c0_448 = arith.constant 0 : index
    %c512_449 = arith.constant 512 : index
    %352 = vector.load %arg8[%c0_448, %c512_449] : memref<64x1152xbf16, #tpu.memory_space<vmem>>, vector<64x128xbf16>
    tpu.vector_store %arg8[%c0_448, %c512_449], %351 {strides = array<i32>} : memref<64x1152xbf16, #tpu.memory_space<vmem>>, vector<64x128xbf16>,
    %c0_450 = arith.constant 0 : index
    %c1_451 = arith.constant 1 : index
    %c0_452 = arith.constant 0 : index
    %c0_453 = arith.constant 0 : index
    %353 = vector.load %arg7[%c0_450, %c1_451, %c0_452, %c0_453] : memref<2x6x8x128xf32, #tpu.memory_space<vmem>>, vector<2x4x8x128xf32>
    %354 = vector.shape_cast %353 : vector<2x4x8x128xf32> to vector<64x128xf32>
    %355 = arith.truncf %354 : vector<64x128xf32> to vector<64x128xbf16>
    %c0_454 = arith.constant 0 : index
    %c640_455 = arith.constant 640 : index
    %356 = vector.load %arg8[%c0_454, %c640_455] : memref<64x1152xbf16, #tpu.memory_space<vmem>>, vector<64x128xbf16>
    tpu.vector_store %arg8[%c0_454, %c640_455], %355 {strides = array<i32>} : memref<64x1152xbf16, #tpu.memory_space<vmem>>, vector<64x128xbf16>,
    %c0_456 = arith.constant 0 : index
    %c2_457 = arith.constant 2 : index
    %c0_458 = arith.constant 0 : index
    %c0_459 = arith.constant 0 : index
    %357 = vector.load %arg5[%c0_456, %c2_457, %c0_458, %c0_459] : memref<2x6x8x128xf32, #tpu.memory_space<vmem>>, vector<2x4x8x128xf32>
    %358 = vector.shape_cast %357 : vector<2x4x8x128xf32> to vector<64x128xf32>
    %359 = arith.truncf %358 : vector<64x128xf32> to vector<64x128xbf16>
    %c0_460 = arith.constant 0 : index
    %c768_461 = arith.constant 768 : index
    %360 = vector.load %arg8[%c0_460, %c768_461] : memref<64x1152xbf16, #tpu.memory_space<vmem>>, vector<64x128xbf16>
    tpu.vector_store %arg8[%c0_460, %c768_461], %359 {strides = array<i32>} : memref<64x1152xbf16, #tpu.memory_space<vmem>>, vector<64x128xbf16>,
    %c0_462 = arith.constant 0 : index
    %c2_463 = arith.constant 2 : index
    %c0_464 = arith.constant 0 : index
    %c0_465 = arith.constant 0 : index
    %361 = vector.load %arg6[%c0_462, %c2_463, %c0_464, %c0_465] : memref<2x6x8x128xf32, #tpu.memory_space<vmem>>, vector<2x4x8x128xf32>
    %362 = vector.shape_cast %361 : vector<2x4x8x128xf32> to vector<64x128xf32>
    %363 = arith.truncf %362 : vector<64x128xf32> to vector<64x128xbf16>
    %c0_466 = arith.constant 0 : index
    %c896_467 = arith.constant 896 : index
    %364 = vector.load %arg8[%c0_466, %c896_467] : memref<64x1152xbf16, #tpu.memory_space<vmem>>, vector<64x128xbf16>
    tpu.vector_store %arg8[%c0_466, %c896_467], %363 {strides = array<i32>} : memref<64x1152xbf16, #tpu.memory_space<vmem>>, vector<64x128xbf16>,
    %c0_468 = arith.constant 0 : index
    %c2_469 = arith.constant 2 : index
    %c0_470 = arith.constant 0 : index
    %c0_471 = arith.constant 0 : index
    %365 = vector.load %arg7[%c0_468, %c2_469, %c0_470, %c0_471] : memref<2x6x8x128xf32, #tpu.memory_space<vmem>>, vector<2x4x8x128xf32>
    %366 = vector.shape_cast %365 : vector<2x4x8x128xf32> to vector<64x128xf32>
    %367 = arith.truncf %366 : vector<64x128xf32> to vector<64x128xbf16>
    %c0_472 = arith.constant 0 : index
    %c1024_473 = arith.constant 1024 : index
    %368 = vector.load %arg8[%c0_472, %c1024_473] : memref<64x1152xbf16, #tpu.memory_space<vmem>>, vector<64x128xbf16>
    tpu.vector_store %arg8[%c0_472, %c1024_473], %367 {strides = array<i32>} : memref<64x1152xbf16, #tpu.memory_space<vmem>>, vector<64x128xbf16>,
    %c0_474 = arith.constant 0 : index
    %c0_475 = arith.constant 0 : index
    %369 = vector.load %arg8[%c0_474, %c0_475] : memref<64x1152xbf16, #tpu.memory_space<vmem>>, vector<64x1152xbf16>
    %c5 = arith.constant 5 : index
    %c0_476 = arith.constant 0 : index
    %c0_477 = arith.constant 0 : index
    %370 = vector.load %arg2[%c5, %c0_476, %c0_477] : memref<6x1152x128xbf16, #tpu.memory_space<vmem>>, vector<1x1152x128xbf16>
    %371 = vector.shape_cast %370 : vector<1x1152x128xbf16> to vector<1152x128xbf16>
    %cst_478 = arith.constant dense<0.000000e+00> : vector<64x128xf32>
    %372 = tpu.matmul %369, %371, %cst_478 {dimension_numbers = #tpu.dot_dimension_numbers<[1], [0], [0], [1], [0, 0, 1, 1], [], []>} : vector<64x1152xbf16>, vector<1152x128xbf16>, vector<64x128xf32> -> vector<64x128xf32>
    %c5_479 = arith.constant 5 : index
    %c0_480 = arith.constant 0 : index
    %373 = vector.load %arg3[%c5_479, %c0_480] : memref<6x128xf32, #tpu.memory_space<vmem>>, vector<1x128xf32>
    %374 = vector.broadcast %373 : vector<1x128xf32> to vector<64x128xf32>
    %375 = arith.addf %372, %374 : vector<64x128xf32>
    %376 = vector.shape_cast %375 : vector<64x128xf32> to vector<2x4x8x128xf32>
    %c0_481 = arith.constant 0 : index
    %c0_482 = arith.constant 0 : index
    %c0_483 = arith.constant 0 : index
    %c0_484 = arith.constant 0 : index
    %377 = vector.load %arg4[%c0_481, %c0_482, %c0_483, %c0_484] : memref<2x4x8x128xf32, #tpu.memory_space<vmem>>, vector<2x4x8x128xf32>
    tpu.vector_store %arg4[%c0_481, %c0_482, %c0_483, %c0_484], %376 {strides = array<i32>} : memref<2x4x8x128xf32, #tpu.memory_space<vmem>>, vector<2x4x8x128xf32>,
    return
  }
  func.func @transform_0(%arg0: i32) -> (i32, i32, i32, i32) {
    %c0_i32 = arith.constant 0 : i32
    %c0_i32_0 = arith.constant 0 : i32
    %c0_i32_1 = arith.constant 0 : i32
    %c0_i32_2 = arith.constant 0 : i32
    %c0_i32_3 = arith.constant 0 : i32
    return %c0_i32, %c0_i32_0, %c0_i32_1, %c0_i32_2 : i32, i32, i32, i32
  }
  func.func @transform_1(%arg0: i32) -> (i32, i32, i32) {
    %c0_i32 = arith.constant 0 : i32
    %c0_i32_0 = arith.constant 0 : i32
    %c0_i32_1 = arith.constant 0 : i32
    %c0_i32_2 = arith.constant 0 : i32
    return %c0_i32, %c0_i32_0, %c0_i32_1 : i32, i32, i32
  }
  func.func @transform_2(%arg0: i32) -> (i32, i32) {
    %c0_i32 = arith.constant 0 : i32
    %c0_i32_0 = arith.constant 0 : i32
    %c0_i32_1 = arith.constant 0 : i32
    return %c0_i32, %c0_i32_0 : i32, i32
  }
  func.func @transform_3(%arg0: i32) -> (i32, i32, i32, i32) {
    %c0_i32 = arith.constant 0 : i32
    %c0_i32_0 = arith.constant 0 : i32
    %c0_i32_1 = arith.constant 0 : i32
    %c0_i32_2 = arith.constant 0 : i32
    %c0_i32_3 = arith.constant 0 : i32
    return %c0_i32, %c0_i32_0, %c0_i32_1, %c0_i32_2 : i32, i32, i32, i32
  }
}

</mosaic_0001>

<llo_original>
// kernel: d3drir_forward.1
$region0: #{d3drir_forward.1}
  #allocation0 [shape = 'u32[]', space=smem, size = 0x4, offset = 0x4, fixed_abs, tag = 'smem constant byte address 0x4 - core index']
  #allocation1 [shape = 'u32[144,128]{1,0:T(1,128)}', space=vmem, size = 0x12000, scoped, tag = 'internal scratch']
  #allocation2 [shape = 'f32[2,6,8,128]{3,2,1,0:T(8,128)}', space=vmem, size = 0xc000, scoped, tag = 'scratch operand']
  #allocation3 [shape = 'f32[2,6,8,128]{3,2,1,0:T(8,128)}', space=vmem, size = 0xc000, scoped, tag = 'scratch operand']
  #allocation4 [shape = 'f32[2,6,8,128]{3,2,1,0:T(8,128)}', space=vmem, size = 0xc000, scoped, tag = 'scratch operand']
  #allocation5 [shape = 'bf16[64,1152]{1,0:T(8,128)(2,1)}', space=vmem, size = 0x24000, scoped, tag = 'scratch operand']
  %s0 = inlined_call_operand.vmem [shape: f32[2,4,8,128], index: 0, kind: input, shape index: {}]
  %s1 = inlined_call_operand.hbm [shape: bf16[6,1152,128], index: 1, kind: input, shape index: {}]
  %s2 = inlined_call_operand.hbm [shape: f32[6,128], index: 2, kind: input, shape index: {}]
  %s3 = inlined_call_operand.vmem [shape: f32[2,4,8,128], index: 3, kind: output, shape index: {}]
  %s4 = sld [smem:[#allocation0]]
  $region30: #{d3drir_forward.1} parent=0
    _
  %s6 = ssub.s32 1, %s4
  %s7 = scalar_select 0, %s6, %s4
  $region1: #{d3drir_forward.1} parent=0
    #allocation6 [shape = 'u8[1769472]{0}', space=vmem, size = 0x1b0000, scoped, tag = 'input window, operand 1, single buffered']
    #allocation7 [shape = 's32[1]{0}', space=sflag, size = 0x4, scoped, tag = 'scoped memory for d3drir_forward.1']
    #allocation8 [shape = 'u8[4096]{0}', space=vmem, size = 0x1000, scoped, tag = 'input window, operand 2, single buffered']
    #allocation9 [shape = 's32[1]{0}', space=sflag, size = 0x4, scoped, tag = 'scoped memory for d3drir_forward.1']
    %8 = vsyncpa [#allocation7], 0
    %9 = vsyncpa [#allocation9], 0
    // Predicated region
    $region2: #{d3drir_forward.1} parent=1 // pred_check
      _
    $region3: #{d3drir_forward.1} parent=1 // pred_check_branch
      %11 = sbr.rel (0) target = $region5
    $region4: #{d3drir_forward.1} parent=1 // pred_region
      _
    $region5: #{d3drir_forward.1} parent=1 // pred_fallthru
      _
    // Predicated region
    $region6: #{d3drir_forward.1} parent=1 // pred_check
      _
    $region7: #{d3drir_forward.1} parent=1 // pred_check_branch
      %13 = sbr.rel (0) target = $region9
    $region8: #{d3drir_forward.1} parent=1 // pred_region
      %s15 = ssub.s32 55296, 55296
      %16 = vsyncadd [#allocation7], %s15
      %s17 = sshll.u32 [#allocation6], 4
      %s18 = int_to_ptr.vmem [resolvable:$true] %s17
      %23 = dma.hbm_to_vmem [thread:$0]  %s1, 55296, %s18, [#allocation7], 64, 64, 4
    $region9: #{d3drir_forward.1} parent=1 // pred_fallthru
      _
    // Predicated region
    $region10: #{d3drir_forward.1} parent=1 // pred_check
      _
    $region11: #{d3drir_forward.1} parent=1 // pred_check_branch
      %25 = sbr.rel (0) target = $region13
    $region12: #{d3drir_forward.1} parent=1 // pred_region
      %s27 = ssub.s32 128, 128
      %28 = vsyncadd [#allocation9], %s27
      %s30 = sshll.u32 [#allocation8], 4
      %s31 = int_to_ptr.vmem [resolvable:$true] %s30
      %33 = dma.hbm_to_vmem [thread:$0]  %s2, 128, %s31, [#allocation9]
    $region13: #{d3drir_forward.1} parent=1 // pred_fallthru
      _
    // Predicated region
    $region14: #{d3drir_forward.1} parent=1 // pred_check
      _
    $region15: #{d3drir_forward.1} parent=1 // pred_check_branch
      %35 = sbr.rel (0) target = $region17
    $region16: #{d3drir_forward.1} parent=1 // pred_region
      %36 = dma.done [#allocation7], 55296
    $region17: #{d3drir_forward.1} parent=1 // pred_fallthru
      _
    // Predicated region
    $region18: #{d3drir_forward.1} parent=1 // pred_check
      _
    $region19: #{d3drir_forward.1} parent=1 // pred_check_branch
      %38 = sbr.rel (0) target = $region21
    $region20: #{d3drir_forward.1} parent=1 // pred_region
      %39 = dma.done [#allocation9], 128
    $region21: #{d3drir_forward.1} parent=1 // pred_fallthru
      _
    %41 = vst [vmem:[#allocation2] sm:$0xff] 0.0
    %42 = vst [vmem:[#allocation2 + $0x8] sm:$0xff] 0.0
    %43 = vst [vmem:[#allocation2 + $0x10] sm:$0xff] 0.0
    %44 = vst [vmem:[#allocation2 + $0x18] sm:$0xff] 0.0
    %45 = vst [vmem:[#allocation2 + $0x20] sm:$0xff] 0.0
    %46 = vst [vmem:[#allocation2 + $0x28] sm:$0xff] 0.0
    %47 = vst [vmem:[#allocation2 + $0x30] sm:$0xff] 0.0
    %48 = vst [vmem:[#allocation2 + $0x38] sm:$0xff] 0.0
    %49 = vst [vmem:[#allocation2 + $0x40] sm:$0xff] 0.0
    %50 = vst [vmem:[#allocation2 + $0x48] sm:$0xff] 0.0
    %51 = vst [vmem:[#allocation2 + $0x50] sm:$0xff] 0.0
    %52 = vst [vmem:[#allocation2 + $0x58] sm:$0xff] 0.0
    %53 = vst [vmem:[#allocation3] sm:$0xff] 0.0
    %54 = vst [vmem:[#allocation3 + $0x8] sm:$0xff] 0.0
    %55 = vst [vmem:[#allocation3 + $0x10] sm:$0xff] 0.0
    %56 = vst [vmem:[#allocation3 + $0x18] sm:$0xff] 0.0
    %57 = vst [vmem:[#allocation3 + $0x20] sm:$0xff] 0.0
    %58 = vst [vmem:[#allocation3 + $0x28] sm:$0xff] 0.0
    %59 = vst [vmem:[#allocation3 + $0x30] sm:$0xff] 0.0
    %60 = vst [vmem:[#allocation3 + $0x38] sm:$0xff] 0.0
    %61 = vst [vmem:[#allocation3 + $0x40] sm:$0xff] 0.0
    %62 = vst [vmem:[#allocation3 + $0x48] sm:$0xff] 0.0
    %63 = vst [vmem:[#allocation3 + $0x50] sm:$0xff] 0.0
    %64 = vst [vmem:[#allocation3 + $0x58] sm:$0xff] 0.0
    %65 = vst [vmem:[#allocation4] sm:$0xff] 0.0
    %66 = vst [vmem:[#allocation4 + $0x8] sm:$0xff] 0.0
    %67 = vst [vmem:[#allocation4 + $0x10] sm:$0xff] 0.0
    %68 = vst [vmem:[#allocation4 + $0x18] sm:$0xff] 0.0
    %69 = vst [vmem:[#allocation4 + $0x20] sm:$0xff] 0.0
    %70 = vst [vmem:[#allocation4 + $0x28] sm:$0xff] 0.0
    %71 = vst [vmem:[#allocation4 + $0x30] sm:$0xff] 0.0
    %72 = vst [vmem:[#allocation4 + $0x38] sm:$0xff] 0.0
    %73 = vst [vmem:[#allocation4 + $0x40] sm:$0xff] 0.0
    %74 = vst [vmem:[#allocation4 + $0x48] sm:$0xff] 0.0
    %75 = vst [vmem:[#allocation4 + $0x50] sm:$0xff] 0.0
    %76 = vst [vmem:[#allocation4 + $0x58] sm:$0xff] 0.0
    %v77 = vlaneseq
    %v78 = vshrl.u32 %v77, 7
    %v79 = vadd.s32 %v78, 8
    %v80 = vadd.s32 %v78, 16
    %v81 = vadd.s32 %v78, 24
    %v82 = vadd.s32 %v78, 32
    %v83 = vadd.s32 %v78, 40
    %v84 = vadd.s32 %v78, 48
    %v85 = vadd.s32 %v78, 56
    %vm86 = vcmp.lt.s32.totalorder %v78, 0
    %v87 = vsub.s32 0, %v78
    %v88 = vsel %vm86, %v87, %v78
    %v89 = vshrl.u32 %v88, 3
    %v90 = vand.u32 %v88, 7
    %v91 = vsub.s32 0, %v90
    %v92 = vsel %vm86, %v91, %v90
    %vm93 = vcmp.lt.s32.totalorder %v79, 0
    %v94 = vsub.s32 0, %v79
    %v95 = vsel %vm93, %v94, %v79
    %v96 = vshrl.u32 %v95, 3
    %v97 = vand.u32 %v95, 7
    %v98 = vsub.s32 0, %v97
    %v99 = vsel %vm93, %v98, %v97
    %vm100 = vcmp.lt.s32.totalorder %v80, 0
    %v101 = vsub.s32 0, %v80
    %v102 = vsel %vm100, %v101, %v80
    %v103 = vshrl.u32 %v102, 3
    %v104 = vand.u32 %v102, 7
    %v105 = vsub.s32 0, %v104
    %v106 = vsel %vm100, %v105, %v104
    %vm107 = vcmp.lt.s32.totalorder %v81, 0
    %v108 = vsub.s32 0, %v81
    %v109 = vsel %vm107, %v108, %v81
    %v110 = vshrl.u32 %v109, 3
    %v111 = vand.u32 %v109, 7
    %v112 = vsub.s32 0, %v111
    %v113 = vsel %vm107, %v112, %v111
    %vm114 = vcmp.lt.s32.totalorder %v82, 0
    %v115 = vsub.s32 0, %v82
    %v116 = vsel %vm114, %v115, %v82
    %v117 = vshrl.u32 %v116, 3
    %v118 = vand.u32 %v116, 7
    %v119 = vsub.s32 0, %v118
    %v120 = vsel %vm114, %v119, %v118
    %vm121 = vcmp.lt.s32.totalorder %v83, 0
    %v122 = vsub.s32 0, %v83
    %v123 = vsel %vm121, %v122, %v83
    %v124 = vshrl.u32 %v123, 3
    %v125 = vand.u32 %v123, 7
    %v126 = vsub.s32 0, %v125
    %v127 = vsel %vm121, %v126, %v125
    %vm128 = vcmp.lt.s32.totalorder %v84, 0
    %v129 = vsub.s32 0, %v84
    %v130 = vsel %vm128, %v129, %v84
    %v131 = vshrl.u32 %v130, 3
    %v132 = vand.u32 %v130, 7
    %v133 = vsub.s32 0, %v132
    %v134 = vsel %vm128, %v133, %v132
    %vm135 = vcmp.lt.s32.totalorder %v85, 0
    %v136 = vsub.s32 0, %v85
    %v137 = vsel %vm135, %v136, %v85
    %v138 = vshrl.u32 %v137, 3
    %v139 = vand.u32 %v137, 7
    %v140 = vsub.s32 0, %v139
    %v141 = vsel %vm135, %v140, %v139
    %vm142 = vcmp.ne.s32.totalorder %v92, 0
    %vm143 = vcmp.ne.s32.totalorder %v99, 0
    %vm144 = vcmp.ne.s32.totalorder %v106, 0
    %vm145 = vcmp.ne.s32.totalorder %v113, 0
    %vm146 = vcmp.ne.s32.totalorder %v120, 0
    %vm147 = vcmp.ne.s32.totalorder %v127, 0
    %vm148 = vcmp.ne.s32.totalorder %v134, 0
    %vm149 = vcmp.ne.s32.totalorder %v141, 0
    %vm150 = vcmp.lt.s32.totalorder %v92, 0
    %vm151 = vcmp.lt.s32.totalorder %v99, 0
    %vm152 = vcmp.lt.s32.totalorder %v106, 0
    %vm153 = vcmp.lt.s32.totalorder %v113, 0
    %vm154 = vcmp.lt.s32.totalorder %v120, 0
    %vm155 = vcmp.lt.s32.totalorder %v127, 0
    %vm156 = vcmp.lt.s32.totalorder %v134, 0
    %vm157 = vcmp.lt.s32.totalorder %v141, 0
    %vm158 = vmand %vm150, %vm142
    %vm159 = vmand %vm151, %vm143
    %vm160 = vmand %vm152, %vm144
    %vm161 = vmand %vm153, %vm145
    %vm162 = vmand %vm154, %vm146
    %vm163 = vmand %vm155, %vm147
    %vm164 = vmand %vm156, %vm148
    %vm165 = vmand %vm157, %vm149
    %v166 = vadd.s32 %v92, 8
    %v167 = vadd.s32 %v99, 8
    %v168 = vadd.s32 %v106, 8
    %v169 = vadd.s32 %v113, 8
    %v170 = vadd.s32 %v120, 8
    %v171 = vadd.s32 %v127, 8
    %v172 = vadd.s32 %v134, 8
    %v173 = vadd.s32 %v141, 8
    %v174 = vsel %vm158, %v166, %v92
    %v175 = vsel %vm159, %v167, %v99
    %v176 = vsel %vm160, %v168, %v106
    %v177 = vsel %vm161, %v169, %v113
    %v178 = vsel %vm162, %v170, %v120
    %v179 = vsel %vm163, %v171, %v127
    %v180 = vsel %vm164, %v172, %v134
    %v181 = vsel %vm165, %v173, %v141
    %vm182 = vcmp.eq.s32.totalorder %v174, 0
    %vm183 = vcmp.eq.s32.totalorder %v175, 0
    %vm184 = vcmp.eq.s32.totalorder %v176, 0
    %vm185 = vcmp.eq.s32.totalorder %v177, 0
    %vm186 = vcmp.eq.s32.totalorder %v178, 0
    %vm187 = vcmp.eq.s32.totalorder %v179, 0
    %vm188 = vcmp.eq.s32.totalorder %v180, 0
    %vm189 = vcmp.eq.s32.totalorder %v181, 0
    %vm190 = vcmp.eq.s32.totalorder %v174, 7
    %vm191 = vcmp.eq.s32.totalorder %v175, 7
    %vm192 = vcmp.eq.s32.totalorder %v176, 7
    %vm193 = vcmp.eq.s32.totalorder %v177, 7
    %vm194 = vcmp.eq.s32.totalorder %v178, 7
    %vm195 = vcmp.eq.s32.totalorder %v179, 7
    %vm196 = vcmp.eq.s32.totalorder %v180, 7
    %vm197 = vcmp.eq.s32.totalorder %v181, 7
    %v198 = vld [vmem:[%s0] sm:$0xff]
    %v199 = vld [vmem:[%s0 + $0x8] sm:$0xff]
    %v200 = vld [vmem:[%s0 + $0x10] sm:$0xff]
    %v201 = vld [vmem:[%s0 + $0x18] sm:$0xff]
    %v202 = vld [vmem:[%s0 + $0x20] sm:$0xff]
    %v203 = vld [vmem:[%s0 + $0x28] sm:$0xff]
    %v204 = vld [vmem:[%s0 + $0x30] sm:$0xff]
    %v205 = vld [vmem:[%s0 + $0x38] sm:$0xff]
    %s206 = scalar_lea.vmem [#allocation3], 8
    %207 = vst [vmem:[%s206] sm:$0xff] %v198
    %208 = vst [vmem:[%s206 + $0x8] sm:$0xff] %v199
    %209 = vst [vmem:[%s206 + $0x10] sm:$0xff] %v200
    %210 = vst [vmem:[%s206 + $0x18] sm:$0xff] %v201
    %211 = vst [vmem:[%s206 + $0x30] sm:$0xff] %v202
    %212 = vst [vmem:[%s206 + $0x38] sm:$0xff] %v203
    %213 = vst [vmem:[%s206 + $0x40] sm:$0xff] %v204
    %214 = vst [vmem:[%s206 + $0x48] sm:$0xff] %v205
    %v215 = vrot.slane %v198, 7
    %v216 = vrot.slane %v199, 7
    %v217 = vrot.slane %v200, 7
    %v218 = vrot.slane %v201, 7
    %v219 = vrot.slane %v202, 7
    %v220 = vrot.slane %v203, 7
    %v221 = vrot.slane %v204, 7
    %v222 = vrot.slane %v205, 7
    %vm223 = vcmp.lt.s32.totalorder %v78, 1
    %v224 = vsel %vm223, %v221, %v222
    %v225 = vsel %vm223, %v220, %v221
    %v226 = vsel %vm223, %v219, %v220
    %v227 = vsel %vm223, %v218, %v219
    %v228 = vsel %vm223, %v217, %v218
    %v229 = vsel %vm223, %v216, %v217
    %v230 = vsel %vm223, %v215, %v216
    %v231 = vsel %vm223, %v222, %v215
    %v232 = vsel %vm182, 0.0, %v231
    %v233 = vsel %vm183, 0.0, %v230
    %v234 = vsel %vm184, 0.0, %v229
    %v235 = vsel %vm185, 0.0, %v228
    %v236 = vsel %vm186, 0.0, %v227
    %v237 = vsel %vm187, 0.0, %v226
    %v238 = vsel %vm188, 0.0, %v225
    %v239 = vsel %vm189, 0.0, %v224
    %s240 = scalar_lea.vmem [#allocation2], 8
    %241 = vst [vmem:[%s240] sm:$0xff] %v232
    %242 = vst [vmem:[%s240 + $0x8] sm:$0xff] %v233
    %243 = vst [vmem:[%s240 + $0x10] sm:$0xff] %v234
    %244 = vst [vmem:[%s240 + $0x18] sm:$0xff] %v235
    %245 = vst [vmem:[%s240 + $0x30] sm:$0xff] %v236
    %246 = vst [vmem:[%s240 + $0x38] sm:$0xff] %v237
    %247 = vst [vmem:[%s240 + $0x40] sm:$0xff] %v238
    %248 = vst [vmem:[%s240 + $0x48] sm:$0xff] %v239
    %v249 = vrot.slane %v198, 1
    %v250 = vrot.slane %v199, 1
    %v251 = vrot.slane %v200, 1
    %v252 = vrot.slane %v201, 1
    %v253 = vrot.slane %v202, 1
    %v254 = vrot.slane %v203, 1
    %v255 = vrot.slane %v204, 1
    %v256 = vrot.slane %v205, 1
    %vm257 = vcmp.lt.s32.totalorder %v78, 7
    %v258 = vsel %vm257, %v255, %v256
    %v259 = vsel %vm257, %v254, %v255
    %v260 = vsel %vm257, %v253, %v254
    %v261 = vsel %vm257, %v252, %v253
    %v262 = vsel %vm257, %v251, %v252
    %v263 = vsel %vm257, %v250, %v251
    %v264 = vsel %vm257, %v249, %v250
    %v265 = vsel %vm257, %v256, %v249
    %v266 = vsel %vm190, 0.0, %v264
    %v267 = vsel %vm191, 0.0, %v263
    %v268 = vsel %vm192, 0.0, %v262
    %v269 = vsel %vm193, 0.0, %v261
    %v270 = vsel %vm194, 0.0, %v260
    %v271 = vsel %vm195, 0.0, %v259
    %v272 = vsel %vm196, 0.0, %v258
    %v273 = vsel %vm197, 0.0, %v265
    %s274 = scalar_lea.vmem [#allocation4], 8
    %275 = vst [vmem:[%s274] sm:$0xff] %v266
    %276 = vst [vmem:[%s274 + $0x8] sm:$0xff] %v267
    %277 = vst [vmem:[%s274 + $0x10] sm:$0xff] %v268
    %278 = vst [vmem:[%s274 + $0x18] sm:$0xff] %v269
    %279 = vst [vmem:[%s274 + $0x30] sm:$0xff] %v270
    %280 = vst [vmem:[%s274 + $0x38] sm:$0xff] %v271
    %281 = vst [vmem:[%s274 + $0x40] sm:$0xff] %v272
    %282 = vst [vmem:[%s274 + $0x48] sm:$0xff] %v273
    %v283 = vld [vmem:[#allocation2] sm:$0xff]
    %v284 = vld [vmem:[#allocation2 + $0x8] sm:$0xff]
    %v285 = vld [vmem:[#allocation2 + $0x10] sm:$0xff]
    %v286 = vld [vmem:[#allocation2 + $0x18] sm:$0xff]
    %v287 = vld [vmem:[#allocation2 + $0x30] sm:$0xff]
    %v288 = vld [vmem:[#allocation2 + $0x38] sm:$0xff]
    %v289 = vld [vmem:[#allocation2 + $0x40] sm:$0xff]
    %v290 = vld [vmem:[#allocation2 + $0x48] sm:$0xff]
    %v291 = vpack.c.bf16 %v284, %v283
    %v292 = vpack.c.bf16 %v286, %v285
    %v293 = vpack.c.bf16 %v288, %v287
    %v294 = vpack.c.bf16 %v290, %v289
    %v299 = vunpack.c.l.b16 %v291
    %v300 = vunpack.c.h.b16 %v291
    %v301 = vunpack.c.l.b16 %v292
    %v302 = vunpack.c.h.b16 %v292
    %v303 = vunpack.c.l.b16 %v293
    %v304 = vunpack.c.h.b16 %v293
    %v305 = vunpack.c.l.b16 %v294
    %v306 = vunpack.c.h.b16 %v294
    %v307 = vpack.c.b16 %v299, %v299
    %v308 = vpack.c.b16 %v300, %v300
    %v309 = vpack.c.b16 %v301, %v301
    %v310 = vpack.c.b16 %v302, %v302
    %v311 = vpack.c.b16 %v303, %v303
    %v312 = vpack.c.b16 %v304, %v304
    %v313 = vpack.c.b16 %v305, %v305
    %v314 = vpack.c.b16 %v306, %v306
    %323 = vst [vmem:[#allocation5] sm:$0xf] %v307
    %324 = vst [vmem:[#allocation5 + $0x24] sm:$0xf] %v308
    %325 = vst [vmem:[#allocation5 + $0x48] sm:$0xf] %v309
    %326 = vst [vmem:[#allocation5 + $0x6c] sm:$0xf] %v310
    %327 = vst [vmem:[#allocation5 + $0x90] sm:$0xf] %v311
    %328 = vst [vmem:[#allocation5 + $0xb4] sm:$0xf] %v312
    %329 = vst [vmem:[#allocation5 + $0xd8] sm:$0xf] %v313
    %330 = vst [vmem:[#allocation5 + $0xfc] sm:$0xf] %v314
    %v331 = vld [vmem:[#allocation3] sm:$0xff]
    %v332 = vld [vmem:[#allocation3 + $0x8] sm:$0xff]
    %v333 = vld [vmem:[#allocation3 + $0x10] sm:$0xff]
    %v334 = vld [vmem:[#allocation3 + $0x18] sm:$0xff]
    %v335 = vld [vmem:[#allocation3 + $0x30] sm:$0xff]
    %v336 = vld [vmem:[#allocation3 + $0x38] sm:$0xff]
    %v337 = vld [vmem:[#allocation3 + $0x40] sm:$0xff]
    %v338 = vld [vmem:[#allocation3 + $0x48] sm:$0xff]
    %v339 = vpack.c.bf16 %v332, %v331
    %v340 = vpack.c.bf16 %v334, %v333
    %v341 = vpack.c.bf16 %v336, %v335
    %v342 = vpack.c.bf16 %v338, %v337
    %v347 = vunpack.c.l.b16 %v339
    %v348 = vunpack.c.h.b16 %v339
    %v349 = vunpack.c.l.b16 %v340
    %v350 = vunpack.c.h.b16 %v340
    %v351 = vunpack.c.l.b16 %v341
    %v352 = vunpack.c.h.b16 %v341
    %v353 = vunpack.c.l.b16 %v342
    %v354 = vunpack.c.h.b16 %v342
    %v355 = vpack.c.b16 %v347, %v347
    %v356 = vpack.c.b16 %v348, %v348
    %v357 = vpack.c.b16 %v349, %v349
    %v358 = vpack.c.b16 %v350, %v350
    %v359 = vpack.c.b16 %v351, %v351
    %v360 = vpack.c.b16 %v352, %v352
    %v361 = vpack.c.b16 %v353, %v353
    %v362 = vpack.c.b16 %v354, %v354
    %371 = vst [vmem:[#allocation5 + $0x4] sm:$0xf] %v355
    %372 = vst [vmem:[#allocation5 + $0x28] sm:$0xf] %v356
    %373 = vst [vmem:[#allocation5 + $0x4c] sm:$0xf] %v357
    %374 = vst [vmem:[#allocation5 + $0x70] sm:$0xf] %v358
    %375 = vst [vmem:[#allocation5 + $0x94] sm:$0xf] %v359
    %376 = vst [vmem:[#allocation5 + $0xb8] sm:$0xf] %v360
    %377 = vst [vmem:[#allocation5 + $0xdc] sm:$0xf] %v361
    %378 = vst [vmem:[#allocation5 + $0x100] sm:$0xf] %v362
    %v379 = vld [vmem:[#allocation4] sm:$0xff]
    %v380 = vld [vmem:[#allocation4 + $0x8] sm:$0xff]
    %v381 = vld [vmem:[#allocation4 + $0x10] sm:$0xff]
    %v382 = vld [vmem:[#allocation4 + $0x18] sm:$0xff]
    %v383 = vld [vmem:[#allocation4 + $0x30] sm:$0xff]
    %v384 = vld [vmem:[#allocation4 + $0x38] sm:$0xff]
    %v385 = vld [vmem:[#allocation4 + $0x40] sm:$0xff]
    %v386 = vld [vmem:[#allocation4 + $0x48] sm:$0xff]
    %v387 = vpack.c.bf16 %v380, %v379
    %v388 = vpack.c.bf16 %v382, %v381
    %v389 = vpack.c.bf16 %v384, %v383
    %v390 = vpack.c.bf16 %v386, %v385
    %v395 = vunpack.c.l.b16 %v387
    %v396 = vunpack.c.h.b16 %v387
    %v397 = vunpack.c.l.b16 %v388
    %v398 = vunpack.c.h.b16 %v388
    %v399 = vunpack.c.l.b16 %v389
    %v400 = vunpack.c.h.b16 %v389
    %v401 = vunpack.c.l.b16 %v390
    %v402 = vunpack.c.h.b16 %v390
    %v403 = vpack.c.b16 %v395, %v395
    %v404 = vpack.c.b16 %v396, %v396
    %v405 = vpack.c.b16 %v397, %v397
    %v406 = vpack.c.b16 %v398, %v398
    %v407 = vpack.c.b16 %v399, %v399
    %v408 = vpack.c.b16 %v400, %v400
    %v409 = vpack.c.b16 %v401, %v401
    %v410 = vpack.c.b16 %v402, %v402
    %419 = vst [vmem:[#allocation5 + $0x8] sm:$0xf] %v403
    %420 = vst [vmem:[#allocation5 + $0x2c] sm:$0xf] %v404
    %421 = vst [vmem:[#allocation5 + $0x50] sm:$0xf] %v405
    %422 = vst [vmem:[#allocation5 + $0x74] sm:$0xf] %v406
    %423 = vst [vmem:[#allocation5 + $0x98] sm:$0xf] %v407
    %424 = vst [vmem:[#allocation5 + $0xbc] sm:$0xf] %v408
    %425 = vst [vmem:[#allocation5 + $0xe0] sm:$0xf] %v409
    %426 = vst [vmem:[#allocation5 + $0x104] sm:$0xf] %v410
    %v427 = vld [vmem:[%s240] sm:$0xff]
    %v428 = vld [vmem:[%s240 + $0x8] sm:$0xff]
    %v429 = vld [vmem:[%s240 + $0x10] sm:$0xff]
    %v430 = vld [vmem:[%s240 + $0x18] sm:$0xff]
    %v431 = vld [vmem:[%s240 + $0x30] sm:$0xff]
    %v432 = vld [vmem:[%s240 + $0x38] sm:$0xff]
    %v433 = vld [vmem:[%s240 + $0x40] sm:$0xff]
    %v434 = vld [vmem:[%s240 + $0x48] sm:$0xff]
    %v435 = vpack.c.bf16 %v428, %v427
    %v436 = vpack.c.bf16 %v430, %v429
    %v437 = vpack.c.bf16 %v432, %v431
    %v438 = vpack.c.bf16 %v434, %v433
    %v443 = vunpack.c.l.b16 %v435
    %v444 = vunpack.c.h.b16 %v435
    %v445 = vunpack.c.l.b16 %v436
    %v446 = vunpack.c.h.b16 %v436
    %v447 = vunpack.c.l.b16 %v437
    %v448 = vunpack.c.h.b16 %v437
    %v449 = vunpack.c.l.b16 %v438
    %v450 = vunpack.c.h.b16 %v438
    %v451 = vpack.c.b16 %v443, %v443
    %v452 = vpack.c.b16 %v444, %v444
    %v453 = vpack.c.b16 %v445, %v445
    %v454 = vpack.c.b16 %v446, %v446
    %v455 = vpack.c.b16 %v447, %v447
    %v456 = vpack.c.b16 %v448, %v448
    %v457 = vpack.c.b16 %v449, %v449
    %v458 = vpack.c.b16 %v450, %v450
    %467 = vst [vmem:[#allocation5 + $0xc] sm:$0xf] %v451
    %468 = vst [vmem:[#allocation5 + $0x30] sm:$0xf] %v452
    %469 = vst [vmem:[#allocation5 + $0x54] sm:$0xf] %v453
    %470 = vst [vmem:[#allocation5 + $0x78] sm:$0xf] %v454
    %471 = vst [vmem:[#allocation5 + $0x9c] sm:$0xf] %v455
    %472 = vst [vmem:[#allocation5 + $0xc0] sm:$0xf] %v456
    %473 = vst [vmem:[#allocation5 + $0xe4] sm:$0xf] %v457
    %474 = vst [vmem:[#allocation5 + $0x108] sm:$0xf] %v458
    %v475 = vld [vmem:[%s206] sm:$0xff]
    %v476 = vld [vmem:[%s206 + $0x8] sm:$0xff]
    %v477 = vld [vmem:[%s206 + $0x10] sm:$0xff]
    %v478 = vld [vmem:[%s206 + $0x18] sm:$0xff]
    %v479 = vld [vmem:[%s206 + $0x30] sm:$0xff]
    %v480 = vld [vmem:[%s206 + $0x38] sm:$0xff]
    %v481 = vld [vmem:[%s206 + $0x40] sm:$0xff]
    %v482 = vld [vmem:[%s206 + $0x48] sm:$0xff]
    %v483 = vpack.c.bf16 %v476, %v475
    %v484 = vpack.c.bf16 %v478, %v477
    %v485 = vpack.c.bf16 %v480, %v479
    %v486 = vpack.c.bf16 %v482, %v481
    %v491 = vunpack.c.l.b16 %v483
    %v492 = vunpack.c.h.b16 %v483
    %v493 = vunpack.c.l.b16 %v484
    %v494 = vunpack.c.h.b16 %v484
    %v495 = vunpack.c.l.b16 %v485
    %v496 = vunpack.c.h.b16 %v485
    %v497 = vunpack.c.l.b16 %v486
    %v498 = vunpack.c.h.b16 %v486
    %v499 = vpack.c.b16 %v491, %v491
    %v500 = vpack.c.b16 %v492, %v492
    %v501 = vpack.c.b16 %v493, %v493
    %v502 = vpack.c.b16 %v494, %v494
    %v503 = vpack.c.b16 %v495, %v495
    %v504 = vpack.c.b16 %v496, %v496
    %v505 = vpack.c.b16 %v497, %v497
    %v506 = vpack.c.b16 %v498, %v498
    %515 = vst [vmem:[#allocation5 + $0x10] sm:$0xf] %v499
    %516 = vst [vmem:[#allocation5 + $0x34] sm:$0xf] %v500
    %517 = vst [vmem:[#allocation5 + $0x58] sm:$0xf] %v501
    %518 = vst [vmem:[#allocation5 + $0x7c] sm:$0xf] %v502
    %519 = vst [vmem:[#allocation5 + $0xa0] sm:$0xf] %v503
    %520 = vst [vmem:[#allocation5 + $0xc4] sm:$0xf] %v504
    %521 = vst [vmem:[#allocation5 + $0xe8] sm:$0xf] %v505
    %522 = vst [vmem:[#allocation5 + $0x10c] sm:$0xf] %v506
    %v523 = vld [vmem:[%s274] sm:$0xff]
    %v524 = vld [vmem:[%s274 + $0x8] sm:$0xff]
    %v525 = vld [vmem:[%s274 + $0x10] sm:$0xff]
    %v526 = vld [vmem:[%s274 + $0x18] sm:$0xff]
    %v527 = vld [vmem:[%s274 + $0x30] sm:$0xff]
    %v528 = vld [vmem:[%s274 + $0x38] sm:$0xff]
    %v529 = vld [vmem:[%s274 + $0x40] sm:$0xff]
    %v530 = vld [vmem:[%s274 + $0x48] sm:$0xff]
    %v531 = vpack.c.bf16 %v524, %v523
    %v532 = vpack.c.bf16 %v526, %v525
    %v533 = vpack.c.bf16 %v528, %v527
    %v534 = vpack.c.bf16 %v530, %v529
    %v539 = vunpack.c.l.b16 %v531
    %v540 = vunpack.c.h.b16 %v531
    %v541 = vunpack.c.l.b16 %v532
    %v542 = vunpack.c.h.b16 %v532
    %v543 = vunpack.c.l.b16 %v533
    %v544 = vunpack.c.h.b16 %v533
    %v545 = vunpack.c.l.b16 %v534
    %v546 = vunpack.c.h.b16 %v534
    %v547 = vpack.c.b16 %v539, %v539
    %v548 = vpack.c.b16 %v540, %v540
    %v549 = vpack.c.b16 %v541, %v541
    %v550 = vpack.c.b16 %v542, %v542
    %v551 = vpack.c.b16 %v543, %v543
    %v552 = vpack.c.b16 %v544, %v544
    %v553 = vpack.c.b16 %v545, %v545
    %v554 = vpack.c.b16 %v546, %v546
    %563 = vst [vmem:[#allocation5 + $0x14] sm:$0xf] %v547
    %564 = vst [vmem:[#allocation5 + $0x38] sm:$0xf] %v548
    %565 = vst [vmem:[#allocation5 + $0x5c] sm:$0xf] %v549
    %566 = vst [vmem:[#allocation5 + $0x80] sm:$0xf] %v550
    %567 = vst [vmem:[#allocation5 + $0xa4] sm:$0xf] %v551
    %568 = vst [vmem:[#allocation5 + $0xc8] sm:$0xf] %v552
    %569 = vst [vmem:[#allocation5 + $0xec] sm:$0xf] %v553
    %570 = vst [vmem:[#allocation5 + $0x110] sm:$0xf] %v554
    %s571 = scalar_lea.vmem [#allocation2], 16
    %v572 = vld [vmem:[%s571] sm:$0xff]
    %v573 = vld [vmem:[%s571 + $0x8] sm:$0xff]
    %v574 = vld [vmem:[%s571 + $0x10] sm:$0xff]
    %v575 = vld [vmem:[%s571 + $0x18] sm:$0xff]
    %v576 = vld [vmem:[%s571 + $0x30] sm:$0xff]
    %v577 = vld [vmem:[%s571 + $0x38] sm:$0xff]
    %v578 = vld [vmem:[%s571 + $0x40] sm:$0xff]
    %v579 = vld [vmem:[%s571 + $0x48] sm:$0xff]
    %v580 = vpack.c.bf16 %v573, %v572
    %v581 = vpack.c.bf16 %v575, %v574
    %v582 = vpack.c.bf16 %v577, %v576
    %v583 = vpack.c.bf16 %v579, %v578
    %v588 = vunpack.c.l.b16 %v580
    %v589 = vunpack.c.h.b16 %v580
    %v590 = vunpack.c.l.b16 %v581
    %v591 = vunpack.c.h.b16 %v581
    %v592 = vunpack.c.l.b16 %v582
    %v593 = vunpack.c.h.b16 %v582
    %v594 = vunpack.c.l.b16 %v583
    %v595 = vunpack.c.h.b16 %v583
    %v596 = vpack.c.b16 %v588, %v588
    %v597 = vpack.c.b16 %v589, %v589
    %v598 = vpack.c.b16 %v590, %v590
    %v599 = vpack.c.b16 %v591, %v591
    %v600 = vpack.c.b16 %v592, %v592
    %v601 = vpack.c.b16 %v593, %v593
    %v602 = vpack.c.b16 %v594, %v594
    %v603 = vpack.c.b16 %v595, %v595
    %612 = vst [vmem:[#allocation5 + $0x18] sm:$0xf] %v596
    %613 = vst [vmem:[#allocation5 + $0x3c] sm:$0xf] %v597
    %614 = vst [vmem:[#allocation5 + $0x60] sm:$0xf] %v598
    %615 = vst [vmem:[#allocation5 + $0x84] sm:$0xf] %v599
    %616 = vst [vmem:[#allocation5 + $0xa8] sm:$0xf] %v600
    %617 = vst [vmem:[#allocation5 + $0xcc] sm:$0xf] %v601
    %618 = vst [vmem:[#allocation5 + $0xf0] sm:$0xf] %v602
    %619 = vst [vmem:[#allocation5 + $0x114] sm:$0xf] %v603
    %s620 = scalar_lea.vmem [#allocation3], 16
    %v621 = vld [vmem:[%s620] sm:$0xff]
    %v622 = vld [vmem:[%s620 + $0x8] sm:$0xff]
    %v623 = vld [vmem:[%s620 + $0x10] sm:$0xff]
    %v624 = vld [vmem:[%s620 + $0x18] sm:$0xff]
    %v625 = vld [vmem:[%s620 + $0x30] sm:$0xff]
    %v626 = vld [vmem:[%s620 + $0x38] sm:$0xff]
    %v627 = vld [vmem:[%s620 + $0x40] sm:$0xff]
    %v628 = vld [vmem:[%s620 + $0x48] sm:$0xff]
    %v629 = vpack.c.bf16 %v622, %v621
    %v630 = vpack.c.bf16 %v624, %v623
    %v631 = vpack.c.bf16 %v626, %v625
    %v632 = vpack.c.bf16 %v628, %v627
    %v637 = vunpack.c.l.b16 %v629
    %v638 = vunpack.c.h.b16 %v629
    %v639 = vunpack.c.l.b16 %v630
    %v640 = vunpack.c.h.b16 %v630
    %v641 = vunpack.c.l.b16 %v631
    %v642 = vunpack.c.h.b16 %v631
    %v643 = vunpack.c.l.b16 %v632
    %v644 = vunpack.c.h.b16 %v632
    %v645 = vpack.c.b16 %v637, %v637
    %v646 = vpack.c.b16 %v638, %v638
    %v647 = vpack.c.b16 %v639, %v639
    %v648 = vpack.c.b16 %v640, %v640
    %v649 = vpack.c.b16 %v641, %v641
    %v650 = vpack.c.b16 %v642, %v642
    %v651 = vpack.c.b16 %v643, %v643
    %v652 = vpack.c.b16 %v644, %v644
    %661 = vst [vmem:[#allocation5 + $0x1c] sm:$0xf] %v645
    %662 = vst [vmem:[#allocation5 + $0x40] sm:$0xf] %v646
    %663 = vst [vmem:[#allocation5 + $0x64] sm:$0xf] %v647
    %664 = vst [vmem:[#allocation5 + $0x88] sm:$0xf] %v648
    %665 = vst [vmem:[#allocation5 + $0xac] sm:$0xf] %v649
    %666 = vst [vmem:[#allocation5 + $0xd0] sm:$0xf] %v650
    %667 = vst [vmem:[#allocation5 + $0xf4] sm:$0xf] %v651
    %668 = vst [vmem:[#allocation5 + $0x118] sm:$0xf] %v652
    %s669 = scalar_lea.vmem [#allocation4], 16
    %v670 = vld [vmem:[%s669] sm:$0xff]
    %v671 = vld [vmem:[%s669 + $0x8] sm:$0xff]
    %v672 = vld [vmem:[%s669 + $0x10] sm:$0xff]
    %v673 = vld [vmem:[%s669 + $0x18] sm:$0xff]
    %v674 = vld [vmem:[%s669 + $0x30] sm:$0xff]
    %v675 = vld [vmem:[%s669 + $0x38] sm:$0xff]
    %v676 = vld [vmem:[%s669 + $0x40] sm:$0xff]
    %v677 = vld [vmem:[%s669 + $0x48] sm:$0xff]
    %v678 = vpack.c.bf16 %v671, %v670
    %v679 = vpack.c.bf16 %v673, %v672
    %v680 = vpack.c.bf16 %v675, %v674
    %v681 = vpack.c.bf16 %v677, %v676
    %v686 = vunpack.c.l.b16 %v678
    %v687 = vunpack.c.h.b16 %v678
    %v688 = vunpack.c.l.b16 %v679
    %v689 = vunpack.c.h.b16 %v679
    %v690 = vunpack.c.l.b16 %v680
    %v691 = vunpack.c.h.b16 %v680
    %v692 = vunpack.c.l.b16 %v681
    %v693 = vunpack.c.h.b16 %v681
    %v694 = vpack.c.b16 %v686, %v686
    %v695 = vpack.c.b16 %v687, %v687
    %v696 = vpack.c.b16 %v688, %v688
    %v697 = vpack.c.b16 %v689, %v689
    %v698 = vpack.c.b16 %v690, %v690
    %v699 = vpack.c.b16 %v691, %v691
    %v700 = vpack.c.b16 %v692, %v692
    %v701 = vpack.c.b16 %v693, %v693
    %710 = vst [vmem:[#allocation5 + $0x20] sm:$0xf] %v694
    %711 = vst [vmem:[#allocation5 + $0x44] sm:$0xf] %v695
    %712 = vst [vmem:[#allocation5 + $0x68] sm:$0xf] %v696
    %713 = vst [vmem:[#allocation5 + $0x8c] sm:$0xf] %v697
    %714 = vst [vmem:[#allocation5 + $0xb0] sm:$0xf] %v698
    %715 = vst [vmem:[#allocation5 + $0xd4] sm:$0xf] %v699
    %716 = vst [vmem:[#allocation5 + $0xf8] sm:$0xf] %v700
    %717 = vst [vmem:[#allocation5 + $0x11c] sm:$0xf] %v701
    %v718 = vld [vmem:[#allocation5] sm:$0xff]
    %v719 = vld [vmem:[#allocation5 + $0x8] sm:$0xff]
    %v720 = vld [vmem:[#allocation5 + $0x10] sm:$0xff]
    %v721 = vld [vmem:[#allocation5 + $0x18] sm:$0xff]
    %v722 = vld [vmem:[#allocation5 + $0x20] sm:$0xf]
    %v723 = vld [vmem:[#allocation5 + $0x24] sm:$0xff]
    %v724 = vld [vmem:[#allocation5 + $0x2c] sm:$0xff]
    %v725 = vld [vmem:[#allocation5 + $0x34] sm:$0xff]
    %v726 = vld [vmem:[#allocation5 + $0x3c] sm:$0xff]
    %v727 = vld [vmem:[#allocation5 + $0x44] sm:$0xf]
    %v728 = vld [vmem:[#allocation5 + $0x48] sm:$0xff]
    %v729 = vld [vmem:[#allocation5 + $0x50] sm:$0xff]
    %v730 = vld [vmem:[#allocation5 + $0x58] sm:$0xff]
    %v731 = vld [vmem:[#allocation5 + $0x60] sm:$0xff]
    %v732 = vld [vmem:[#allocation5 + $0x68] sm:$0xf]
    %v733 = vld [vmem:[#allocation5 + $0x6c] sm:$0xff]
    %v734 = vld [vmem:[#allocation5 + $0x74] sm:$0xff]
    %v735 = vld [vmem:[#allocation5 + $0x7c] sm:$0xff]
    %v736 = vld [vmem:[#allocation5 + $0x84] sm:$0xff]
    %v737 = vld [vmem:[#allocation5 + $0x8c] sm:$0xf]
    %v738 = vld [vmem:[#allocation5 + $0x90] sm:$0xff]
    %v739 = vld [vmem:[#allocation5 + $0x98] sm:$0xff]
    %v740 = vld [vmem:[#allocation5 + $0xa0] sm:$0xff]
    %v741 = vld [vmem:[#allocation5 + $0xa8] sm:$0xff]
    %v742 = vld [vmem:[#allocation5 + $0xb0] sm:$0xf]
    %v743 = vld [vmem:[#allocation5 + $0xb4] sm:$0xff]
    %v744 = vld [vmem:[#allocation5 + $0xbc] sm:$0xff]
    %v745 = vld [vmem:[#allocation5 + $0xc4] sm:$0xff]
    %v746 = vld [vmem:[#allocation5 + $0xcc] sm:$0xff]
    %v747 = vld [vmem:[#allocation5 + $0xd4] sm:$0xf]
    %v748 = vld [vmem:[#allocation5 + $0xd8] sm:$0xff]
    %v749 = vld [vmem:[#allocation5 + $0xe0] sm:$0xff]
    %v750 = vld [vmem:[#allocation5 + $0xe8] sm:$0xff]
    %v751 = vld [vmem:[#allocation5 + $0xf0] sm:$0xff]
    %v752 = vld [vmem:[#allocation5 + $0xf8] sm:$0xf]
    %v753 = vld [vmem:[#allocation5 + $0xfc] sm:$0xff]
    %v754 = vld [vmem:[#allocation5 + $0x104] sm:$0xff]
    %v755 = vld [vmem:[#allocation5 + $0x10c] sm:$0xff]
    %v756 = vld [vmem:[#allocation5 + $0x114] sm:$0xff]
    %v757 = vld [vmem:[#allocation5 + $0x11c] sm:$0xf]
    %v758 = vld [vmem:[#allocation6] sm:$0xf]
    %v759 = vld [vmem:[#allocation6 + $0x4] sm:$0xf]
    %v760 = vld [vmem:[#allocation6 + $0x8] sm:$0xf]
    %v761 = vld [vmem:[#allocation6 + $0xc] sm:$0xf]
    %v762 = vld [vmem:[#allocation6 + $0x10] sm:$0xf]
    %v763 = vld [vmem:[#allocation6 + $0x14] sm:$0xf]
    %v764 = vld [vmem:[#allocation6 + $0x18] sm:$0xf]
    %v765 = vld [vmem:[#allocation6 + $0x1c] sm:$0xf]
    %v766 = vld [vmem:[#allocation6 + $0x20] sm:$0xf]
    %v767 = vld [vmem:[#allocation6 + $0x24] sm:$0xf]
    %v768 = vld [vmem:[#allocation6 + $0x28] sm:$0xf]
    %v769 = vld [vmem:[#allocation6 + $0x2c] sm:$0xf]
    %v770 = vld [vmem:[#allocation6 + $0x30] sm:$0xf]
    %v771 = vld [vmem:[#allocation6 + $0x34] sm:$0xf]
    %v772 = vld [vmem:[#allocation6 + $0x38] sm:$0xf]
    %v773 = vld [vmem:[#allocation6 + $0x3c] sm:$0xf]
    %v774 = vld [vmem:[#allocation6 + $0x40] sm:$0xf]
    %v775 = vld [vmem:[#allocation6 + $0x44] sm:$0xf]
    %v776 = vld [vmem:[#allocation6 + $0x48] sm:$0xf]
    %v777 = vld [vmem:[#allocation6 + $0x4c] sm:$0xf]
    %v778 = vld [vmem:[#allocation6 + $0x50] sm:$0xf]
    %v779 = vld [vmem:[#allocation6 + $0x54] sm:$0xf]
    %v780 = vld [vmem:[#allocation6 + $0x58] sm:$0xf]
    %v781 = vld [vmem:[#allocation6 + $0x5c] sm:$0xf]
    %v782 = vld [vmem:[#allocation6 + $0x60] sm:$0xf]
    %v783 = vld [vmem:[#allocation6 + $0x64] sm:$0xf]
    %v784 = vld [vmem:[#allocation6 + $0x68] sm:$0xf]
    %v785 = vld [vmem:[#allocation6 + $0x6c] sm:$0xf]
    %v786 = vld [vmem:[#allocation6 + $0x70] sm:$0xf]
    %v787 = vld [vmem:[#allocation6 + $0x74] sm:$0xf]
    %v788 = vld [vmem:[#allocation6 + $0x78] sm:$0xf]
    %v789 = vld [vmem:[#allocation6 + $0x7c] sm:$0xf]
    %v790 = vld [vmem:[#allocation6 + $0x80] sm:$0xf]
    %v791 = vld [vmem:[#allocation6 + $0x84] sm:$0xf]
    %v792 = vld [vmem:[#allocation6 + $0x88] sm:$0xf]
    %v793 = vld [vmem:[#allocation6 + $0x8c] sm:$0xf]
    %v794 = vld [vmem:[#allocation6 + $0x90] sm:$0xf]
    %v795 = vld [vmem:[#allocation6 + $0x94] sm:$0xf]
    %v796 = vld [vmem:[#allocation6 + $0x98] sm:$0xf]
    %v797 = vld [vmem:[#allocation6 + $0x9c] sm:$0xf]
    %v798 = vld [vmem:[#allocation6 + $0xa0] sm:$0xf]
    %v799 = vld [vmem:[#allocation6 + $0xa4] sm:$0xf]
    %v800 = vld [vmem:[#allocation6 + $0xa8] sm:$0xf]
    %v801 = vld [vmem:[#allocation6 + $0xac] sm:$0xf]
    %v802 = vld [vmem:[#allocation6 + $0xb0] sm:$0xf]
    %v803 = vld [vmem:[#allocation6 + $0xb4] sm:$0xf]
    %v804 = vld [vmem:[#allocation6 + $0xb8] sm:$0xf]
    %v805 = vld [vmem:[#allocation6 + $0xbc] sm:$0xf]
    %v806 = vld [vmem:[#allocation6 + $0xc0] sm:$0xf]
    %v807 = vld [vmem:[#allocation6 + $0xc4] sm:$0xf]
    %v808 = vld [vmem:[#allocation6 + $0xc8] sm:$0xf]
    %v809 = vld [vmem:[#allocation6 + $0xcc] sm:$0xf]
    %v810 = vld [vmem:[#allocation6 + $0xd0] sm:$0xf]
    %v811 = vld [vmem:[#allocation6 + $0xd4] sm:$0xf]
    %v812 = vld [vmem:[#allocation6 + $0xd8] sm:$0xf]
    %v813 = vld [vmem:[#allocation6 + $0xdc] sm:$0xf]
    %v814 = vld [vmem:[#allocation6 + $0xe0] sm:$0xf]
    %v815 = vld [vmem:[#allocation6 + $0xe4] sm:$0xf]
    %v816 = vld [vmem:[#allocation6 + $0xe8] sm:$0xf]
    %v817 = vld [vmem:[#allocation6 + $0xec] sm:$0xf]
    %v818 = vld [vmem:[#allocation6 + $0xf0] sm:$0xf]
    %v819 = vld [vmem:[#allocation6 + $0xf4] sm:$0xf]
    %v820 = vld [vmem:[#allocation6 + $0xf8] sm:$0xf]
    %v821 = vld [vmem:[#allocation6 + $0xfc] sm:$0xf]
    %v822 = vld [vmem:[#allocation6 + $0x100] sm:$0xf]
    %v823 = vld [vmem:[#allocation6 + $0x104] sm:$0xf]
    %v824 = vld [vmem:[#allocation6 + $0x108] sm:$0xf]
    %v825 = vld [vmem:[#allocation6 + $0x10c] sm:$0xf]
    %v826 = vld [vmem:[#allocation6 + $0x110] sm:$0xf]
    %v827 = vld [vmem:[#allocation6 + $0x114] sm:$0xf]
    %v828 = vld [vmem:[#allocation6 + $0x118] sm:$0xf]
    %v829 = vld [vmem:[#allocation6 + $0x11c] sm:$0xf]
    %v830 = vld [vmem:[#allocation6 + $0x120] sm:$0xf]
    %v831 = vld [vmem:[#allocation6 + $0x124] sm:$0xf]
    %v832 = vld [vmem:[#allocation6 + $0x128] sm:$0xf]
    %v833 = vld [vmem:[#allocation6 + $0x12c] sm:$0xf]
    %v834 = vld [vmem:[#allocation6 + $0x130] sm:$0xf]
    %v835 = vld [vmem:[#allocation6 + $0x134] sm:$0xf]
    %v836 = vld [vmem:[#allocation6 + $0x138] sm:$0xf]
    %v837 = vld [vmem:[#allocation6 + $0x13c] sm:$0xf]
    %v838 = vld [vmem:[#allocation6 + $0x140] sm:$0xf]
    %v839 = vld [vmem:[#allocation6 + $0x144] sm:$0xf]
    %v840 = vld [vmem:[#allocation6 + $0x148] sm:$0xf]
    %v841 = vld [vmem:[#allocation6 + $0x14c] sm:$0xf]
    %v842 = vld [vmem:[#allocation6 + $0x150] sm:$0xf]
    %v843 = vld [vmem:[#allocation6 + $0x154] sm:$0xf]
    %v844 = vld [vmem:[#allocation6 + $0x158] sm:$0xf]
    %v845 = vld [vmem:[#allocation6 + $0x15c] sm:$0xf]
    %v846 = vld [vmem:[#allocation6 + $0x160] sm:$0xf]
    %v847 = vld [vmem:[#allocation6 + $0x164] sm:$0xf]
    %v848 = vld [vmem:[#allocation6 + $0x168] sm:$0xf]
    %v849 = vld [vmem:[#allocation6 + $0x16c] sm:$0xf]
    %v850 = vld [vmem:[#allocation6 + $0x170] sm:$0xf]
    %v851 = vld [vmem:[#allocation6 + $0x174] sm:$0xf]
    %v852 = vld [vmem:[#allocation6 + $0x178] sm:$0xf]
    %v853 = vld [vmem:[#allocation6 + $0x17c] sm:$0xf]
    %v854 = vld [vmem:[#allocation6 + $0x180] sm:$0xf]
    %v855 = vld [vmem:[#allocation6 + $0x184] sm:$0xf]
    %v856 = vld [vmem:[#allocation6 + $0x188] sm:$0xf]
    %v857 = vld [vmem:[#allocation6 + $0x18c] sm:$0xf]
    %v858 = vld [vmem:[#allocation6 + $0x190] sm:$0xf]
    %v859 = vld [vmem:[#allocation6 + $0x194] sm:$0xf]
    %v860 = vld [vmem:[#allocation6 + $0x198] sm:$0xf]
    %v861 = vld [vmem:[#allocation6 + $0x19c] sm:$0xf]
    %v862 = vld [vmem:[#allocation6 + $0x1a0] sm:$0xf]
    %v863 = vld [vmem:[#allocation6 + $0x1a4] sm:$0xf]
    %v864 = vld [vmem:[#allocation6 + $0x1a8] sm:$0xf]
    %v865 = vld [vmem:[#allocation6 + $0x1ac] sm:$0xf]
    %v866 = vld [vmem:[#allocation6 + $0x1b0] sm:$0xf]
    %v867 = vld [vmem:[#allocation6 + $0x1b4] sm:$0xf]
    %v868 = vld [vmem:[#allocation6 + $0x1b8] sm:$0xf]
    %v869 = vld [vmem:[#allocation6 + $0x1bc] sm:$0xf]
    %v870 = vld [vmem:[#allocation6 + $0x1c0] sm:$0xf]
    %v871 = vld [vmem:[#allocation6 + $0x1c4] sm:$0xf]
    %v872 = vld [vmem:[#allocation6 + $0x1c8] sm:$0xf]
    %v873 = vld [vmem:[#allocation6 + $0x1cc] sm:$0xf]
    %v874 = vld [vmem:[#allocation6 + $0x1d0] sm:$0xf]
    %v875 = vld [vmem:[#allocation6 + $0x1d4] sm:$0xf]
    %v876 = vld [vmem:[#allocation6 + $0x1d8] sm:$0xf]
    %v877 = vld [vmem:[#allocation6 + $0x1dc] sm:$0xf]
    %v878 = vld [vmem:[#allocation6 + $0x1e0] sm:$0xf]
    %v879 = vld [vmem:[#allocation6 + $0x1e4] sm:$0xf]
    %v880 = vld [vmem:[#allocation6 + $0x1e8] sm:$0xf]
    %v881 = vld [vmem:[#allocation6 + $0x1ec] sm:$0xf]
    %v882 = vld [vmem:[#allocation6 + $0x1f0] sm:$0xf]
    %v883 = vld [vmem:[#allocation6 + $0x1f4] sm:$0xf]
    %v884 = vld [vmem:[#allocation6 + $0x1f8] sm:$0xf]
    %v885 = vld [vmem:[#allocation6 + $0x1fc] sm:$0xf]
    %v886 = vld [vmem:[#allocation6 + $0x200] sm:$0xf]
    %v887 = vld [vmem:[#allocation6 + $0x204] sm:$0xf]
    %v888 = vld [vmem:[#allocation6 + $0x208] sm:$0xf]
    %v889 = vld [vmem:[#allocation6 + $0x20c] sm:$0xf]
    %v890 = vld [vmem:[#allocation6 + $0x210] sm:$0xf]
    %v891 = vld [vmem:[#allocation6 + $0x214] sm:$0xf]
    %v892 = vld [vmem:[#allocation6 + $0x218] sm:$0xf]
    %v893 = vld [vmem:[#allocation6 + $0x21c] sm:$0xf]
    %v894 = vld [vmem:[#allocation6 + $0x220] sm:$0xf]
    %v895 = vld [vmem:[#allocation6 + $0x224] sm:$0xf]
    %v896 = vld [vmem:[#allocation6 + $0x228] sm:$0xf]
    %v897 = vld [vmem:[#allocation6 + $0x22c] sm:$0xf]
    %v898 = vld [vmem:[#allocation6 + $0x230] sm:$0xf]
    %v899 = vld [vmem:[#allocation6 + $0x234] sm:$0xf]
    %v900 = vld [vmem:[#allocation6 + $0x238] sm:$0xf]
    %v901 = vld [vmem:[#allocation6 + $0x23c] sm:$0xf]
    %v902 = vld [vmem:[#allocation8] sm:$0x1]
    %v903 = vlaneseq
    %v904 = vshrl.u32 %v903, 7
    %v905 = vsub.s32 0, %v904
    %v906 = vrot.slane %v902, %v905
    %v947 = vunpack.c.l.b16 %v718
    %v948 = vunpack.c.h.b16 %v718
    %v949 = vunpack.c.l.b16 %v719
    %v950 = vunpack.c.h.b16 %v719
    %v951 = vunpack.c.l.b16 %v720
    %v952 = vunpack.c.h.b16 %v720
    %v953 = vunpack.c.l.b16 %v721
    %v954 = vunpack.c.h.b16 %v721
    %v955 = vunpack.c.l.b16 %v722
    %v956 = vunpack.c.l.b16 %v723
    %v957 = vunpack.c.h.b16 %v723
    %v958 = vunpack.c.l.b16 %v724
    %v959 = vunpack.c.h.b16 %v724
    %v960 = vunpack.c.l.b16 %v725
    %v961 = vunpack.c.h.b16 %v725
    %v962 = vunpack.c.l.b16 %v726
    %v963 = vunpack.c.h.b16 %v726
    %v964 = vunpack.c.l.b16 %v727
    %v965 = vunpack.c.l.b16 %v728
    %v966 = vunpack.c.h.b16 %v728
    %v967 = vunpack.c.l.b16 %v729
    %v968 = vunpack.c.h.b16 %v729
    %v969 = vunpack.c.l.b16 %v730
    %v970 = vunpack.c.h.b16 %v730
    %v971 = vunpack.c.l.b16 %v731
    %v972 = vunpack.c.h.b16 %v731
    %v973 = vunpack.c.l.b16 %v732
    %v974 = vunpack.c.l.b16 %v733
    %v975 = vunpack.c.h.b16 %v733
    %v976 = vunpack.c.l.b16 %v734
    %v977 = vunpack.c.h.b16 %v734
    %v978 = vunpack.c.l.b16 %v735
    %v979 = vunpack.c.h.b16 %v735
    %v980 = vunpack.c.l.b16 %v736
    %v981 = vunpack.c.h.b16 %v736
    %v982 = vunpack.c.l.b16 %v737
    %v983 = vunpack.c.l.b16 %v738
    %v984 = vunpack.c.h.b16 %v738
    %v985 = vunpack.c.l.b16 %v739
    %v986 = vunpack.c.h.b16 %v739
    %v987 = vunpack.c.l.b16 %v740
    %v988 = vunpack.c.h.b16 %v740
    %v989 = vunpack.c.l.b16 %v741
    %v990 = vunpack.c.h.b16 %v741
    %v991 = vunpack.c.l.b16 %v742
    %v992 = vunpack.c.l.b16 %v743
    %v993 = vunpack.c.h.b16 %v743
    %v994 = vunpack.c.l.b16 %v744
    %v995 = vunpack.c.h.b16 %v744
    %v996 = vunpack.c.l.b16 %v745
    %v997 = vunpack.c.h.b16 %v745
    %v998 = vunpack.c.l.b16 %v746
    %v999 = vunpack.c.h.b16 %v746
    %v1000 = vunpack.c.l.b16 %v747
    %v1001 = vunpack.c.l.b16 %v748
    %v1002 = vunpack.c.h.b16 %v748
    %v1003 = vunpack.c.l.b16 %v749
    %v1004 = vunpack.c.h.b16 %v749
    %v1005 = vunpack.c.l.b16 %v750
    %v1006 = vunpack.c.h.b16 %v750
    %v1007 = vunpack.c.l.b16 %v751
    %v1008 = vunpack.c.h.b16 %v751
    %v1009 = vunpack.c.l.b16 %v752
    %v1010 = vunpack.c.l.b16 %v753
    %v1011 = vunpack.c.h.b16 %v753
    %v1012 = vunpack.c.l.b16 %v754
    %v1013 = vunpack.c.h.b16 %v754
    %v1014 = vunpack.c.l.b16 %v755
    %v1015 = vunpack.c.h.b16 %v755
    %v1016 = vunpack.c.l.b16 %v756
    %v1017 = vunpack.c.h.b16 %v756
    %v1018 = vunpack.c.l.b16 %v757
    %v1019 = vpack.c.b16 %v956, %v947
    %v1020 = vpack.c.b16 %v957, %v948
    %v1021 = vpack.c.b16 %v958, %v949
    %v1022 = vpack.c.b16 %v959, %v950
    %v1023 = vpack.c.b16 %v960, %v951
    %v1024 = vpack.c.b16 %v961, %v952
    %v1025 = vpack.c.b16 %v962, %v953
    %v1026 = vpack.c.b16 %v963, %v954
    %v1027 = vpack.c.b16 %v964, %v955
    %v1028 = vpack.c.b16 %v974, %v965
    %v1029 = vpack.c.b16 %v975, %v966
    %v1030 = vpack.c.b16 %v976, %v967
    %v1031 = vpack.c.b16 %v977, %v968
    %v1032 = vpack.c.b16 %v978, %v969
    %v1033 = vpack.c.b16 %v979, %v970
    %v1034 = vpack.c.b16 %v980, %v971
    %v1035 = vpack.c.b16 %v981, %v972
    %v1036 = vpack.c.b16 %v982, %v973
    %v1037 = vpack.c.b16 %v992, %v983
    %v1038 = vpack.c.b16 %v993, %v984
    %v1039 = vpack.c.b16 %v994, %v985
    %v1040 = vpack.c.b16 %v995, %v986
    %v1041 = vpack.c.b16 %v996, %v987
    %v1042 = vpack.c.b16 %v997, %v988
    %v1043 = vpack.c.b16 %v998, %v989
    %v1044 = vpack.c.b16 %v999, %v990
    %v1045 = vpack.c.b16 %v1000, %v991
    %v1046 = vpack.c.b16 %v1010, %v1001
    %v1047 = vpack.c.b16 %v1011, %v1002
    %v1048 = vpack.c.b16 %v1012, %v1003
    %v1049 = vpack.c.b16 %v1013, %v1004
    %v1050 = vpack.c.b16 %v1014, %v1005
    %v1051 = vpack.c.b16 %v1015, %v1006
    %v1052 = vpack.c.b16 %v1016, %v1007
    %v1053 = vpack.c.b16 %v1017, %v1008
    %v1054 = vpack.c.b16 %v1018, %v1009
    %v1235 = vunpack.c.l.b16 %v758
    %v1236 = vunpack.c.l.b16 %v759
    %v1237 = vunpack.c.l.b16 %v760
    %v1238 = vunpack.c.l.b16 %v761
    %v1239 = vunpack.c.l.b16 %v762
    %v1240 = vunpack.c.l.b16 %v763
    %v1241 = vunpack.c.l.b16 %v764
    %v1242 = vunpack.c.l.b16 %v765
    %v1243 = vunpack.c.l.b16 %v766
    %v1244 = vunpack.c.l.b16 %v767
    %v1245 = vunpack.c.l.b16 %v768
    %v1246 = vunpack.c.l.b16 %v769
    %v1247 = vunpack.c.l.b16 %v770
    %v1248 = vunpack.c.l.b16 %v771
    %v1249 = vunpack.c.l.b16 %v772
    %v1250 = vunpack.c.l.b16 %v773
    %v1251 = vunpack.c.l.b16 %v774
    %v1252 = vunpack.c.l.b16 %v775
    %v1253 = vunpack.c.l.b16 %v776
    %v1254 = vunpack.c.l.b16 %v777
    %v1255 = vunpack.c.l.b16 %v778
    %v1256 = vunpack.c.l.b16 %v779
    %v1257 = vunpack.c.l.b16 %v780
    %v1258 = vunpack.c.l.b16 %v781
    %v1259 = vunpack.c.l.b16 %v782
    %v1260 = vunpack.c.l.b16 %v783
    %v1261 = vunpack.c.l.b16 %v784
    %v1262 = vunpack.c.l.b16 %v785
    %v1263 = vunpack.c.l.b16 %v786
    %v1264 = vunpack.c.l.b16 %v787
    %v1265 = vunpack.c.l.b16 %v788
    %v1266 = vunpack.c.l.b16 %v789
    %v1267 = vunpack.c.l.b16 %v790
    %v1268 = vunpack.c.l.b16 %v791
    %v1269 = vunpack.c.l.b16 %v792
    %v1270 = vunpack.c.l.b16 %v793
    %v1271 = vunpack.c.l.b16 %v794
    %v1272 = vunpack.c.l.b16 %v795
    %v1273 = vunpack.c.l.b16 %v796
    %v1274 = vunpack.c.l.b16 %v797
    %v1275 = vunpack.c.l.b16 %v798
    %v1276 = vunpack.c.l.b16 %v799
    %v1277 = vunpack.c.l.b16 %v800
    %v1278 = vunpack.c.l.b16 %v801
    %v1279 = vunpack.c.l.b16 %v802
    %v1280 = vunpack.c.l.b16 %v803
    %v1281 = vunpack.c.l.b16 %v804
    %v1282 = vunpack.c.l.b16 %v805
    %v1283 = vunpack.c.l.b16 %v806
    %v1284 = vunpack.c.l.b16 %v807
    %v1285 = vunpack.c.l.b16 %v808
    %v1286 = vunpack.c.l.b16 %v809
    %v1287 = vunpack.c.l.b16 %v810
    %v1288 = vunpack.c.l.b16 %v811
    %v1289 = vunpack.c.l.b16 %v812
    %v1290 = vunpack.c.l.b16 %v813
    %v1291 = vunpack.c.l.b16 %v814
    %v1292 = vunpack.c.l.b16 %v815
    %v1293 = vunpack.c.l.b16 %v816
    %v1294 = vunpack.c.l.b16 %v817
    %v1295 = vunpack.c.l.b16 %v818
    %v1296 = vunpack.c.l.b16 %v819
    %v1297 = vunpack.c.l.b16 %v820
    %v1298 = vunpack.c.l.b16 %v821
    %v1299 = vunpack.c.l.b16 %v822
    %v1300 = vunpack.c.l.b16 %v823
    %v1301 = vunpack.c.l.b16 %v824
    %v1302 = vunpack.c.l.b16 %v825
    %v1303 = vunpack.c.l.b16 %v826
    %v1304 = vunpack.c.l.b16 %v827
    %v1305 = vunpack.c.l.b16 %v828
    %v1306 = vunpack.c.l.b16 %v829
    %v1307 = vunpack.c.l.b16 %v830
    %v1308 = vunpack.c.l.b16 %v831
    %v1309 = vunpack.c.l.b16 %v832
    %v1310 = vunpack.c.l.b16 %v833
    %v1311 = vunpack.c.l.b16 %v834
    %v1312 = vunpack.c.l.b16 %v835
    %v1313 = vunpack.c.l.b16 %v836
    %v1314 = vunpack.c.l.b16 %v837
    %v1315 = vunpack.c.l.b16 %v838
    %v1316 = vunpack.c.l.b16 %v839
    %v1317 = vunpack.c.l.b16 %v840
    %v1318 = vunpack.c.l.b16 %v841
    %v1319 = vunpack.c.l.b16 %v842
    %v1320 = vunpack.c.l.b16 %v843
    %v1321 = vunpack.c.l.b16 %v844
    %v1322 = vunpack.c.l.b16 %v845
    %v1323 = vunpack.c.l.b16 %v846
    %v1324 = vunpack.c.l.b16 %v847
    %v1325 = vunpack.c.l.b16 %v848
    %v1326 = vunpack.c.l.b16 %v849
    %v1327 = vunpack.c.l.b16 %v850
    %v1328 = vunpack.c.l.b16 %v851
    %v1329 = vunpack.c.l.b16 %v852
    %v1330 = vunpack.c.l.b16 %v853
    %v1331 = vunpack.c.l.b16 %v854
    %v1332 = vunpack.c.l.b16 %v855
    %v1333 = vunpack.c.l.b16 %v856
    %v1334 = vunpack.c.l.b16 %v857
    %v1335 = vunpack.c.l.b16 %v858
    %v1336 = vunpack.c.l.b16 %v859
    %v1337 = vunpack.c.l.b16 %v860
    %v1338 = vunpack.c.l.b16 %v861
    %v1339 = vunpack.c.l.b16 %v862
    %v1340 = vunpack.c.l.b16 %v863
    %v1341 = vunpack.c.l.b16 %v864
    %v1342 = vunpack.c.l.b16 %v865
    %v1343 = vunpack.c.l.b16 %v866
    %v1344 = vunpack.c.l.b16 %v867
    %v1345 = vunpack.c.l.b16 %v868
    %v1346 = vunpack.c.l.b16 %v869
    %v1347 = vunpack.c.l.b16 %v870
    %v1348 = vunpack.c.l.b16 %v871
    %v1349 = vunpack.c.l.b16 %v872
    %v1350 = vunpack.c.l.b16 %v873
    %v1351 = vunpack.c.l.b16 %v874
    %v1352 = vunpack.c.l.b16 %v875
    %v1353 = vunpack.c.l.b16 %v876
    %v1354 = vunpack.c.l.b16 %v877
    %v1355 = vunpack.c.l.b16 %v878
    %v1356 = vunpack.c.l.b16 %v879
    %v1357 = vunpack.c.l.b16 %v880
    %v1358 = vunpack.c.l.b16 %v881
    %v1359 = vunpack.c.l.b16 %v882
    %v1360 = vunpack.c.l.b16 %v883
    %v1361 = vunpack.c.l.b16 %v884
    %v1362 = vunpack.c.l.b16 %v885
    %v1363 = vunpack.c.l.b16 %v886
    %v1364 = vunpack.c.l.b16 %v887
    %v1365 = vunpack.c.l.b16 %v888
    %v1366 = vunpack.c.l.b16 %v889
    %v1367 = vunpack.c.l.b16 %v890
    %v1368 = vunpack.c.l.b16 %v891
    %v1369 = vunpack.c.l.b16 %v892
    %v1370 = vunpack.c.l.b16 %v893
    %v1371 = vunpack.c.l.b16 %v894
    %v1372 = vunpack.c.l.b16 %v895
    %v1373 = vunpack.c.l.b16 %v896
    %v1374 = vunpack.c.l.b16 %v897
    %v1375 = vunpack.c.l.b16 %v898
    %v1376 = vunpack.c.l.b16 %v899
    %v1377 = vunpack.c.l.b16 %v900
    %v1378 = vunpack.c.l.b16 %v901
    %v1379 = vpack.c.b16 %v1236, %v1235
    %v1380 = vpack.c.b16 %v1238, %v1237
    %v1381 = vpack.c.b16 %v1240, %v1239
    %v1382 = vpack.c.b16 %v1242, %v1241
    %v1383 = vpack.c.b16 %v1244, %v1243
    %v1384 = vpack.c.b16 %v1246, %v1245
    %v1385 = vpack.c.b16 %v1248, %v1247
    %v1386 = vpack.c.b16 %v1250, %v1249
    %v1387 = vpack.c.b16 %v1252, %v1251
    %v1388 = vpack.c.b16 %v1254, %v1253
    %v1389 = vpack.c.b16 %v1256, %v1255
    %v1390 = vpack.c.b16 %v1258, %v1257
    %v1391 = vpack.c.b16 %v1260, %v1259
    %v1392 = vpack.c.b16 %v1262, %v1261
    %v1393 = vpack.c.b16 %v1264, %v1263
    %v1394 = vpack.c.b16 %v1266, %v1265
    %v1395 = vpack.c.b16 %v1268, %v1267
    %v1396 = vpack.c.b16 %v1270, %v1269
    %v1397 = vpack.c.b16 %v1272, %v1271
    %v1398 = vpack.c.b16 %v1274, %v1273
    %v1399 = vpack.c.b16 %v1276, %v1275
    %v1400 = vpack.c.b16 %v1278, %v1277
    %v1401 = vpack.c.b16 %v1280, %v1279
    %v1402 = vpack.c.b16 %v1282, %v1281
    %v1403 = vpack.c.b16 %v1284, %v1283
    %v1404 = vpack.c.b16 %v1286, %v1285
    %v1405 = vpack.c.b16 %v1288, %v1287
    %v1406 = vpack.c.b16 %v1290, %v1289
    %v1407 = vpack.c.b16 %v1292, %v1291
    %v1408 = vpack.c.b16 %v1294, %v1293
    %v1409 = vpack.c.b16 %v1296, %v1295
    %v1410 = vpack.c.b16 %v1298, %v1297
    %v1411 = vpack.c.b16 %v1300, %v1299
    %v1412 = vpack.c.b16 %v1302, %v1301
    %v1413 = vpack.c.b16 %v1304, %v1303
    %v1414 = vpack.c.b16 %v1306, %v1305
    %v1415 = vpack.c.b16 %v1308, %v1307
    %v1416 = vpack.c.b16 %v1310, %v1309
    %v1417 = vpack.c.b16 %v1312, %v1311
    %v1418 = vpack.c.b16 %v1314, %v1313
    %v1419 = vpack.c.b16 %v1316, %v1315
    %v1420 = vpack.c.b16 %v1318, %v1317
    %v1421 = vpack.c.b16 %v1320, %v1319
    %v1422 = vpack.c.b16 %v1322, %v1321
    %v1423 = vpack.c.b16 %v1324, %v1323
    %v1424 = vpack.c.b16 %v1326, %v1325
    %v1425 = vpack.c.b16 %v1328, %v1327
    %v1426 = vpack.c.b16 %v1330, %v1329
    %v1427 = vpack.c.b16 %v1332, %v1331
    %v1428 = vpack.c.b16 %v1334, %v1333
    %v1429 = vpack.c.b16 %v1336, %v1335
    %v1430 = vpack.c.b16 %v1338, %v1337
    %v1431 = vpack.c.b16 %v1340, %v1339
    %v1432 = vpack.c.b16 %v1342, %v1341
    %v1433 = vpack.c.b16 %v1344, %v1343
    %v1434 = vpack.c.b16 %v1346, %v1345
    %v1435 = vpack.c.b16 %v1348, %v1347
    %v1436 = vpack.c.b16 %v1350, %v1349
    %v1437 = vpack.c.b16 %v1352, %v1351
    %v1438 = vpack.c.b16 %v1354, %v1353
    %v1439 = vpack.c.b16 %v1356, %v1355
    %v1440 = vpack.c.b16 %v1358, %v1357
    %v1441 = vpack.c.b16 %v1360, %v1359
    %v1442 = vpack.c.b16 %v1362, %v1361
    %v1443 = vpack.c.b16 %v1364, %v1363
    %v1444 = vpack.c.b16 %v1366, %v1365
    %v1445 = vpack.c.b16 %v1368, %v1367
    %v1446 = vpack.c.b16 %v1370, %v1369
    %v1447 = vpack.c.b16 %v1372, %v1371
    %v1448 = vpack.c.b16 %v1374, %v1373
    %v1449 = vpack.c.b16 %v1376, %v1375
    %v1450 = vpack.c.b16 %v1378, %v1377
    %1523 = vmatprep.subr.bf16.mxu0 0
    %1524 = vmatpush1.bf16.msra.mxu0 %v1386
    %1525 = vmatprep.subr.bf16.mxu0 0
    %1526 = vmatpush1.bf16.msra.mxu0 %v1385
    %1527 = vmatprep.subr.bf16.mxu0 0
    %1528 = vmatpush1.bf16.msra.mxu0 %v1384
    %1529 = vmatprep.subr.bf16.mxu0 0
    %1530 = vmatpush1.bf16.msra.mxu0 %v1383
    %1531 = vmatprep.subr.bf16.mxu0 0
    %1532 = vmatpush1.bf16.msra.mxu0 %v1382
    %1533 = vmatprep.subr.bf16.mxu0 0
    %1534 = vmatpush1.bf16.msra.mxu0 %v1381
    %1535 = vmatprep.subr.bf16.mxu0 0
    %1536 = vmatpush1.bf16.msra.mxu0 %v1380
    %1537 = vmatprep.subr.bf16.mxu0 0
    %1538 = vmatpush1.bf16.msra.mxu0 %v1379
    %1539 = vmatprep.subr.bf16.mxu0 0
    %1540 = vmatpush2.bf16.msra.mxu0 %v1394
    %1541 = vmatprep.subr.bf16.mxu0 0
    %1542 = vmatpush2.bf16.msra.mxu0 %v1393
    %1543 = vmatprep.subr.bf16.mxu0 0
    %1544 = vmatpush2.bf16.msra.mxu0 %v1392
    %1545 = vmatprep.subr.bf16.mxu0 0
    %1546 = vmatpush2.bf16.msra.mxu0 %v1391
    %1547 = vmatprep.subr.bf16.mxu0 0
    %1548 = vmatpush2.bf16.msra.mxu0 %v1390
    %1549 = vmatprep.subr.bf16.mxu0 0
    %1550 = vmatpush2.bf16.msra.mxu0 %v1389
    %1551 = vmatprep.subr.bf16.mxu0 0
    %1552 = vmatpush2.bf16.msra.mxu0 %v1388
    %1553 = vmatprep.subr.bf16.mxu0 0
    %1554 = vmatpush2.bf16.msra.mxu0 %v1387
    %1555 = vmatprep.mubr.bf16.mxu0 %v1020
    %1556 = vmatmul.mubr.bf16.gmra.mxu0 %v1019
    %v1557 = vpop.f32.mrf.mxu0
    %v1558 = vadd.f32 %v906, %v1557
    %v1559 = vpop.f32.mrf.mxu0
    %v1560 = vpop.f32.mrf.mxu0
    %v1561 = vadd.f32 %v906, %v1560
    %v1562 = vpop.f32.mrf.mxu0
    %1563 = vmatprep.mubr.bf16.mxu0 %v1029
    %1564 = vmatmul.mubr.bf16.gmra.mxu0 %v1028
    %v1565 = vpop.f32.mrf.mxu0
    %v1566 = vadd.f32 %v906, %v1565
    %v1567 = vpop.f32.mrf.mxu0
    %v1568 = vpop.f32.mrf.mxu0
    %v1569 = vadd.f32 %v906, %v1568
    %v1570 = vpop.f32.mrf.mxu0
    %1571 = vmatprep.mubr.bf16.mxu0 %v1038
    %1572 = vmatmul.mubr.bf16.gmra.mxu0 %v1037
    %v1573 = vpop.f32.mrf.mxu0
    %v1574 = vadd.f32 %v906, %v1573
    %v1575 = vpop.f32.mrf.mxu0
    %v1576 = vpop.f32.mrf.mxu0
    %v1577 = vadd.f32 %v906, %v1576
    %v1578 = vpop.f32.mrf.mxu0
    %1579 = vmatprep.mubr.bf16.mxu0 %v1047
    %1580 = vmatmul.mubr.bf16.gmra.mxu0 %v1046
    %v1581 = vpop.f32.mrf.mxu0
    %v1582 = vadd.f32 %v906, %v1581
    %v1583 = vpop.f32.mrf.mxu0
    %v1584 = vpop.f32.mrf.mxu0
    %v1585 = vadd.f32 %v906, %v1584
    %v1586 = vpop.f32.mrf.mxu0
    %1587 = vdwg.mxu0
    %1588 = vmatprep.subr.bf16.mxu0 0
    %1589 = vmatpush1.bf16.msra.mxu0 %v1402
    %1590 = vmatprep.subr.bf16.mxu0 0
    %1591 = vmatpush1.bf16.msra.mxu0 %v1401
    %1592 = vmatprep.subr.bf16.mxu0 0
    %1593 = vmatpush1.bf16.msra.mxu0 %v1400
    %1594 = vmatprep.subr.bf16.mxu0 0
    %1595 = vmatpush1.bf16.msra.mxu0 %v1399
    %1596 = vmatprep.subr.bf16.mxu0 0
    %1597 = vmatpush1.bf16.msra.mxu0 %v1398
    %1598 = vmatprep.subr.bf16.mxu0 0
    %1599 = vmatpush1.bf16.msra.mxu0 %v1397
    %1600 = vmatprep.subr.bf16.mxu0 0
    %1601 = vmatpush1.bf16.msra.mxu0 %v1396
    %1602 = vmatprep.subr.bf16.mxu0 0
    %1603 = vmatpush1.bf16.msra.mxu0 %v1395
    %1604 = vmatprep.subr.bf16.mxu0 0
    %1605 = vmatpush2.bf16.msra.mxu0 %v1410
    %1606 = vmatprep.subr.bf16.mxu0 0
    %1607 = vmatpush2.bf16.msra.mxu0 %v1409
    %1608 = vmatprep.subr.bf16.mxu0 0
    %1609 = vmatpush2.bf16.msra.mxu0 %v1408
    %1610 = vmatprep.subr.bf16.mxu0 0
    %1611 = vmatpush2.bf16.msra.mxu0 %v1407
    %1612 = vmatprep.subr.bf16.mxu0 0
    %1613 = vmatpush2.bf16.msra.mxu0 %v1406
    %1614 = vmatprep.subr.bf16.mxu0 0
    %1615 = vmatpush2.bf16.msra.mxu0 %v1405
    %1616 = vmatprep.subr.bf16.mxu0 0
    %1617 = vmatpush2.bf16.msra.mxu0 %v1404
    %1618 = vmatprep.subr.bf16.mxu0 0
    %1619 = vmatpush2.bf16.msra.mxu0 %v1403
    %1620 = vmatprep.mubr.bf16.mxu0 %v1022
    %1621 = vmatmul.mubr.bf16.gmra.mxu0 %v1021
    %v1622 = vpop.f32.mrf.mxu0
    %v1623 = vadd.f32 %v1558, %v1622
    %v1624 = vpop.f32.mrf.mxu0
    %v1625 = vpop.f32.mrf.mxu0
    %v1626 = vadd.f32 %v1561, %v1625
    %v1627 = vpop.f32.mrf.mxu0
    %1628 = vmatprep.mubr.bf16.mxu0 %v1031
    %1629 = vmatmul.mubr.bf16.gmra.mxu0 %v1030
    %v1630 = vpop.f32.mrf.mxu0
    %v1631 = vadd.f32 %v1566, %v1630
    %v1632 = vpop.f32.mrf.mxu0
    %v1633 = vpop.f32.mrf.mxu0
    %v1634 = vadd.f32 %v1569, %v1633
    %v1635 = vpop.f32.mrf.mxu0
    %1636 = vmatprep.mubr.bf16.mxu0 %v1040
    %1637 = vmatmul.mubr.bf16.gmra.mxu0 %v1039
    %v1638 = vpop.f32.mrf.mxu0
    %v1639 = vadd.f32 %v1574, %v1638
    %v1640 = vpop.f32.mrf.mxu0
    %v1641 = vpop.f32.mrf.mxu0
    %v1642 = vadd.f32 %v1577, %v1641
    %v1643 = vpop.f32.mrf.mxu0
    %1644 = vmatprep.mubr.bf16.mxu0 %v1049
    %1645 = vmatmul.mubr.bf16.gmra.mxu0 %v1048
    %v1646 = vpop.f32.mrf.mxu0
    %v1647 = vadd.f32 %v1582, %v1646
    %v1648 = vpop.f32.mrf.mxu0
    %v1649 = vpop.f32.mrf.mxu0
    %v1650 = vadd.f32 %v1585, %v1649
    %v1651 = vpop.f32.mrf.mxu0
    %1652 = vdwg.mxu0
    %1653 = vmatprep.subr.bf16.mxu0 0
    %1654 = vmatpush1.bf16.msra.mxu0 %v1418
    %1655 = vmatprep.subr.bf16.mxu0 0
    %1656 = vmatpush1.bf16.msra.mxu0 %v1417
    %1657 = vmatprep.subr.bf16.mxu0 0
    %1658 = vmatpush1.bf16.msra.mxu0 %v1416
    %1659 = vmatprep.subr.bf16.mxu0 0
    %1660 = vmatpush1.bf16.msra.mxu0 %v1415
    %1661 = vmatprep.subr.bf16.mxu0 0
    %1662 = vmatpush1.bf16.msra.mxu0 %v1414
    %1663 = vmatprep.subr.bf16.mxu0 0
    %1664 = vmatpush1.bf16.msra.mxu0 %v1413
    %1665 = vmatprep.subr.bf16.mxu0 0
    %1666 = vmatpush1.bf16.msra.mxu0 %v1412
    %1667 = vmatprep.subr.bf16.mxu0 0
    %1668 = vmatpush1.bf16.msra.mxu0 %v1411
    %1669 = vmatprep.subr.bf16.mxu0 0
    %1670 = vmatpush2.bf16.msra.mxu0 %v1426
    %1671 = vmatprep.subr.bf16.mxu0 0
    %1672 = vmatpush2.bf16.msra.mxu0 %v1425
    %1673 = vmatprep.subr.bf16.mxu0 0
    %1674 = vmatpush2.bf16.msra.mxu0 %v1424
    %1675 = vmatprep.subr.bf16.mxu0 0
    %1676 = vmatpush2.bf16.msra.mxu0 %v1423
    %1677 = vmatprep.subr.bf16.mxu0 0
    %1678 = vmatpush2.bf16.msra.mxu0 %v1422
    %1679 = vmatprep.subr.bf16.mxu0 0
    %1680 = vmatpush2.bf16.msra.mxu0 %v1421
    %1681 = vmatprep.subr.bf16.mxu0 0
    %1682 = vmatpush2.bf16.msra.mxu0 %v1420
    %1683 = vmatprep.subr.bf16.mxu0 0
    %1684 = vmatpush2.bf16.msra.mxu0 %v1419
    %1685 = vmatprep.mubr.bf16.mxu0 %v1024
    %1686 = vmatmul.mubr.bf16.gmra.mxu0 %v1023
    %v1687 = vpop.f32.mrf.mxu0
    %v1688 = vadd.f32 %v1623, %v1687
    %v1689 = vpop.f32.mrf.mxu0
    %v1690 = vpop.f32.mrf.mxu0
    %v1691 = vadd.f32 %v1626, %v1690
    %v1692 = vpop.f32.mrf.mxu0
    %1693 = vmatprep.mubr.bf16.mxu0 %v1033
    %1694 = vmatmul.mubr.bf16.gmra.mxu0 %v1032
    %v1695 = vpop.f32.mrf.mxu0
    %v1696 = vadd.f32 %v1631, %v1695
    %v1697 = vpop.f32.mrf.mxu0
    %v1698 = vpop.f32.mrf.mxu0
    %v1699 = vadd.f32 %v1634, %v1698
    %v1700 = vpop.f32.mrf.mxu0
    %1701 = vmatprep.mubr.bf16.mxu0 %v1042
    %1702 = vmatmul.mubr.bf16.gmra.mxu0 %v1041
    %v1703 = vpop.f32.mrf.mxu0
    %v1704 = vadd.f32 %v1639, %v1703
    %v1705 = vpop.f32.mrf.mxu0
    %v1706 = vpop.f32.mrf.mxu0
    %v1707 = vadd.f32 %v1642, %v1706
    %v1708 = vpop.f32.mrf.mxu0
    %1709 = vmatprep.mubr.bf16.mxu0 %v1051
    %1710 = vmatmul.mubr.bf16.gmra.mxu0 %v1050
    %v1711 = vpop.f32.mrf.mxu0
    %v1712 = vadd.f32 %v1647, %v1711
    %v1713 = vpop.f32.mrf.mxu0
    %v1714 = vpop.f32.mrf.mxu0
    %v1715 = vadd.f32 %v1650, %v1714
    %v1716 = vpop.f32.mrf.mxu0
    %1717 = vdwg.mxu0
    %1718 = vmatprep.subr.bf16.mxu0 0
    %1719 = vmatpush1.bf16.msra.mxu0 %v1434
    %1720 = vmatprep.subr.bf16.mxu0 0
    %1721 = vmatpush1.bf16.msra.mxu0 %v1433
    %1722 = vmatprep.subr.bf16.mxu0 0
    %1723 = vmatpush1.bf16.msra.mxu0 %v1432
    %1724 = vmatprep.subr.bf16.mxu0 0
    %1725 = vmatpush1.bf16.msra.mxu0 %v1431
    %1726 = vmatprep.subr.bf16.mxu0 0
    %1727 = vmatpush1.bf16.msra.mxu0 %v1430
    %1728 = vmatprep.subr.bf16.mxu0 0
    %1729 = vmatpush1.bf16.msra.mxu0 %v1429
    %1730 = vmatprep.subr.bf16.mxu0 0
    %1731 = vmatpush1.bf16.msra.mxu0 %v1428
    %1732 = vmatprep.subr.bf16.mxu0 0
    %1733 = vmatpush1.bf16.msra.mxu0 %v1427
    %1734 = vmatprep.subr.bf16.mxu0 0
    %1735 = vmatpush2.bf16.msra.mxu0 %v1442
    %1736 = vmatprep.subr.bf16.mxu0 0
    %1737 = vmatpush2.bf16.msra.mxu0 %v1441
    %1738 = vmatprep.subr.bf16.mxu0 0
    %1739 = vmatpush2.bf16.msra.mxu0 %v1440
    %1740 = vmatprep.subr.bf16.mxu0 0
    %1741 = vmatpush2.bf16.msra.mxu0 %v1439
    %1742 = vmatprep.subr.bf16.mxu0 0
    %1743 = vmatpush2.bf16.msra.mxu0 %v1438
    %1744 = vmatprep.subr.bf16.mxu0 0
    %1745 = vmatpush2.bf16.msra.mxu0 %v1437
    %1746 = vmatprep.subr.bf16.mxu0 0
    %1747 = vmatpush2.bf16.msra.mxu0 %v1436
    %1748 = vmatprep.subr.bf16.mxu0 0
    %1749 = vmatpush2.bf16.msra.mxu0 %v1435
    %1750 = vmatprep.mubr.bf16.mxu0 %v1026
    %1751 = vmatmul.mubr.bf16.gmra.mxu0 %v1025
    %v1752 = vpop.f32.mrf.mxu0
    %v1753 = vadd.f32 %v1688, %v1752
    %v1754 = vpop.f32.mrf.mxu0
    %v1755 = vpop.f32.mrf.mxu0
    %v1756 = vadd.f32 %v1691, %v1755
    %v1757 = vpop.f32.mrf.mxu0
    %1758 = vmatprep.mubr.bf16.mxu0 %v1035
    %1759 = vmatmul.mubr.bf16.gmra.mxu0 %v1034
    %v1760 = vpop.f32.mrf.mxu0
    %v1761 = vadd.f32 %v1696, %v1760
    %v1762 = vpop.f32.mrf.mxu0
    %v1763 = vpop.f32.mrf.mxu0
    %v1764 = vadd.f32 %v1699, %v1763
    %v1765 = vpop.f32.mrf.mxu0
    %1766 = vmatprep.mubr.bf16.mxu0 %v1044
    %1767 = vmatmul.mubr.bf16.gmra.mxu0 %v1043
    %v1768 = vpop.f32.mrf.mxu0
    %v1769 = vadd.f32 %v1704, %v1768
    %v1770 = vpop.f32.mrf.mxu0
    %v1771 = vpop.f32.mrf.mxu0
    %v1772 = vadd.f32 %v1707, %v1771
    %v1773 = vpop.f32.mrf.mxu0
    %1774 = vmatprep.mubr.bf16.mxu0 %v1053
    %1775 = vmatmul.mubr.bf16.gmra.mxu0 %v1052
    %v1776 = vpop.f32.mrf.mxu0
    %v1777 = vadd.f32 %v1712, %v1776
    %v1778 = vpop.f32.mrf.mxu0
    %v1779 = vpop.f32.mrf.mxu0
    %v1780 = vadd.f32 %v1715, %v1779
    %v1781 = vpop.f32.mrf.mxu0
    %1782 = vdwg.mxu0
    %1783 = vmatprep.subr.bf16.mxu0 0
    %1784 = vmatpush1.bf16.msra.mxu0 %v1450
    %1785 = vmatprep.subr.bf16.mxu0 0
    %1786 = vmatpush1.bf16.msra.mxu0 %v1449
    %1787 = vmatprep.subr.bf16.mxu0 0
    %1788 = vmatpush1.bf16.msra.mxu0 %v1448
    %1789 = vmatprep.subr.bf16.mxu0 0
    %1790 = vmatpush1.bf16.msra.mxu0 %v1447
    %1791 = vmatprep.subr.bf16.mxu0 0
    %1792 = vmatpush1.bf16.msra.mxu0 %v1446
    %1793 = vmatprep.subr.bf16.mxu0 0
    %1794 = vmatpush1.bf16.msra.mxu0 %v1445
    %1795 = vmatprep.subr.bf16.mxu0 0
    %1796 = vmatpush1.bf16.msra.mxu0 %v1444
    %1797 = vmatprep.subr.bf16.mxu0 0
    %1798 = vmatpush1.bf16.msra.mxu0 %v1443
    %1799 = vmatprep.subr.bf16.mxu0 0
    %1800 = vmatpush2.bf16.msra.mxu0 0
    %1801 = vmatprep.subr.bf16.mxu0 0
    %1802 = vmatpush2.bf16.msra.mxu0 0
    %1803 = vmatprep.subr.bf16.mxu0 0
    %1804 = vmatpush2.bf16.msra.mxu0 0
    %1805 = vmatprep.subr.bf16.mxu0 0
    %1806 = vmatpush2.bf16.msra.mxu0 0
    %1807 = vmatprep.subr.bf16.mxu0 0
    %1808 = vmatpush2.bf16.msra.mxu0 0
    %1809 = vmatprep.subr.bf16.mxu0 0
    %1810 = vmatpush2.bf16.msra.mxu0 0
    %1811 = vmatprep.subr.bf16.mxu0 0
    %1812 = vmatpush2.bf16.msra.mxu0 0
    %1813 = vmatprep.subr.bf16.mxu0 0
    %1814 = vmatpush2.bf16.msra.mxu0 0
    %1815 = vmatprep.mubr.bf16.mxu0 0
    %1816 = vmatmul.mubr.bf16.gmra.mxu0 %v1027
    %v1817 = vpop.f32.mrf.mxu0
    %v1818 = vadd.f32 %v1753, %v1817
    %v1819 = vpop.f32.mrf.mxu0
    %v1820 = vpop.f32.mrf.mxu0
    %v1821 = vadd.f32 %v1756, %v1820
    %v1822 = vpop.f32.mrf.mxu0
    %1823 = vmatprep.mubr.bf16.mxu0 0
    %1824 = vmatmul.mubr.bf16.gmra.mxu0 %v1036
    %v1825 = vpop.f32.mrf.mxu0
    %v1826 = vadd.f32 %v1761, %v1825
    %v1827 = vpop.f32.mrf.mxu0
    %v1828 = vpop.f32.mrf.mxu0
    %v1829 = vadd.f32 %v1764, %v1828
    %v1830 = vpop.f32.mrf.mxu0
    %1831 = vmatprep.mubr.bf16.mxu0 0
    %1832 = vmatmul.mubr.bf16.gmra.mxu0 %v1045
    %v1833 = vpop.f32.mrf.mxu0
    %v1834 = vadd.f32 %v1769, %v1833
    %v1835 = vpop.f32.mrf.mxu0
    %v1836 = vpop.f32.mrf.mxu0
    %v1837 = vadd.f32 %v1772, %v1836
    %v1838 = vpop.f32.mrf.mxu0
    %1839 = vmatprep.mubr.bf16.mxu0 0
    %1840 = vmatmul.mubr.bf16.gmra.mxu0 %v1054
    %v1841 = vpop.f32.mrf.mxu0
    %v1842 = vadd.f32 %v1777, %v1841
    %v1843 = vpop.f32.mrf.mxu0
    %v1844 = vpop.f32.mrf.mxu0
    %v1845 = vadd.f32 %v1780, %v1844
    %v1846 = vpop.f32.mrf.mxu0
    %1847 = vdwg.mxu0
    %vm1848 = vcmp.ge.f32.partialorder %v1818, 0.0
    %vm1849 = vcmp.ge.f32.partialorder %v1821, 0.0
    %vm1850 = vcmp.ge.f32.partialorder %v1826, 0.0
    %vm1851 = vcmp.ge.f32.partialorder %v1829, 0.0
    %vm1852 = vcmp.ge.f32.partialorder %v1834, 0.0
    %vm1853 = vcmp.ge.f32.partialorder %v1837, 0.0
    %vm1854 = vcmp.ge.f32.partialorder %v1842, 0.0
    %vm1855 = vcmp.ge.f32.partialorder %v1845, 0.0
    %v1856 = vmul.f32 %v1818, 0.1
    %v1857 = vmul.f32 %v1821, 0.1
    %v1858 = vmul.f32 %v1826, 0.1
    %v1859 = vmul.f32 %v1829, 0.1
    %v1860 = vmul.f32 %v1834, 0.1
    %v1861 = vmul.f32 %v1837, 0.1
    %v1862 = vmul.f32 %v1842, 0.1
    %v1863 = vmul.f32 %v1845, 0.1
    %v1864 = vsel %vm1848, %v1818, %v1856
    %v1865 = vsel %vm1849, %v1821, %v1857
    %v1866 = vsel %vm1850, %v1826, %v1858
    %v1867 = vsel %vm1851, %v1829, %v1859
    %v1868 = vsel %vm1852, %v1834, %v1860
    %v1869 = vsel %vm1853, %v1837, %v1861
    %v1870 = vsel %vm1854, %v1842, %v1862
    %v1871 = vsel %vm1855, %v1845, %v1863
    %1872 = vst [vmem:[%s206] sm:$0xff] %v1864
    %1873 = vst [vmem:[%s206 + $0x8] sm:$0xff] %v1865
    %1874 = vst [vmem:[%s206 + $0x10] sm:$0xff] %v1866
    %1875 = vst [vmem:[%s206 + $0x18] sm:$0xff] %v1867
    %1876 = vst [vmem:[%s206 + $0x30] sm:$0xff] %v1868
    %1877 = vst [vmem:[%s206 + $0x38] sm:$0xff] %v1869
    %1878 = vst [vmem:[%s206 + $0x40] sm:$0xff] %v1870
    %1879 = vst [vmem:[%s206 + $0x48] sm:$0xff] %v1871
    %v1880 = vrot.slane %v1864, 7
    %v1881 = vrot.slane %v1865, 7
    %v1882 = vrot.slane %v1866, 7
    %v1883 = vrot.slane %v1867, 7
    %v1884 = vrot.slane %v1868, 7
    %v1885 = vrot.slane %v1869, 7
    %v1886 = vrot.slane %v1870, 7
    %v1887 = vrot.slane %v1871, 7
    %v1888 = vsel %vm223, %v1886, %v1887
    %v1889 = vsel %vm223, %v1885, %v1886
    %v1890 = vsel %vm223, %v1884, %v1885
    %v1891 = vsel %vm223, %v1883, %v1884
    %v1892 = vsel %vm223, %v1882, %v1883
    %v1893 = vsel %vm223, %v1881, %v1882
    %v1894 = vsel %vm223, %v1880, %v1881
    %v1895 = vsel %vm223, %v1887, %v1880
    %v1896 = vsel %vm182, 0.0, %v1895
    %v1897 = vsel %vm183, 0.0, %v1894
    %v1898 = vsel %vm184, 0.0, %v1893
    %v1899 = vsel %vm185, 0.0, %v1892
    %v1900 = vsel %vm186, 0.0, %v1891
    %v1901 = vsel %vm187, 0.0, %v1890
    %v1902 = vsel %vm188, 0.0, %v1889
    %v1903 = vsel %vm189, 0.0, %v1888
    %1904 = vst [vmem:[%s240] sm:$0xff] %v1896
    %1905 = vst [vmem:[%s240 + $0x8] sm:$0xff] %v1897
    %1906 = vst [vmem:[%s240 + $0x10] sm:$0xff] %v1898
    %1907 = vst [vmem:[%s240 + $0x18] sm:$0xff] %v1899
    %1908 = vst [vmem:[%s240 + $0x30] sm:$0xff] %v1900
    %1909 = vst [vmem:[%s240 + $0x38] sm:$0xff] %v1901
    %1910 = vst [vmem:[%s240 + $0x40] sm:$0xff] %v1902
    %1911 = vst [vmem:[%s240 + $0x48] sm:$0xff] %v1903
    %v1912 = vrot.slane %v1864, 1
    %v1913 = vrot.slane %v1865, 1
    %v1914 = vrot.slane %v1866, 1
    %v1915 = vrot.slane %v1867, 1
    %v1916 = vrot.slane %v1868, 1
    %v1917 = vrot.slane %v1869, 1
    %v1918 = vrot.slane %v1870, 1
    %v1919 = vrot.slane %v1871, 1
    %v1920 = vsel %vm257, %v1918, %v1919
    %v1921 = vsel %vm257, %v1917, %v1918
    %v1922 = vsel %vm257, %v1916, %v1917
    %v1923 = vsel %vm257, %v1915, %v1916
    %v1924 = vsel %vm257, %v1914, %v1915
    %v1925 = vsel %vm257, %v1913, %v1914
    %v1926 = vsel %vm257, %v1912, %v1913
    %v1927 = vsel %vm257, %v1919, %v1912
    %v1928 = vsel %vm190, 0.0, %v1926
    %v1929 = vsel %vm191, 0.0, %v1925
    %v1930 = vsel %vm192, 0.0, %v1924
    %v1931 = vsel %vm193, 0.0, %v1923
    %v1932 = vsel %vm194, 0.0, %v1922
    %v1933 = vsel %vm195, 0.0, %v1921
    %v1934 = vsel %vm196, 0.0, %v1920
    %v1935 = vsel %vm197, 0.0, %v1927
    %1936 = vst [vmem:[%s274] sm:$0xff] %v1928
    %1937 = vst [vmem:[%s274 + $0x8] sm:$0xff] %v1929
    %1938 = vst [vmem:[%s274 + $0x10] sm:$0xff] %v1930
    %1939 = vst [vmem:[%s274 + $0x18] sm:$0xff] %v1931
    %1940 = vst [vmem:[%s274 + $0x30] sm:$0xff] %v1932
    %1941 = vst [vmem:[%s274 + $0x38] sm:$0xff] %v1933
    %1942 = vst [vmem:[%s274 + $0x40] sm:$0xff] %v1934
    %1943 = vst [vmem:[%s274 + $0x48] sm:$0xff] %v1935
    %v1944 = vld [vmem:[#allocation2] sm:$0xff]
    %v1945 = vld [vmem:[#allocation2 + $0x8] sm:$0xff]
    %v1946 = vld [vmem:[#allocation2 + $0x10] sm:$0xff]
    %v1947 = vld [vmem:[#allocation2 + $0x18] sm:$0xff]
    %v1948 = vld [vmem:[#allocation2 + $0x30] sm:$0xff]
    %v1949 = vld [vmem:[#allocation2 + $0x38] sm:$0xff]
    %v1950 = vld [vmem:[#allocation2 + $0x40] sm:$0xff]
    %v1951 = vld [vmem:[#allocation2 + $0x48] sm:$0xff]
    %v1952 = vpack.c.bf16 %v1945, %v1944
    %v1953 = vpack.c.bf16 %v1947, %v1946
    %v1954 = vpack.c.bf16 %v1949, %v1948
    %v1955 = vpack.c.bf16 %v1951, %v1950
    %v1960 = vunpack.c.l.b16 %v1952
    %v1961 = vunpack.c.h.b16 %v1952
    %v1962 = vunpack.c.l.b16 %v1953
    %v1963 = vunpack.c.h.b16 %v1953
    %v1964 = vunpack.c.l.b16 %v1954
    %v1965 = vunpack.c.h.b16 %v1954
    %v1966 = vunpack.c.l.b16 %v1955
    %v1967 = vunpack.c.h.b16 %v1955
    %v1968 = vpack.c.b16 %v1960, %v1960
    %v1969 = vpack.c.b16 %v1961, %v1961
    %v1970 = vpack.c.b16 %v1962, %v1962
    %v1971 = vpack.c.b16 %v1963, %v1963
    %v1972 = vpack.c.b16 %v1964, %v1964
    %v1973 = vpack.c.b16 %v1965, %v1965
    %v1974 = vpack.c.b16 %v1966, %v1966
    %v1975 = vpack.c.b16 %v1967, %v1967
    %1984 = vst [vmem:[#allocation5] sm:$0xf] %v1968
    %1985 = vst [vmem:[#allocation5 + $0x24] sm:$0xf] %v1969
    %1986 = vst [vmem:[#allocation5 + $0x48] sm:$0xf] %v1970
    %1987 = vst [vmem:[#allocation5 + $0x6c] sm:$0xf] %v1971
    %1988 = vst [vmem:[#allocation5 + $0x90] sm:$0xf] %v1972
    %1989 = vst [vmem:[#allocation5 + $0xb4] sm:$0xf] %v1973
    %1990 = vst [vmem:[#allocation5 + $0xd8] sm:$0xf] %v1974
    %1991 = vst [vmem:[#allocation5 + $0xfc] sm:$0xf] %v1975
    %v1992 = vld [vmem:[#allocation3] sm:$0xff]
    %v1993 = vld [vmem:[#allocation3 + $0x8] sm:$0xff]
    %v1994 = vld [vmem:[#allocation3 + $0x10] sm:$0xff]
    %v1995 = vld [vmem:[#allocation3 + $0x18] sm:$0xff]
    %v1996 = vld [vmem:[#allocation3 + $0x30] sm:$0xff]
    %v1997 = vld [vmem:[#allocation3 + $0x38] sm:$0xff]
    %v1998 = vld [vmem:[#allocation3 + $0x40] sm:$0xff]
    %v1999 = vld [vmem:[#allocation3 + $0x48] sm:$0xff]
    %v2000 = vpack.c.bf16 %v1993, %v1992
    %v2001 = vpack.c.bf16 %v1995, %v1994
    %v2002 = vpack.c.bf16 %v1997, %v1996
    %v2003 = vpack.c.bf16 %v1999, %v1998
    %v2008 = vunpack.c.l.b16 %v2000
    %v2009 = vunpack.c.h.b16 %v2000
    %v2010 = vunpack.c.l.b16 %v2001
    %v2011 = vunpack.c.h.b16 %v2001
    %v2012 = vunpack.c.l.b16 %v2002
    %v2013 = vunpack.c.h.b16 %v2002
    %v2014 = vunpack.c.l.b16 %v2003
    %v2015 = vunpack.c.h.b16 %v2003
    %v2016 = vpack.c.b16 %v2008, %v2008
    %v2017 = vpack.c.b16 %v2009, %v2009
    %v2018 = vpack.c.b16 %v2010, %v2010
    %v2019 = vpack.c.b16 %v2011, %v2011
    %v2020 = vpack.c.b16 %v2012, %v2012
    %v2021 = vpack.c.b16 %v2013, %v2013
    %v2022 = vpack.c.b16 %v2014, %v2014
    %v2023 = vpack.c.b16 %v2015, %v2015
    %2032 = vst [vmem:[#allocation5 + $0x4] sm:$0xf] %v2016
    %2033 = vst [vmem:[#allocation5 + $0x28] sm:$0xf] %v2017
    %2034 = vst [vmem:[#allocation5 + $0x4c] sm:$0xf] %v2018
    %2035 = vst [vmem:[#allocation5 + $0x70] sm:$0xf] %v2019
    %2036 = vst [vmem:[#allocation5 + $0x94] sm:$0xf] %v2020
    %2037 = vst [vmem:[#allocation5 + $0xb8] sm:$0xf] %v2021
    %2038 = vst [vmem:[#allocation5 + $0xdc] sm:$0xf] %v2022
    %2039 = vst [vmem:[#allocation5 + $0x100] sm:$0xf] %v2023
    %v2040 = vld [vmem:[#allocation4] sm:$0xff]
    %v2041 = vld [vmem:[#allocation4 + $0x8] sm:$0xff]
    %v2042 = vld [vmem:[#allocation4 + $0x10] sm:$0xff]
    %v2043 = vld [vmem:[#allocation4 + $0x18] sm:$0xff]
    %v2044 = vld [vmem:[#allocation4 + $0x30] sm:$0xff]
    %v2045 = vld [vmem:[#allocation4 + $0x38] sm:$0xff]
    %v2046 = vld [vmem:[#allocation4 + $0x40] sm:$0xff]
    %v2047 = vld [vmem:[#allocation4 + $0x48] sm:$0xff]
    %v2048 = vpack.c.bf16 %v2041, %v2040
    %v2049 = vpack.c.bf16 %v2043, %v2042
    %v2050 = vpack.c.bf16 %v2045, %v2044
    %v2051 = vpack.c.bf16 %v2047, %v2046
    %v2056 = vunpack.c.l.b16 %v2048
    %v2057 = vunpack.c.h.b16 %v2048
    %v2058 = vunpack.c.l.b16 %v2049
    %v2059 = vunpack.c.h.b16 %v2049
    %v2060 = vunpack.c.l.b16 %v2050
    %v2061 = vunpack.c.h.b16 %v2050
    %v2062 = vunpack.c.l.b16 %v2051
    %v2063 = vunpack.c.h.b16 %v2051
    %v2064 = vpack.c.b16 %v2056, %v2056
    %v2065 = vpack.c.b16 %v2057, %v2057
    %v2066 = vpack.c.b16 %v2058, %v2058
    %v2067 = vpack.c.b16 %v2059, %v2059
    %v2068 = vpack.c.b16 %v2060, %v2060
    %v2069 = vpack.c.b16 %v2061, %v2061
    %v2070 = vpack.c.b16 %v2062, %v2062
    %v2071 = vpack.c.b16 %v2063, %v2063
    %2080 = vst [vmem:[#allocation5 + $0x8] sm:$0xf] %v2064
    %2081 = vst [vmem:[#allocation5 + $0x2c] sm:$0xf] %v2065
    %2082 = vst [vmem:[#allocation5 + $0x50] sm:$0xf] %v2066
    %2083 = vst [vmem:[#allocation5 + $0x74] sm:$0xf] %v2067
    %2084 = vst [vmem:[#allocation5 + $0x98] sm:$0xf] %v2068
    %2085 = vst [vmem:[#allocation5 + $0xbc] sm:$0xf] %v2069
    %2086 = vst [vmem:[#allocation5 + $0xe0] sm:$0xf] %v2070
    %2087 = vst [vmem:[#allocation5 + $0x104] sm:$0xf] %v2071
    %v2088 = vld [vmem:[%s240] sm:$0xff]
    %v2089 = vld [vmem:[%s240 + $0x8] sm:$0xff]
    %v2090 = vld [vmem:[%s240 + $0x10] sm:$0xff]
    %v2091 = vld [vmem:[%s240 + $0x18] sm:$0xff]
    %v2092 = vld [vmem:[%s240 + $0x30] sm:$0xff]
    %v2093 = vld [vmem:[%s240 + $0x38] sm:$0xff]
    %v2094 = vld [vmem:[%s240 + $0x40] sm:$0xff]
    %v2095 = vld [vmem:[%s240 + $0x48] sm:$0xff]
    %v2096 = vpack.c.bf16 %v2089, %v2088
    %v2097 = vpack.c.bf16 %v2091, %v2090
    %v2098 = vpack.c.bf16 %v2093, %v2092
    %v2099 = vpack.c.bf16 %v2095, %v2094
    %v2104 = vunpack.c.l.b16 %v2096
    %v2105 = vunpack.c.h.b16 %v2096
    %v2106 = vunpack.c.l.b16 %v2097
    %v2107 = vunpack.c.h.b16 %v2097
    %v2108 = vunpack.c.l.b16 %v2098
    %v2109 = vunpack.c.h.b16 %v2098
    %v2110 = vunpack.c.l.b16 %v2099
    %v2111 = vunpack.c.h.b16 %v2099
    %v2112 = vpack.c.b16 %v2104, %v2104
    %v2113 = vpack.c.b16 %v2105, %v2105
    %v2114 = vpack.c.b16 %v2106, %v2106
    %v2115 = vpack.c.b16 %v2107, %v2107
    %v2116 = vpack.c.b16 %v2108, %v2108
    %v2117 = vpack.c.b16 %v2109, %v2109
    %v2118 = vpack.c.b16 %v2110, %v2110
    %v2119 = vpack.c.b16 %v2111, %v2111
    %2128 = vst [vmem:[#allocation5 + $0xc] sm:$0xf] %v2112
    %2129 = vst [vmem:[#allocation5 + $0x30] sm:$0xf] %v2113
    %2130 = vst [vmem:[#allocation5 + $0x54] sm:$0xf] %v2114
    %2131 = vst [vmem:[#allocation5 + $0x78] sm:$0xf] %v2115
    %2132 = vst [vmem:[#allocation5 + $0x9c] sm:$0xf] %v2116
    %2133 = vst [vmem:[#allocation5 + $0xc0] sm:$0xf] %v2117
    %2134 = vst [vmem:[#allocation5 + $0xe4] sm:$0xf] %v2118
    %2135 = vst [vmem:[#allocation5 + $0x108] sm:$0xf] %v2119
    %v2136 = vld [vmem:[%s206] sm:$0xff]
    %v2137 = vld [vmem:[%s206 + $0x8] sm:$0xff]
    %v2138 = vld [vmem:[%s206 + $0x10] sm:$0xff]
    %v2139 = vld [vmem:[%s206 + $0x18] sm:$0xff]
    %v2140 = vld [vmem:[%s206 + $0x30] sm:$0xff]
    %v2141 = vld [vmem:[%s206 + $0x38] sm:$0xff]
    %v2142 = vld [vmem:[%s206 + $0x40] sm:$0xff]
    %v2143 = vld [vmem:[%s206 + $0x48] sm:$0xff]
    %v2144 = vpack.c.bf16 %v2137, %v2136
    %v2145 = vpack.c.bf16 %v2139, %v2138
    %v2146 = vpack.c.bf16 %v2141, %v2140
    %v2147 = vpack.c.bf16 %v2143, %v2142
    %v2152 = vunpack.c.l.b16 %v2144
    %v2153 = vunpack.c.h.b16 %v2144
    %v2154 = vunpack.c.l.b16 %v2145
    %v2155 = vunpack.c.h.b16 %v2145
    %v2156 = vunpack.c.l.b16 %v2146
    %v2157 = vunpack.c.h.b16 %v2146
    %v2158 = vunpack.c.l.b16 %v2147
    %v2159 = vunpack.c.h.b16 %v2147
    %v2160 = vpack.c.b16 %v2152, %v2152
    %v2161 = vpack.c.b16 %v2153, %v2153
    %v2162 = vpack.c.b16 %v2154, %v2154
    %v2163 = vpack.c.b16 %v2155, %v2155
    %v2164 = vpack.c.b16 %v2156, %v2156
    %v2165 = vpack.c.b16 %v2157, %v2157
    %v2166 = vpack.c.b16 %v2158, %v2158
    %v2167 = vpack.c.b16 %v2159, %v2159
    %2176 = vst [vmem:[#allocation5 + $0x10] sm:$0xf] %v2160
    %2177 = vst [vmem:[#allocation5 + $0x34] sm:$0xf] %v2161
    %2178 = vst [vmem:[#allocation5 + $0x58] sm:$0xf] %v2162
    %2179 = vst [vmem:[#allocation5 + $0x7c] sm:$0xf] %v2163
    %2180 = vst [vmem:[#allocation5 + $0xa0] sm:$0xf] %v2164
    %2181 = vst [vmem:[#allocation5 + $0xc4] sm:$0xf] %v2165
    %2182 = vst [vmem:[#allocation5 + $0xe8] sm:$0xf] %v2166
    %2183 = vst [vmem:[#allocation5 + $0x10c] sm:$0xf] %v2167
    %v2184 = vld [vmem:[%s274] sm:$0xff]
    %v2185 = vld [vmem:[%s274 + $0x8] sm:$0xff]
    %v2186 = vld [vmem:[%s274 + $0x10] sm:$0xff]
    %v2187 = vld [vmem:[%s274 + $0x18] sm:$0xff]
    %v2188 = vld [vmem:[%s274 + $0x30] sm:$0xff]
    %v2189 = vld [vmem:[%s274 + $0x38] sm:$0xff]
    %v2190 = vld [vmem:[%s274 + $0x40] sm:$0xff]
    %v2191 = vld [vmem:[%s274 + $0x48] sm:$0xff]
    %v2192 = vpack.c.bf16 %v2185, %v2184
    %v2193 = vpack.c.bf16 %v2187, %v2186
    %v2194 = vpack.c.bf16 %v2189, %v2188
    %v2195 = vpack.c.bf16 %v2191, %v2190
    %v2200 = vunpack.c.l.b16 %v2192
    %v2201 = vunpack.c.h.b16 %v2192
    %v2202 = vunpack.c.l.b16 %v2193
    %v2203 = vunpack.c.h.b16 %v2193
    %v2204 = vunpack.c.l.b16 %v2194
    %v2205 = vunpack.c.h.b16 %v2194
    %v2206 = vunpack.c.l.b16 %v2195
    %v2207 = vunpack.c.h.b16 %v2195
    %v2208 = vpack.c.b16 %v2200, %v2200
    %v2209 = vpack.c.b16 %v2201, %v2201
    %v2210 = vpack.c.b16 %v2202, %v2202
    %v2211 = vpack.c.b16 %v2203, %v2203
    %v2212 = vpack.c.b16 %v2204, %v2204
    %v2213 = vpack.c.b16 %v2205, %v2205
    %v2214 = vpack.c.b16 %v2206, %v2206
    %v2215 = vpack.c.b16 %v2207, %v2207
    %2224 = vst [vmem:[#allocation5 + $0x14] sm:$0xf] %v2208
    %2225 = vst [vmem:[#allocation5 + $0x38] sm:$0xf] %v2209
    %2226 = vst [vmem:[#allocation5 + $0x5c] sm:$0xf] %v2210
    %2227 = vst [vmem:[#allocation5 + $0x80] sm:$0xf] %v2211
    %2228 = vst [vmem:[#allocation5 + $0xa4] sm:$0xf] %v2212
    %2229 = vst [vmem:[#allocation5 + $0xc8] sm:$0xf] %v2213
    %2230 = vst [vmem:[#allocation5 + $0xec] sm:$0xf] %v2214
    %2231 = vst [vmem:[#allocation5 + $0x110] sm:$0xf] %v2215
    %v2232 = vld [vmem:[%s571] sm:$0xff]
    %v2233 = vld [vmem:[%s571 + $0x8] sm:$0xff]
    %v2234 = vld [vmem:[%s571 + $0x10] sm:$0xff]
    %v2235 = vld [vmem:[%s571 + $0x18] sm:$0xff]
    %v2236 = vld [vmem:[%s571 + $0x30] sm:$0xff]
    %v2237 = vld [vmem:[%s571 + $0x38] sm:$0xff]
    %v2238 = vld [vmem:[%s571 + $0x40] sm:$0xff]
    %v2239 = vld [vmem:[%s571 + $0x48] sm:$0xff]
    %v2240 = vpack.c.bf16 %v2233, %v2232
    %v2241 = vpack.c.bf16 %v2235, %v2234
    %v2242 = vpack.c.bf16 %v2237, %v2236
    %v2243 = vpack.c.bf16 %v2239, %v2238
    %v2248 = vunpack.c.l.b16 %v2240
    %v2249 = vunpack.c.h.b16 %v2240
    %v2250 = vunpack.c.l.b16 %v2241
    %v2251 = vunpack.c.h.b16 %v2241
    %v2252 = vunpack.c.l.b16 %v2242
    %v2253 = vunpack.c.h.b16 %v2242
    %v2254 = vunpack.c.l.b16 %v2243
    %v2255 = vunpack.c.h.b16 %v2243
    %v2256 = vpack.c.b16 %v2248, %v2248
    %v2257 = vpack.c.b16 %v2249, %v2249
    %v2258 = vpack.c.b16 %v2250, %v2250
    %v2259 = vpack.c.b16 %v2251, %v2251
    %v2260 = vpack.c.b16 %v2252, %v2252
    %v2261 = vpack.c.b16 %v2253, %v2253
    %v2262 = vpack.c.b16 %v2254, %v2254
    %v2263 = vpack.c.b16 %v2255, %v2255
    %2272 = vst [vmem:[#allocation5 + $0x18] sm:$0xf] %v2256
    %2273 = vst [vmem:[#allocation5 + $0x3c] sm:$0xf] %v2257
    %2274 = vst [vmem:[#allocation5 + $0x60] sm:$0xf] %v2258
    %2275 = vst [vmem:[#allocation5 + $0x84] sm:$0xf] %v2259
    %2276 = vst [vmem:[#allocation5 + $0xa8] sm:$0xf] %v2260
    %2277 = vst [vmem:[#allocation5 + $0xcc] sm:$0xf] %v2261
    %2278 = vst [vmem:[#allocation5 + $0xf0] sm:$0xf] %v2262
    %2279 = vst [vmem:[#allocation5 + $0x114] sm:$0xf] %v2263
    %v2280 = vld [vmem:[%s620] sm:$0xff]
    %v2281 = vld [vmem:[%s620 + $0x8] sm:$0xff]
    %v2282 = vld [vmem:[%s620 + $0x10] sm:$0xff]
    %v2283 = vld [vmem:[%s620 + $0x18] sm:$0xff]
    %v2284 = vld [vmem:[%s620 + $0x30] sm:$0xff]
    %v2285 = vld [vmem:[%s620 + $0x38] sm:$0xff]
    %v2286 = vld [vmem:[%s620 + $0x40] sm:$0xff]
    %v2287 = vld [vmem:[%s620 + $0x48] sm:$0xff]
    %v2288 = vpack.c.bf16 %v2281, %v2280
    %v2289 = vpack.c.bf16 %v2283, %v2282
    %v2290 = vpack.c.bf16 %v2285, %v2284
    %v2291 = vpack.c.bf16 %v2287, %v2286
    %v2296 = vunpack.c.l.b16 %v2288
    %v2297 = vunpack.c.h.b16 %v2288
    %v2298 = vunpack.c.l.b16 %v2289
    %v2299 = vunpack.c.h.b16 %v2289
    %v2300 = vunpack.c.l.b16 %v2290
    %v2301 = vunpack.c.h.b16 %v2290
    %v2302 = vunpack.c.l.b16 %v2291
    %v2303 = vunpack.c.h.b16 %v2291
    %v2304 = vpack.c.b16 %v2296, %v2296
    %v2305 = vpack.c.b16 %v2297, %v2297
    %v2306 = vpack.c.b16 %v2298, %v2298
    %v2307 = vpack.c.b16 %v2299, %v2299
    %v2308 = vpack.c.b16 %v2300, %v2300
    %v2309 = vpack.c.b16 %v2301, %v2301
    %v2310 = vpack.c.b16 %v2302, %v2302
    %v2311 = vpack.c.b16 %v2303, %v2303
    %2320 = vst [vmem:[#allocation5 + $0x1c] sm:$0xf] %v2304
    %2321 = vst [vmem:[#allocation5 + $0x40] sm:$0xf] %v2305
    %2322 = vst [vmem:[#allocation5 + $0x64] sm:$0xf] %v2306
    %2323 = vst [vmem:[#allocation5 + $0x88] sm:$0xf] %v2307
    %2324 = vst [vmem:[#allocation5 + $0xac] sm:$0xf] %v2308
    %2325 = vst [vmem:[#allocation5 + $0xd0] sm:$0xf] %v2309
    %2326 = vst [vmem:[#allocation5 + $0xf4] sm:$0xf] %v2310
    %2327 = vst [vmem:[#allocation5 + $0x118] sm:$0xf] %v2311
    %v2328 = vld [vmem:[%s669] sm:$0xff]
    %v2329 = vld [vmem:[%s669 + $0x8] sm:$0xff]
    %v2330 = vld [vmem:[%s669 + $0x10] sm:$0xff]
    %v2331 = vld [vmem:[%s669 + $0x18] sm:$0xff]
    %v2332 = vld [vmem:[%s669 + $0x30] sm:$0xff]
    %v2333 = vld [vmem:[%s669 + $0x38] sm:$0xff]
    %v2334 = vld [vmem:[%s669 + $0x40] sm:$0xff]
    %v2335 = vld [vmem:[%s669 + $0x48] sm:$0xff]
    %v2336 = vpack.c.bf16 %v2329, %v2328
    %v2337 = vpack.c.bf16 %v2331, %v2330
    %v2338 = vpack.c.bf16 %v2333, %v2332
    %v2339 = vpack.c.bf16 %v2335, %v2334
    %v2344 = vunpack.c.l.b16 %v2336
    %v2345 = vunpack.c.h.b16 %v2336
    %v2346 = vunpack.c.l.b16 %v2337
    %v2347 = vunpack.c.h.b16 %v2337
    %v2348 = vunpack.c.l.b16 %v2338
    %v2349 = vunpack.c.h.b16 %v2338
    %v2350 = vunpack.c.l.b16 %v2339
    %v2351 = vunpack.c.h.b16 %v2339
    %v2352 = vpack.c.b16 %v2344, %v2344
    %v2353 = vpack.c.b16 %v2345, %v2345
    %v2354 = vpack.c.b16 %v2346, %v2346
    %v2355 = vpack.c.b16 %v2347, %v2347
    %v2356 = vpack.c.b16 %v2348, %v2348
    %v2357 = vpack.c.b16 %v2349, %v2349
    %v2358 = vpack.c.b16 %v2350, %v2350
    %v2359 = vpack.c.b16 %v2351, %v2351
    %2368 = vst [vmem:[#allocation5 + $0x20] sm:$0xf] %v2352
    %2369 = vst [vmem:[#allocation5 + $0x44] sm:$0xf] %v2353
    %2370 = vst [vmem:[#allocation5 + $0x68] sm:$0xf] %v2354
    %2371 = vst [vmem:[#allocation5 + $0x8c] sm:$0xf] %v2355
    %2372 = vst [vmem:[#allocation5 + $0xb0] sm:$0xf] %v2356
    %2373 = vst [vmem:[#allocation5 + $0xd4] sm:$0xf] %v2357
    %2374 = vst [vmem:[#allocation5 + $0xf8] sm:$0xf] %v2358
    %2375 = vst [vmem:[#allocation5 + $0x11c] sm:$0xf] %v2359
    %v2376 = vld [vmem:[#allocation5] sm:$0xff]
    %v2377 = vld [vmem:[#allocation5 + $0x8] sm:$0xff]
    %v2378 = vld [vmem:[#allocation5 + $0x10] sm:$0xff]
    %v2379 = vld [vmem:[#allocation5 + $0x18] sm:$0xff]
    %v2380 = vld [vmem:[#allocation5 + $0x20] sm:$0xf]
    %v2381 = vld [vmem:[#allocation5 + $0x24] sm:$0xff]
    %v2382 = vld [vmem:[#allocation5 + $0x2c] sm:$0xff]
    %v2383 = vld [vmem:[#allocation5 + $0x34] sm:$0xff]
    %v2384 = vld [vmem:[#allocation5 + $0x3c] sm:$0xff]
    %v2385 = vld [vmem:[#allocation5 + $0x44] sm:$0xf]
    %v2386 = vld [vmem:[#allocation5 + $0x48] sm:$0xff]
    %v2387 = vld [vmem:[#allocation5 + $0x50] sm:$0xff]
    %v2388 = vld [vmem:[#allocation5 + $0x58] sm:$0xff]
    %v2389 = vld [vmem:[#allocation5 + $0x60] sm:$0xff]
    %v2390 = vld [vmem:[#allocation5 + $0x68] sm:$0xf]
    %v2391 = vld [vmem:[#allocation5 + $0x6c] sm:$0xff]
    %v2392 = vld [vmem:[#allocation5 + $0x74] sm:$0xff]
    %v2393 = vld [vmem:[#allocation5 + $0x7c] sm:$0xff]
    %v2394 = vld [vmem:[#allocation5 + $0x84] sm:$0xff]
    %v2395 = vld [vmem:[#allocation5 + $0x8c] sm:$0xf]
    %v2396 = vld [vmem:[#allocation5 + $0x90] sm:$0xff]
    %v2397 = vld [vmem:[#allocation5 + $0x98] sm:$0xff]
    %v2398 = vld [vmem:[#allocation5 + $0xa0] sm:$0xff]
    %v2399 = vld [vmem:[#allocation5 + $0xa8] sm:$0xff]
    %v2400 = vld [vmem:[#allocation5 + $0xb0] sm:$0xf]
    %v2401 = vld [vmem:[#allocation5 + $0xb4] sm:$0xff]
    %v2402 = vld [vmem:[#allocation5 + $0xbc] sm:$0xff]
    %v2403 = vld [vmem:[#allocation5 + $0xc4] sm:$0xff]
    %v2404 = vld [vmem:[#allocation5 + $0xcc] sm:$0xff]
    %v2405 = vld [vmem:[#allocation5 + $0xd4] sm:$0xf]
    %v2406 = vld [vmem:[#allocation5 + $0xd8] sm:$0xff]
    %v2407 = vld [vmem:[#allocation5 + $0xe0] sm:$0xff]
    %v2408 = vld [vmem:[#allocation5 + $0xe8] sm:$0xff]
    %v2409 = vld [vmem:[#allocation5 + $0xf0] sm:$0xff]
    %v2410 = vld [vmem:[#allocation5 + $0xf8] sm:$0xf]
    %v2411 = vld [vmem:[#allocation5 + $0xfc] sm:$0xff]
    %v2412 = vld [vmem:[#allocation5 + $0x104] sm:$0xff]
    %v2413 = vld [vmem:[#allocation5 + $0x10c] sm:$0xff]
    %v2414 = vld [vmem:[#allocation5 + $0x114] sm:$0xff]
    %v2415 = vld [vmem:[#allocation5 + $0x11c] sm:$0xf]
    %s2416 = scalar_lea.vmem [#allocation6], 576
    %v2417 = vld [vmem:[%s2416] sm:$0xf]
    %v2418 = vld [vmem:[%s2416 + $0x4] sm:$0xf]
    %v2419 = vld [vmem:[%s2416 + $0x8] sm:$0xf]
    %v2420 = vld [vmem:[%s2416 + $0xc] sm:$0xf]
    %v2421 = vld [vmem:[%s2416 + $0x10] sm:$0xf]
    %v2422 = vld [vmem:[%s2416 + $0x14] sm:$0xf]
    %v2423 = vld [vmem:[%s2416 + $0x18] sm:$0xf]
    %v2424 = vld [vmem:[%s2416 + $0x1c] sm:$0xf]
    %v2425 = vld [vmem:[%s2416 + $0x20] sm:$0xf]
    %v2426 = vld [vmem:[%s2416 + $0x24] sm:$0xf]
    %v2427 = vld [vmem:[%s2416 + $0x28] sm:$0xf]
    %v2428 = vld [vmem:[%s2416 + $0x2c] sm:$0xf]
    %v2429 = vld [vmem:[%s2416 + $0x30] sm:$0xf]
    %v2430 = vld [vmem:[%s2416 + $0x34] sm:$0xf]
    %v2431 = vld [vmem:[%s2416 + $0x38] sm:$0xf]
    %v2432 = vld [vmem:[%s2416 + $0x3c] sm:$0xf]
    %v2433 = vld [vmem:[%s2416 + $0x40] sm:$0xf]
    %v2434 = vld [vmem:[%s2416 + $0x44] sm:$0xf]
    %v2435 = vld [vmem:[%s2416 + $0x48] sm:$0xf]
    %v2436 = vld [vmem:[%s2416 + $0x4c] sm:$0xf]
    %v2437 = vld [vmem:[%s2416 + $0x50] sm:$0xf]
    %v2438 = vld [vmem:[%s2416 + $0x54] sm:$0xf]
    %v2439 = vld [vmem:[%s2416 + $0x58] sm:$0xf]
    %v2440 = vld [vmem:[%s2416 + $0x5c] sm:$0xf]
    %v2441 = vld [vmem:[%s2416 + $0x60] sm:$0xf]
    %v2442 = vld [vmem:[%s2416 + $0x64] sm:$0xf]
    %v2443 = vld [vmem:[%s2416 + $0x68] sm:$0xf]
    %v2444 = vld [vmem:[%s2416 + $0x6c] sm:$0xf]
    %v2445 = vld [vmem:[%s2416 + $0x70] sm:$0xf]
    %v2446 = vld [vmem:[%s2416 + $0x74] sm:$0xf]
    %v2447 = vld [vmem:[%s2416 + $0x78] sm:$0xf]
    %v2448 = vld [vmem:[%s2416 + $0x7c] sm:$0xf]
    %v2449 = vld [vmem:[%s2416 + $0x80] sm:$0xf]
    %v2450 = vld [vmem:[%s2416 + $0x84] sm:$0xf]
    %v2451 = vld [vmem:[%s2416 + $0x88] sm:$0xf]
    %v2452 = vld [vmem:[%s2416 + $0x8c] sm:$0xf]
    %v2453 = vld [vmem:[%s2416 + $0x90] sm:$0xf]
    %v2454 = vld [vmem:[%s2416 + $0x94] sm:$0xf]
    %v2455 = vld [vmem:[%s2416 + $0x98] sm:$0xf]
    %v2456 = vld [vmem:[%s2416 + $0x9c] sm:$0xf]
    %v2457 = vld [vmem:[%s2416 + $0xa0] sm:$0xf]
    %v2458 = vld [vmem:[%s2416 + $0xa4] sm:$0xf]
    %v2459 = vld [vmem:[%s2416 + $0xa8] sm:$0xf]
    %v2460 = vld [vmem:[%s2416 + $0xac] sm:$0xf]
    %v2461 = vld [vmem:[%s2416 + $0xb0] sm:$0xf]
    %v2462 = vld [vmem:[%s2416 + $0xb4] sm:$0xf]
    %v2463 = vld [vmem:[%s2416 + $0xb8] sm:$0xf]
    %v2464 = vld [vmem:[%s2416 + $0xbc] sm:$0xf]
    %v2465 = vld [vmem:[%s2416 + $0xc0] sm:$0xf]
    %v2466 = vld [vmem:[%s2416 + $0xc4] sm:$0xf]
    %v2467 = vld [vmem:[%s2416 + $0xc8] sm:$0xf]
    %v2468 = vld [vmem:[%s2416 + $0xcc] sm:$0xf]
    %v2469 = vld [vmem:[%s2416 + $0xd0] sm:$0xf]
    %v2470 = vld [vmem:[%s2416 + $0xd4] sm:$0xf]
    %v2471 = vld [vmem:[%s2416 + $0xd8] sm:$0xf]
    %v2472 = vld [vmem:[%s2416 + $0xdc] sm:$0xf]
    %v2473 = vld [vmem:[%s2416 + $0xe0] sm:$0xf]
    %v2474 = vld [vmem:[%s2416 + $0xe4] sm:$0xf]
    %v2475 = vld [vmem:[%s2416 + $0xe8] sm:$0xf]
    %v2476 = vld [vmem:[%s2416 + $0xec] sm:$0xf]
    %v2477 = vld [vmem:[%s2416 + $0xf0] sm:$0xf]
    %v2478 = vld [vmem:[%s2416 + $0xf4] sm:$0xf]
    %v2479 = vld [vmem:[%s2416 + $0xf8] sm:$0xf]
    %v2480 = vld [vmem:[%s2416 + $0xfc] sm:$0xf]
    %v2481 = vld [vmem:[%s2416 + $0x100] sm:$0xf]
    %v2482 = vld [vmem:[%s2416 + $0x104] sm:$0xf]
    %v2483 = vld [vmem:[%s2416 + $0x108] sm:$0xf]
    %v2484 = vld [vmem:[%s2416 + $0x10c] sm:$0xf]
    %v2485 = vld [vmem:[%s2416 + $0x110] sm:$0xf]
    %v2486 = vld [vmem:[%s2416 + $0x114] sm:$0xf]
    %v2487 = vld [vmem:[%s2416 + $0x118] sm:$0xf]
    %v2488 = vld [vmem:[%s2416 + $0x11c] sm:$0xf]
    %v2489 = vld [vmem:[%s2416 + $0x120] sm:$0xf]
    %v2490 = vld [vmem:[%s2416 + $0x124] sm:$0xf]
    %v2491 = vld [vmem:[%s2416 + $0x128] sm:$0xf]
    %v2492 = vld [vmem:[%s2416 + $0x12c] sm:$0xf]
    %v2493 = vld [vmem:[%s2416 + $0x130] sm:$0xf]
    %v2494 = vld [vmem:[%s2416 + $0x134] sm:$0xf]
    %v2495 = vld [vmem:[%s2416 + $0x138] sm:$0xf]
    %v2496 = vld [vmem:[%s2416 + $0x13c] sm:$0xf]
    %v2497 = vld [vmem:[%s2416 + $0x140] sm:$0xf]
    %v2498 = vld [vmem:[%s2416 + $0x144] sm:$0xf]
    %v2499 = vld [vmem:[%s2416 + $0x148] sm:$0xf]
    %v2500 = vld [vmem:[%s2416 + $0x14c] sm:$0xf]
    %v2501 = vld [vmem:[%s2416 + $0x150] sm:$0xf]
    %v2502 = vld [vmem:[%s2416 + $0x154] sm:$0xf]
    %v2503 = vld [vmem:[%s2416 + $0x158] sm:$0xf]
    %v2504 = vld [vmem:[%s2416 + $0x15c] sm:$0xf]
    %v2505 = vld [vmem:[%s2416 + $0x160] sm:$0xf]
    %v2506 = vld [vmem:[%s2416 + $0x164] sm:$0xf]
    %v2507 = vld [vmem:[%s2416 + $0x168] sm:$0xf]
    %v2508 = vld [vmem:[%s2416 + $0x16c] sm:$0xf]
    %v2509 = vld [vmem:[%s2416 + $0x170] sm:$0xf]
    %v2510 = vld [vmem:[%s2416 + $0x174] sm:$0xf]
    %v2511 = vld [vmem:[%s2416 + $0x178] sm:$0xf]
    %v2512 = vld [vmem:[%s2416 + $0x17c] sm:$0xf]
    %v2513 = vld [vmem:[%s2416 + $0x180] sm:$0xf]
    %v2514 = vld [vmem:[%s2416 + $0x184] sm:$0xf]
    %v2515 = vld [vmem:[%s2416 + $0x188] sm:$0xf]
    %v2516 = vld [vmem:[%s2416 + $0x18c] sm:$0xf]
    %v2517 = vld [vmem:[%s2416 + $0x190] sm:$0xf]
    %v2518 = vld [vmem:[%s2416 + $0x194] sm:$0xf]
    %v2519 = vld [vmem:[%s2416 + $0x198] sm:$0xf]
    %v2520 = vld [vmem:[%s2416 + $0x19c] sm:$0xf]
    %v2521 = vld [vmem:[%s2416 + $0x1a0] sm:$0xf]
    %v2522 = vld [vmem:[%s2416 + $0x1a4] sm:$0xf]
    %v2523 = vld [vmem:[%s2416 + $0x1a8] sm:$0xf]
    %v2524 = vld [vmem:[%s2416 + $0x1ac] sm:$0xf]
    %v2525 = vld [vmem:[%s2416 + $0x1b0] sm:$0xf]
    %v2526 = vld [vmem:[%s2416 + $0x1b4] sm:$0xf]
    %v2527 = vld [vmem:[%s2416 + $0x1b8] sm:$0xf]
    %v2528 = vld [vmem:[%s2416 + $0x1bc] sm:$0xf]
    %v2529 = vld [vmem:[%s2416 + $0x1c0] sm:$0xf]
    %v2530 = vld [vmem:[%s2416 + $0x1c4] sm:$0xf]
    %v2531 = vld [vmem:[%s2416 + $0x1c8] sm:$0xf]
    %v2532 = vld [vmem:[%s2416 + $0x1cc] sm:$0xf]
    %v2533 = vld [vmem:[%s2416 + $0x1d0] sm:$0xf]
    %v2534 = vld [vmem:[%s2416 + $0x1d4] sm:$0xf]
    %v2535 = vld [vmem:[%s2416 + $0x1d8] sm:$0xf]
    %v2536 = vld [vmem:[%s2416 + $0x1dc] sm:$0xf]
    %v2537 = vld [vmem:[%s2416 + $0x1e0] sm:$0xf]
    %v2538 = vld [vmem:[%s2416 + $0x1e4] sm:$0xf]
    %v2539 = vld [vmem:[%s2416 + $0x1e8] sm:$0xf]
    %v2540 = vld [vmem:[%s2416 + $0x1ec] sm:$0xf]
    %v2541 = vld [vmem:[%s2416 + $0x1f0] sm:$0xf]
    %v2542 = vld [vmem:[%s2416 + $0x1f4] sm:$0xf]
    %v2543 = vld [vmem:[%s2416 + $0x1f8] sm:$0xf]
    %v2544 = vld [vmem:[%s2416 + $0x1fc] sm:$0xf]
    %v2545 = vld [vmem:[%s2416 + $0x200] sm:$0xf]
    %v2546 = vld [vmem:[%s2416 + $0x204] sm:$0xf]
    %v2547 = vld [vmem:[%s2416 + $0x208] sm:$0xf]
    %v2548 = vld [vmem:[%s2416 + $0x20c] sm:$0xf]
    %v2549 = vld [vmem:[%s2416 + $0x210] sm:$0xf]
    %v2550 = vld [vmem:[%s2416 + $0x214] sm:$0xf]
    %v2551 = vld [vmem:[%s2416 + $0x218] sm:$0xf]
    %v2552 = vld [vmem:[%s2416 + $0x21c] sm:$0xf]
    %v2553 = vld [vmem:[%s2416 + $0x220] sm:$0xf]
    %v2554 = vld [vmem:[%s2416 + $0x224] sm:$0xf]
    %v2555 = vld [vmem:[%s2416 + $0x228] sm:$0xf]
    %v2556 = vld [vmem:[%s2416 + $0x22c] sm:$0xf]
    %v2557 = vld [vmem:[%s2416 + $0x230] sm:$0xf]
    %v2558 = vld [vmem:[%s2416 + $0x234] sm:$0xf]
    %v2559 = vld [vmem:[%s2416 + $0x238] sm:$0xf]
    %v2560 = vld [vmem:[%s2416 + $0x23c] sm:$0xf]
    %v2561 = vld [vmem:[#allocation8 + $0x1] sm:$0x1]
    %v2562 = vlaneseq
    %v2563 = vshrl.u32 %v2562, 7
    %v2564 = vsub.s32 0, %v2563
    %v2565 = vrot.slane %v2561, %v2564
    %v2606 = vunpack.c.l.b16 %v2376
    %v2607 = vunpack.c.h.b16 %v2376
    %v2608 = vunpack.c.l.b16 %v2377
    %v2609 = vunpack.c.h.b16 %v2377
    %v2610 = vunpack.c.l.b16 %v2378
    %v2611 = vunpack.c.h.b16 %v2378
    %v2612 = vunpack.c.l.b16 %v2379
    %v2613 = vunpack.c.h.b16 %v2379
    %v2614 = vunpack.c.l.b16 %v2380
    %v2615 = vunpack.c.l.b16 %v2381
    %v2616 = vunpack.c.h.b16 %v2381
    %v2617 = vunpack.c.l.b16 %v2382
    %v2618 = vunpack.c.h.b16 %v2382
    %v2619 = vunpack.c.l.b16 %v2383
    %v2620 = vunpack.c.h.b16 %v2383
    %v2621 = vunpack.c.l.b16 %v2384
    %v2622 = vunpack.c.h.b16 %v2384
    %v2623 = vunpack.c.l.b16 %v2385
    %v2624 = vunpack.c.l.b16 %v2386
    %v2625 = vunpack.c.h.b16 %v2386
    %v2626 = vunpack.c.l.b16 %v2387
    %v2627 = vunpack.c.h.b16 %v2387
    %v2628 = vunpack.c.l.b16 %v2388
    %v2629 = vunpack.c.h.b16 %v2388
    %v2630 = vunpack.c.l.b16 %v2389
    %v2631 = vunpack.c.h.b16 %v2389
    %v2632 = vunpack.c.l.b16 %v2390
    %v2633 = vunpack.c.l.b16 %v2391
    %v2634 = vunpack.c.h.b16 %v2391
    %v2635 = vunpack.c.l.b16 %v2392
    %v2636 = vunpack.c.h.b16 %v2392
    %v2637 = vunpack.c.l.b16 %v2393
    %v2638 = vunpack.c.h.b16 %v2393
    %v2639 = vunpack.c.l.b16 %v2394
    %v2640 = vunpack.c.h.b16 %v2394
    %v2641 = vunpack.c.l.b16 %v2395
    %v2642 = vunpack.c.l.b16 %v2396
    %v2643 = vunpack.c.h.b16 %v2396
    %v2644 = vunpack.c.l.b16 %v2397
    %v2645 = vunpack.c.h.b16 %v2397
    %v2646 = vunpack.c.l.b16 %v2398
    %v2647 = vunpack.c.h.b16 %v2398
    %v2648 = vunpack.c.l.b16 %v2399
    %v2649 = vunpack.c.h.b16 %v2399
    %v2650 = vunpack.c.l.b16 %v2400
    %v2651 = vunpack.c.l.b16 %v2401
    %v2652 = vunpack.c.h.b16 %v2401
    %v2653 = vunpack.c.l.b16 %v2402
    %v2654 = vunpack.c.h.b16 %v2402
    %v2655 = vunpack.c.l.b16 %v2403
    %v2656 = vunpack.c.h.b16 %v2403
    %v2657 = vunpack.c.l.b16 %v2404
    %v2658 = vunpack.c.h.b16 %v2404
    %v2659 = vunpack.c.l.b16 %v2405
    %v2660 = vunpack.c.l.b16 %v2406
    %v2661 = vunpack.c.h.b16 %v2406
    %v2662 = vunpack.c.l.b16 %v2407
    %v2663 = vunpack.c.h.b16 %v2407
    %v2664 = vunpack.c.l.b16 %v2408
    %v2665 = vunpack.c.h.b16 %v2408
    %v2666 = vunpack.c.l.b16 %v2409
    %v2667 = vunpack.c.h.b16 %v2409
    %v2668 = vunpack.c.l.b16 %v2410
    %v2669 = vunpack.c.l.b16 %v2411
    %v2670 = vunpack.c.h.b16 %v2411
    %v2671 = vunpack.c.l.b16 %v2412
    %v2672 = vunpack.c.h.b16 %v2412
    %v2673 = vunpack.c.l.b16 %v2413
    %v2674 = vunpack.c.h.b16 %v2413
    %v2675 = vunpack.c.l.b16 %v2414
    %v2676 = vunpack.c.h.b16 %v2414
    %v2677 = vunpack.c.l.b16 %v2415
    %v2678 = vpack.c.b16 %v2615, %v2606
    %v2679 = vpack.c.b16 %v2616, %v2607
    %v2680 = vpack.c.b16 %v2617, %v2608
    %v2681 = vpack.c.b16 %v2618, %v2609
    %v2682 = vpack.c.b16 %v2619, %v2610
    %v2683 = vpack.c.b16 %v2620, %v2611
    %v2684 = vpack.c.b16 %v2621, %v2612
    %v2685 = vpack.c.b16 %v2622, %v2613
    %v2686 = vpack.c.b16 %v2623, %v2614
    %v2687 = vpack.c.b16 %v2633, %v2624
    %v2688 = vpack.c.b16 %v2634, %v2625
    %v2689 = vpack.c.b16 %v2635, %v2626
    %v2690 = vpack.c.b16 %v2636, %v2627
    %v2691 = vpack.c.b16 %v2637, %v2628
    %v2692 = vpack.c.b16 %v2638, %v2629
    %v2693 = vpack.c.b16 %v2639, %v2630
    %v2694 = vpack.c.b16 %v2640, %v2631
    %v2695 = vpack.c.b16 %v2641, %v2632
    %v2696 = vpack.c.b16 %v2651, %v2642
    %v2697 = vpack.c.b16 %v2652, %v2643
    %v2698 = vpack.c.b16 %v2653, %v2644
    %v2699 = vpack.c.b16 %v2654, %v2645
    %v2700 = vpack.c.b16 %v2655, %v2646
    %v2701 = vpack.c.b16 %v2656, %v2647
    %v2702 = vpack.c.b16 %v2657, %v2648
    %v2703 = vpack.c.b16 %v2658, %v2649
    %v2704 = vpack.c.b16 %v2659, %v2650
    %v2705 = vpack.c.b16 %v2669, %v2660
    %v2706 = vpack.c.b16 %v2670, %v2661
    %v2707 = vpack.c.b16 %v2671, %v2662
    %v2708 = vpack.c.b16 %v2672, %v2663
    %v2709 = vpack.c.b16 %v2673, %v2664
    %v2710 = vpack.c.b16 %v2674, %v2665
    %v2711 = vpack.c.b16 %v2675, %v2666
    %v2712 = vpack.c.b16 %v2676, %v2667
    %v2713 = vpack.c.b16 %v2677, %v2668
    %v2894 = vunpack.c.l.b16 %v2417
    %v2895 = vunpack.c.l.b16 %v2418
    %v2896 = vunpack.c.l.b16 %v2419
    %v2897 = vunpack.c.l.b16 %v2420
    %v2898 = vunpack.c.l.b16 %v2421
    %v2899 = vunpack.c.l.b16 %v2422
    %v2900 = vunpack.c.l.b16 %v2423
    %v2901 = vunpack.c.l.b16 %v2424
    %v2902 = vunpack.c.l.b16 %v2425
    %v2903 = vunpack.c.l.b16 %v2426
    %v2904 = vunpack.c.l.b16 %v2427
    %v2905 = vunpack.c.l.b16 %v2428
    %v2906 = vunpack.c.l.b16 %v2429
    %v2907 = vunpack.c.l.b16 %v2430
    %v2908 = vunpack.c.l.b16 %v2431
    %v2909 = vunpack.c.l.b16 %v2432
    %v2910 = vunpack.c.l.b16 %v2433
    %v2911 = vunpack.c.l.b16 %v2434
    %v2912 = vunpack.c.l.b16 %v2435
    %v2913 = vunpack.c.l.b16 %v2436
    %v2914 = vunpack.c.l.b16 %v2437
    %v2915 = vunpack.c.l.b16 %v2438
    %v2916 = vunpack.c.l.b16 %v2439
    %v2917 = vunpack.c.l.b16 %v2440
    %v2918 = vunpack.c.l.b16 %v2441
    %v2919 = vunpack.c.l.b16 %v2442
    %v2920 = vunpack.c.l.b16 %v2443
    %v2921 = vunpack.c.l.b16 %v2444
    %v2922 = vunpack.c.l.b16 %v2445
    %v2923 = vunpack.c.l.b16 %v2446
    %v2924 = vunpack.c.l.b16 %v2447
    %v2925 = vunpack.c.l.b16 %v2448
    %v2926 = vunpack.c.l.b16 %v2449
    %v2927 = vunpack.c.l.b16 %v2450
    %v2928 = vunpack.c.l.b16 %v2451
    %v2929 = vunpack.c.l.b16 %v2452
    %v2930 = vunpack.c.l.b16 %v2453
    %v2931 = vunpack.c.l.b16 %v2454
    %v2932 = vunpack.c.l.b16 %v2455
    %v2933 = vunpack.c.l.b16 %v2456
    %v2934 = vunpack.c.l.b16 %v2457
    %v2935 = vunpack.c.l.b16 %v2458
    %v2936 = vunpack.c.l.b16 %v2459
    %v2937 = vunpack.c.l.b16 %v2460
    %v2938 = vunpack.c.l.b16 %v2461
    %v2939 = vunpack.c.l.b16 %v2462
    %v2940 = vunpack.c.l.b16 %v2463
    %v2941 = vunpack.c.l.b16 %v2464
    %v2942 = vunpack.c.l.b16 %v2465
    %v2943 = vunpack.c.l.b16 %v2466
    %v2944 = vunpack.c.l.b16 %v2467
    %v2945 = vunpack.c.l.b16 %v2468
    %v2946 = vunpack.c.l.b16 %v2469
    %v2947 = vunpack.c.l.b16 %v2470
    %v2948 = vunpack.c.l.b16 %v2471
    %v2949 = vunpack.c.l.b16 %v2472
    %v2950 = vunpack.c.l.b16 %v2473
    %v2951 = vunpack.c.l.b16 %v2474
    %v2952 = vunpack.c.l.b16 %v2475
    %v2953 = vunpack.c.l.b16 %v2476
    %v2954 = vunpack.c.l.b16 %v2477
    %v2955 = vunpack.c.l.b16 %v2478
    %v2956 = vunpack.c.l.b16 %v2479
    %v2957 = vunpack.c.l.b16 %v2480
    %v2958 = vunpack.c.l.b16 %v2481
    %v2959 = vunpack.c.l.b16 %v2482
    %v2960 = vunpack.c.l.b16 %v2483
    %v2961 = vunpack.c.l.b16 %v2484
    %v2962 = vunpack.c.l.b16 %v2485
    %v2963 = vunpack.c.l.b16 %v2486
    %v2964 = vunpack.c.l.b16 %v2487
    %v2965 = vunpack.c.l.b16 %v2488
    %v2966 = vunpack.c.l.b16 %v2489
    %v2967 = vunpack.c.l.b16 %v2490
    %v2968 = vunpack.c.l.b16 %v2491
    %v2969 = vunpack.c.l.b16 %v2492
    %v2970 = vunpack.c.l.b16 %v2493
    %v2971 = vunpack.c.l.b16 %v2494
    %v2972 = vunpack.c.l.b16 %v2495
    %v2973 = vunpack.c.l.b16 %v2496
    %v2974 = vunpack.c.l.b16 %v2497
    %v2975 = vunpack.c.l.b16 %v2498
    %v2976 = vunpack.c.l.b16 %v2499
    %v2977 = vunpack.c.l.b16 %v2500
    %v2978 = vunpack.c.l.b16 %v2501
    %v2979 = vunpack.c.l.b16 %v2502
    %v2980 = vunpack.c.l.b16 %v2503
    %v2981 = vunpack.c.l.b16 %v2504
    %v2982 = vunpack.c.l.b16 %v2505
    %v2983 = vunpack.c.l.b16 %v2506
    %v2984 = vunpack.c.l.b16 %v2507
    %v2985 = vunpack.c.l.b16 %v2508
    %v2986 = vunpack.c.l.b16 %v2509
    %v2987 = vunpack.c.l.b16 %v2510
    %v2988 = vunpack.c.l.b16 %v2511
    %v2989 = vunpack.c.l.b16 %v2512
    %v2990 = vunpack.c.l.b16 %v2513
    %v2991 = vunpack.c.l.b16 %v2514
    %v2992 = vunpack.c.l.b16 %v2515
    %v2993 = vunpack.c.l.b16 %v2516
    %v2994 = vunpack.c.l.b16 %v2517
    %v2995 = vunpack.c.l.b16 %v2518
    %v2996 = vunpack.c.l.b16 %v2519
    %v2997 = vunpack.c.l.b16 %v2520
    %v2998 = vunpack.c.l.b16 %v2521
    %v2999 = vunpack.c.l.b16 %v2522
    %v3000 = vunpack.c.l.b16 %v2523
    %v3001 = vunpack.c.l.b16 %v2524
    %v3002 = vunpack.c.l.b16 %v2525
    %v3003 = vunpack.c.l.b16 %v2526
    %v3004 = vunpack.c.l.b16 %v2527
    %v3005 = vunpack.c.l.b16 %v2528
    %v3006 = vunpack.c.l.b16 %v2529
    %v3007 = vunpack.c.l.b16 %v2530
    %v3008 = vunpack.c.l.b16 %v2531
    %v3009 = vunpack.c.l.b16 %v2532
    %v3010 = vunpack.c.l.b16 %v2533
    %v3011 = vunpack.c.l.b16 %v2534
    %v3012 = vunpack.c.l.b16 %v2535
    %v3013 = vunpack.c.l.b16 %v2536
    %v3014 = vunpack.c.l.b16 %v2537
    %v3015 = vunpack.c.l.b16 %v2538
    %v3016 = vunpack.c.l.b16 %v2539
    %v3017 = vunpack.c.l.b16 %v2540
    %v3018 = vunpack.c.l.b16 %v2541
    %v3019 = vunpack.c.l.b16 %v2542
    %v3020 = vunpack.c.l.b16 %v2543
    %v3021 = vunpack.c.l.b16 %v2544
    %v3022 = vunpack.c.l.b16 %v2545
    %v3023 = vunpack.c.l.b16 %v2546
    %v3024 = vunpack.c.l.b16 %v2547
    %v3025 = vunpack.c.l.b16 %v2548
    %v3026 = vunpack.c.l.b16 %v2549
    %v3027 = vunpack.c.l.b16 %v2550
    %v3028 = vunpack.c.l.b16 %v2551
    %v3029 = vunpack.c.l.b16 %v2552
    %v3030 = vunpack.c.l.b16 %v2553
    %v3031 = vunpack.c.l.b16 %v2554
    %v3032 = vunpack.c.l.b16 %v2555
    %v3033 = vunpack.c.l.b16 %v2556
    %v3034 = vunpack.c.l.b16 %v2557
    %v3035 = vunpack.c.l.b16 %v2558
    %v3036 = vunpack.c.l.b16 %v2559
    %v3037 = vunpack.c.l.b16 %v2560
    %v3038 = vpack.c.b16 %v2895, %v2894
    %v3039 = vpack.c.b16 %v2897, %v2896
    %v3040 = vpack.c.b16 %v2899, %v2898
    %v3041 = vpack.c.b16 %v2901, %v2900
    %v3042 = vpack.c.b16 %v2903, %v2902
    %v3043 = vpack.c.b16 %v2905, %v2904
    %v3044 = vpack.c.b16 %v2907, %v2906
    %v3045 = vpack.c.b16 %v2909, %v2908
    %v3046 = vpack.c.b16 %v2911, %v2910
    %v3047 = vpack.c.b16 %v2913, %v2912
    %v3048 = vpack.c.b16 %v2915, %v2914
    %v3049 = vpack.c.b16 %v2917, %v2916
    %v3050 = vpack.c.b16 %v2919, %v2918
    %v3051 = vpack.c.b16 %v2921, %v2920
    %v3052 = vpack.c.b16 %v2923, %v2922
    %v3053 = vpack.c.b16 %v2925, %v2924
    %v3054 = vpack.c.b16 %v2927, %v2926
    %v3055 = vpack.c.b16 %v2929, %v2928
    %v3056 = vpack.c.b16 %v2931, %v2930
    %v3057 = vpack.c.b16 %v2933, %v2932
    %v3058 = vpack.c.b16 %v2935, %v2934
    %v3059 = vpack.c.b16 %v2937, %v2936
    %v3060 = vpack.c.b16 %v2939, %v2938
    %v3061 = vpack.c.b16 %v2941, %v2940
    %v3062 = vpack.c.b16 %v2943, %v2942
    %v3063 = vpack.c.b16 %v2945, %v2944
    %v3064 = vpack.c.b16 %v2947, %v2946
    %v3065 = vpack.c.b16 %v2949, %v2948
    %v3066 = vpack.c.b16 %v2951, %v2950
    %v3067 = vpack.c.b16 %v2953, %v2952
    %v3068 = vpack.c.b16 %v2955, %v2954
    %v3069 = vpack.c.b16 %v2957, %v2956
    %v3070 = vpack.c.b16 %v2959, %v2958
    %v3071 = vpack.c.b16 %v2961, %v2960
    %v3072 = vpack.c.b16 %v2963, %v2962
    %v3073 = vpack.c.b16 %v2965, %v2964
    %v3074 = vpack.c.b16 %v2967, %v2966
    %v3075 = vpack.c.b16 %v2969, %v2968
    %v3076 = vpack.c.b16 %v2971, %v2970
    %v3077 = vpack.c.b16 %v2973, %v2972
    %v3078 = vpack.c.b16 %v2975, %v2974
    %v3079 = vpack.c.b16 %v2977, %v2976
    %v3080 = vpack.c.b16 %v2979, %v2978
    %v3081 = vpack.c.b16 %v2981, %v2980
    %v3082 = vpack.c.b16 %v2983, %v2982
    %v3083 = vpack.c.b16 %v2985, %v2984
    %v3084 = vpack.c.b16 %v2987, %v2986
    %v3085 = vpack.c.b16 %v2989, %v2988
    %v3086 = vpack.c.b16 %v2991, %v2990
    %v3087 = vpack.c.b16 %v2993, %v2992
    %v3088 = vpack.c.b16 %v2995, %v2994
    %v3089 = vpack.c.b16 %v2997, %v2996
    %v3090 = vpack.c.b16 %v2999, %v2998
    %v3091 = vpack.c.b16 %v3001, %v3000
    %v3092 = vpack.c.b16 %v3003, %v3002
    %v3093 = vpack.c.b16 %v3005, %v3004
    %v3094 = vpack.c.b16 %v3007, %v3006
    %v3095 = vpack.c.b16 %v3009, %v3008
    %v3096 = vpack.c.b16 %v3011, %v3010
    %v3097 = vpack.c.b16 %v3013, %v3012
    %v3098 = vpack.c.b16 %v3015, %v3014
    %v3099 = vpack.c.b16 %v3017, %v3016
    %v3100 = vpack.c.b16 %v3019, %v3018
    %v3101 = vpack.c.b16 %v3021, %v3020
    %v3102 = vpack.c.b16 %v3023, %v3022
    %v3103 = vpack.c.b16 %v3025, %v3024
    %v3104 = vpack.c.b16 %v3027, %v3026
    %v3105 = vpack.c.b16 %v3029, %v3028
    %v3106 = vpack.c.b16 %v3031, %v3030
    %v3107 = vpack.c.b16 %v3033, %v3032
    %v3108 = vpack.c.b16 %v3035, %v3034
    %v3109 = vpack.c.b16 %v3037, %v3036
    %3182 = vmatprep.subr.bf16.mxu0 0
    %3183 = vmatpush1.bf16.msra.mxu0 %v3045
    %3184 = vmatprep.subr.bf16.mxu0 0
    %3185 = vmatpush1.bf16.msra.mxu0 %v3044
    %3186 = vmatprep.subr.bf16.mxu0 0
    %3187 = vmatpush1.bf16.msra.mxu0 %v3043
    %3188 = vmatprep.subr.bf16.mxu0 0
    %3189 = vmatpush1.bf16.msra.mxu0 %v3042
    %3190 = vmatprep.subr.bf16.mxu0 0
    %3191 = vmatpush1.bf16.msra.mxu0 %v3041
    %3192 = vmatprep.subr.bf16.mxu0 0
    %3193 = vmatpush1.bf16.msra.mxu0 %v3040
    %3194 = vmatprep.subr.bf16.mxu0 0
    %3195 = vmatpush1.bf16.msra.mxu0 %v3039
    %3196 = vmatprep.subr.bf16.mxu0 0
    %3197 = vmatpush1.bf16.msra.mxu0 %v3038
    %3198 = vmatprep.subr.bf16.mxu0 0
    %3199 = vmatpush2.bf16.msra.mxu0 %v3053
    %3200 = vmatprep.subr.bf16.mxu0 0
    %3201 = vmatpush2.bf16.msra.mxu0 %v3052
    %3202 = vmatprep.subr.bf16.mxu0 0
    %3203 = vmatpush2.bf16.msra.mxu0 %v3051
    %3204 = vmatprep.subr.bf16.mxu0 0
    %3205 = vmatpush2.bf16.msra.mxu0 %v3050
    %3206 = vmatprep.subr.bf16.mxu0 0
    %3207 = vmatpush2.bf16.msra.mxu0 %v3049
    %3208 = vmatprep.subr.bf16.mxu0 0
    %3209 = vmatpush2.bf16.msra.mxu0 %v3048
    %3210 = vmatprep.subr.bf16.mxu0 0
    %3211 = vmatpush2.bf16.msra.mxu0 %v3047
    %3212 = vmatprep.subr.bf16.mxu0 0
    %3213 = vmatpush2.bf16.msra.mxu0 %v3046
    %3214 = vmatprep.mubr.bf16.mxu0 %v2679
    %3215 = vmatmul.mubr.bf16.gmra.mxu0 %v2678
    %v3216 = vpop.f32.mrf.mxu0
    %v3217 = vadd.f32 %v2565, %v3216
    %v3218 = vpop.f32.mrf.mxu0
    %v3219 = vpop.f32.mrf.mxu0
    %v3220 = vadd.f32 %v2565, %v3219
    %v3221 = vpop.f32.mrf.mxu0
    %3222 = vmatprep.mubr.bf16.mxu0 %v2688
    %3223 = vmatmul.mubr.bf16.gmra.mxu0 %v2687
    %v3224 = vpop.f32.mrf.mxu0
    %v3225 = vadd.f32 %v2565, %v3224
    %v3226 = vpop.f32.mrf.mxu0
    %v3227 = vpop.f32.mrf.mxu0
    %v3228 = vadd.f32 %v2565, %v3227
    %v3229 = vpop.f32.mrf.mxu0
    %3230 = vmatprep.mubr.bf16.mxu0 %v2697
    %3231 = vmatmul.mubr.bf16.gmra.mxu0 %v2696
    %v3232 = vpop.f32.mrf.mxu0
    %v3233 = vadd.f32 %v2565, %v3232
    %v3234 = vpop.f32.mrf.mxu0
    %v3235 = vpop.f32.mrf.mxu0
    %v3236 = vadd.f32 %v2565, %v3235
    %v3237 = vpop.f32.mrf.mxu0
    %3238 = vmatprep.mubr.bf16.mxu0 %v2706
    %3239 = vmatmul.mubr.bf16.gmra.mxu0 %v2705
    %v3240 = vpop.f32.mrf.mxu0
    %v3241 = vadd.f32 %v2565, %v3240
    %v3242 = vpop.f32.mrf.mxu0
    %v3243 = vpop.f32.mrf.mxu0
    %v3244 = vadd.f32 %v2565, %v3243
    %v3245 = vpop.f32.mrf.mxu0
    %3246 = vdwg.mxu0
    %3247 = vmatprep.subr.bf16.mxu0 0
    %3248 = vmatpush1.bf16.msra.mxu0 %v3061
    %3249 = vmatprep.subr.bf16.mxu0 0
    %3250 = vmatpush1.bf16.msra.mxu0 %v3060
    %3251 = vmatprep.subr.bf16.mxu0 0
    %3252 = vmatpush1.bf16.msra.mxu0 %v3059
    %3253 = vmatprep.subr.bf16.mxu0 0
    %3254 = vmatpush1.bf16.msra.mxu0 %v3058
    %3255 = vmatprep.subr.bf16.mxu0 0
    %3256 = vmatpush1.bf16.msra.mxu0 %v3057
    %3257 = vmatprep.subr.bf16.mxu0 0
    %3258 = vmatpush1.bf16.msra.mxu0 %v3056
    %3259 = vmatprep.subr.bf16.mxu0 0
    %3260 = vmatpush1.bf16.msra.mxu0 %v3055
    %3261 = vmatprep.subr.bf16.mxu0 0
    %3262 = vmatpush1.bf16.msra.mxu0 %v3054
    %3263 = vmatprep.subr.bf16.mxu0 0
    %3264 = vmatpush2.bf16.msra.mxu0 %v3069
    %3265 = vmatprep.subr.bf16.mxu0 0
    %3266 = vmatpush2.bf16.msra.mxu0 %v3068
    %3267 = vmatprep.subr.bf16.mxu0 0
    %3268 = vmatpush2.bf16.msra.mxu0 %v3067
    %3269 = vmatprep.subr.bf16.mxu0 0
    %3270 = vmatpush2.bf16.msra.mxu0 %v3066
    %3271 = vmatprep.subr.bf16.mxu0 0
    %3272 = vmatpush2.bf16.msra.mxu0 %v3065
    %3273 = vmatprep.subr.bf16.mxu0 0
    %3274 = vmatpush2.bf16.msra.mxu0 %v3064
    %3275 = vmatprep.subr.bf16.mxu0 0
    %3276 = vmatpush2.bf16.msra.mxu0 %v3063
    %3277 = vmatprep.subr.bf16.mxu0 0
    %3278 = vmatpush2.bf16.msra.mxu0 %v3062
    %3279 = vmatprep.mubr.bf16.mxu0 %v2681
    %3280 = vmatmul.mubr.bf16.gmra.mxu0 %v2680
    %v3281 = vpop.f32.mrf.mxu0
    %v3282 = vadd.f32 %v3217, %v3281
    %v3283 = vpop.f32.mrf.mxu0
    %v3284 = vpop.f32.mrf.mxu0
    %v3285 = vadd.f32 %v3220, %v3284
    %v3286 = vpop.f32.mrf.mxu0
    %3287 = vmatprep.mubr.bf16.mxu0 %v2690
    %3288 = vmatmul.mubr.bf16.gmra.mxu0 %v2689
    %v3289 = vpop.f32.mrf.mxu0
    %v3290 = vadd.f32 %v3225, %v3289
    %v3291 = vpop.f32.mrf.mxu0
    %v3292 = vpop.f32.mrf.mxu0
    %v3293 = vadd.f32 %v3228, %v3292
    %v3294 = vpop.f32.mrf.mxu0
    %3295 = vmatprep.mubr.bf16.mxu0 %v2699
    %3296 = vmatmul.mubr.bf16.gmra.mxu0 %v2698
    %v3297 = vpop.f32.mrf.mxu0
    %v3298 = vadd.f32 %v3233, %v3297
    %v3299 = vpop.f32.mrf.mxu0
    %v3300 = vpop.f32.mrf.mxu0
    %v3301 = vadd.f32 %v3236, %v3300
    %v3302 = vpop.f32.mrf.mxu0
    %3303 = vmatprep.mubr.bf16.mxu0 %v2708
    %3304 = vmatmul.mubr.bf16.gmra.mxu0 %v2707
    %v3305 = vpop.f32.mrf.mxu0
    %v3306 = vadd.f32 %v3241, %v3305
    %v3307 = vpop.f32.mrf.mxu0
    %v3308 = vpop.f32.mrf.mxu0
    %v3309 = vadd.f32 %v3244, %v3308
    %v3310 = vpop.f32.mrf.mxu0
    %3311 = vdwg.mxu0
    %3312 = vmatprep.subr.bf16.mxu0 0
    %3313 = vmatpush1.bf16.msra.mxu0 %v3077
    %3314 = vmatprep.subr.bf16.mxu0 0
    %3315 = vmatpush1.bf16.msra.mxu0 %v3076
    %3316 = vmatprep.subr.bf16.mxu0 0
    %3317 = vmatpush1.bf16.msra.mxu0 %v3075
    %3318 = vmatprep.subr.bf16.mxu0 0
    %3319 = vmatpush1.bf16.msra.mxu0 %v3074
    %3320 = vmatprep.subr.bf16.mxu0 0
    %3321 = vmatpush1.bf16.msra.mxu0 %v3073
    %3322 = vmatprep.subr.bf16.mxu0 0
    %3323 = vmatpush1.bf16.msra.mxu0 %v3072
    %3324 = vmatprep.subr.bf16.mxu0 0
    %3325 = vmatpush1.bf16.msra.mxu0 %v3071
    %3326 = vmatprep.subr.bf16.mxu0 0
    %3327 = vmatpush1.bf16.msra.mxu0 %v3070
    %3328 = vmatprep.subr.bf16.mxu0 0
    %3329 = vmatpush2.bf16.msra.mxu0 %v3085
    %3330 = vmatprep.subr.bf16.mxu0 0
    %3331 = vmatpush2.bf16.msra.mxu0 %v3084
    %3332 = vmatprep.subr.bf16.mxu0 0
    %3333 = vmatpush2.bf16.msra.mxu0 %v3083
    %3334 = vmatprep.subr.bf16.mxu0 0
    %3335 = vmatpush2.bf16.msra.mxu0 %v3082
    %3336 = vmatprep.subr.bf16.mxu0 0
    %3337 = vmatpush2.bf16.msra.mxu0 %v3081
    %3338 = vmatprep.subr.bf16.mxu0 0
    %3339 = vmatpush2.bf16.msra.mxu0 %v3080
    %3340 = vmatprep.subr.bf16.mxu0 0
    %3341 = vmatpush2.bf16.msra.mxu0 %v3079
    %3342 = vmatprep.subr.bf16.mxu0 0
    %3343 = vmatpush2.bf16.msra.mxu0 %v3078
    %3344 = vmatprep.mubr.bf16.mxu0 %v2683
    %3345 = vmatmul.mubr.bf16.gmra.mxu0 %v2682
    %v3346 = vpop.f32.mrf.mxu0
    %v3347 = vadd.f32 %v3282, %v3346
    %v3348 = vpop.f32.mrf.mxu0
    %v3349 = vpop.f32.mrf.mxu0
    %v3350 = vadd.f32 %v3285, %v3349
    %v3351 = vpop.f32.mrf.mxu0
    %3352 = vmatprep.mubr.bf16.mxu0 %v2692
    %3353 = vmatmul.mubr.bf16.gmra.mxu0 %v2691
    %v3354 = vpop.f32.mrf.mxu0
    %v3355 = vadd.f32 %v3290, %v3354
    %v3356 = vpop.f32.mrf.mxu0
    %v3357 = vpop.f32.mrf.mxu0
    %v3358 = vadd.f32 %v3293, %v3357
    %v3359 = vpop.f32.mrf.mxu0
    %3360 = vmatprep.mubr.bf16.mxu0 %v2701
    %3361 = vmatmul.mubr.bf16.gmra.mxu0 %v2700
    %v3362 = vpop.f32.mrf.mxu0
    %v3363 = vadd.f32 %v3298, %v3362
    %v3364 = vpop.f32.mrf.mxu0
    %v3365 = vpop.f32.mrf.mxu0
    %v3366 = vadd.f32 %v3301, %v3365
    %v3367 = vpop.f32.mrf.mxu0
    %3368 = vmatprep.mubr.bf16.mxu0 %v2710
    %3369 = vmatmul.mubr.bf16.gmra.mxu0 %v2709
    %v3370 = vpop.f32.mrf.mxu0
    %v3371 = vadd.f32 %v3306, %v3370
    %v3372 = vpop.f32.mrf.mxu0
    %v3373 = vpop.f32.mrf.mxu0
    %v3374 = vadd.f32 %v3309, %v3373
    %v3375 = vpop.f32.mrf.mxu0
    %3376 = vdwg.mxu0
    %3377 = vmatprep.subr.bf16.mxu0 0
    %3378 = vmatpush1.bf16.msra.mxu0 %v3093
    %3379 = vmatprep.subr.bf16.mxu0 0
    %3380 = vmatpush1.bf16.msra.mxu0 %v3092
    %3381 = vmatprep.subr.bf16.mxu0 0
    %3382 = vmatpush1.bf16.msra.mxu0 %v3091
    %3383 = vmatprep.subr.bf16.mxu0 0
    %3384 = vmatpush1.bf16.msra.mxu0 %v3090
    %3385 = vmatprep.subr.bf16.mxu0 0
    %3386 = vmatpush1.bf16.msra.mxu0 %v3089
    %3387 = vmatprep.subr.bf16.mxu0 0
    %3388 = vmatpush1.bf16.msra.mxu0 %v3088
    %3389 = vmatprep.subr.bf16.mxu0 0
    %3390 = vmatpush1.bf16.msra.mxu0 %v3087
    %3391 = vmatprep.subr.bf16.mxu0 0
    %3392 = vmatpush1.bf16.msra.mxu0 %v3086
    %3393 = vmatprep.subr.bf16.mxu0 0
    %3394 = vmatpush2.bf16.msra.mxu0 %v3101
    %3395 = vmatprep.subr.bf16.mxu0 0
    %3396 = vmatpush2.bf16.msra.mxu0 %v3100
    %3397 = vmatprep.subr.bf16.mxu0 0
    %3398 = vmatpush2.bf16.msra.mxu0 %v3099
    %3399 = vmatprep.subr.bf16.mxu0 0
    %3400 = vmatpush2.bf16.msra.mxu0 %v3098
    %3401 = vmatprep.subr.bf16.mxu0 0
    %3402 = vmatpush2.bf16.msra.mxu0 %v3097
    %3403 = vmatprep.subr.bf16.mxu0 0
    %3404 = vmatpush2.bf16.msra.mxu0 %v3096
    %3405 = vmatprep.subr.bf16.mxu0 0
    %3406 = vmatpush2.bf16.msra.mxu0 %v3095
    %3407 = vmatprep.subr.bf16.mxu0 0
    %3408 = vmatpush2.bf16.msra.mxu0 %v3094
    %3409 = vmatprep.mubr.bf16.mxu0 %v2685
    %3410 = vmatmul.mubr.bf16.gmra.mxu0 %v2684
    %v3411 = vpop.f32.mrf.mxu0
    %v3412 = vadd.f32 %v3347, %v3411
    %v3413 = vpop.f32.mrf.mxu0
    %v3414 = vpop.f32.mrf.mxu0
    %v3415 = vadd.f32 %v3350, %v3414
    %v3416 = vpop.f32.mrf.mxu0
    %3417 = vmatprep.mubr.bf16.mxu0 %v2694
    %3418 = vmatmul.mubr.bf16.gmra.mxu0 %v2693
    %v3419 = vpop.f32.mrf.mxu0
    %v3420 = vadd.f32 %v3355, %v3419
    %v3421 = vpop.f32.mrf.mxu0
    %v3422 = vpop.f32.mrf.mxu0
    %v3423 = vadd.f32 %v3358, %v3422
    %v3424 = vpop.f32.mrf.mxu0
    %3425 = vmatprep.mubr.bf16.mxu0 %v2703
    %3426 = vmatmul.mubr.bf16.gmra.mxu0 %v2702
    %v3427 = vpop.f32.mrf.mxu0
    %v3428 = vadd.f32 %v3363, %v3427
    %v3429 = vpop.f32.mrf.mxu0
    %v3430 = vpop.f32.mrf.mxu0
    %v3431 = vadd.f32 %v3366, %v3430
    %v3432 = vpop.f32.mrf.mxu0
    %3433 = vmatprep.mubr.bf16.mxu0 %v2712
    %3434 = vmatmul.mubr.bf16.gmra.mxu0 %v2711
    %v3435 = vpop.f32.mrf.mxu0
    %v3436 = vadd.f32 %v3371, %v3435
    %v3437 = vpop.f32.mrf.mxu0
    %v3438 = vpop.f32.mrf.mxu0
    %v3439 = vadd.f32 %v3374, %v3438
    %v3440 = vpop.f32.mrf.mxu0
    %3441 = vdwg.mxu0
    %3442 = vmatprep.subr.bf16.mxu0 0
    %3443 = vmatpush1.bf16.msra.mxu0 %v3109
    %3444 = vmatprep.subr.bf16.mxu0 0
    %3445 = vmatpush1.bf16.msra.mxu0 %v3108
    %3446 = vmatprep.subr.bf16.mxu0 0
    %3447 = vmatpush1.bf16.msra.mxu0 %v3107
    %3448 = vmatprep.subr.bf16.mxu0 0
    %3449 = vmatpush1.bf16.msra.mxu0 %v3106
    %3450 = vmatprep.subr.bf16.mxu0 0
    %3451 = vmatpush1.bf16.msra.mxu0 %v3105
    %3452 = vmatprep.subr.bf16.mxu0 0
    %3453 = vmatpush1.bf16.msra.mxu0 %v3104
    %3454 = vmatprep.subr.bf16.mxu0 0
    %3455 = vmatpush1.bf16.msra.mxu0 %v3103
    %3456 = vmatprep.subr.bf16.mxu0 0
    %3457 = vmatpush1.bf16.msra.mxu0 %v3102
    %3458 = vmatprep.subr.bf16.mxu0 0
    %3459 = vmatpush2.bf16.msra.mxu0 0
    %3460 = vmatprep.subr.bf16.mxu0 0
    %3461 = vmatpush2.bf16.msra.mxu0 0
    %3462 = vmatprep.subr.bf16.mxu0 0
    %3463 = vmatpush2.bf16.msra.mxu0 0
    %3464 = vmatprep.subr.bf16.mxu0 0
    %3465 = vmatpush2.bf16.msra.mxu0 0
    %3466 = vmatprep.subr.bf16.mxu0 0
    %3467 = vmatpush2.bf16.msra.mxu0 0
    %3468 = vmatprep.subr.bf16.mxu0 0
    %3469 = vmatpush2.bf16.msra.mxu0 0
    %3470 = vmatprep.subr.bf16.mxu0 0
    %3471 = vmatpush2.bf16.msra.mxu0 0
    %3472 = vmatprep.subr.bf16.mxu0 0
    %3473 = vmatpush2.bf16.msra.mxu0 0
    %3474 = vmatprep.mubr.bf16.mxu0 0
    %3475 = vmatmul.mubr.bf16.gmra.mxu0 %v2686
    %v3476 = vpop.f32.mrf.mxu0
    %v3477 = vadd.f32 %v3412, %v3476
    %v3478 = vpop.f32.mrf.mxu0
    %v3479 = vpop.f32.mrf.mxu0
    %v3480 = vadd.f32 %v3415, %v3479
    %v3481 = vpop.f32.mrf.mxu0
    %3482 = vmatprep.mubr.bf16.mxu0 0
    %3483 = vmatmul.mubr.bf16.gmra.mxu0 %v2695
    %v3484 = vpop.f32.mrf.mxu0
    %v3485 = vadd.f32 %v3420, %v3484
    %v3486 = vpop.f32.mrf.mxu0
    %v3487 = vpop.f32.mrf.mxu0
    %v3488 = vadd.f32 %v3423, %v3487
    %v3489 = vpop.f32.mrf.mxu0
    %3490 = vmatprep.mubr.bf16.mxu0 0
    %3491 = vmatmul.mubr.bf16.gmra.mxu0 %v2704
    %v3492 = vpop.f32.mrf.mxu0
    %v3493 = vadd.f32 %v3428, %v3492
    %v3494 = vpop.f32.mrf.mxu0
    %v3495 = vpop.f32.mrf.mxu0
    %v3496 = vadd.f32 %v3431, %v3495
    %v3497 = vpop.f32.mrf.mxu0
    %3498 = vmatprep.mubr.bf16.mxu0 0
    %3499 = vmatmul.mubr.bf16.gmra.mxu0 %v2713
    %v3500 = vpop.f32.mrf.mxu0
    %v3501 = vadd.f32 %v3436, %v3500
    %v3502 = vpop.f32.mrf.mxu0
    %v3503 = vpop.f32.mrf.mxu0
    %v3504 = vadd.f32 %v3439, %v3503
    %v3505 = vpop.f32.mrf.mxu0
    %3506 = vdwg.mxu0
    %vm3507 = vcmp.ge.f32.partialorder %v3477, 0.0
    %vm3508 = vcmp.ge.f32.partialorder %v3480, 0.0
    %vm3509 = vcmp.ge.f32.partialorder %v3485, 0.0
    %vm3510 = vcmp.ge.f32.partialorder %v3488, 0.0
    %vm3511 = vcmp.ge.f32.partialorder %v3493, 0.0
    %vm3512 = vcmp.ge.f32.partialorder %v3496, 0.0
    %vm3513 = vcmp.ge.f32.partialorder %v3501, 0.0
    %vm3514 = vcmp.ge.f32.partialorder %v3504, 0.0
    %v3515 = vmul.f32 %v3477, 0.1
    %v3516 = vmul.f32 %v3480, 0.1
    %v3517 = vmul.f32 %v3485, 0.1
    %v3518 = vmul.f32 %v3488, 0.1
    %v3519 = vmul.f32 %v3493, 0.1
    %v3520 = vmul.f32 %v3496, 0.1
    %v3521 = vmul.f32 %v3501, 0.1
    %v3522 = vmul.f32 %v3504, 0.1
    %v3523 = vsel %vm3507, %v3477, %v3515
    %v3524 = vsel %vm3508, %v3480, %v3516
    %v3525 = vsel %vm3509, %v3485, %v3517
    %v3526 = vsel %vm3510, %v3488, %v3518
    %v3527 = vsel %vm3511, %v3493, %v3519
    %v3528 = vsel %vm3512, %v3496, %v3520
    %v3529 = vsel %vm3513, %v3501, %v3521
    %v3530 = vsel %vm3514, %v3504, %v3522
    %3531 = vst [vmem:[%s206] sm:$0xff] %v3523
    %3532 = vst [vmem:[%s206 + $0x8] sm:$0xff] %v3524
    %3533 = vst [vmem:[%s206 + $0x10] sm:$0xff] %v3525
    %3534 = vst [vmem:[%s206 + $0x18] sm:$0xff] %v3526
    %3535 = vst [vmem:[%s206 + $0x30] sm:$0xff] %v3527
    %3536 = vst [vmem:[%s206 + $0x38] sm:$0xff] %v3528
    %3537 = vst [vmem:[%s206 + $0x40] sm:$0xff] %v3529
    %3538 = vst [vmem:[%s206 + $0x48] sm:$0xff] %v3530
    %v3539 = vrot.slane %v3523, 7
    %v3540 = vrot.slane %v3524, 7
    %v3541 = vrot.slane %v3525, 7
    %v3542 = vrot.slane %v3526, 7
    %v3543 = vrot.slane %v3527, 7
    %v3544 = vrot.slane %v3528, 7
    %v3545 = vrot.slane %v3529, 7
    %v3546 = vrot.slane %v3530, 7
    %v3547 = vsel %vm223, %v3545, %v3546
    %v3548 = vsel %vm223, %v3544, %v3545
    %v3549 = vsel %vm223, %v3543, %v3544
    %v3550 = vsel %vm223, %v3542, %v3543
    %v3551 = vsel %vm223, %v3541, %v3542
    %v3552 = vsel %vm223, %v3540, %v3541
    %v3553 = vsel %vm223, %v3539, %v3540
    %v3554 = vsel %vm223, %v3546, %v3539
    %v3555 = vsel %vm182, 0.0, %v3554
    %v3556 = vsel %vm183, 0.0, %v3553
    %v3557 = vsel %vm184, 0.0, %v3552
    %v3558 = vsel %vm185, 0.0, %v3551
    %v3559 = vsel %vm186, 0.0, %v3550
    %v3560 = vsel %vm187, 0.0, %v3549
    %v3561 = vsel %vm188, 0.0, %v3548
    %v3562 = vsel %vm189, 0.0, %v3547
    %3563 = vst [vmem:[%s240] sm:$0xff] %v3555
    %3564 = vst [vmem:[%s240 + $0x8] sm:$0xff] %v3556
    %3565 = vst [vmem:[%s240 + $0x10] sm:$0xff] %v3557
    %3566 = vst [vmem:[%s240 + $0x18] sm:$0xff] %v3558
    %3567 = vst [vmem:[%s240 + $0x30] sm:$0xff] %v3559
    %3568 = vst [vmem:[%s240 + $0x38] sm:$0xff] %v3560
    %3569 = vst [vmem:[%s240 + $0x40] sm:$0xff] %v3561
    %3570 = vst [vmem:[%s240 + $0x48] sm:$0xff] %v3562
    %v3571 = vrot.slane %v3523, 1
    %v3572 = vrot.slane %v3524, 1
    %v3573 = vrot.slane %v3525, 1
    %v3574 = vrot.slane %v3526, 1
    %v3575 = vrot.slane %v3527, 1
    %v3576 = vrot.slane %v3528, 1
    %v3577 = vrot.slane %v3529, 1
    %v3578 = vrot.slane %v3530, 1
    %v3579 = vsel %vm257, %v3577, %v3578
    %v3580 = vsel %vm257, %v3576, %v3577
    %v3581 = vsel %vm257, %v3575, %v3576
    %v3582 = vsel %vm257, %v3574, %v3575
    %v3583 = vsel %vm257, %v3573, %v3574
    %v3584 = vsel %vm257, %v3572, %v3573
    %v3585 = vsel %vm257, %v3571, %v3572
    %v3586 = vsel %vm257, %v3578, %v3571
    %v3587 = vsel %vm190, 0.0, %v3585
    %v3588 = vsel %vm191, 0.0, %v3584
    %v3589 = vsel %vm192, 0.0, %v3583
    %v3590 = vsel %vm193, 0.0, %v3582
    %v3591 = vsel %vm194, 0.0, %v3581
    %v3592 = vsel %vm195, 0.0, %v3580
    %v3593 = vsel %vm196, 0.0, %v3579
    %v3594 = vsel %vm197, 0.0, %v3586
    %3595 = vst [vmem:[%s274] sm:$0xff] %v3587
    %3596 = vst [vmem:[%s274 + $0x8] sm:$0xff] %v3588
    %3597 = vst [vmem:[%s274 + $0x10] sm:$0xff] %v3589
    %3598 = vst [vmem:[%s274 + $0x18] sm:$0xff] %v3590
    %3599 = vst [vmem:[%s274 + $0x30] sm:$0xff] %v3591
    %3600 = vst [vmem:[%s274 + $0x38] sm:$0xff] %v3592
    %3601 = vst [vmem:[%s274 + $0x40] sm:$0xff] %v3593
    %3602 = vst [vmem:[%s274 + $0x48] sm:$0xff] %v3594
    %v3603 = vld [vmem:[#allocation2] sm:$0xff]
    %v3604 = vld [vmem:[#allocation2 + $0x8] sm:$0xff]
    %v3605 = vld [vmem:[#allocation2 + $0x10] sm:$0xff]
    %v3606 = vld [vmem:[#allocation2 + $0x18] sm:$0xff]
    %v3607 = vld [vmem:[#allocation2 + $0x30] sm:$0xff]
    %v3608 = vld [vmem:[#allocation2 + $0x38] sm:$0xff]
    %v3609 = vld [vmem:[#allocation2 + $0x40] sm:$0xff]
    %v3610 = vld [vmem:[#allocation2 + $0x48] sm:$0xff]
    %v3611 = vpack.c.bf16 %v3604, %v3603
    %v3612 = vpack.c.bf16 %v3606, %v3605
    %v3613 = vpack.c.bf16 %v3608, %v3607
    %v3614 = vpack.c.bf16 %v3610, %v3609
    %v3619 = vunpack.c.l.b16 %v3611
    %v3620 = vunpack.c.h.b16 %v3611
    %v3621 = vunpack.c.l.b16 %v3612
    %v3622 = vunpack.c.h.b16 %v3612
    %v3623 = vunpack.c.l.b16 %v3613
    %v3624 = vunpack.c.h.b16 %v3613
    %v3625 = vunpack.c.l.b16 %v3614
    %v3626 = vunpack.c.h.b16 %v3614
    %v3627 = vpack.c.b16 %v3619, %v3619
    %v3628 = vpack.c.b16 %v3620, %v3620
    %v3629 = vpack.c.b16 %v3621, %v3621
    %v3630 = vpack.c.b16 %v3622, %v3622
    %v3631 = vpack.c.b16 %v3623, %v3623
    %v3632 = vpack.c.b16 %v3624, %v3624
    %v3633 = vpack.c.b16 %v3625, %v3625
    %v3634 = vpack.c.b16 %v3626, %v3626
    %3643 = vst [vmem:[#allocation5] sm:$0xf] %v3627
    %3644 = vst [vmem:[#allocation5 + $0x24] sm:$0xf] %v3628
    %3645 = vst [vmem:[#allocation5 + $0x48] sm:$0xf] %v3629
    %3646 = vst [vmem:[#allocation5 + $0x6c] sm:$0xf] %v3630
    %3647 = vst [vmem:[#allocation5 + $0x90] sm:$0xf] %v3631
    %3648 = vst [vmem:[#allocation5 + $0xb4] sm:$0xf] %v3632
    %3649 = vst [vmem:[#allocation5 + $0xd8] sm:$0xf] %v3633
    %3650 = vst [vmem:[#allocation5 + $0xfc] sm:$0xf] %v3634
    %v3651 = vld [vmem:[#allocation3] sm:$0xff]
    %v3652 = vld [vmem:[#allocation3 + $0x8] sm:$0xff]
    %v3653 = vld [vmem:[#allocation3 + $0x10] sm:$0xff]
    %v3654 = vld [vmem:[#allocation3 + $0x18] sm:$0xff]
    %v3655 = vld [vmem:[#allocation3 + $0x30] sm:$0xff]
    %v3656 = vld [vmem:[#allocation3 + $0x38] sm:$0xff]
    %v3657 = vld [vmem:[#allocation3 + $0x40] sm:$0xff]
    %v3658 = vld [vmem:[#allocation3 + $0x48] sm:$0xff]
    %v3659 = vpack.c.bf16 %v3652, %v3651
    %v3660 = vpack.c.bf16 %v3654, %v3653
    %v3661 = vpack.c.bf16 %v3656, %v3655
    %v3662 = vpack.c.bf16 %v3658, %v3657
    %v3667 = vunpack.c.l.b16 %v3659
    %v3668 = vunpack.c.h.b16 %v3659
    %v3669 = vunpack.c.l.b16 %v3660
    %v3670 = vunpack.c.h.b16 %v3660
    %v3671 = vunpack.c.l.b16 %v3661
    %v3672 = vunpack.c.h.b16 %v3661
    %v3673 = vunpack.c.l.b16 %v3662
    %v3674 = vunpack.c.h.b16 %v3662
    %v3675 = vpack.c.b16 %v3667, %v3667
    %v3676 = vpack.c.b16 %v3668, %v3668
    %v3677 = vpack.c.b16 %v3669, %v3669
    %v3678 = vpack.c.b16 %v3670, %v3670
    %v3679 = vpack.c.b16 %v3671, %v3671
    %v3680 = vpack.c.b16 %v3672, %v3672
    %v3681 = vpack.c.b16 %v3673, %v3673
    %v3682 = vpack.c.b16 %v3674, %v3674
    %3691 = vst [vmem:[#allocation5 + $0x4] sm:$0xf] %v3675
    %3692 = vst [vmem:[#allocation5 + $0x28] sm:$0xf] %v3676
    %3693 = vst [vmem:[#allocation5 + $0x4c] sm:$0xf] %v3677
    %3694 = vst [vmem:[#allocation5 + $0x70] sm:$0xf] %v3678
    %3695 = vst [vmem:[#allocation5 + $0x94] sm:$0xf] %v3679
    %3696 = vst [vmem:[#allocation5 + $0xb8] sm:$0xf] %v3680
    %3697 = vst [vmem:[#allocation5 + $0xdc] sm:$0xf] %v3681
    %3698 = vst [vmem:[#allocation5 + $0x100] sm:$0xf] %v3682
    %v3699 = vld [vmem:[#allocation4] sm:$0xff]
    %v3700 = vld [vmem:[#allocation4 + $0x8] sm:$0xff]
    %v3701 = vld [vmem:[#allocation4 + $0x10] sm:$0xff]
    %v3702 = vld [vmem:[#allocation4 + $0x18] sm:$0xff]
    %v3703 = vld [vmem:[#allocation4 + $0x30] sm:$0xff]
    %v3704 = vld [vmem:[#allocation4 + $0x38] sm:$0xff]
    %v3705 = vld [vmem:[#allocation4 + $0x40] sm:$0xff]
    %v3706 = vld [vmem:[#allocation4 + $0x48] sm:$0xff]
    %v3707 = vpack.c.bf16 %v3700, %v3699
    %v3708 = vpack.c.bf16 %v3702, %v3701
    %v3709 = vpack.c.bf16 %v3704, %v3703
    %v3710 = vpack.c.bf16 %v3706, %v3705
    %v3715 = vunpack.c.l.b16 %v3707
    %v3716 = vunpack.c.h.b16 %v3707
    %v3717 = vunpack.c.l.b16 %v3708
    %v3718 = vunpack.c.h.b16 %v3708
    %v3719 = vunpack.c.l.b16 %v3709
    %v3720 = vunpack.c.h.b16 %v3709
    %v3721 = vunpack.c.l.b16 %v3710
    %v3722 = vunpack.c.h.b16 %v3710
    %v3723 = vpack.c.b16 %v3715, %v3715
    %v3724 = vpack.c.b16 %v3716, %v3716
    %v3725 = vpack.c.b16 %v3717, %v3717
    %v3726 = vpack.c.b16 %v3718, %v3718
    %v3727 = vpack.c.b16 %v3719, %v3719
    %v3728 = vpack.c.b16 %v3720, %v3720
    %v3729 = vpack.c.b16 %v3721, %v3721
    %v3730 = vpack.c.b16 %v3722, %v3722
    %3739 = vst [vmem:[#allocation5 + $0x8] sm:$0xf] %v3723
    %3740 = vst [vmem:[#allocation5 + $0x2c] sm:$0xf] %v3724
    %3741 = vst [vmem:[#allocation5 + $0x50] sm:$0xf] %v3725
    %3742 = vst [vmem:[#allocation5 + $0x74] sm:$0xf] %v3726
    %3743 = vst [vmem:[#allocation5 + $0x98] sm:$0xf] %v3727
    %3744 = vst [vmem:[#allocation5 + $0xbc] sm:$0xf] %v3728
    %3745 = vst [vmem:[#allocation5 + $0xe0] sm:$0xf] %v3729
    %3746 = vst [vmem:[#allocation5 + $0x104] sm:$0xf] %v3730
    %v3747 = vld [vmem:[%s240] sm:$0xff]
    %v3748 = vld [vmem:[%s240 + $0x8] sm:$0xff]
    %v3749 = vld [vmem:[%s240 + $0x10] sm:$0xff]
    %v3750 = vld [vmem:[%s240 + $0x18] sm:$0xff]
    %v3751 = vld [vmem:[%s240 + $0x30] sm:$0xff]
    %v3752 = vld [vmem:[%s240 + $0x38] sm:$0xff]
    %v3753 = vld [vmem:[%s240 + $0x40] sm:$0xff]
    %v3754 = vld [vmem:[%s240 + $0x48] sm:$0xff]
    %v3755 = vpack.c.bf16 %v3748, %v3747
    %v3756 = vpack.c.bf16 %v3750, %v3749
    %v3757 = vpack.c.bf16 %v3752, %v3751
    %v3758 = vpack.c.bf16 %v3754, %v3753
    %v3763 = vunpack.c.l.b16 %v3755
    %v3764 = vunpack.c.h.b16 %v3755
    %v3765 = vunpack.c.l.b16 %v3756
    %v3766 = vunpack.c.h.b16 %v3756
    %v3767 = vunpack.c.l.b16 %v3757
    %v3768 = vunpack.c.h.b16 %v3757
    %v3769 = vunpack.c.l.b16 %v3758
    %v3770 = vunpack.c.h.b16 %v3758
    %v3771 = vpack.c.b16 %v3763, %v3763
    %v3772 = vpack.c.b16 %v3764, %v3764
    %v3773 = vpack.c.b16 %v3765, %v3765
    %v3774 = vpack.c.b16 %v3766, %v3766
    %v3775 = vpack.c.b16 %v3767, %v3767
    %v3776 = vpack.c.b16 %v3768, %v3768
    %v3777 = vpack.c.b16 %v3769, %v3769
    %v3778 = vpack.c.b16 %v3770, %v3770
    %3787 = vst [vmem:[#allocation5 + $0xc] sm:$0xf] %v3771
    %3788 = vst [vmem:[#allocation5 + $0x30] sm:$0xf] %v3772
    %3789 = vst [vmem:[#allocation5 + $0x54] sm:$0xf] %v3773
    %3790 = vst [vmem:[#allocation5 + $0x78] sm:$0xf] %v3774
    %3791 = vst [vmem:[#allocation5 + $0x9c] sm:$0xf] %v3775
    %3792 = vst [vmem:[#allocation5 + $0xc0] sm:$0xf] %v3776
    %3793 = vst [vmem:[#allocation5 + $0xe4] sm:$0xf] %v3777
    %3794 = vst [vmem:[#allocation5 + $0x108] sm:$0xf] %v3778
    %v3795 = vld [vmem:[%s206] sm:$0xff]
    %v3796 = vld [vmem:[%s206 + $0x8] sm:$0xff]
    %v3797 = vld [vmem:[%s206 + $0x10] sm:$0xff]
    %v3798 = vld [vmem:[%s206 + $0x18] sm:$0xff]
    %v3799 = vld [vmem:[%s206 + $0x30] sm:$0xff]
    %v3800 = vld [vmem:[%s206 + $0x38] sm:$0xff]
    %v3801 = vld [vmem:[%s206 + $0x40] sm:$0xff]
    %v3802 = vld [vmem:[%s206 + $0x48] sm:$0xff]
    %v3803 = vpack.c.bf16 %v3796, %v3795
    %v3804 = vpack.c.bf16 %v3798, %v3797
    %v3805 = vpack.c.bf16 %v3800, %v3799
    %v3806 = vpack.c.bf16 %v3802, %v3801
    %v3811 = vunpack.c.l.b16 %v3803
    %v3812 = vunpack.c.h.b16 %v3803
    %v3813 = vunpack.c.l.b16 %v3804
    %v3814 = vunpack.c.h.b16 %v3804
    %v3815 = vunpack.c.l.b16 %v3805
    %v3816 = vunpack.c.h.b16 %v3805
    %v3817 = vunpack.c.l.b16 %v3806
    %v3818 = vunpack.c.h.b16 %v3806
    %v3819 = vpack.c.b16 %v3811, %v3811
    %v3820 = vpack.c.b16 %v3812, %v3812
    %v3821 = vpack.c.b16 %v3813, %v3813
    %v3822 = vpack.c.b16 %v3814, %v3814
    %v3823 = vpack.c.b16 %v3815, %v3815
    %v3824 = vpack.c.b16 %v3816, %v3816
    %v3825 = vpack.c.b16 %v3817, %v3817
    %v3826 = vpack.c.b16 %v3818, %v3818
    %3835 = vst [vmem:[#allocation5 + $0x10] sm:$0xf] %v3819
    %3836 = vst [vmem:[#allocation5 + $0x34] sm:$0xf] %v3820
    %3837 = vst [vmem:[#allocation5 + $0x58] sm:$0xf] %v3821
    %3838 = vst [vmem:[#allocation5 + $0x7c] sm:$0xf] %v3822
    %3839 = vst [vmem:[#allocation5 + $0xa0] sm:$0xf] %v3823
    %3840 = vst [vmem:[#allocation5 + $0xc4] sm:$0xf] %v3824
    %3841 = vst [vmem:[#allocation5 + $0xe8] sm:$0xf] %v3825
    %3842 = vst [vmem:[#allocation5 + $0x10c] sm:$0xf] %v3826
    %v3843 = vld [vmem:[%s274] sm:$0xff]
    %v3844 = vld [vmem:[%s274 + $0x8] sm:$0xff]
    %v3845 = vld [vmem:[%s274 + $0x10] sm:$0xff]
    %v3846 = vld [vmem:[%s274 + $0x18] sm:$0xff]
    %v3847 = vld [vmem:[%s274 + $0x30] sm:$0xff]
    %v3848 = vld [vmem:[%s274 + $0x38] sm:$0xff]
    %v3849 = vld [vmem:[%s274 + $0x40] sm:$0xff]
    %v3850 = vld [vmem:[%s274 + $0x48] sm:$0xff]
    %v3851 = vpack.c.bf16 %v3844, %v3843
    %v3852 = vpack.c.bf16 %v3846, %v3845
    %v3853 = vpack.c.bf16 %v3848, %v3847
    %v3854 = vpack.c.bf16 %v3850, %v3849
    %v3859 = vunpack.c.l.b16 %v3851
    %v3860 = vunpack.c.h.b16 %v3851
    %v3861 = vunpack.c.l.b16 %v3852
    %v3862 = vunpack.c.h.b16 %v3852
    %v3863 = vunpack.c.l.b16 %v3853
    %v3864 = vunpack.c.h.b16 %v3853
    %v3865 = vunpack.c.l.b16 %v3854
    %v3866 = vunpack.c.h.b16 %v3854
    %v3867 = vpack.c.b16 %v3859, %v3859
    %v3868 = vpack.c.b16 %v3860, %v3860
    %v3869 = vpack.c.b16 %v3861, %v3861
    %v3870 = vpack.c.b16 %v3862, %v3862
    %v3871 = vpack.c.b16 %v3863, %v3863
    %v3872 = vpack.c.b16 %v3864, %v3864
    %v3873 = vpack.c.b16 %v3865, %v3865
    %v3874 = vpack.c.b16 %v3866, %v3866
    %3883 = vst [vmem:[#allocation5 + $0x14] sm:$0xf] %v3867
    %3884 = vst [vmem:[#allocation5 + $0x38] sm:$0xf] %v3868
    %3885 = vst [vmem:[#allocation5 + $0x5c] sm:$0xf] %v3869
    %3886 = vst [vmem:[#allocation5 + $0x80] sm:$0xf] %v3870
    %3887 = vst [vmem:[#allocation5 + $0xa4] sm:$0xf] %v3871
    %3888 = vst [vmem:[#allocation5 + $0xc8] sm:$0xf] %v3872
    %3889 = vst [vmem:[#allocation5 + $0xec] sm:$0xf] %v3873
    %3890 = vst [vmem:[#allocation5 + $0x110] sm:$0xf] %v3874
    %v3891 = vld [vmem:[%s571] sm:$0xff]
    %v3892 = vld [vmem:[%s571 + $0x8] sm:$0xff]
    %v3893 = vld [vmem:[%s571 + $0x10] sm:$0xff]
    %v3894 = vld [vmem:[%s571 + $0x18] sm:$0xff]
    %v3895 = vld [vmem:[%s571 + $0x30] sm:$0xff]
    %v3896 = vld [vmem:[%s571 + $0x38] sm:$0xff]
    %v3897 = vld [vmem:[%s571 + $0x40] sm:$0xff]
    %v3898 = vld [vmem:[%s571 + $0x48] sm:$0xff]
    %v3899 = vpack.c.bf16 %v3892, %v3891
    %v3900 = vpack.c.bf16 %v3894, %v3893
    %v3901 = vpack.c.bf16 %v3896, %v3895
    %v3902 = vpack.c.bf16 %v3898, %v3897
    %v3907 = vunpack.c.l.b16 %v3899
    %v3908 = vunpack.c.h.b16 %v3899
    %v3909 = vunpack.c.l.b16 %v3900
    %v3910 = vunpack.c.h.b16 %v3900
    %v3911 = vunpack.c.l.b16 %v3901
    %v3912 = vunpack.c.h.b16 %v3901
    %v3913 = vunpack.c.l.b16 %v3902
    %v3914 = vunpack.c.h.b16 %v3902
    %v3915 = vpack.c.b16 %v3907, %v3907
    %v3916 = vpack.c.b16 %v3908, %v3908
    %v3917 = vpack.c.b16 %v3909, %v3909
    %v3918 = vpack.c.b16 %v3910, %v3910
    %v3919 = vpack.c.b16 %v3911, %v3911
    %v3920 = vpack.c.b16 %v3912, %v3912
    %v3921 = vpack.c.b16 %v3913, %v3913
    %v3922 = vpack.c.b16 %v3914, %v3914
    %3931 = vst [vmem:[#allocation5 + $0x18] sm:$0xf] %v3915
    %3932 = vst [vmem:[#allocation5 + $0x3c] sm:$0xf] %v3916
    %3933 = vst [vmem:[#allocation5 + $0x60] sm:$0xf] %v3917
    %3934 = vst [vmem:[#allocation5 + $0x84] sm:$0xf] %v3918
    %3935 = vst [vmem:[#allocation5 + $0xa8] sm:$0xf] %v3919
    %3936 = vst [vmem:[#allocation5 + $0xcc] sm:$0xf] %v3920
    %3937 = vst [vmem:[#allocation5 + $0xf0] sm:$0xf] %v3921
    %3938 = vst [vmem:[#allocation5 + $0x114] sm:$0xf] %v3922
    %v3939 = vld [vmem:[%s620] sm:$0xff]
    %v3940 = vld [vmem:[%s620 + $0x8] sm:$0xff]
    %v3941 = vld [vmem:[%s620 + $0x10] sm:$0xff]
    %v3942 = vld [vmem:[%s620 + $0x18] sm:$0xff]
    %v3943 = vld [vmem:[%s620 + $0x30] sm:$0xff]
    %v3944 = vld [vmem:[%s620 + $0x38] sm:$0xff]
    %v3945 = vld [vmem:[%s620 + $0x40] sm:$0xff]
    %v3946 = vld [vmem:[%s620 + $0x48] sm:$0xff]
    %v3947 = vpack.c.bf16 %v3940, %v3939
    %v3948 = vpack.c.bf16 %v3942, %v3941
    %v3949 = vpack.c.bf16 %v3944, %v3943
    %v3950 = vpack.c.bf16 %v3946, %v3945
    %v3955 = vunpack.c.l.b16 %v3947
    %v3956 = vunpack.c.h.b16 %v3947
    %v3957 = vunpack.c.l.b16 %v3948
    %v3958 = vunpack.c.h.b16 %v3948
    %v3959 = vunpack.c.l.b16 %v3949
    %v3960 = vunpack.c.h.b16 %v3949
    %v3961 = vunpack.c.l.b16 %v3950
    %v3962 = vunpack.c.h.b16 %v3950
    %v3963 = vpack.c.b16 %v3955, %v3955
    %v3964 = vpack.c.b16 %v3956, %v3956
    %v3965 = vpack.c.b16 %v3957, %v3957
    %v3966 = vpack.c.b16 %v3958, %v3958
    %v3967 = vpack.c.b16 %v3959, %v3959
    %v3968 = vpack.c.b16 %v3960, %v3960
    %v3969 = vpack.c.b16 %v3961, %v3961
    %v3970 = vpack.c.b16 %v3962, %v3962
    %3979 = vst [vmem:[#allocation5 + $0x1c] sm:$0xf] %v3963
    %3980 = vst [vmem:[#allocation5 + $0x40] sm:$0xf] %v3964
    %3981 = vst [vmem:[#allocation5 + $0x64] sm:$0xf] %v3965
    %3982 = vst [vmem:[#allocation5 + $0x88] sm:$0xf] %v3966
    %3983 = vst [vmem:[#allocation5 + $0xac] sm:$0xf] %v3967
    %3984 = vst [vmem:[#allocation5 + $0xd0] sm:$0xf] %v3968
    %3985 = vst [vmem:[#allocation5 + $0xf4] sm:$0xf] %v3969
    %3986 = vst [vmem:[#allocation5 + $0x118] sm:$0xf] %v3970
    %v3987 = vld [vmem:[%s669] sm:$0xff]
    %v3988 = vld [vmem:[%s669 + $0x8] sm:$0xff]
    %v3989 = vld [vmem:[%s669 + $0x10] sm:$0xff]
    %v3990 = vld [vmem:[%s669 + $0x18] sm:$0xff]
    %v3991 = vld [vmem:[%s669 + $0x30] sm:$0xff]
    %v3992 = vld [vmem:[%s669 + $0x38] sm:$0xff]
    %v3993 = vld [vmem:[%s669 + $0x40] sm:$0xff]
    %v3994 = vld [vmem:[%s669 + $0x48] sm:$0xff]
    %v3995 = vpack.c.bf16 %v3988, %v3987
    %v3996 = vpack.c.bf16 %v3990, %v3989
    %v3997 = vpack.c.bf16 %v3992, %v3991
    %v3998 = vpack.c.bf16 %v3994, %v3993
    %v4003 = vunpack.c.l.b16 %v3995
    %v4004 = vunpack.c.h.b16 %v3995
    %v4005 = vunpack.c.l.b16 %v3996
    %v4006 = vunpack.c.h.b16 %v3996
    %v4007 = vunpack.c.l.b16 %v3997
    %v4008 = vunpack.c.h.b16 %v3997
    %v4009 = vunpack.c.l.b16 %v3998
    %v4010 = vunpack.c.h.b16 %v3998
    %v4011 = vpack.c.b16 %v4003, %v4003
    %v4012 = vpack.c.b16 %v4004, %v4004
    %v4013 = vpack.c.b16 %v4005, %v4005
    %v4014 = vpack.c.b16 %v4006, %v4006
    %v4015 = vpack.c.b16 %v4007, %v4007
    %v4016 = vpack.c.b16 %v4008, %v4008
    %v4017 = vpack.c.b16 %v4009, %v4009
    %v4018 = vpack.c.b16 %v4010, %v4010
    %4027 = vst [vmem:[#allocation5 + $0x20] sm:$0xf] %v4011
    %4028 = vst [vmem:[#allocation5 + $0x44] sm:$0xf] %v4012
    %4029 = vst [vmem:[#allocation5 + $0x68] sm:$0xf] %v4013
    %4030 = vst [vmem:[#allocation5 + $0x8c] sm:$0xf] %v4014
    %4031 = vst [vmem:[#allocation5 + $0xb0] sm:$0xf] %v4015
    %4032 = vst [vmem:[#allocation5 + $0xd4] sm:$0xf] %v4016
    %4033 = vst [vmem:[#allocation5 + $0xf8] sm:$0xf] %v4017
    %4034 = vst [vmem:[#allocation5 + $0x11c] sm:$0xf] %v4018
    %v4035 = vld [vmem:[#allocation5] sm:$0xff]
    %v4036 = vld [vmem:[#allocation5 + $0x8] sm:$0xff]
    %v4037 = vld [vmem:[#allocation5 + $0x10] sm:$0xff]
    %v4038 = vld [vmem:[#allocation5 + $0x18] sm:$0xff]
    %v4039 = vld [vmem:[#allocation5 + $0x20] sm:$0xf]
    %v4040 = vld [vmem:[#allocation5 + $0x24] sm:$0xff]
    %v4041 = vld [vmem:[#allocation5 + $0x2c] sm:$0xff]
    %v4042 = vld [vmem:[#allocation5 + $0x34] sm:$0xff]
    %v4043 = vld [vmem:[#allocation5 + $0x3c] sm:$0xff]
    %v4044 = vld [vmem:[#allocation5 + $0x44] sm:$0xf]
    %v4045 = vld [vmem:[#allocation5 + $0x48] sm:$0xff]
    %v4046 = vld [vmem:[#allocation5 + $0x50] sm:$0xff]
    %v4047 = vld [vmem:[#allocation5 + $0x58] sm:$0xff]
    %v4048 = vld [vmem:[#allocation5 + $0x60] sm:$0xff]
    %v4049 = vld [vmem:[#allocation5 + $0x68] sm:$0xf]
    %v4050 = vld [vmem:[#allocation5 + $0x6c] sm:$0xff]
    %v4051 = vld [vmem:[#allocation5 + $0x74] sm:$0xff]
    %v4052 = vld [vmem:[#allocation5 + $0x7c] sm:$0xff]
    %v4053 = vld [vmem:[#allocation5 + $0x84] sm:$0xff]
    %v4054 = vld [vmem:[#allocation5 + $0x8c] sm:$0xf]
    %v4055 = vld [vmem:[#allocation5 + $0x90] sm:$0xff]
    %v4056 = vld [vmem:[#allocation5 + $0x98] sm:$0xff]
    %v4057 = vld [vmem:[#allocation5 + $0xa0] sm:$0xff]
    %v4058 = vld [vmem:[#allocation5 + $0xa8] sm:$0xff]
    %v4059 = vld [vmem:[#allocation5 + $0xb0] sm:$0xf]
    %v4060 = vld [vmem:[#allocation5 + $0xb4] sm:$0xff]
    %v4061 = vld [vmem:[#allocation5 + $0xbc] sm:$0xff]
    %v4062 = vld [vmem:[#allocation5 + $0xc4] sm:$0xff]
    %v4063 = vld [vmem:[#allocation5 + $0xcc] sm:$0xff]
    %v4064 = vld [vmem:[#allocation5 + $0xd4] sm:$0xf]
    %v4065 = vld [vmem:[#allocation5 + $0xd8] sm:$0xff]
    %v4066 = vld [vmem:[#allocation5 + $0xe0] sm:$0xff]
    %v4067 = vld [vmem:[#allocation5 + $0xe8] sm:$0xff]
    %v4068 = vld [vmem:[#allocation5 + $0xf0] sm:$0xff]
    %v4069 = vld [vmem:[#allocation5 + $0xf8] sm:$0xf]
    %v4070 = vld [vmem:[#allocation5 + $0xfc] sm:$0xff]
    %v4071 = vld [vmem:[#allocation5 + $0x104] sm:$0xff]
    %v4072 = vld [vmem:[#allocation5 + $0x10c] sm:$0xff]
    %v4073 = vld [vmem:[#allocation5 + $0x114] sm:$0xff]
    %v4074 = vld [vmem:[#allocation5 + $0x11c] sm:$0xf]
    %s4075 = scalar_lea.vmem [#allocation6], 1152
    %v4076 = vld [vmem:[%s4075] sm:$0xf]
    %v4077 = vld [vmem:[%s4075 + $0x4] sm:$0xf]
    %v4078 = vld [vmem:[%s4075 + $0x8] sm:$0xf]
    %v4079 = vld [vmem:[%s4075 + $0xc] sm:$0xf]
    %v4080 = vld [vmem:[%s4075 + $0x10] sm:$0xf]
    %v4081 = vld [vmem:[%s4075 + $0x14] sm:$0xf]
    %v4082 = vld [vmem:[%s4075 + $0x18] sm:$0xf]
    %v4083 = vld [vmem:[%s4075 + $0x1c] sm:$0xf]
    %v4084 = vld [vmem:[%s4075 + $0x20] sm:$0xf]
    %v4085 = vld [vmem:[%s4075 + $0x24] sm:$0xf]
    %v4086 = vld [vmem:[%s4075 + $0x28] sm:$0xf]
    %v4087 = vld [vmem:[%s4075 + $0x2c] sm:$0xf]
    %v4088 = vld [vmem:[%s4075 + $0x30] sm:$0xf]
    %v4089 = vld [vmem:[%s4075 + $0x34] sm:$0xf]
    %v4090 = vld [vmem:[%s4075 + $0x38] sm:$0xf]
    %v4091 = vld [vmem:[%s4075 + $0x3c] sm:$0xf]
    %v4092 = vld [vmem:[%s4075 + $0x40] sm:$0xf]
    %v4093 = vld [vmem:[%s4075 + $0x44] sm:$0xf]
    %v4094 = vld [vmem:[%s4075 + $0x48] sm:$0xf]
    %v4095 = vld [vmem:[%s4075 + $0x4c] sm:$0xf]
    %v4096 = vld [vmem:[%s4075 + $0x50] sm:$0xf]
    %v4097 = vld [vmem:[%s4075 + $0x54] sm:$0xf]
    %v4098 = vld [vmem:[%s4075 + $0x58] sm:$0xf]
    %v4099 = vld [vmem:[%s4075 + $0x5c] sm:$0xf]
    %v4100 = vld [vmem:[%s4075 + $0x60] sm:$0xf]
    %v4101 = vld [vmem:[%s4075 + $0x64] sm:$0xf]
    %v4102 = vld [vmem:[%s4075 + $0x68] sm:$0xf]
    %v4103 = vld [vmem:[%s4075 + $0x6c] sm:$0xf]
    %v4104 = vld [vmem:[%s4075 + $0x70] sm:$0xf]
    %v4105 = vld [vmem:[%s4075 + $0x74] sm:$0xf]
    %v4106 = vld [vmem:[%s4075 + $0x78] sm:$0xf]
    %v4107 = vld [vmem:[%s4075 + $0x7c] sm:$0xf]
    %v4108 = vld [vmem:[%s4075 + $0x80] sm:$0xf]
    %v4109 = vld [vmem:[%s4075 + $0x84] sm:$0xf]
    %v4110 = vld [vmem:[%s4075 + $0x88] sm:$0xf]
    %v4111 = vld [vmem:[%s4075 + $0x8c] sm:$0xf]
    %v4112 = vld [vmem:[%s4075 + $0x90] sm:$0xf]
    %v4113 = vld [vmem:[%s4075 + $0x94] sm:$0xf]
    %v4114 = vld [vmem:[%s4075 + $0x98] sm:$0xf]
    %v4115 = vld [vmem:[%s4075 + $0x9c] sm:$0xf]
    %v4116 = vld [vmem:[%s4075 + $0xa0] sm:$0xf]
    %v4117 = vld [vmem:[%s4075 + $0xa4] sm:$0xf]
    %v4118 = vld [vmem:[%s4075 + $0xa8] sm:$0xf]
    %v4119 = vld [vmem:[%s4075 + $0xac] sm:$0xf]
    %v4120 = vld [vmem:[%s4075 + $0xb0] sm:$0xf]
    %v4121 = vld [vmem:[%s4075 + $0xb4] sm:$0xf]
    %v4122 = vld [vmem:[%s4075 + $0xb8] sm:$0xf]
    %v4123 = vld [vmem:[%s4075 + $0xbc] sm:$0xf]
    %v4124 = vld [vmem:[%s4075 + $0xc0] sm:$0xf]
    %v4125 = vld [vmem:[%s4075 + $0xc4] sm:$0xf]
    %v4126 = vld [vmem:[%s4075 + $0xc8] sm:$0xf]
    %v4127 = vld [vmem:[%s4075 + $0xcc] sm:$0xf]
    %v4128 = vld [vmem:[%s4075 + $0xd0] sm:$0xf]
    %v4129 = vld [vmem:[%s4075 + $0xd4] sm:$0xf]
    %v4130 = vld [vmem:[%s4075 + $0xd8] sm:$0xf]
    %v4131 = vld [vmem:[%s4075 + $0xdc] sm:$0xf]
    %v4132 = vld [vmem:[%s4075 + $0xe0] sm:$0xf]
    %v4133 = vld [vmem:[%s4075 + $0xe4] sm:$0xf]
    %v4134 = vld [vmem:[%s4075 + $0xe8] sm:$0xf]
    %v4135 = vld [vmem:[%s4075 + $0xec] sm:$0xf]
    %v4136 = vld [vmem:[%s4075 + $0xf0] sm:$0xf]
    %v4137 = vld [vmem:[%s4075 + $0xf4] sm:$0xf]
    %v4138 = vld [vmem:[%s4075 + $0xf8] sm:$0xf]
    %v4139 = vld [vmem:[%s4075 + $0xfc] sm:$0xf]
    %v4140 = vld [vmem:[%s4075 + $0x100] sm:$0xf]
    %v4141 = vld [vmem:[%s4075 + $0x104] sm:$0xf]
    %v4142 = vld [vmem:[%s4075 + $0x108] sm:$0xf]
    %v4143 = vld [vmem:[%s4075 + $0x10c] sm:$0xf]
    %v4144 = vld [vmem:[%s4075 + $0x110] sm:$0xf]
    %v4145 = vld [vmem:[%s4075 + $0x114] sm:$0xf]
    %v4146 = vld [vmem:[%s4075 + $0x118] sm:$0xf]
    %v4147 = vld [vmem:[%s4075 + $0x11c] sm:$0xf]
    %v4148 = vld [vmem:[%s4075 + $0x120] sm:$0xf]
    %v4149 = vld [vmem:[%s4075 + $0x124] sm:$0xf]
    %v4150 = vld [vmem:[%s4075 + $0x128] sm:$0xf]
    %v4151 = vld [vmem:[%s4075 + $0x12c] sm:$0xf]
    %v4152 = vld [vmem:[%s4075 + $0x130] sm:$0xf]
    %v4153 = vld [vmem:[%s4075 + $0x134] sm:$0xf]
    %v4154 = vld [vmem:[%s4075 + $0x138] sm:$0xf]
    %v4155 = vld [vmem:[%s4075 + $0x13c] sm:$0xf]
    %v4156 = vld [vmem:[%s4075 + $0x140] sm:$0xf]
    %v4157 = vld [vmem:[%s4075 + $0x144] sm:$0xf]
    %v4158 = vld [vmem:[%s4075 + $0x148] sm:$0xf]
    %v4159 = vld [vmem:[%s4075 + $0x14c] sm:$0xf]
    %v4160 = vld [vmem:[%s4075 + $0x150] sm:$0xf]
    %v4161 = vld [vmem:[%s4075 + $0x154] sm:$0xf]
    %v4162 = vld [vmem:[%s4075 + $0x158] sm:$0xf]
    %v4163 = vld [vmem:[%s4075 + $0x15c] sm:$0xf]
    %v4164 = vld [vmem:[%s4075 + $0x160] sm:$0xf]
    %v4165 = vld [vmem:[%s4075 + $0x164] sm:$0xf]
    %v4166 = vld [vmem:[%s4075 + $0x168] sm:$0xf]
    %v4167 = vld [vmem:[%s4075 + $0x16c] sm:$0xf]
    %v4168 = vld [vmem:[%s4075 + $0x170] sm:$0xf]
    %v4169 = vld [vmem:[%s4075 + $0x174] sm:$0xf]
    %v4170 = vld [vmem:[%s4075 + $0x178] sm:$0xf]
    %v4171 = vld [vmem:[%s4075 + $0x17c] sm:$0xf]
    %v4172 = vld [vmem:[%s4075 + $0x180] sm:$0xf]
    %v4173 = vld [vmem:[%s4075 + $0x184] sm:$0xf]
    %v4174 = vld [vmem:[%s4075 + $0x188] sm:$0xf]
    %v4175 = vld [vmem:[%s4075 + $0x18c] sm:$0xf]
    %v4176 = vld [vmem:[%s4075 + $0x190] sm:$0xf]
    %v4177 = vld [vmem:[%s4075 + $0x194] sm:$0xf]
    %v4178 = vld [vmem:[%s4075 + $0x198] sm:$0xf]
    %v4179 = vld [vmem:[%s4075 + $0x19c] sm:$0xf]
    %v4180 = vld [vmem:[%s4075 + $0x1a0] sm:$0xf]
    %v4181 = vld [vmem:[%s4075 + $0x1a4] sm:$0xf]
    %v4182 = vld [vmem:[%s4075 + $0x1a8] sm:$0xf]
    %v4183 = vld [vmem:[%s4075 + $0x1ac] sm:$0xf]
    %v4184 = vld [vmem:[%s4075 + $0x1b0] sm:$0xf]
    %v4185 = vld [vmem:[%s4075 + $0x1b4] sm:$0xf]
    %v4186 = vld [vmem:[%s4075 + $0x1b8] sm:$0xf]
    %v4187 = vld [vmem:[%s4075 + $0x1bc] sm:$0xf]
    %v4188 = vld [vmem:[%s4075 + $0x1c0] sm:$0xf]
    %v4189 = vld [vmem:[%s4075 + $0x1c4] sm:$0xf]
    %v4190 = vld [vmem:[%s4075 + $0x1c8] sm:$0xf]
    %v4191 = vld [vmem:[%s4075 + $0x1cc] sm:$0xf]
    %v4192 = vld [vmem:[%s4075 + $0x1d0] sm:$0xf]
    %v4193 = vld [vmem:[%s4075 + $0x1d4] sm:$0xf]
    %v4194 = vld [vmem:[%s4075 + $0x1d8] sm:$0xf]
    %v4195 = vld [vmem:[%s4075 + $0x1dc] sm:$0xf]
    %v4196 = vld [vmem:[%s4075 + $0x1e0] sm:$0xf]
    %v4197 = vld [vmem:[%s4075 + $0x1e4] sm:$0xf]
    %v4198 = vld [vmem:[%s4075 + $0x1e8] sm:$0xf]
    %v4199 = vld [vmem:[%s4075 + $0x1ec] sm:$0xf]
    %v4200 = vld [vmem:[%s4075 + $0x1f0] sm:$0xf]
    %v4201 = vld [vmem:[%s4075 + $0x1f4] sm:$0xf]
    %v4202 = vld [vmem:[%s4075 + $0x1f8] sm:$0xf]
    %v4203 = vld [vmem:[%s4075 + $0x1fc] sm:$0xf]
    %v4204 = vld [vmem:[%s4075 + $0x200] sm:$0xf]
    %v4205 = vld [vmem:[%s4075 + $0x204] sm:$0xf]
    %v4206 = vld [vmem:[%s4075 + $0x208] sm:$0xf]
    %v4207 = vld [vmem:[%s4075 + $0x20c] sm:$0xf]
    %v4208 = vld [vmem:[%s4075 + $0x210] sm:$0xf]
    %v4209 = vld [vmem:[%s4075 + $0x214] sm:$0xf]
    %v4210 = vld [vmem:[%s4075 + $0x218] sm:$0xf]
    %v4211 = vld [vmem:[%s4075 + $0x21c] sm:$0xf]
    %v4212 = vld [vmem:[%s4075 + $0x220] sm:$0xf]
    %v4213 = vld [vmem:[%s4075 + $0x224] sm:$0xf]
    %v4214 = vld [vmem:[%s4075 + $0x228] sm:$0xf]
    %v4215 = vld [vmem:[%s4075 + $0x22c] sm:$0xf]
    %v4216 = vld [vmem:[%s4075 + $0x230] sm:$0xf]
    %v4217 = vld [vmem:[%s4075 + $0x234] sm:$0xf]
    %v4218 = vld [vmem:[%s4075 + $0x238] sm:$0xf]
    %v4219 = vld [vmem:[%s4075 + $0x23c] sm:$0xf]
    %v4220 = vld [vmem:[#allocation8 + $0x2] sm:$0x1]
    %v4221 = vlaneseq
    %v4222 = vshrl.u32 %v4221, 7
    %v4223 = vsub.s32 0, %v4222
    %v4224 = vrot.slane %v4220, %v4223
    %v4265 = vunpack.c.l.b16 %v4035
    %v4266 = vunpack.c.h.b16 %v4035
    %v4267 = vunpack.c.l.b16 %v4036
    %v4268 = vunpack.c.h.b16 %v4036
    %v4269 = vunpack.c.l.b16 %v4037
    %v4270 = vunpack.c.h.b16 %v4037
    %v4271 = vunpack.c.l.b16 %v4038
    %v4272 = vunpack.c.h.b16 %v4038
    %v4273 = vunpack.c.l.b16 %v4039
    %v4274 = vunpack.c.l.b16 %v4040
    %v4275 = vunpack.c.h.b16 %v4040
    %v4276 = vunpack.c.l.b16 %v4041
    %v4277 = vunpack.c.h.b16 %v4041
    %v4278 = vunpack.c.l.b16 %v4042
    %v4279 = vunpack.c.h.b16 %v4042
    %v4280 = vunpack.c.l.b16 %v4043
    %v4281 = vunpack.c.h.b16 %v4043
    %v4282 = vunpack.c.l.b16 %v4044
    %v4283 = vunpack.c.l.b16 %v4045
    %v4284 = vunpack.c.h.b16 %v4045
    %v4285 = vunpack.c.l.b16 %v4046
    %v4286 = vunpack.c.h.b16 %v4046
    %v4287 = vunpack.c.l.b16 %v4047
    %v4288 = vunpack.c.h.b16 %v4047
    %v4289 = vunpack.c.l.b16 %v4048
    %v4290 = vunpack.c.h.b16 %v4048
    %v4291 = vunpack.c.l.b16 %v4049
    %v4292 = vunpack.c.l.b16 %v4050
    %v4293 = vunpack.c.h.b16 %v4050
    %v4294 = vunpack.c.l.b16 %v4051
    %v4295 = vunpack.c.h.b16 %v4051
    %v4296 = vunpack.c.l.b16 %v4052
    %v4297 = vunpack.c.h.b16 %v4052
    %v4298 = vunpack.c.l.b16 %v4053
    %v4299 = vunpack.c.h.b16 %v4053
    %v4300 = vunpack.c.l.b16 %v4054
    %v4301 = vunpack.c.l.b16 %v4055
    %v4302 = vunpack.c.h.b16 %v4055
    %v4303 = vunpack.c.l.b16 %v4056
    %v4304 = vunpack.c.h.b16 %v4056
    %v4305 = vunpack.c.l.b16 %v4057
    %v4306 = vunpack.c.h.b16 %v4057
    %v4307 = vunpack.c.l.b16 %v4058
    %v4308 = vunpack.c.h.b16 %v4058
    %v4309 = vunpack.c.l.b16 %v4059
    %v4310 = vunpack.c.l.b16 %v4060
    %v4311 = vunpack.c.h.b16 %v4060
    %v4312 = vunpack.c.l.b16 %v4061
    %v4313 = vunpack.c.h.b16 %v4061
    %v4314 = vunpack.c.l.b16 %v4062
    %v4315 = vunpack.c.h.b16 %v4062
    %v4316 = vunpack.c.l.b16 %v4063
    %v4317 = vunpack.c.h.b16 %v4063
    %v4318 = vunpack.c.l.b16 %v4064
    %v4319 = vunpack.c.l.b16 %v4065
    %v4320 = vunpack.c.h.b16 %v4065
    %v4321 = vunpack.c.l.b16 %v4066
    %v4322 = vunpack.c.h.b16 %v4066
    %v4323 = vunpack.c.l.b16 %v4067
    %v4324 = vunpack.c.h.b16 %v4067
    %v4325 = vunpack.c.l.b16 %v4068
    %v4326 = vunpack.c.h.b16 %v4068
    %v4327 = vunpack.c.l.b16 %v4069
    %v4328 = vunpack.c.l.b16 %v4070
    %v4329 = vunpack.c.h.b16 %v4070
    %v4330 = vunpack.c.l.b16 %v4071
    %v4331 = vunpack.c.h.b16 %v4071
    %v4332 = vunpack.c.l.b16 %v4072
    %v4333 = vunpack.c.h.b16 %v4072
    %v4334 = vunpack.c.l.b16 %v4073
    %v4335 = vunpack.c.h.b16 %v4073
    %v4336 = vunpack.c.l.b16 %v4074
    %v4337 = vpack.c.b16 %v4274, %v4265
    %v4338 = vpack.c.b16 %v4275, %v4266
    %v4339 = vpack.c.b16 %v4276, %v4267
    %v4340 = vpack.c.b16 %v4277, %v4268
    %v4341 = vpack.c.b16 %v4278, %v4269
    %v4342 = vpack.c.b16 %v4279, %v4270
    %v4343 = vpack.c.b16 %v4280, %v4271
    %v4344 = vpack.c.b16 %v4281, %v4272
    %v4345 = vpack.c.b16 %v4282, %v4273
    %v4346 = vpack.c.b16 %v4292, %v4283
    %v4347 = vpack.c.b16 %v4293, %v4284
    %v4348 = vpack.c.b16 %v4294, %v4285
    %v4349 = vpack.c.b16 %v4295, %v4286
    %v4350 = vpack.c.b16 %v4296, %v4287
    %v4351 = vpack.c.b16 %v4297, %v4288
    %v4352 = vpack.c.b16 %v4298, %v4289
    %v4353 = vpack.c.b16 %v4299, %v4290
    %v4354 = vpack.c.b16 %v4300, %v4291
    %v4355 = vpack.c.b16 %v4310, %v4301
    %v4356 = vpack.c.b16 %v4311, %v4302
    %v4357 = vpack.c.b16 %v4312, %v4303
    %v4358 = vpack.c.b16 %v4313, %v4304
    %v4359 = vpack.c.b16 %v4314, %v4305
    %v4360 = vpack.c.b16 %v4315, %v4306
    %v4361 = vpack.c.b16 %v4316, %v4307
    %v4362 = vpack.c.b16 %v4317, %v4308
    %v4363 = vpack.c.b16 %v4318, %v4309
    %v4364 = vpack.c.b16 %v4328, %v4319
    %v4365 = vpack.c.b16 %v4329, %v4320
    %v4366 = vpack.c.b16 %v4330, %v4321
    %v4367 = vpack.c.b16 %v4331, %v4322
    %v4368 = vpack.c.b16 %v4332, %v4323
    %v4369 = vpack.c.b16 %v4333, %v4324
    %v4370 = vpack.c.b16 %v4334, %v4325
    %v4371 = vpack.c.b16 %v4335, %v4326
    %v4372 = vpack.c.b16 %v4336, %v4327
    %v4553 = vunpack.c.l.b16 %v4076
    %v4554 = vunpack.c.l.b16 %v4077
    %v4555 = vunpack.c.l.b16 %v4078
    %v4556 = vunpack.c.l.b16 %v4079
    %v4557 = vunpack.c.l.b16 %v4080
    %v4558 = vunpack.c.l.b16 %v4081
    %v4559 = vunpack.c.l.b16 %v4082
    %v4560 = vunpack.c.l.b16 %v4083
    %v4561 = vunpack.c.l.b16 %v4084
    %v4562 = vunpack.c.l.b16 %v4085
    %v4563 = vunpack.c.l.b16 %v4086
    %v4564 = vunpack.c.l.b16 %v4087
    %v4565 = vunpack.c.l.b16 %v4088
    %v4566 = vunpack.c.l.b16 %v4089
    %v4567 = vunpack.c.l.b16 %v4090
    %v4568 = vunpack.c.l.b16 %v4091
    %v4569 = vunpack.c.l.b16 %v4092
    %v4570 = vunpack.c.l.b16 %v4093
    %v4571 = vunpack.c.l.b16 %v4094
    %v4572 = vunpack.c.l.b16 %v4095
    %v4573 = vunpack.c.l.b16 %v4096
    %v4574 = vunpack.c.l.b16 %v4097
    %v4575 = vunpack.c.l.b16 %v4098
    %v4576 = vunpack.c.l.b16 %v4099
    %v4577 = vunpack.c.l.b16 %v4100
    %v4578 = vunpack.c.l.b16 %v4101
    %v4579 = vunpack.c.l.b16 %v4102
    %v4580 = vunpack.c.l.b16 %v4103
    %v4581 = vunpack.c.l.b16 %v4104
    %v4582 = vunpack.c.l.b16 %v4105
    %v4583 = vunpack.c.l.b16 %v4106
    %v4584 = vunpack.c.l.b16 %v4107
    %v4585 = vunpack.c.l.b16 %v4108
    %v4586 = vunpack.c.l.b16 %v4109
    %v4587 = vunpack.c.l.b16 %v4110
    %v4588 = vunpack.c.l.b16 %v4111
    %v4589 = vunpack.c.l.b16 %v4112
    %v4590 = vunpack.c.l.b16 %v4113
    %v4591 = vunpack.c.l.b16 %v4114
    %v4592 = vunpack.c.l.b16 %v4115
    %v4593 = vunpack.c.l.b16 %v4116
    %v4594 = vunpack.c.l.b16 %v4117
    %v4595 = vunpack.c.l.b16 %v4118
    %v4596 = vunpack.c.l.b16 %v4119
    %v4597 = vunpack.c.l.b16 %v4120
    %v4598 = vunpack.c.l.b16 %v4121
    %v4599 = vunpack.c.l.b16 %v4122
    %v4600 = vunpack.c.l.b16 %v4123
    %v4601 = vunpack.c.l.b16 %v4124
    %v4602 = vunpack.c.l.b16 %v4125
    %v4603 = vunpack.c.l.b16 %v4126
    %v4604 = vunpack.c.l.b16 %v4127
    %v4605 = vunpack.c.l.b16 %v4128
    %v4606 = vunpack.c.l.b16 %v4129
    %v4607 = vunpack.c.l.b16 %v4130
    %v4608 = vunpack.c.l.b16 %v4131
    %v4609 = vunpack.c.l.b16 %v4132
    %v4610 = vunpack.c.l.b16 %v4133
    %v4611 = vunpack.c.l.b16 %v4134
    %v4612 = vunpack.c.l.b16 %v4135
    %v4613 = vunpack.c.l.b16 %v4136
    %v4614 = vunpack.c.l.b16 %v4137
    %v4615 = vunpack.c.l.b16 %v4138
    %v4616 = vunpack.c.l.b16 %v4139
    %v4617 = vunpack.c.l.b16 %v4140
    %v4618 = vunpack.c.l.b16 %v4141
    %v4619 = vunpack.c.l.b16 %v4142
    %v4620 = vunpack.c.l.b16 %v4143
    %v4621 = vunpack.c.l.b16 %v4144
    %v4622 = vunpack.c.l.b16 %v4145
    %v4623 = vunpack.c.l.b16 %v4146
    %v4624 = vunpack.c.l.b16 %v4147
    %v4625 = vunpack.c.l.b16 %v4148
    %v4626 = vunpack.c.l.b16 %v4149
    %v4627 = vunpack.c.l.b16 %v4150
    %v4628 = vunpack.c.l.b16 %v4151
    %v4629 = vunpack.c.l.b16 %v4152
    %v4630 = vunpack.c.l.b16 %v4153
    %v4631 = vunpack.c.l.b16 %v4154
    %v4632 = vunpack.c.l.b16 %v4155
    %v4633 = vunpack.c.l.b16 %v4156
    %v4634 = vunpack.c.l.b16 %v4157
    %v4635 = vunpack.c.l.b16 %v4158
    %v4636 = vunpack.c.l.b16 %v4159
    %v4637 = vunpack.c.l.b16 %v4160
    %v4638 = vunpack.c.l.b16 %v4161
    %v4639 = vunpack.c.l.b16 %v4162
    %v4640 = vunpack.c.l.b16 %v4163
    %v4641 = vunpack.c.l.b16 %v4164
    %v4642 = vunpack.c.l.b16 %v4165
    %v4643 = vunpack.c.l.b16 %v4166
    %v4644 = vunpack.c.l.b16 %v4167
    %v4645 = vunpack.c.l.b16 %v4168
    %v4646 = vunpack.c.l.b16 %v4169
    %v4647 = vunpack.c.l.b16 %v4170
    %v4648 = vunpack.c.l.b16 %v4171
    %v4649 = vunpack.c.l.b16 %v4172
    %v4650 = vunpack.c.l.b16 %v4173
    %v4651 = vunpack.c.l.b16 %v4174
    %v4652 = vunpack.c.l.b16 %v4175
    %v4653 = vunpack.c.l.b16 %v4176
    %v4654 = vunpack.c.l.b16 %v4177
    %v4655 = vunpack.c.l.b16 %v4178
    %v4656 = vunpack.c.l.b16 %v4179
    %v4657 = vunpack.c.l.b16 %v4180
    %v4658 = vunpack.c.l.b16 %v4181
    %v4659 = vunpack.c.l.b16 %v4182
    %v4660 = vunpack.c.l.b16 %v4183
    %v4661 = vunpack.c.l.b16 %v4184
    %v4662 = vunpack.c.l.b16 %v4185
    %v4663 = vunpack.c.l.b16 %v4186
    %v4664 = vunpack.c.l.b16 %v4187
    %v4665 = vunpack.c.l.b16 %v4188
    %v4666 = vunpack.c.l.b16 %v4189
    %v4667 = vunpack.c.l.b16 %v4190
    %v4668 = vunpack.c.l.b16 %v4191
    %v4669 = vunpack.c.l.b16 %v4192
    %v4670 = vunpack.c.l.b16 %v4193
    %v4671 = vunpack.c.l.b16 %v4194
    %v4672 = vunpack.c.l.b16 %v4195
    %v4673 = vunpack.c.l.b16 %v4196
    %v4674 = vunpack.c.l.b16 %v4197
    %v4675 = vunpack.c.l.b16 %v4198
    %v4676 = vunpack.c.l.b16 %v4199
    %v4677 = vunpack.c.l.b16 %v4200
    %v4678 = vunpack.c.l.b16 %v4201
    %v4679 = vunpack.c.l.b16 %v4202
    %v4680 = vunpack.c.l.b16 %v4203
    %v4681 = vunpack.c.l.b16 %v4204
    %v4682 = vunpack.c.l.b16 %v4205
    %v4683 = vunpack.c.l.b16 %v4206
    %v4684 = vunpack.c.l.b16 %v4207
    %v4685 = vunpack.c.l.b16 %v4208
    %v4686 = vunpack.c.l.b16 %v4209
    %v4687 = vunpack.c.l.b16 %v4210
    %v4688 = vunpack.c.l.b16 %v4211
    %v4689 = vunpack.c.l.b16 %v4212
    %v4690 = vunpack.c.l.b16 %v4213
    %v4691 = vunpack.c.l.b16 %v4214
    %v4692 = vunpack.c.l.b16 %v4215
    %v4693 = vunpack.c.l.b16 %v4216
    %v4694 = vunpack.c.l.b16 %v4217
    %v4695 = vunpack.c.l.b16 %v4218
    %v4696 = vunpack.c.l.b16 %v4219
    %v4697 = vpack.c.b16 %v4554, %v4553
    %v4698 = vpack.c.b16 %v4556, %v4555
    %v4699 = vpack.c.b16 %v4558, %v4557
    %v4700 = vpack.c.b16 %v4560, %v4559
    %v4701 = vpack.c.b16 %v4562, %v4561
    %v4702 = vpack.c.b16 %v4564, %v4563
    %v4703 = vpack.c.b16 %v4566, %v4565
    %v4704 = vpack.c.b16 %v4568, %v4567
    %v4705 = vpack.c.b16 %v4570, %v4569
    %v4706 = vpack.c.b16 %v4572, %v4571
    %v4707 = vpack.c.b16 %v4574, %v4573
    %v4708 = vpack.c.b16 %v4576, %v4575
    %v4709 = vpack.c.b16 %v4578, %v4577
    %v4710 = vpack.c.b16 %v4580, %v4579
    %v4711 = vpack.c.b16 %v4582, %v4581
    %v4712 = vpack.c.b16 %v4584, %v4583
    %v4713 = vpack.c.b16 %v4586, %v4585
    %v4714 = vpack.c.b16 %v4588, %v4587
    %v4715 = vpack.c.b16 %v4590, %v4589
    %v4716 = vpack.c.b16 %v4592, %v4591
    %v4717 = vpack.c.b16 %v4594, %v4593
    %v4718 = vpack.c.b16 %v4596, %v4595
    %v4719 = vpack.c.b16 %v4598, %v4597
    %v4720 = vpack.c.b16 %v4600, %v4599
    %v4721 = vpack.c.b16 %v4602, %v4601
    %v4722 = vpack.c.b16 %v4604, %v4603
    %v4723 = vpack.c.b16 %v4606, %v4605
    %v4724 = vpack.c.b16 %v4608, %v4607
    %v4725 = vpack.c.b16 %v4610, %v4609
    %v4726 = vpack.c.b16 %v4612, %v4611
    %v4727 = vpack.c.b16 %v4614, %v4613
    %v4728 = vpack.c.b16 %v4616, %v4615
    %v4729 = vpack.c.b16 %v4618, %v4617
    %v4730 = vpack.c.b16 %v4620, %v4619
    %v4731 = vpack.c.b16 %v4622, %v4621
    %v4732 = vpack.c.b16 %v4624, %v4623
    %v4733 = vpack.c.b16 %v4626, %v4625
    %v4734 = vpack.c.b16 %v4628, %v4627
    %v4735 = vpack.c.b16 %v4630, %v4629
    %v4736 = vpack.c.b16 %v4632, %v4631
    %v4737 = vpack.c.b16 %v4634, %v4633
    %v4738 = vpack.c.b16 %v4636, %v4635
    %v4739 = vpack.c.b16 %v4638, %v4637
    %v4740 = vpack.c.b16 %v4640, %v4639
    %v4741 = vpack.c.b16 %v4642, %v4641
    %v4742 = vpack.c.b16 %v4644, %v4643
    %v4743 = vpack.c.b16 %v4646, %v4645
    %v4744 = vpack.c.b16 %v4648, %v4647
    %v4745 = vpack.c.b16 %v4650, %v4649
    %v4746 = vpack.c.b16 %v4652, %v4651
    %v4747 = vpack.c.b16 %v4654, %v4653
    %v4748 = vpack.c.b16 %v4656, %v4655
    %v4749 = vpack.c.b16 %v4658, %v4657
    %v4750 = vpack.c.b16 %v4660, %v4659
    %v4751 = vpack.c.b16 %v4662, %v4661
    %v4752 = vpack.c.b16 %v4664, %v4663
    %v4753 = vpack.c.b16 %v4666, %v4665
    %v4754 = vpack.c.b16 %v4668, %v4667
    %v4755 = vpack.c.b16 %v4670, %v4669
    %v4756 = vpack.c.b16 %v4672, %v4671
    %v4757 = vpack.c.b16 %v4674, %v4673
    %v4758 = vpack.c.b16 %v4676, %v4675
    %v4759 = vpack.c.b16 %v4678, %v4677
    %v4760 = vpack.c.b16 %v4680, %v4679
    %v4761 = vpack.c.b16 %v4682, %v4681
    %v4762 = vpack.c.b16 %v4684, %v4683
    %v4763 = vpack.c.b16 %v4686, %v4685
    %v4764 = vpack.c.b16 %v4688, %v4687
    %v4765 = vpack.c.b16 %v4690, %v4689
    %v4766 = vpack.c.b16 %v4692, %v4691
    %v4767 = vpack.c.b16 %v4694, %v4693
    %v4768 = vpack.c.b16 %v4696, %v4695
    %4841 = vmatprep.subr.bf16.mxu0 0
    %4842 = vmatpush1.bf16.msra.mxu0 %v4704
    %4843 = vmatprep.subr.bf16.mxu0 0
    %4844 = vmatpush1.bf16.msra.mxu0 %v4703
    %4845 = vmatprep.subr.bf16.mxu0 0
    %4846 = vmatpush1.bf16.msra.mxu0 %v4702
    %4847 = vmatprep.subr.bf16.mxu0 0
    %4848 = vmatpush1.bf16.msra.mxu0 %v4701
    %4849 = vmatprep.subr.bf16.mxu0 0
    %4850 = vmatpush1.bf16.msra.mxu0 %v4700
    %4851 = vmatprep.subr.bf16.mxu0 0
    %4852 = vmatpush1.bf16.msra.mxu0 %v4699
    %4853 = vmatprep.subr.bf16.mxu0 0
    %4854 = vmatpush1.bf16.msra.mxu0 %v4698
    %4855 = vmatprep.subr.bf16.mxu0 0
    %4856 = vmatpush1.bf16.msra.mxu0 %v4697
    %4857 = vmatprep.subr.bf16.mxu0 0
    %4858 = vmatpush2.bf16.msra.mxu0 %v4712
    %4859 = vmatprep.subr.bf16.mxu0 0
    %4860 = vmatpush2.bf16.msra.mxu0 %v4711
    %4861 = vmatprep.subr.bf16.mxu0 0
    %4862 = vmatpush2.bf16.msra.mxu0 %v4710
    %4863 = vmatprep.subr.bf16.mxu0 0
    %4864 = vmatpush2.bf16.msra.mxu0 %v4709
    %4865 = vmatprep.subr.bf16.mxu0 0
    %4866 = vmatpush2.bf16.msra.mxu0 %v4708
    %4867 = vmatprep.subr.bf16.mxu0 0
    %4868 = vmatpush2.bf16.msra.mxu0 %v4707
    %4869 = vmatprep.subr.bf16.mxu0 0
    %4870 = vmatpush2.bf16.msra.mxu0 %v4706
    %4871 = vmatprep.subr.bf16.mxu0 0
    %4872 = vmatpush2.bf16.msra.mxu0 %v4705
    %4873 = vmatprep.mubr.bf16.mxu0 %v4338
    %4874 = vmatmul.mubr.bf16.gmra.mxu0 %v4337
    %v4875 = vpop.f32.mrf.mxu0
    %v4876 = vadd.f32 %v4224, %v4875
    %v4877 = vpop.f32.mrf.mxu0
    %v4878 = vpop.f32.mrf.mxu0
    %v4879 = vadd.f32 %v4224, %v4878
    %v4880 = vpop.f32.mrf.mxu0
    %4881 = vmatprep.mubr.bf16.mxu0 %v4347
    %4882 = vmatmul.mubr.bf16.gmra.mxu0 %v4346
    %v4883 = vpop.f32.mrf.mxu0
    %v4884 = vadd.f32 %v4224, %v4883
    %v4885 = vpop.f32.mrf.mxu0
    %v4886 = vpop.f32.mrf.mxu0
    %v4887 = vadd.f32 %v4224, %v4886
    %v4888 = vpop.f32.mrf.mxu0
    %4889 = vmatprep.mubr.bf16.mxu0 %v4356
    %4890 = vmatmul.mubr.bf16.gmra.mxu0 %v4355
    %v4891 = vpop.f32.mrf.mxu0
    %v4892 = vadd.f32 %v4224, %v4891
    %v4893 = vpop.f32.mrf.mxu0
    %v4894 = vpop.f32.mrf.mxu0
    %v4895 = vadd.f32 %v4224, %v4894
    %v4896 = vpop.f32.mrf.mxu0
    %4897 = vmatprep.mubr.bf16.mxu0 %v4365
    %4898 = vmatmul.mubr.bf16.gmra.mxu0 %v4364
    %v4899 = vpop.f32.mrf.mxu0
    %v4900 = vadd.f32 %v4224, %v4899
    %v4901 = vpop.f32.mrf.mxu0
    %v4902 = vpop.f32.mrf.mxu0
    %v4903 = vadd.f32 %v4224, %v4902
    %v4904 = vpop.f32.mrf.mxu0
    %4905 = vdwg.mxu0
    %4906 = vmatprep.subr.bf16.mxu0 0
    %4907 = vmatpush1.bf16.msra.mxu0 %v4720
    %4908 = vmatprep.subr.bf16.mxu0 0
    %4909 = vmatpush1.bf16.msra.mxu0 %v4719
    %4910 = vmatprep.subr.bf16.mxu0 0
    %4911 = vmatpush1.bf16.msra.mxu0 %v4718
    %4912 = vmatprep.subr.bf16.mxu0 0
    %4913 = vmatpush1.bf16.msra.mxu0 %v4717
    %4914 = vmatprep.subr.bf16.mxu0 0
    %4915 = vmatpush1.bf16.msra.mxu0 %v4716
    %4916 = vmatprep.subr.bf16.mxu0 0
    %4917 = vmatpush1.bf16.msra.mxu0 %v4715
    %4918 = vmatprep.subr.bf16.mxu0 0
    %4919 = vmatpush1.bf16.msra.mxu0 %v4714
    %4920 = vmatprep.subr.bf16.mxu0 0
    %4921 = vmatpush1.bf16.msra.mxu0 %v4713
    %4922 = vmatprep.subr.bf16.mxu0 0
    %4923 = vmatpush2.bf16.msra.mxu0 %v4728
    %4924 = vmatprep.subr.bf16.mxu0 0
    %4925 = vmatpush2.bf16.msra.mxu0 %v4727
    %4926 = vmatprep.subr.bf16.mxu0 0
    %4927 = vmatpush2.bf16.msra.mxu0 %v4726
    %4928 = vmatprep.subr.bf16.mxu0 0
    %4929 = vmatpush2.bf16.msra.mxu0 %v4725
    %4930 = vmatprep.subr.bf16.mxu0 0
    %4931 = vmatpush2.bf16.msra.mxu0 %v4724
    %4932 = vmatprep.subr.bf16.mxu0 0
    %4933 = vmatpush2.bf16.msra.mxu0 %v4723
    %4934 = vmatprep.subr.bf16.mxu0 0
    %4935 = vmatpush2.bf16.msra.mxu0 %v4722
    %4936 = vmatprep.subr.bf16.mxu0 0
    %4937 = vmatpush2.bf16.msra.mxu0 %v4721
    %4938 = vmatprep.mubr.bf16.mxu0 %v4340
    %4939 = vmatmul.mubr.bf16.gmra.mxu0 %v4339
    %v4940 = vpop.f32.mrf.mxu0
    %v4941 = vadd.f32 %v4876, %v4940
    %v4942 = vpop.f32.mrf.mxu0
    %v4943 = vpop.f32.mrf.mxu0
    %v4944 = vadd.f32 %v4879, %v4943
    %v4945 = vpop.f32.mrf.mxu0
    %4946 = vmatprep.mubr.bf16.mxu0 %v4349
    %4947 = vmatmul.mubr.bf16.gmra.mxu0 %v4348
    %v4948 = vpop.f32.mrf.mxu0
    %v4949 = vadd.f32 %v4884, %v4948
    %v4950 = vpop.f32.mrf.mxu0
    %v4951 = vpop.f32.mrf.mxu0
    %v4952 = vadd.f32 %v4887, %v4951
    %v4953 = vpop.f32.mrf.mxu0
    %4954 = vmatprep.mubr.bf16.mxu0 %v4358
    %4955 = vmatmul.mubr.bf16.gmra.mxu0 %v4357
    %v4956 = vpop.f32.mrf.mxu0
    %v4957 = vadd.f32 %v4892, %v4956
    %v4958 = vpop.f32.mrf.mxu0
    %v4959 = vpop.f32.mrf.mxu0
    %v4960 = vadd.f32 %v4895, %v4959
    %v4961 = vpop.f32.mrf.mxu0
    %4962 = vmatprep.mubr.bf16.mxu0 %v4367
    %4963 = vmatmul.mubr.bf16.gmra.mxu0 %v4366
    %v4964 = vpop.f32.mrf.mxu0
    %v4965 = vadd.f32 %v4900, %v4964
    %v4966 = vpop.f32.mrf.mxu0
    %v4967 = vpop.f32.mrf.mxu0
    %v4968 = vadd.f32 %v4903, %v4967
    %v4969 = vpop.f32.mrf.mxu0
    %4970 = vdwg.mxu0
    %4971 = vmatprep.subr.bf16.mxu0 0
    %4972 = vmatpush1.bf16.msra.mxu0 %v4736
    %4973 = vmatprep.subr.bf16.mxu0 0
    %4974 = vmatpush1.bf16.msra.mxu0 %v4735
    %4975 = vmatprep.subr.bf16.mxu0 0
    %4976 = vmatpush1.bf16.msra.mxu0 %v4734
    %4977 = vmatprep.subr.bf16.mxu0 0
    %4978 = vmatpush1.bf16.msra.mxu0 %v4733
    %4979 = vmatprep.subr.bf16.mxu0 0
    %4980 = vmatpush1.bf16.msra.mxu0 %v4732
    %4981 = vmatprep.subr.bf16.mxu0 0
    %4982 = vmatpush1.bf16.msra.mxu0 %v4731
    %4983 = vmatprep.subr.bf16.mxu0 0
    %4984 = vmatpush1.bf16.msra.mxu0 %v4730
    %4985 = vmatprep.subr.bf16.mxu0 0
    %4986 = vmatpush1.bf16.msra.mxu0 %v4729
    %4987 = vmatprep.subr.bf16.mxu0 0
    %4988 = vmatpush2.bf16.msra.mxu0 %v4744
    %4989 = vmatprep.subr.bf16.mxu0 0
    %4990 = vmatpush2.bf16.msra.mxu0 %v4743
    %4991 = vmatprep.subr.bf16.mxu0 0
    %4992 = vmatpush2.bf16.msra.mxu0 %v4742
    %4993 = vmatprep.subr.bf16.mxu0 0
    %4994 = vmatpush2.bf16.msra.mxu0 %v4741
    %4995 = vmatprep.subr.bf16.mxu0 0
    %4996 = vmatpush2.bf16.msra.mxu0 %v4740
    %4997 = vmatprep.subr.bf16.mxu0 0
    %4998 = vmatpush2.bf16.msra.mxu0 %v4739
    %4999 = vmatprep.subr.bf16.mxu0 0
    %5000 = vmatpush2.bf16.msra.mxu0 %v4738
    %5001 = vmatprep.subr.bf16.mxu0 0
    %5002 = vmatpush2.bf16.msra.mxu0 %v4737
    %5003 = vmatprep.mubr.bf16.mxu0 %v4342
    %5004 = vmatmul.mubr.bf16.gmra.mxu0 %v4341
    %v5005 = vpop.f32.mrf.mxu0
    %v5006 = vadd.f32 %v4941, %v5005
    %v5007 = vpop.f32.mrf.mxu0
    %v5008 = vpop.f32.mrf.mxu0
    %v5009 = vadd.f32 %v4944, %v5008
    %v5010 = vpop.f32.mrf.mxu0
    %5011 = vmatprep.mubr.bf16.mxu0 %v4351
    %5012 = vmatmul.mubr.bf16.gmra.mxu0 %v4350
    %v5013 = vpop.f32.mrf.mxu0
    %v5014 = vadd.f32 %v4949, %v5013
    %v5015 = vpop.f32.mrf.mxu0
    %v5016 = vpop.f32.mrf.mxu0
    %v5017 = vadd.f32 %v4952, %v5016
    %v5018 = vpop.f32.mrf.mxu0
    %5019 = vmatprep.mubr.bf16.mxu0 %v4360
    %5020 = vmatmul.mubr.bf16.gmra.mxu0 %v4359
    %v5021 = vpop.f32.mrf.mxu0
    %v5022 = vadd.f32 %v4957, %v5021
    %v5023 = vpop.f32.mrf.mxu0
    %v5024 = vpop.f32.mrf.mxu0
    %v5025 = vadd.f32 %v4960, %v5024
    %v5026 = vpop.f32.mrf.mxu0
    %5027 = vmatprep.mubr.bf16.mxu0 %v4369
    %5028 = vmatmul.mubr.bf16.gmra.mxu0 %v4368
    %v5029 = vpop.f32.mrf.mxu0
    %v5030 = vadd.f32 %v4965, %v5029
    %v5031 = vpop.f32.mrf.mxu0
    %v5032 = vpop.f32.mrf.mxu0
    %v5033 = vadd.f32 %v4968, %v5032
    %v5034 = vpop.f32.mrf.mxu0
    %5035 = vdwg.mxu0
    %5036 = vmatprep.subr.bf16.mxu0 0
    %5037 = vmatpush1.bf16.msra.mxu0 %v4752
    %5038 = vmatprep.subr.bf16.mxu0 0
    %5039 = vmatpush1.bf16.msra.mxu0 %v4751
    %5040 = vmatprep.subr.bf16.mxu0 0
    %5041 = vmatpush1.bf16.msra.mxu0 %v4750
    %5042 = vmatprep.subr.bf16.mxu0 0
    %5043 = vmatpush1.bf16.msra.mxu0 %v4749
    %5044 = vmatprep.subr.bf16.mxu0 0
    %5045 = vmatpush1.bf16.msra.mxu0 %v4748
    %5046 = vmatprep.subr.bf16.mxu0 0
    %5047 = vmatpush1.bf16.msra.mxu0 %v4747
    %5048 = vmatprep.subr.bf16.mxu0 0
    %5049 = vmatpush1.bf16.msra.mxu0 %v4746
    %5050 = vmatprep.subr.bf16.mxu0 0
    %5051 = vmatpush1.bf16.msra.mxu0 %v4745
    %5052 = vmatprep.subr.bf16.mxu0 0
    %5053 = vmatpush2.bf16.msra.mxu0 %v4760
    %5054 = vmatprep.subr.bf16.mxu0 0
    %5055 = vmatpush2.bf16.msra.mxu0 %v4759
    %5056 = vmatprep.subr.bf16.mxu0 0
    %5057 = vmatpush2.bf16.msra.mxu0 %v4758
    %5058 = vmatprep.subr.bf16.mxu0 0
    %5059 = vmatpush2.bf16.msra.mxu0 %v4757
    %5060 = vmatprep.subr.bf16.mxu0 0
    %5061 = vmatpush2.bf16.msra.mxu0 %v4756
    %5062 = vmatprep.subr.bf16.mxu0 0
    %5063 = vmatpush2.bf16.msra.mxu0 %v4755
    %5064 = vmatprep.subr.bf16.mxu0 0
    %5065 = vmatpush2.bf16.msra.mxu0 %v4754
    %5066 = vmatprep.subr.bf16.mxu0 0
    %5067 = vmatpush2.bf16.msra.mxu0 %v4753
    %5068 = vmatprep.mubr.bf16.mxu0 %v4344
    %5069 = vmatmul.mubr.bf16.gmra.mxu0 %v4343
    %v5070 = vpop.f32.mrf.mxu0
    %v5071 = vadd.f32 %v5006, %v5070
    %v5072 = vpop.f32.mrf.mxu0
    %v5073 = vpop.f32.mrf.mxu0
    %v5074 = vadd.f32 %v5009, %v5073
    %v5075 = vpop.f32.mrf.mxu0
    %5076 = vmatprep.mubr.bf16.mxu0 %v4353
    %5077 = vmatmul.mubr.bf16.gmra.mxu0 %v4352
    %v5078 = vpop.f32.mrf.mxu0
    %v5079 = vadd.f32 %v5014, %v5078
    %v5080 = vpop.f32.mrf.mxu0
    %v5081 = vpop.f32.mrf.mxu0
    %v5082 = vadd.f32 %v5017, %v5081
    %v5083 = vpop.f32.mrf.mxu0
    %5084 = vmatprep.mubr.bf16.mxu0 %v4362
    %5085 = vmatmul.mubr.bf16.gmra.mxu0 %v4361
    %v5086 = vpop.f32.mrf.mxu0
    %v5087 = vadd.f32 %v5022, %v5086
    %v5088 = vpop.f32.mrf.mxu0
    %v5089 = vpop.f32.mrf.mxu0
    %v5090 = vadd.f32 %v5025, %v5089
    %v5091 = vpop.f32.mrf.mxu0
    %5092 = vmatprep.mubr.bf16.mxu0 %v4371
    %5093 = vmatmul.mubr.bf16.gmra.mxu0 %v4370
    %v5094 = vpop.f32.mrf.mxu0
    %v5095 = vadd.f32 %v5030, %v5094
    %v5096 = vpop.f32.mrf.mxu0
    %v5097 = vpop.f32.mrf.mxu0
    %v5098 = vadd.f32 %v5033, %v5097
    %v5099 = vpop.f32.mrf.mxu0
    %5100 = vdwg.mxu0
    %5101 = vmatprep.subr.bf16.mxu0 0
    %5102 = vmatpush1.bf16.msra.mxu0 %v4768
    %5103 = vmatprep.subr.bf16.mxu0 0
    %5104 = vmatpush1.bf16.msra.mxu0 %v4767
    %5105 = vmatprep.subr.bf16.mxu0 0
    %5106 = vmatpush1.bf16.msra.mxu0 %v4766
    %5107 = vmatprep.subr.bf16.mxu0 0
    %5108 = vmatpush1.bf16.msra.mxu0 %v4765
    %5109 = vmatprep.subr.bf16.mxu0 0
    %5110 = vmatpush1.bf16.msra.mxu0 %v4764
    %5111 = vmatprep.subr.bf16.mxu0 0
    %5112 = vmatpush1.bf16.msra.mxu0 %v4763
    %5113 = vmatprep.subr.bf16.mxu0 0
    %5114 = vmatpush1.bf16.msra.mxu0 %v4762
    %5115 = vmatprep.subr.bf16.mxu0 0
    %5116 = vmatpush1.bf16.msra.mxu0 %v4761
    %5117 = vmatprep.subr.bf16.mxu0 0
    %5118 = vmatpush2.bf16.msra.mxu0 0
    %5119 = vmatprep.subr.bf16.mxu0 0
    %5120 = vmatpush2.bf16.msra.mxu0 0
    %5121 = vmatprep.subr.bf16.mxu0 0
    %5122 = vmatpush2.bf16.msra.mxu0 0
    %5123 = vmatprep.subr.bf16.mxu0 0
    %5124 = vmatpush2.bf16.msra.mxu0 0
    %5125 = vmatprep.subr.bf16.mxu0 0
    %5126 = vmatpush2.bf16.msra.mxu0 0
    %5127 = vmatprep.subr.bf16.mxu0 0
    %5128 = vmatpush2.bf16.msra.mxu0 0
    %5129 = vmatprep.subr.bf16.mxu0 0
    %5130 = vmatpush2.bf16.msra.mxu0 0
    %5131 = vmatprep.subr.bf16.mxu0 0
    %5132 = vmatpush2.bf16.msra.mxu0 0
    %5133 = vmatprep.mubr.bf16.mxu0 0
    %5134 = vmatmul.mubr.bf16.gmra.mxu0 %v4345
    %v5135 = vpop.f32.mrf.mxu0
    %v5136 = vadd.f32 %v5071, %v5135
    %v5137 = vpop.f32.mrf.mxu0
    %v5138 = vpop.f32.mrf.mxu0
    %v5139 = vadd.f32 %v5074, %v5138
    %v5140 = vpop.f32.mrf.mxu0
    %5141 = vmatprep.mubr.bf16.mxu0 0
    %5142 = vmatmul.mubr.bf16.gmra.mxu0 %v4354
    %v5143 = vpop.f32.mrf.mxu0
    %v5144 = vadd.f32 %v5079, %v5143
    %v5145 = vpop.f32.mrf.mxu0
    %v5146 = vpop.f32.mrf.mxu0
    %v5147 = vadd.f32 %v5082, %v5146
    %v5148 = vpop.f32.mrf.mxu0
    %5149 = vmatprep.mubr.bf16.mxu0 0
    %5150 = vmatmul.mubr.bf16.gmra.mxu0 %v4363
    %v5151 = vpop.f32.mrf.mxu0
    %v5152 = vadd.f32 %v5087, %v5151
    %v5153 = vpop.f32.mrf.mxu0
    %v5154 = vpop.f32.mrf.mxu0
    %v5155 = vadd.f32 %v5090, %v5154
    %v5156 = vpop.f32.mrf.mxu0
    %5157 = vmatprep.mubr.bf16.mxu0 0
    %5158 = vmatmul.mubr.bf16.gmra.mxu0 %v4372
    %v5159 = vpop.f32.mrf.mxu0
    %v5160 = vadd.f32 %v5095, %v5159
    %v5161 = vpop.f32.mrf.mxu0
    %v5162 = vpop.f32.mrf.mxu0
    %v5163 = vadd.f32 %v5098, %v5162
    %v5164 = vpop.f32.mrf.mxu0
    %5165 = vdwg.mxu0
    %v5166 = vadd.f32 %v5136, %v1864
    %v5167 = vadd.f32 %v5139, %v1865
    %v5168 = vadd.f32 %v5144, %v1866
    %v5169 = vadd.f32 %v5147, %v1867
    %v5170 = vadd.f32 %v5152, %v1868
    %v5171 = vadd.f32 %v5155, %v1869
    %v5172 = vadd.f32 %v5160, %v1870
    %v5173 = vadd.f32 %v5163, %v1871
    %5174 = vst [vmem:[%s206] sm:$0xff] %v5166
    %5175 = vst [vmem:[%s206 + $0x8] sm:$0xff] %v5167
    %5176 = vst [vmem:[%s206 + $0x10] sm:$0xff] %v5168
    %5177 = vst [vmem:[%s206 + $0x18] sm:$0xff] %v5169
    %5178 = vst [vmem:[%s206 + $0x30] sm:$0xff] %v5170
    %5179 = vst [vmem:[%s206 + $0x38] sm:$0xff] %v5171
    %5180 = vst [vmem:[%s206 + $0x40] sm:$0xff] %v5172
    %5181 = vst [vmem:[%s206 + $0x48] sm:$0xff] %v5173
    %v5182 = vrot.slane %v5166, 7
    %v5183 = vrot.slane %v5167, 7
    %v5184 = vrot.slane %v5168, 7
    %v5185 = vrot.slane %v5169, 7
    %v5186 = vrot.slane %v5170, 7
    %v5187 = vrot.slane %v5171, 7
    %v5188 = vrot.slane %v5172, 7
    %v5189 = vrot.slane %v5173, 7
    %v5190 = vsel %vm223, %v5188, %v5189
    %v5191 = vsel %vm223, %v5187, %v5188
    %v5192 = vsel %vm223, %v5186, %v5187
    %v5193 = vsel %vm223, %v5185, %v5186
    %v5194 = vsel %vm223, %v5184, %v5185
    %v5195 = vsel %vm223, %v5183, %v5184
    %v5196 = vsel %vm223, %v5182, %v5183
    %v5197 = vsel %vm223, %v5189, %v5182
    %v5198 = vsel %vm182, 0.0, %v5197
    %v5199 = vsel %vm183, 0.0, %v5196
    %v5200 = vsel %vm184, 0.0, %v5195
    %v5201 = vsel %vm185, 0.0, %v5194
    %v5202 = vsel %vm186, 0.0, %v5193
    %v5203 = vsel %vm187, 0.0, %v5192
    %v5204 = vsel %vm188, 0.0, %v5191
    %v5205 = vsel %vm189, 0.0, %v5190
    %5206 = vst [vmem:[%s240] sm:$0xff] %v5198
    %5207 = vst [vmem:[%s240 + $0x8] sm:$0xff] %v5199
    %5208 = vst [vmem:[%s240 + $0x10] sm:$0xff] %v5200
    %5209 = vst [vmem:[%s240 + $0x18] sm:$0xff] %v5201
    %5210 = vst [vmem:[%s240 + $0x30] sm:$0xff] %v5202
    %5211 = vst [vmem:[%s240 + $0x38] sm:$0xff] %v5203
    %5212 = vst [vmem:[%s240 + $0x40] sm:$0xff] %v5204
    %5213 = vst [vmem:[%s240 + $0x48] sm:$0xff] %v5205
    %v5214 = vrot.slane %v5166, 1
    %v5215 = vrot.slane %v5167, 1
    %v5216 = vrot.slane %v5168, 1
    %v5217 = vrot.slane %v5169, 1
    %v5218 = vrot.slane %v5170, 1
    %v5219 = vrot.slane %v5171, 1
    %v5220 = vrot.slane %v5172, 1
    %v5221 = vrot.slane %v5173, 1
    %v5222 = vsel %vm257, %v5220, %v5221
    %v5223 = vsel %vm257, %v5219, %v5220
    %v5224 = vsel %vm257, %v5218, %v5219
    %v5225 = vsel %vm257, %v5217, %v5218
    %v5226 = vsel %vm257, %v5216, %v5217
    %v5227 = vsel %vm257, %v5215, %v5216
    %v5228 = vsel %vm257, %v5214, %v5215
    %v5229 = vsel %vm257, %v5221, %v5214
    %v5230 = vsel %vm190, 0.0, %v5228
    %v5231 = vsel %vm191, 0.0, %v5227
    %v5232 = vsel %vm192, 0.0, %v5226
    %v5233 = vsel %vm193, 0.0, %v5225
    %v5234 = vsel %vm194, 0.0, %v5224
    %v5235 = vsel %vm195, 0.0, %v5223
    %v5236 = vsel %vm196, 0.0, %v5222
    %v5237 = vsel %vm197, 0.0, %v5229
    %5238 = vst [vmem:[%s274] sm:$0xff] %v5230
    %5239 = vst [vmem:[%s274 + $0x8] sm:$0xff] %v5231
    %5240 = vst [vmem:[%s274 + $0x10] sm:$0xff] %v5232
    %5241 = vst [vmem:[%s274 + $0x18] sm:$0xff] %v5233
    %5242 = vst [vmem:[%s274 + $0x30] sm:$0xff] %v5234
    %5243 = vst [vmem:[%s274 + $0x38] sm:$0xff] %v5235
    %5244 = vst [vmem:[%s274 + $0x40] sm:$0xff] %v5236
    %5245 = vst [vmem:[%s274 + $0x48] sm:$0xff] %v5237
    %v5246 = vld [vmem:[#allocation2] sm:$0xff]
    %v5247 = vld [vmem:[#allocation2 + $0x8] sm:$0xff]
    %v5248 = vld [vmem:[#allocation2 + $0x10] sm:$0xff]
    %v5249 = vld [vmem:[#allocation2 + $0x18] sm:$0xff]
    %v5250 = vld [vmem:[#allocation2 + $0x30] sm:$0xff]
    %v5251 = vld [vmem:[#allocation2 + $0x38] sm:$0xff]
    %v5252 = vld [vmem:[#allocation2 + $0x40] sm:$0xff]
    %v5253 = vld [vmem:[#allocation2 + $0x48] sm:$0xff]
    %v5254 = vpack.c.bf16 %v5247, %v5246
    %v5255 = vpack.c.bf16 %v5249, %v5248
    %v5256 = vpack.c.bf16 %v5251, %v5250
    %v5257 = vpack.c.bf16 %v5253, %v5252
    %v5262 = vunpack.c.l.b16 %v5254
    %v5263 = vunpack.c.h.b16 %v5254
    %v5264 = vunpack.c.l.b16 %v5255
    %v5265 = vunpack.c.h.b16 %v5255
    %v5266 = vunpack.c.l.b16 %v5256
    %v5267 = vunpack.c.h.b16 %v5256
    %v5268 = vunpack.c.l.b16 %v5257
    %v5269 = vunpack.c.h.b16 %v5257
    %v5270 = vpack.c.b16 %v5262, %v5262
    %v5271 = vpack.c.b16 %v5263, %v5263
    %v5272 = vpack.c.b16 %v5264, %v5264
    %v5273 = vpack.c.b16 %v5265, %v5265
    %v5274 = vpack.c.b16 %v5266, %v5266
    %v5275 = vpack.c.b16 %v5267, %v5267
    %v5276 = vpack.c.b16 %v5268, %v5268
    %v5277 = vpack.c.b16 %v5269, %v5269
    %5286 = vst [vmem:[#allocation5] sm:$0xf] %v5270
    %5287 = vst [vmem:[#allocation5 + $0x24] sm:$0xf] %v5271
    %5288 = vst [vmem:[#allocation5 + $0x48] sm:$0xf] %v5272
    %5289 = vst [vmem:[#allocation5 + $0x6c] sm:$0xf] %v5273
    %5290 = vst [vmem:[#allocation5 + $0x90] sm:$0xf] %v5274
    %5291 = vst [vmem:[#allocation5 + $0xb4] sm:$0xf] %v5275
    %5292 = vst [vmem:[#allocation5 + $0xd8] sm:$0xf] %v5276
    %5293 = vst [vmem:[#allocation5 + $0xfc] sm:$0xf] %v5277
    %v5294 = vld [vmem:[#allocation3] sm:$0xff]
    %v5295 = vld [vmem:[#allocation3 + $0x8] sm:$0xff]
    %v5296 = vld [vmem:[#allocation3 + $0x10] sm:$0xff]
    %v5297 = vld [vmem:[#allocation3 + $0x18] sm:$0xff]
    %v5298 = vld [vmem:[#allocation3 + $0x30] sm:$0xff]
    %v5299 = vld [vmem:[#allocation3 + $0x38] sm:$0xff]
    %v5300 = vld [vmem:[#allocation3 + $0x40] sm:$0xff]
    %v5301 = vld [vmem:[#allocation3 + $0x48] sm:$0xff]
    %v5302 = vpack.c.bf16 %v5295, %v5294
    %v5303 = vpack.c.bf16 %v5297, %v5296
    %v5304 = vpack.c.bf16 %v5299, %v5298
    %v5305 = vpack.c.bf16 %v5301, %v5300
    %v5310 = vunpack.c.l.b16 %v5302
    %v5311 = vunpack.c.h.b16 %v5302
    %v5312 = vunpack.c.l.b16 %v5303
    %v5313 = vunpack.c.h.b16 %v5303
    %v5314 = vunpack.c.l.b16 %v5304
    %v5315 = vunpack.c.h.b16 %v5304
    %v5316 = vunpack.c.l.b16 %v5305
    %v5317 = vunpack.c.h.b16 %v5305
    %v5318 = vpack.c.b16 %v5310, %v5310
    %v5319 = vpack.c.b16 %v5311, %v5311
    %v5320 = vpack.c.b16 %v5312, %v5312
    %v5321 = vpack.c.b16 %v5313, %v5313
    %v5322 = vpack.c.b16 %v5314, %v5314
    %v5323 = vpack.c.b16 %v5315, %v5315
    %v5324 = vpack.c.b16 %v5316, %v5316
    %v5325 = vpack.c.b16 %v5317, %v5317
    %5334 = vst [vmem:[#allocation5 + $0x4] sm:$0xf] %v5318
    %5335 = vst [vmem:[#allocation5 + $0x28] sm:$0xf] %v5319
    %5336 = vst [vmem:[#allocation5 + $0x4c] sm:$0xf] %v5320
    %5337 = vst [vmem:[#allocation5 + $0x70] sm:$0xf] %v5321
    %5338 = vst [vmem:[#allocation5 + $0x94] sm:$0xf] %v5322
    %5339 = vst [vmem:[#allocation5 + $0xb8] sm:$0xf] %v5323
    %5340 = vst [vmem:[#allocation5 + $0xdc] sm:$0xf] %v5324
    %5341 = vst [vmem:[#allocation5 + $0x100] sm:$0xf] %v5325
    %v5342 = vld [vmem:[#allocation4] sm:$0xff]
    %v5343 = vld [vmem:[#allocation4 + $0x8] sm:$0xff]
    %v5344 = vld [vmem:[#allocation4 + $0x10] sm:$0xff]
    %v5345 = vld [vmem:[#allocation4 + $0x18] sm:$0xff]
    %v5346 = vld [vmem:[#allocation4 + $0x30] sm:$0xff]
    %v5347 = vld [vmem:[#allocation4 + $0x38] sm:$0xff]
    %v5348 = vld [vmem:[#allocation4 + $0x40] sm:$0xff]
    %v5349 = vld [vmem:[#allocation4 + $0x48] sm:$0xff]
    %v5350 = vpack.c.bf16 %v5343, %v5342
    %v5351 = vpack.c.bf16 %v5345, %v5344
    %v5352 = vpack.c.bf16 %v5347, %v5346
    %v5353 = vpack.c.bf16 %v5349, %v5348
    %v5358 = vunpack.c.l.b16 %v5350
    %v5359 = vunpack.c.h.b16 %v5350
    %v5360 = vunpack.c.l.b16 %v5351
    %v5361 = vunpack.c.h.b16 %v5351
    %v5362 = vunpack.c.l.b16 %v5352
    %v5363 = vunpack.c.h.b16 %v5352
    %v5364 = vunpack.c.l.b16 %v5353
    %v5365 = vunpack.c.h.b16 %v5353
    %v5366 = vpack.c.b16 %v5358, %v5358
    %v5367 = vpack.c.b16 %v5359, %v5359
    %v5368 = vpack.c.b16 %v5360, %v5360
    %v5369 = vpack.c.b16 %v5361, %v5361
    %v5370 = vpack.c.b16 %v5362, %v5362
    %v5371 = vpack.c.b16 %v5363, %v5363
    %v5372 = vpack.c.b16 %v5364, %v5364
    %v5373 = vpack.c.b16 %v5365, %v5365
    %5382 = vst [vmem:[#allocation5 + $0x8] sm:$0xf] %v5366
    %5383 = vst [vmem:[#allocation5 + $0x2c] sm:$0xf] %v5367
    %5384 = vst [vmem:[#allocation5 + $0x50] sm:$0xf] %v5368
    %5385 = vst [vmem:[#allocation5 + $0x74] sm:$0xf] %v5369
    %5386 = vst [vmem:[#allocation5 + $0x98] sm:$0xf] %v5370
    %5387 = vst [vmem:[#allocation5 + $0xbc] sm:$0xf] %v5371
    %5388 = vst [vmem:[#allocation5 + $0xe0] sm:$0xf] %v5372
    %5389 = vst [vmem:[#allocation5 + $0x104] sm:$0xf] %v5373
    %v5390 = vld [vmem:[%s240] sm:$0xff]
    %v5391 = vld [vmem:[%s240 + $0x8] sm:$0xff]
    %v5392 = vld [vmem:[%s240 + $0x10] sm:$0xff]
    %v5393 = vld [vmem:[%s240 + $0x18] sm:$0xff]
    %v5394 = vld [vmem:[%s240 + $0x30] sm:$0xff]
    %v5395 = vld [vmem:[%s240 + $0x38] sm:$0xff]
    %v5396 = vld [vmem:[%s240 + $0x40] sm:$0xff]
    %v5397 = vld [vmem:[%s240 + $0x48] sm:$0xff]
    %v5398 = vpack.c.bf16 %v5391, %v5390
    %v5399 = vpack.c.bf16 %v5393, %v5392
    %v5400 = vpack.c.bf16 %v5395, %v5394
    %v5401 = vpack.c.bf16 %v5397, %v5396
    %v5406 = vunpack.c.l.b16 %v5398
    %v5407 = vunpack.c.h.b16 %v5398
    %v5408 = vunpack.c.l.b16 %v5399
    %v5409 = vunpack.c.h.b16 %v5399
    %v5410 = vunpack.c.l.b16 %v5400
    %v5411 = vunpack.c.h.b16 %v5400
    %v5412 = vunpack.c.l.b16 %v5401
    %v5413 = vunpack.c.h.b16 %v5401
    %v5414 = vpack.c.b16 %v5406, %v5406
    %v5415 = vpack.c.b16 %v5407, %v5407
    %v5416 = vpack.c.b16 %v5408, %v5408
    %v5417 = vpack.c.b16 %v5409, %v5409
    %v5418 = vpack.c.b16 %v5410, %v5410
    %v5419 = vpack.c.b16 %v5411, %v5411
    %v5420 = vpack.c.b16 %v5412, %v5412
    %v5421 = vpack.c.b16 %v5413, %v5413
    %5430 = vst [vmem:[#allocation5 + $0xc] sm:$0xf] %v5414
    %5431 = vst [vmem:[#allocation5 + $0x30] sm:$0xf] %v5415
    %5432 = vst [vmem:[#allocation5 + $0x54] sm:$0xf] %v5416
    %5433 = vst [vmem:[#allocation5 + $0x78] sm:$0xf] %v5417
    %5434 = vst [vmem:[#allocation5 + $0x9c] sm:$0xf] %v5418
    %5435 = vst [vmem:[#allocation5 + $0xc0] sm:$0xf] %v5419
    %5436 = vst [vmem:[#allocation5 + $0xe4] sm:$0xf] %v5420
    %5437 = vst [vmem:[#allocation5 + $0x108] sm:$0xf] %v5421
    %v5438 = vld [vmem:[%s206] sm:$0xff]
    %v5439 = vld [vmem:[%s206 + $0x8] sm:$0xff]
    %v5440 = vld [vmem:[%s206 + $0x10] sm:$0xff]
    %v5441 = vld [vmem:[%s206 + $0x18] sm:$0xff]
    %v5442 = vld [vmem:[%s206 + $0x30] sm:$0xff]
    %v5443 = vld [vmem:[%s206 + $0x38] sm:$0xff]
    %v5444 = vld [vmem:[%s206 + $0x40] sm:$0xff]
    %v5445 = vld [vmem:[%s206 + $0x48] sm:$0xff]
    %v5446 = vpack.c.bf16 %v5439, %v5438
    %v5447 = vpack.c.bf16 %v5441, %v5440
    %v5448 = vpack.c.bf16 %v5443, %v5442
    %v5449 = vpack.c.bf16 %v5445, %v5444
    %v5454 = vunpack.c.l.b16 %v5446
    %v5455 = vunpack.c.h.b16 %v5446
    %v5456 = vunpack.c.l.b16 %v5447
    %v5457 = vunpack.c.h.b16 %v5447
    %v5458 = vunpack.c.l.b16 %v5448
    %v5459 = vunpack.c.h.b16 %v5448
    %v5460 = vunpack.c.l.b16 %v5449
    %v5461 = vunpack.c.h.b16 %v5449
    %v5462 = vpack.c.b16 %v5454, %v5454
    %v5463 = vpack.c.b16 %v5455, %v5455
    %v5464 = vpack.c.b16 %v5456, %v5456
    %v5465 = vpack.c.b16 %v5457, %v5457
    %v5466 = vpack.c.b16 %v5458, %v5458
    %v5467 = vpack.c.b16 %v5459, %v5459
    %v5468 = vpack.c.b16 %v5460, %v5460
    %v5469 = vpack.c.b16 %v5461, %v5461
    %5478 = vst [vmem:[#allocation5 + $0x10] sm:$0xf] %v5462
    %5479 = vst [vmem:[#allocation5 + $0x34] sm:$0xf] %v5463
    %5480 = vst [vmem:[#allocation5 + $0x58] sm:$0xf] %v5464
    %5481 = vst [vmem:[#allocation5 + $0x7c] sm:$0xf] %v5465
    %5482 = vst [vmem:[#allocation5 + $0xa0] sm:$0xf] %v5466
    %5483 = vst [vmem:[#allocation5 + $0xc4] sm:$0xf] %v5467
    %5484 = vst [vmem:[#allocation5 + $0xe8] sm:$0xf] %v5468
    %5485 = vst [vmem:[#allocation5 + $0x10c] sm:$0xf] %v5469
    %v5486 = vld [vmem:[%s274] sm:$0xff]
    %v5487 = vld [vmem:[%s274 + $0x8] sm:$0xff]
    %v5488 = vld [vmem:[%s274 + $0x10] sm:$0xff]
    %v5489 = vld [vmem:[%s274 + $0x18] sm:$0xff]
    %v5490 = vld [vmem:[%s274 + $0x30] sm:$0xff]
    %v5491 = vld [vmem:[%s274 + $0x38] sm:$0xff]
    %v5492 = vld [vmem:[%s274 + $0x40] sm:$0xff]
    %v5493 = vld [vmem:[%s274 + $0x48] sm:$0xff]
    %v5494 = vpack.c.bf16 %v5487, %v5486
    %v5495 = vpack.c.bf16 %v5489, %v5488
    %v5496 = vpack.c.bf16 %v5491, %v5490
    %v5497 = vpack.c.bf16 %v5493, %v5492
    %v5502 = vunpack.c.l.b16 %v5494
    %v5503 = vunpack.c.h.b16 %v5494
    %v5504 = vunpack.c.l.b16 %v5495
    %v5505 = vunpack.c.h.b16 %v5495
    %v5506 = vunpack.c.l.b16 %v5496
    %v5507 = vunpack.c.h.b16 %v5496
    %v5508 = vunpack.c.l.b16 %v5497
    %v5509 = vunpack.c.h.b16 %v5497
    %v5510 = vpack.c.b16 %v5502, %v5502
    %v5511 = vpack.c.b16 %v5503, %v5503
    %v5512 = vpack.c.b16 %v5504, %v5504
    %v5513 = vpack.c.b16 %v5505, %v5505
    %v5514 = vpack.c.b16 %v5506, %v5506
    %v5515 = vpack.c.b16 %v5507, %v5507
    %v5516 = vpack.c.b16 %v5508, %v5508
    %v5517 = vpack.c.b16 %v5509, %v5509
    %5526 = vst [vmem:[#allocation5 + $0x14] sm:$0xf] %v5510
    %5527 = vst [vmem:[#allocation5 + $0x38] sm:$0xf] %v5511
    %5528 = vst [vmem:[#allocation5 + $0x5c] sm:$0xf] %v5512
    %5529 = vst [vmem:[#allocation5 + $0x80] sm:$0xf] %v5513
    %5530 = vst [vmem:[#allocation5 + $0xa4] sm:$0xf] %v5514
    %5531 = vst [vmem:[#allocation5 + $0xc8] sm:$0xf] %v5515
    %5532 = vst [vmem:[#allocation5 + $0xec] sm:$0xf] %v5516
    %5533 = vst [vmem:[#allocation5 + $0x110] sm:$0xf] %v5517
    %v5534 = vld [vmem:[%s571] sm:$0xff]
    %v5535 = vld [vmem:[%s571 + $0x8] sm:$0xff]
    %v5536 = vld [vmem:[%s571 + $0x10] sm:$0xff]
    %v5537 = vld [vmem:[%s571 + $0x18] sm:$0xff]
    %v5538 = vld [vmem:[%s571 + $0x30] sm:$0xff]
    %v5539 = vld [vmem:[%s571 + $0x38] sm:$0xff]
    %v5540 = vld [vmem:[%s571 + $0x40] sm:$0xff]
    %v5541 = vld [vmem:[%s571 + $0x48] sm:$0xff]
    %v5542 = vpack.c.bf16 %v5535, %v5534
    %v5543 = vpack.c.bf16 %v5537, %v5536
    %v5544 = vpack.c.bf16 %v5539, %v5538
    %v5545 = vpack.c.bf16 %v5541, %v5540
    %v5550 = vunpack.c.l.b16 %v5542
    %v5551 = vunpack.c.h.b16 %v5542
    %v5552 = vunpack.c.l.b16 %v5543
    %v5553 = vunpack.c.h.b16 %v5543
    %v5554 = vunpack.c.l.b16 %v5544
    %v5555 = vunpack.c.h.b16 %v5544
    %v5556 = vunpack.c.l.b16 %v5545
    %v5557 = vunpack.c.h.b16 %v5545
    %v5558 = vpack.c.b16 %v5550, %v5550
    %v5559 = vpack.c.b16 %v5551, %v5551
    %v5560 = vpack.c.b16 %v5552, %v5552
    %v5561 = vpack.c.b16 %v5553, %v5553
    %v5562 = vpack.c.b16 %v5554, %v5554
    %v5563 = vpack.c.b16 %v5555, %v5555
    %v5564 = vpack.c.b16 %v5556, %v5556
    %v5565 = vpack.c.b16 %v5557, %v5557
    %5574 = vst [vmem:[#allocation5 + $0x18] sm:$0xf] %v5558
    %5575 = vst [vmem:[#allocation5 + $0x3c] sm:$0xf] %v5559
    %5576 = vst [vmem:[#allocation5 + $0x60] sm:$0xf] %v5560
    %5577 = vst [vmem:[#allocation5 + $0x84] sm:$0xf] %v5561
    %5578 = vst [vmem:[#allocation5 + $0xa8] sm:$0xf] %v5562
    %5579 = vst [vmem:[#allocation5 + $0xcc] sm:$0xf] %v5563
    %5580 = vst [vmem:[#allocation5 + $0xf0] sm:$0xf] %v5564
    %5581 = vst [vmem:[#allocation5 + $0x114] sm:$0xf] %v5565
    %v5582 = vld [vmem:[%s620] sm:$0xff]
    %v5583 = vld [vmem:[%s620 + $0x8] sm:$0xff]
    %v5584 = vld [vmem:[%s620 + $0x10] sm:$0xff]
    %v5585 = vld [vmem:[%s620 + $0x18] sm:$0xff]
    %v5586 = vld [vmem:[%s620 + $0x30] sm:$0xff]
    %v5587 = vld [vmem:[%s620 + $0x38] sm:$0xff]
    %v5588 = vld [vmem:[%s620 + $0x40] sm:$0xff]
    %v5589 = vld [vmem:[%s620 + $0x48] sm:$0xff]
    %v5590 = vpack.c.bf16 %v5583, %v5582
    %v5591 = vpack.c.bf16 %v5585, %v5584
    %v5592 = vpack.c.bf16 %v5587, %v5586
    %v5593 = vpack.c.bf16 %v5589, %v5588
    %v5598 = vunpack.c.l.b16 %v5590
    %v5599 = vunpack.c.h.b16 %v5590
    %v5600 = vunpack.c.l.b16 %v5591
    %v5601 = vunpack.c.h.b16 %v5591
    %v5602 = vunpack.c.l.b16 %v5592
    %v5603 = vunpack.c.h.b16 %v5592
    %v5604 = vunpack.c.l.b16 %v5593
    %v5605 = vunpack.c.h.b16 %v5593
    %v5606 = vpack.c.b16 %v5598, %v5598
    %v5607 = vpack.c.b16 %v5599, %v5599
    %v5608 = vpack.c.b16 %v5600, %v5600
    %v5609 = vpack.c.b16 %v5601, %v5601
    %v5610 = vpack.c.b16 %v5602, %v5602
    %v5611 = vpack.c.b16 %v5603, %v5603
    %v5612 = vpack.c.b16 %v5604, %v5604
    %v5613 = vpack.c.b16 %v5605, %v5605
    %5622 = vst [vmem:[#allocation5 + $0x1c] sm:$0xf] %v5606
    %5623 = vst [vmem:[#allocation5 + $0x40] sm:$0xf] %v5607
    %5624 = vst [vmem:[#allocation5 + $0x64] sm:$0xf] %v5608
    %5625 = vst [vmem:[#allocation5 + $0x88] sm:$0xf] %v5609
    %5626 = vst [vmem:[#allocation5 + $0xac] sm:$0xf] %v5610
    %5627 = vst [vmem:[#allocation5 + $0xd0] sm:$0xf] %v5611
    %5628 = vst [vmem:[#allocation5 + $0xf4] sm:$0xf] %v5612
    %5629 = vst [vmem:[#allocation5 + $0x118] sm:$0xf] %v5613
    %v5630 = vld [vmem:[%s669] sm:$0xff]
    %v5631 = vld [vmem:[%s669 + $0x8] sm:$0xff]
    %v5632 = vld [vmem:[%s669 + $0x10] sm:$0xff]
    %v5633 = vld [vmem:[%s669 + $0x18] sm:$0xff]
    %v5634 = vld [vmem:[%s669 + $0x30] sm:$0xff]
    %v5635 = vld [vmem:[%s669 + $0x38] sm:$0xff]
    %v5636 = vld [vmem:[%s669 + $0x40] sm:$0xff]
    %v5637 = vld [vmem:[%s669 + $0x48] sm:$0xff]
    %v5638 = vpack.c.bf16 %v5631, %v5630
    %v5639 = vpack.c.bf16 %v5633, %v5632
    %v5640 = vpack.c.bf16 %v5635, %v5634
    %v5641 = vpack.c.bf16 %v5637, %v5636
    %v5646 = vunpack.c.l.b16 %v5638
    %v5647 = vunpack.c.h.b16 %v5638
    %v5648 = vunpack.c.l.b16 %v5639
    %v5649 = vunpack.c.h.b16 %v5639
    %v5650 = vunpack.c.l.b16 %v5640
    %v5651 = vunpack.c.h.b16 %v5640
    %v5652 = vunpack.c.l.b16 %v5641
    %v5653 = vunpack.c.h.b16 %v5641
    %v5654 = vpack.c.b16 %v5646, %v5646
    %v5655 = vpack.c.b16 %v5647, %v5647
    %v5656 = vpack.c.b16 %v5648, %v5648
    %v5657 = vpack.c.b16 %v5649, %v5649
    %v5658 = vpack.c.b16 %v5650, %v5650
    %v5659 = vpack.c.b16 %v5651, %v5651
    %v5660 = vpack.c.b16 %v5652, %v5652
    %v5661 = vpack.c.b16 %v5653, %v5653
    %5670 = vst [vmem:[#allocation5 + $0x20] sm:$0xf] %v5654
    %5671 = vst [vmem:[#allocation5 + $0x44] sm:$0xf] %v5655
    %5672 = vst [vmem:[#allocation5 + $0x68] sm:$0xf] %v5656
    %5673 = vst [vmem:[#allocation5 + $0x8c] sm:$0xf] %v5657
    %5674 = vst [vmem:[#allocation5 + $0xb0] sm:$0xf] %v5658
    %5675 = vst [vmem:[#allocation5 + $0xd4] sm:$0xf] %v5659
    %5676 = vst [vmem:[#allocation5 + $0xf8] sm:$0xf] %v5660
    %5677 = vst [vmem:[#allocation5 + $0x11c] sm:$0xf] %v5661
    %v5678 = vld [vmem:[#allocation5] sm:$0xff]
    %v5679 = vld [vmem:[#allocation5 + $0x8] sm:$0xff]
    %v5680 = vld [vmem:[#allocation5 + $0x10] sm:$0xff]
    %v5681 = vld [vmem:[#allocation5 + $0x18] sm:$0xff]
    %v5682 = vld [vmem:[#allocation5 + $0x20] sm:$0xf]
    %v5683 = vld [vmem:[#allocation5 + $0x24] sm:$0xff]
    %v5684 = vld [vmem:[#allocation5 + $0x2c] sm:$0xff]
    %v5685 = vld [vmem:[#allocation5 + $0x34] sm:$0xff]
    %v5686 = vld [vmem:[#allocation5 + $0x3c] sm:$0xff]
    %v5687 = vld [vmem:[#allocation5 + $0x44] sm:$0xf]
    %v5688 = vld [vmem:[#allocation5 + $0x48] sm:$0xff]
    %v5689 = vld [vmem:[#allocation5 + $0x50] sm:$0xff]
    %v5690 = vld [vmem:[#allocation5 + $0x58] sm:$0xff]
    %v5691 = vld [vmem:[#allocation5 + $0x60] sm:$0xff]
    %v5692 = vld [vmem:[#allocation5 + $0x68] sm:$0xf]
    %v5693 = vld [vmem:[#allocation5 + $0x6c] sm:$0xff]
    %v5694 = vld [vmem:[#allocation5 + $0x74] sm:$0xff]
    %v5695 = vld [vmem:[#allocation5 + $0x7c] sm:$0xff]
    %v5696 = vld [vmem:[#allocation5 + $0x84] sm:$0xff]
    %v5697 = vld [vmem:[#allocation5 + $0x8c] sm:$0xf]
    %v5698 = vld [vmem:[#allocation5 + $0x90] sm:$0xff]
    %v5699 = vld [vmem:[#allocation5 + $0x98] sm:$0xff]
    %v5700 = vld [vmem:[#allocation5 + $0xa0] sm:$0xff]
    %v5701 = vld [vmem:[#allocation5 + $0xa8] sm:$0xff]
    %v5702 = vld [vmem:[#allocation5 + $0xb0] sm:$0xf]
    %v5703 = vld [vmem:[#allocation5 + $0xb4] sm:$0xff]
    %v5704 = vld [vmem:[#allocation5 + $0xbc] sm:$0xff]
    %v5705 = vld [vmem:[#allocation5 + $0xc4] sm:$0xff]
    %v5706 = vld [vmem:[#allocation5 + $0xcc] sm:$0xff]
    %v5707 = vld [vmem:[#allocation5 + $0xd4] sm:$0xf]
    %v5708 = vld [vmem:[#allocation5 + $0xd8] sm:$0xff]
    %v5709 = vld [vmem:[#allocation5 + $0xe0] sm:$0xff]
    %v5710 = vld [vmem:[#allocation5 + $0xe8] sm:$0xff]
    %v5711 = vld [vmem:[#allocation5 + $0xf0] sm:$0xff]
    %v5712 = vld [vmem:[#allocation5 + $0xf8] sm:$0xf]
    %v5713 = vld [vmem:[#allocation5 + $0xfc] sm:$0xff]
    %v5714 = vld [vmem:[#allocation5 + $0x104] sm:$0xff]
    %v5715 = vld [vmem:[#allocation5 + $0x10c] sm:$0xff]
    %v5716 = vld [vmem:[#allocation5 + $0x114] sm:$0xff]
    %v5717 = vld [vmem:[#allocation5 + $0x11c] sm:$0xf]
    %s5718 = scalar_lea.vmem [#allocation6], 1728
    %v5719 = vld [vmem:[%s5718] sm:$0xf]
    %v5720 = vld [vmem:[%s5718 + $0x4] sm:$0xf]
    %v5721 = vld [vmem:[%s5718 + $0x8] sm:$0xf]
    %v5722 = vld [vmem:[%s5718 + $0xc] sm:$0xf]
    %v5723 = vld [vmem:[%s5718 + $0x10] sm:$0xf]
    %v5724 = vld [vmem:[%s5718 + $0x14] sm:$0xf]
    %v5725 = vld [vmem:[%s5718 + $0x18] sm:$0xf]
    %v5726 = vld [vmem:[%s5718 + $0x1c] sm:$0xf]
    %v5727 = vld [vmem:[%s5718 + $0x20] sm:$0xf]
    %v5728 = vld [vmem:[%s5718 + $0x24] sm:$0xf]
    %v5729 = vld [vmem:[%s5718 + $0x28] sm:$0xf]
    %v5730 = vld [vmem:[%s5718 + $0x2c] sm:$0xf]
    %v5731 = vld [vmem:[%s5718 + $0x30] sm:$0xf]
    %v5732 = vld [vmem:[%s5718 + $0x34] sm:$0xf]
    %v5733 = vld [vmem:[%s5718 + $0x38] sm:$0xf]
    %v5734 = vld [vmem:[%s5718 + $0x3c] sm:$0xf]
    %v5735 = vld [vmem:[%s5718 + $0x40] sm:$0xf]
    %v5736 = vld [vmem:[%s5718 + $0x44] sm:$0xf]
    %v5737 = vld [vmem:[%s5718 + $0x48] sm:$0xf]
    %v5738 = vld [vmem:[%s5718 + $0x4c] sm:$0xf]
    %v5739 = vld [vmem:[%s5718 + $0x50] sm:$0xf]
    %v5740 = vld [vmem:[%s5718 + $0x54] sm:$0xf]
    %v5741 = vld [vmem:[%s5718 + $0x58] sm:$0xf]
    %v5742 = vld [vmem:[%s5718 + $0x5c] sm:$0xf]
    %v5743 = vld [vmem:[%s5718 + $0x60] sm:$0xf]
    %v5744 = vld [vmem:[%s5718 + $0x64] sm:$0xf]
    %v5745 = vld [vmem:[%s5718 + $0x68] sm:$0xf]
    %v5746 = vld [vmem:[%s5718 + $0x6c] sm:$0xf]
    %v5747 = vld [vmem:[%s5718 + $0x70] sm:$0xf]
    %v5748 = vld [vmem:[%s5718 + $0x74] sm:$0xf]
    %v5749 = vld [vmem:[%s5718 + $0x78] sm:$0xf]
    %v5750 = vld [vmem:[%s5718 + $0x7c] sm:$0xf]
    %v5751 = vld [vmem:[%s5718 + $0x80] sm:$0xf]
    %v5752 = vld [vmem:[%s5718 + $0x84] sm:$0xf]
    %v5753 = vld [vmem:[%s5718 + $0x88] sm:$0xf]
    %v5754 = vld [vmem:[%s5718 + $0x8c] sm:$0xf]
    %v5755 = vld [vmem:[%s5718 + $0x90] sm:$0xf]
    %v5756 = vld [vmem:[%s5718 + $0x94] sm:$0xf]
    %v5757 = vld [vmem:[%s5718 + $0x98] sm:$0xf]
    %v5758 = vld [vmem:[%s5718 + $0x9c] sm:$0xf]
    %v5759 = vld [vmem:[%s5718 + $0xa0] sm:$0xf]
    %v5760 = vld [vmem:[%s5718 + $0xa4] sm:$0xf]
    %v5761 = vld [vmem:[%s5718 + $0xa8] sm:$0xf]
    %v5762 = vld [vmem:[%s5718 + $0xac] sm:$0xf]
    %v5763 = vld [vmem:[%s5718 + $0xb0] sm:$0xf]
    %v5764 = vld [vmem:[%s5718 + $0xb4] sm:$0xf]
    %v5765 = vld [vmem:[%s5718 + $0xb8] sm:$0xf]
    %v5766 = vld [vmem:[%s5718 + $0xbc] sm:$0xf]
    %v5767 = vld [vmem:[%s5718 + $0xc0] sm:$0xf]
    %v5768 = vld [vmem:[%s5718 + $0xc4] sm:$0xf]
    %v5769 = vld [vmem:[%s5718 + $0xc8] sm:$0xf]
    %v5770 = vld [vmem:[%s5718 + $0xcc] sm:$0xf]
    %v5771 = vld [vmem:[%s5718 + $0xd0] sm:$0xf]
    %v5772 = vld [vmem:[%s5718 + $0xd4] sm:$0xf]
    %v5773 = vld [vmem:[%s5718 + $0xd8] sm:$0xf]
    %v5774 = vld [vmem:[%s5718 + $0xdc] sm:$0xf]
    %v5775 = vld [vmem:[%s5718 + $0xe0] sm:$0xf]
    %v5776 = vld [vmem:[%s5718 + $0xe4] sm:$0xf]
    %v5777 = vld [vmem:[%s5718 + $0xe8] sm:$0xf]
    %v5778 = vld [vmem:[%s5718 + $0xec] sm:$0xf]
    %v5779 = vld [vmem:[%s5718 + $0xf0] sm:$0xf]
    %v5780 = vld [vmem:[%s5718 + $0xf4] sm:$0xf]
    %v5781 = vld [vmem:[%s5718 + $0xf8] sm:$0xf]
    %v5782 = vld [vmem:[%s5718 + $0xfc] sm:$0xf]
    %v5783 = vld [vmem:[%s5718 + $0x100] sm:$0xf]
    %v5784 = vld [vmem:[%s5718 + $0x104] sm:$0xf]
    %v5785 = vld [vmem:[%s5718 + $0x108] sm:$0xf]
    %v5786 = vld [vmem:[%s5718 + $0x10c] sm:$0xf]
    %v5787 = vld [vmem:[%s5718 + $0x110] sm:$0xf]
    %v5788 = vld [vmem:[%s5718 + $0x114] sm:$0xf]
    %v5789 = vld [vmem:[%s5718 + $0x118] sm:$0xf]
    %v5790 = vld [vmem:[%s5718 + $0x11c] sm:$0xf]
    %v5791 = vld [vmem:[%s5718 + $0x120] sm:$0xf]
    %v5792 = vld [vmem:[%s5718 + $0x124] sm:$0xf]
    %v5793 = vld [vmem:[%s5718 + $0x128] sm:$0xf]
    %v5794 = vld [vmem:[%s5718 + $0x12c] sm:$0xf]
    %v5795 = vld [vmem:[%s5718 + $0x130] sm:$0xf]
    %v5796 = vld [vmem:[%s5718 + $0x134] sm:$0xf]
    %v5797 = vld [vmem:[%s5718 + $0x138] sm:$0xf]
    %v5798 = vld [vmem:[%s5718 + $0x13c] sm:$0xf]
    %v5799 = vld [vmem:[%s5718 + $0x140] sm:$0xf]
    %v5800 = vld [vmem:[%s5718 + $0x144] sm:$0xf]
    %v5801 = vld [vmem:[%s5718 + $0x148] sm:$0xf]
    %v5802 = vld [vmem:[%s5718 + $0x14c] sm:$0xf]
    %v5803 = vld [vmem:[%s5718 + $0x150] sm:$0xf]
    %v5804 = vld [vmem:[%s5718 + $0x154] sm:$0xf]
    %v5805 = vld [vmem:[%s5718 + $0x158] sm:$0xf]
    %v5806 = vld [vmem:[%s5718 + $0x15c] sm:$0xf]
    %v5807 = vld [vmem:[%s5718 + $0x160] sm:$0xf]
    %v5808 = vld [vmem:[%s5718 + $0x164] sm:$0xf]
    %v5809 = vld [vmem:[%s5718 + $0x168] sm:$0xf]
    %v5810 = vld [vmem:[%s5718 + $0x16c] sm:$0xf]
    %v5811 = vld [vmem:[%s5718 + $0x170] sm:$0xf]
    %v5812 = vld [vmem:[%s5718 + $0x174] sm:$0xf]
    %v5813 = vld [vmem:[%s5718 + $0x178] sm:$0xf]
    %v5814 = vld [vmem:[%s5718 + $0x17c] sm:$0xf]
    %v5815 = vld [vmem:[%s5718 + $0x180] sm:$0xf]
    %v5816 = vld [vmem:[%s5718 + $0x184] sm:$0xf]
    %v5817 = vld [vmem:[%s5718 + $0x188] sm:$0xf]
    %v5818 = vld [vmem:[%s5718 + $0x18c] sm:$0xf]
    %v5819 = vld [vmem:[%s5718 + $0x190] sm:$0xf]
    %v5820 = vld [vmem:[%s5718 + $0x194] sm:$0xf]
    %v5821 = vld [vmem:[%s5718 + $0x198] sm:$0xf]
    %v5822 = vld [vmem:[%s5718 + $0x19c] sm:$0xf]
    %v5823 = vld [vmem:[%s5718 + $0x1a0] sm:$0xf]
    %v5824 = vld [vmem:[%s5718 + $0x1a4] sm:$0xf]
    %v5825 = vld [vmem:[%s5718 + $0x1a8] sm:$0xf]
    %v5826 = vld [vmem:[%s5718 + $0x1ac] sm:$0xf]
    %v5827 = vld [vmem:[%s5718 + $0x1b0] sm:$0xf]
    %v5828 = vld [vmem:[%s5718 + $0x1b4] sm:$0xf]
    %v5829 = vld [vmem:[%s5718 + $0x1b8] sm:$0xf]
    %v5830 = vld [vmem:[%s5718 + $0x1bc] sm:$0xf]
    %v5831 = vld [vmem:[%s5718 + $0x1c0] sm:$0xf]
    %v5832 = vld [vmem:[%s5718 + $0x1c4] sm:$0xf]
    %v5833 = vld [vmem:[%s5718 + $0x1c8] sm:$0xf]
    %v5834 = vld [vmem:[%s5718 + $0x1cc] sm:$0xf]
    %v5835 = vld [vmem:[%s5718 + $0x1d0] sm:$0xf]
    %v5836 = vld [vmem:[%s5718 + $0x1d4] sm:$0xf]
    %v5837 = vld [vmem:[%s5718 + $0x1d8] sm:$0xf]
    %v5838 = vld [vmem:[%s5718 + $0x1dc] sm:$0xf]
    %v5839 = vld [vmem:[%s5718 + $0x1e0] sm:$0xf]
    %v5840 = vld [vmem:[%s5718 + $0x1e4] sm:$0xf]
    %v5841 = vld [vmem:[%s5718 + $0x1e8] sm:$0xf]
    %v5842 = vld [vmem:[%s5718 + $0x1ec] sm:$0xf]
    %v5843 = vld [vmem:[%s5718 + $0x1f0] sm:$0xf]
    %v5844 = vld [vmem:[%s5718 + $0x1f4] sm:$0xf]
    %v5845 = vld [vmem:[%s5718 + $0x1f8] sm:$0xf]
    %v5846 = vld [vmem:[%s5718 + $0x1fc] sm:$0xf]
    %v5847 = vld [vmem:[%s5718 + $0x200] sm:$0xf]
    %v5848 = vld [vmem:[%s5718 + $0x204] sm:$0xf]
    %v5849 = vld [vmem:[%s5718 + $0x208] sm:$0xf]
    %v5850 = vld [vmem:[%s5718 + $0x20c] sm:$0xf]
    %v5851 = vld [vmem:[%s5718 + $0x210] sm:$0xf]
    %v5852 = vld [vmem:[%s5718 + $0x214] sm:$0xf]
    %v5853 = vld [vmem:[%s5718 + $0x218] sm:$0xf]
    %v5854 = vld [vmem:[%s5718 + $0x21c] sm:$0xf]
    %v5855 = vld [vmem:[%s5718 + $0x220] sm:$0xf]
    %v5856 = vld [vmem:[%s5718 + $0x224] sm:$0xf]
    %v5857 = vld [vmem:[%s5718 + $0x228] sm:$0xf]
    %v5858 = vld [vmem:[%s5718 + $0x22c] sm:$0xf]
    %v5859 = vld [vmem:[%s5718 + $0x230] sm:$0xf]
    %v5860 = vld [vmem:[%s5718 + $0x234] sm:$0xf]
    %v5861 = vld [vmem:[%s5718 + $0x238] sm:$0xf]
    %v5862 = vld [vmem:[%s5718 + $0x23c] sm:$0xf]
    %v5863 = vld [vmem:[#allocation8 + $0x3] sm:$0x1]
    %v5864 = vlaneseq
    %v5865 = vshrl.u32 %v5864, 7
    %v5866 = vsub.s32 0, %v5865
    %v5867 = vrot.slane %v5863, %v5866
    %v5908 = vunpack.c.l.b16 %v5678
    %v5909 = vunpack.c.h.b16 %v5678
    %v5910 = vunpack.c.l.b16 %v5679
    %v5911 = vunpack.c.h.b16 %v5679
    %v5912 = vunpack.c.l.b16 %v5680
    %v5913 = vunpack.c.h.b16 %v5680
    %v5914 = vunpack.c.l.b16 %v5681
    %v5915 = vunpack.c.h.b16 %v5681
    %v5916 = vunpack.c.l.b16 %v5682
    %v5917 = vunpack.c.l.b16 %v5683
    %v5918 = vunpack.c.h.b16 %v5683
    %v5919 = vunpack.c.l.b16 %v5684
    %v5920 = vunpack.c.h.b16 %v5684
    %v5921 = vunpack.c.l.b16 %v5685
    %v5922 = vunpack.c.h.b16 %v5685
    %v5923 = vunpack.c.l.b16 %v5686
    %v5924 = vunpack.c.h.b16 %v5686
    %v5925 = vunpack.c.l.b16 %v5687
    %v5926 = vunpack.c.l.b16 %v5688
    %v5927 = vunpack.c.h.b16 %v5688
    %v5928 = vunpack.c.l.b16 %v5689
    %v5929 = vunpack.c.h.b16 %v5689
    %v5930 = vunpack.c.l.b16 %v5690
    %v5931 = vunpack.c.h.b16 %v5690
    %v5932 = vunpack.c.l.b16 %v5691
    %v5933 = vunpack.c.h.b16 %v5691
    %v5934 = vunpack.c.l.b16 %v5692
    %v5935 = vunpack.c.l.b16 %v5693
    %v5936 = vunpack.c.h.b16 %v5693
    %v5937 = vunpack.c.l.b16 %v5694
    %v5938 = vunpack.c.h.b16 %v5694
    %v5939 = vunpack.c.l.b16 %v5695
    %v5940 = vunpack.c.h.b16 %v5695
    %v5941 = vunpack.c.l.b16 %v5696
    %v5942 = vunpack.c.h.b16 %v5696
    %v5943 = vunpack.c.l.b16 %v5697
    %v5944 = vunpack.c.l.b16 %v5698
    %v5945 = vunpack.c.h.b16 %v5698
    %v5946 = vunpack.c.l.b16 %v5699
    %v5947 = vunpack.c.h.b16 %v5699
    %v5948 = vunpack.c.l.b16 %v5700
    %v5949 = vunpack.c.h.b16 %v5700
    %v5950 = vunpack.c.l.b16 %v5701
    %v5951 = vunpack.c.h.b16 %v5701
    %v5952 = vunpack.c.l.b16 %v5702
    %v5953 = vunpack.c.l.b16 %v5703
    %v5954 = vunpack.c.h.b16 %v5703
    %v5955 = vunpack.c.l.b16 %v5704
    %v5956 = vunpack.c.h.b16 %v5704
    %v5957 = vunpack.c.l.b16 %v5705
    %v5958 = vunpack.c.h.b16 %v5705
    %v5959 = vunpack.c.l.b16 %v5706
    %v5960 = vunpack.c.h.b16 %v5706
    %v5961 = vunpack.c.l.b16 %v5707
    %v5962 = vunpack.c.l.b16 %v5708
    %v5963 = vunpack.c.h.b16 %v5708
    %v5964 = vunpack.c.l.b16 %v5709
    %v5965 = vunpack.c.h.b16 %v5709
    %v5966 = vunpack.c.l.b16 %v5710
    %v5967 = vunpack.c.h.b16 %v5710
    %v5968 = vunpack.c.l.b16 %v5711
    %v5969 = vunpack.c.h.b16 %v5711
    %v5970 = vunpack.c.l.b16 %v5712
    %v5971 = vunpack.c.l.b16 %v5713
    %v5972 = vunpack.c.h.b16 %v5713
    %v5973 = vunpack.c.l.b16 %v5714
    %v5974 = vunpack.c.h.b16 %v5714
    %v5975 = vunpack.c.l.b16 %v5715
    %v5976 = vunpack.c.h.b16 %v5715
    %v5977 = vunpack.c.l.b16 %v5716
    %v5978 = vunpack.c.h.b16 %v5716
    %v5979 = vunpack.c.l.b16 %v5717
    %v5980 = vpack.c.b16 %v5917, %v5908
    %v5981 = vpack.c.b16 %v5918, %v5909
    %v5982 = vpack.c.b16 %v5919, %v5910
    %v5983 = vpack.c.b16 %v5920, %v5911
    %v5984 = vpack.c.b16 %v5921, %v5912
    %v5985 = vpack.c.b16 %v5922, %v5913
    %v5986 = vpack.c.b16 %v5923, %v5914
    %v5987 = vpack.c.b16 %v5924, %v5915
    %v5988 = vpack.c.b16 %v5925, %v5916
    %v5989 = vpack.c.b16 %v5935, %v5926
    %v5990 = vpack.c.b16 %v5936, %v5927
    %v5991 = vpack.c.b16 %v5937, %v5928
    %v5992 = vpack.c.b16 %v5938, %v5929
    %v5993 = vpack.c.b16 %v5939, %v5930
    %v5994 = vpack.c.b16 %v5940, %v5931
    %v5995 = vpack.c.b16 %v5941, %v5932
    %v5996 = vpack.c.b16 %v5942, %v5933
    %v5997 = vpack.c.b16 %v5943, %v5934
    %v5998 = vpack.c.b16 %v5953, %v5944
    %v5999 = vpack.c.b16 %v5954, %v5945
    %v6000 = vpack.c.b16 %v5955, %v5946
    %v6001 = vpack.c.b16 %v5956, %v5947
    %v6002 = vpack.c.b16 %v5957, %v5948
    %v6003 = vpack.c.b16 %v5958, %v5949
    %v6004 = vpack.c.b16 %v5959, %v5950
    %v6005 = vpack.c.b16 %v5960, %v5951
    %v6006 = vpack.c.b16 %v5961, %v5952
    %v6007 = vpack.c.b16 %v5971, %v5962
    %v6008 = vpack.c.b16 %v5972, %v5963
    %v6009 = vpack.c.b16 %v5973, %v5964
    %v6010 = vpack.c.b16 %v5974, %v5965
    %v6011 = vpack.c.b16 %v5975, %v5966
    %v6012 = vpack.c.b16 %v5976, %v5967
    %v6013 = vpack.c.b16 %v5977, %v5968
    %v6014 = vpack.c.b16 %v5978, %v5969
    %v6015 = vpack.c.b16 %v5979, %v5970
    %v6196 = vunpack.c.l.b16 %v5719
    %v6197 = vunpack.c.l.b16 %v5720
    %v6198 = vunpack.c.l.b16 %v5721
    %v6199 = vunpack.c.l.b16 %v5722
    %v6200 = vunpack.c.l.b16 %v5723
    %v6201 = vunpack.c.l.b16 %v5724
    %v6202 = vunpack.c.l.b16 %v5725
    %v6203 = vunpack.c.l.b16 %v5726
    %v6204 = vunpack.c.l.b16 %v5727
    %v6205 = vunpack.c.l.b16 %v5728
    %v6206 = vunpack.c.l.b16 %v5729
    %v6207 = vunpack.c.l.b16 %v5730
    %v6208 = vunpack.c.l.b16 %v5731
    %v6209 = vunpack.c.l.b16 %v5732
    %v6210 = vunpack.c.l.b16 %v5733
    %v6211 = vunpack.c.l.b16 %v5734
    %v6212 = vunpack.c.l.b16 %v5735
    %v6213 = vunpack.c.l.b16 %v5736
    %v6214 = vunpack.c.l.b16 %v5737
    %v6215 = vunpack.c.l.b16 %v5738
    %v6216 = vunpack.c.l.b16 %v5739
    %v6217 = vunpack.c.l.b16 %v5740
    %v6218 = vunpack.c.l.b16 %v5741
    %v6219 = vunpack.c.l.b16 %v5742
    %v6220 = vunpack.c.l.b16 %v5743
    %v6221 = vunpack.c.l.b16 %v5744
    %v6222 = vunpack.c.l.b16 %v5745
    %v6223 = vunpack.c.l.b16 %v5746
    %v6224 = vunpack.c.l.b16 %v5747
    %v6225 = vunpack.c.l.b16 %v5748
    %v6226 = vunpack.c.l.b16 %v5749
    %v6227 = vunpack.c.l.b16 %v5750
    %v6228 = vunpack.c.l.b16 %v5751
    %v6229 = vunpack.c.l.b16 %v5752
    %v6230 = vunpack.c.l.b16 %v5753
    %v6231 = vunpack.c.l.b16 %v5754
    %v6232 = vunpack.c.l.b16 %v5755
    %v6233 = vunpack.c.l.b16 %v5756
    %v6234 = vunpack.c.l.b16 %v5757
    %v6235 = vunpack.c.l.b16 %v5758
    %v6236 = vunpack.c.l.b16 %v5759
    %v6237 = vunpack.c.l.b16 %v5760
    %v6238 = vunpack.c.l.b16 %v5761
    %v6239 = vunpack.c.l.b16 %v5762
    %v6240 = vunpack.c.l.b16 %v5763
    %v6241 = vunpack.c.l.b16 %v5764
    %v6242 = vunpack.c.l.b16 %v5765
    %v6243 = vunpack.c.l.b16 %v5766
    %v6244 = vunpack.c.l.b16 %v5767
    %v6245 = vunpack.c.l.b16 %v5768
    %v6246 = vunpack.c.l.b16 %v5769
    %v6247 = vunpack.c.l.b16 %v5770
    %v6248 = vunpack.c.l.b16 %v5771
    %v6249 = vunpack.c.l.b16 %v5772
    %v6250 = vunpack.c.l.b16 %v5773
    %v6251 = vunpack.c.l.b16 %v5774
    %v6252 = vunpack.c.l.b16 %v5775
    %v6253 = vunpack.c.l.b16 %v5776
    %v6254 = vunpack.c.l.b16 %v5777
    %v6255 = vunpack.c.l.b16 %v5778
    %v6256 = vunpack.c.l.b16 %v5779
    %v6257 = vunpack.c.l.b16 %v5780
    %v6258 = vunpack.c.l.b16 %v5781
    %v6259 = vunpack.c.l.b16 %v5782
    %v6260 = vunpack.c.l.b16 %v5783
    %v6261 = vunpack.c.l.b16 %v5784
    %v6262 = vunpack.c.l.b16 %v5785
    %v6263 = vunpack.c.l.b16 %v5786
    %v6264 = vunpack.c.l.b16 %v5787
    %v6265 = vunpack.c.l.b16 %v5788
    %v6266 = vunpack.c.l.b16 %v5789
    %v6267 = vunpack.c.l.b16 %v5790
    %v6268 = vunpack.c.l.b16 %v5791
    %v6269 = vunpack.c.l.b16 %v5792
    %v6270 = vunpack.c.l.b16 %v5793
    %v6271 = vunpack.c.l.b16 %v5794
    %v6272 = vunpack.c.l.b16 %v5795
    %v6273 = vunpack.c.l.b16 %v5796
    %v6274 = vunpack.c.l.b16 %v5797
    %v6275 = vunpack.c.l.b16 %v5798
    %v6276 = vunpack.c.l.b16 %v5799
    %v6277 = vunpack.c.l.b16 %v5800
    %v6278 = vunpack.c.l.b16 %v5801
    %v6279 = vunpack.c.l.b16 %v5802
    %v6280 = vunpack.c.l.b16 %v5803
    %v6281 = vunpack.c.l.b16 %v5804
    %v6282 = vunpack.c.l.b16 %v5805
    %v6283 = vunpack.c.l.b16 %v5806
    %v6284 = vunpack.c.l.b16 %v5807
    %v6285 = vunpack.c.l.b16 %v5808
    %v6286 = vunpack.c.l.b16 %v5809
    %v6287 = vunpack.c.l.b16 %v5810
    %v6288 = vunpack.c.l.b16 %v5811
    %v6289 = vunpack.c.l.b16 %v5812
    %v6290 = vunpack.c.l.b16 %v5813
    %v6291 = vunpack.c.l.b16 %v5814
    %v6292 = vunpack.c.l.b16 %v5815
    %v6293 = vunpack.c.l.b16 %v5816
    %v6294 = vunpack.c.l.b16 %v5817
    %v6295 = vunpack.c.l.b16 %v5818
    %v6296 = vunpack.c.l.b16 %v5819
    %v6297 = vunpack.c.l.b16 %v5820
    %v6298 = vunpack.c.l.b16 %v5821
    %v6299 = vunpack.c.l.b16 %v5822
    %v6300 = vunpack.c.l.b16 %v5823
    %v6301 = vunpack.c.l.b16 %v5824
    %v6302 = vunpack.c.l.b16 %v5825
    %v6303 = vunpack.c.l.b16 %v5826
    %v6304 = vunpack.c.l.b16 %v5827
    %v6305 = vunpack.c.l.b16 %v5828
    %v6306 = vunpack.c.l.b16 %v5829
    %v6307 = vunpack.c.l.b16 %v5830
    %v6308 = vunpack.c.l.b16 %v5831
    %v6309 = vunpack.c.l.b16 %v5832
    %v6310 = vunpack.c.l.b16 %v5833
    %v6311 = vunpack.c.l.b16 %v5834
    %v6312 = vunpack.c.l.b16 %v5835
    %v6313 = vunpack.c.l.b16 %v5836
    %v6314 = vunpack.c.l.b16 %v5837
    %v6315 = vunpack.c.l.b16 %v5838
    %v6316 = vunpack.c.l.b16 %v5839
    %v6317 = vunpack.c.l.b16 %v5840
    %v6318 = vunpack.c.l.b16 %v5841
    %v6319 = vunpack.c.l.b16 %v5842
    %v6320 = vunpack.c.l.b16 %v5843
    %v6321 = vunpack.c.l.b16 %v5844
    %v6322 = vunpack.c.l.b16 %v5845
    %v6323 = vunpack.c.l.b16 %v5846
    %v6324 = vunpack.c.l.b16 %v5847
    %v6325 = vunpack.c.l.b16 %v5848
    %v6326 = vunpack.c.l.b16 %v5849
    %v6327 = vunpack.c.l.b16 %v5850
    %v6328 = vunpack.c.l.b16 %v5851
    %v6329 = vunpack.c.l.b16 %v5852
    %v6330 = vunpack.c.l.b16 %v5853
    %v6331 = vunpack.c.l.b16 %v5854
    %v6332 = vunpack.c.l.b16 %v5855
    %v6333 = vunpack.c.l.b16 %v5856
    %v6334 = vunpack.c.l.b16 %v5857
    %v6335 = vunpack.c.l.b16 %v5858
    %v6336 = vunpack.c.l.b16 %v5859
    %v6337 = vunpack.c.l.b16 %v5860
    %v6338 = vunpack.c.l.b16 %v5861
    %v6339 = vunpack.c.l.b16 %v5862
    %v6340 = vpack.c.b16 %v6197, %v6196
    %v6341 = vpack.c.b16 %v6199, %v6198
    %v6342 = vpack.c.b16 %v6201, %v6200
    %v6343 = vpack.c.b16 %v6203, %v6202
    %v6344 = vpack.c.b16 %v6205, %v6204
    %v6345 = vpack.c.b16 %v6207, %v6206
    %v6346 = vpack.c.b16 %v6209, %v6208
    %v6347 = vpack.c.b16 %v6211, %v6210
    %v6348 = vpack.c.b16 %v6213, %v6212
    %v6349 = vpack.c.b16 %v6215, %v6214
    %v6350 = vpack.c.b16 %v6217, %v6216
    %v6351 = vpack.c.b16 %v6219, %v6218
    %v6352 = vpack.c.b16 %v6221, %v6220
    %v6353 = vpack.c.b16 %v6223, %v6222
    %v6354 = vpack.c.b16 %v6225, %v6224
    %v6355 = vpack.c.b16 %v6227, %v6226
    %v6356 = vpack.c.b16 %v6229, %v6228
    %v6357 = vpack.c.b16 %v6231, %v6230
    %v6358 = vpack.c.b16 %v6233, %v6232
    %v6359 = vpack.c.b16 %v6235, %v6234
    %v6360 = vpack.c.b16 %v6237, %v6236
    %v6361 = vpack.c.b16 %v6239, %v6238
    %v6362 = vpack.c.b16 %v6241, %v6240
    %v6363 = vpack.c.b16 %v6243, %v6242
    %v6364 = vpack.c.b16 %v6245, %v6244
    %v6365 = vpack.c.b16 %v6247, %v6246
    %v6366 = vpack.c.b16 %v6249, %v6248
    %v6367 = vpack.c.b16 %v6251, %v6250
    %v6368 = vpack.c.b16 %v6253, %v6252
    %v6369 = vpack.c.b16 %v6255, %v6254
    %v6370 = vpack.c.b16 %v6257, %v6256
    %v6371 = vpack.c.b16 %v6259, %v6258
    %v6372 = vpack.c.b16 %v6261, %v6260
    %v6373 = vpack.c.b16 %v6263, %v6262
    %v6374 = vpack.c.b16 %v6265, %v6264
    %v6375 = vpack.c.b16 %v6267, %v6266
    %v6376 = vpack.c.b16 %v6269, %v6268
    %v6377 = vpack.c.b16 %v6271, %v6270
    %v6378 = vpack.c.b16 %v6273, %v6272
    %v6379 = vpack.c.b16 %v6275, %v6274
    %v6380 = vpack.c.b16 %v6277, %v6276
    %v6381 = vpack.c.b16 %v6279, %v6278
    %v6382 = vpack.c.b16 %v6281, %v6280
    %v6383 = vpack.c.b16 %v6283, %v6282
    %v6384 = vpack.c.b16 %v6285, %v6284
    %v6385 = vpack.c.b16 %v6287, %v6286
    %v6386 = vpack.c.b16 %v6289, %v6288
    %v6387 = vpack.c.b16 %v6291, %v6290
    %v6388 = vpack.c.b16 %v6293, %v6292
    %v6389 = vpack.c.b16 %v6295, %v6294
    %v6390 = vpack.c.b16 %v6297, %v6296
    %v6391 = vpack.c.b16 %v6299, %v6298
    %v6392 = vpack.c.b16 %v6301, %v6300
    %v6393 = vpack.c.b16 %v6303, %v6302
    %v6394 = vpack.c.b16 %v6305, %v6304
    %v6395 = vpack.c.b16 %v6307, %v6306
    %v6396 = vpack.c.b16 %v6309, %v6308
    %v6397 = vpack.c.b16 %v6311, %v6310
    %v6398 = vpack.c.b16 %v6313, %v6312
    %v6399 = vpack.c.b16 %v6315, %v6314
    %v6400 = vpack.c.b16 %v6317, %v6316
    %v6401 = vpack.c.b16 %v6319, %v6318
    %v6402 = vpack.c.b16 %v6321, %v6320
    %v6403 = vpack.c.b16 %v6323, %v6322
    %v6404 = vpack.c.b16 %v6325, %v6324
    %v6405 = vpack.c.b16 %v6327, %v6326
    %v6406 = vpack.c.b16 %v6329, %v6328
    %v6407 = vpack.c.b16 %v6331, %v6330
    %v6408 = vpack.c.b16 %v6333, %v6332
    %v6409 = vpack.c.b16 %v6335, %v6334
    %v6410 = vpack.c.b16 %v6337, %v6336
    %v6411 = vpack.c.b16 %v6339, %v6338
    %6484 = vmatprep.subr.bf16.mxu0 0
    %6485 = vmatpush1.bf16.msra.mxu0 %v6347
    %6486 = vmatprep.subr.bf16.mxu0 0
    %6487 = vmatpush1.bf16.msra.mxu0 %v6346
    %6488 = vmatprep.subr.bf16.mxu0 0
    %6489 = vmatpush1.bf16.msra.mxu0 %v6345
    %6490 = vmatprep.subr.bf16.mxu0 0
    %6491 = vmatpush1.bf16.msra.mxu0 %v6344
    %6492 = vmatprep.subr.bf16.mxu0 0
    %6493 = vmatpush1.bf16.msra.mxu0 %v6343
    %6494 = vmatprep.subr.bf16.mxu0 0
    %6495 = vmatpush1.bf16.msra.mxu0 %v6342
    %6496 = vmatprep.subr.bf16.mxu0 0
    %6497 = vmatpush1.bf16.msra.mxu0 %v6341
    %6498 = vmatprep.subr.bf16.mxu0 0
    %6499 = vmatpush1.bf16.msra.mxu0 %v6340
    %6500 = vmatprep.subr.bf16.mxu0 0
    %6501 = vmatpush2.bf16.msra.mxu0 %v6355
    %6502 = vmatprep.subr.bf16.mxu0 0
    %6503 = vmatpush2.bf16.msra.mxu0 %v6354
    %6504 = vmatprep.subr.bf16.mxu0 0
    %6505 = vmatpush2.bf16.msra.mxu0 %v6353
    %6506 = vmatprep.subr.bf16.mxu0 0
    %6507 = vmatpush2.bf16.msra.mxu0 %v6352
    %6508 = vmatprep.subr.bf16.mxu0 0
    %6509 = vmatpush2.bf16.msra.mxu0 %v6351
    %6510 = vmatprep.subr.bf16.mxu0 0
    %6511 = vmatpush2.bf16.msra.mxu0 %v6350
    %6512 = vmatprep.subr.bf16.mxu0 0
    %6513 = vmatpush2.bf16.msra.mxu0 %v6349
    %6514 = vmatprep.subr.bf16.mxu0 0
    %6515 = vmatpush2.bf16.msra.mxu0 %v6348
    %6516 = vmatprep.mubr.bf16.mxu0 %v5981
    %6517 = vmatmul.mubr.bf16.gmra.mxu0 %v5980
    %v6518 = vpop.f32.mrf.mxu0
    %v6519 = vadd.f32 %v5867, %v6518
    %v6520 = vpop.f32.mrf.mxu0
    %v6521 = vpop.f32.mrf.mxu0
    %v6522 = vadd.f32 %v5867, %v6521
    %v6523 = vpop.f32.mrf.mxu0
    %6524 = vmatprep.mubr.bf16.mxu0 %v5990
    %6525 = vmatmul.mubr.bf16.gmra.mxu0 %v5989
    %v6526 = vpop.f32.mrf.mxu0
    %v6527 = vadd.f32 %v5867, %v6526
    %v6528 = vpop.f32.mrf.mxu0
    %v6529 = vpop.f32.mrf.mxu0
    %v6530 = vadd.f32 %v5867, %v6529
    %v6531 = vpop.f32.mrf.mxu0
    %6532 = vmatprep.mubr.bf16.mxu0 %v5999
    %6533 = vmatmul.mubr.bf16.gmra.mxu0 %v5998
    %v6534 = vpop.f32.mrf.mxu0
    %v6535 = vadd.f32 %v5867, %v6534
    %v6536 = vpop.f32.mrf.mxu0
    %v6537 = vpop.f32.mrf.mxu0
    %v6538 = vadd.f32 %v5867, %v6537
    %v6539 = vpop.f32.mrf.mxu0
    %6540 = vmatprep.mubr.bf16.mxu0 %v6008
    %6541 = vmatmul.mubr.bf16.gmra.mxu0 %v6007
    %v6542 = vpop.f32.mrf.mxu0
    %v6543 = vadd.f32 %v5867, %v6542
    %v6544 = vpop.f32.mrf.mxu0
    %v6545 = vpop.f32.mrf.mxu0
    %v6546 = vadd.f32 %v5867, %v6545
    %v6547 = vpop.f32.mrf.mxu0
    %6548 = vdwg.mxu0
    %6549 = vmatprep.subr.bf16.mxu0 0
    %6550 = vmatpush1.bf16.msra.mxu0 %v6363
    %6551 = vmatprep.subr.bf16.mxu0 0
    %6552 = vmatpush1.bf16.msra.mxu0 %v6362
    %6553 = vmatprep.subr.bf16.mxu0 0
    %6554 = vmatpush1.bf16.msra.mxu0 %v6361
    %6555 = vmatprep.subr.bf16.mxu0 0
    %6556 = vmatpush1.bf16.msra.mxu0 %v6360
    %6557 = vmatprep.subr.bf16.mxu0 0
    %6558 = vmatpush1.bf16.msra.mxu0 %v6359
    %6559 = vmatprep.subr.bf16.mxu0 0
    %6560 = vmatpush1.bf16.msra.mxu0 %v6358
    %6561 = vmatprep.subr.bf16.mxu0 0
    %6562 = vmatpush1.bf16.msra.mxu0 %v6357
    %6563 = vmatprep.subr.bf16.mxu0 0
    %6564 = vmatpush1.bf16.msra.mxu0 %v6356
    %6565 = vmatprep.subr.bf16.mxu0 0
    %6566 = vmatpush2.bf16.msra.mxu0 %v6371
    %6567 = vmatprep.subr.bf16.mxu0 0
    %6568 = vmatpush2.bf16.msra.mxu0 %v6370
    %6569 = vmatprep.subr.bf16.mxu0 0
    %6570 = vmatpush2.bf16.msra.mxu0 %v6369
    %6571 = vmatprep.subr.bf16.mxu0 0
    %6572 = vmatpush2.bf16.msra.mxu0 %v6368
    %6573 = vmatprep.subr.bf16.mxu0 0
    %6574 = vmatpush2.bf16.msra.mxu0 %v6367
    %6575 = vmatprep.subr.bf16.mxu0 0
    %6576 = vmatpush2.bf16.msra.mxu0 %v6366
    %6577 = vmatprep.subr.bf16.mxu0 0
    %6578 = vmatpush2.bf16.msra.mxu0 %v6365
    %6579 = vmatprep.subr.bf16.mxu0 0
    %6580 = vmatpush2.bf16.msra.mxu0 %v6364
    %6581 = vmatprep.mubr.bf16.mxu0 %v5983
    %6582 = vmatmul.mubr.bf16.gmra.mxu0 %v5982
    %v6583 = vpop.f32.mrf.mxu0
    %v6584 = vadd.f32 %v6519, %v6583
    %v6585 = vpop.f32.mrf.mxu0
    %v6586 = vpop.f32.mrf.mxu0
    %v6587 = vadd.f32 %v6522, %v6586
    %v6588 = vpop.f32.mrf.mxu0
    %6589 = vmatprep.mubr.bf16.mxu0 %v5992
    %6590 = vmatmul.mubr.bf16.gmra.mxu0 %v5991
    %v6591 = vpop.f32.mrf.mxu0
    %v6592 = vadd.f32 %v6527, %v6591
    %v6593 = vpop.f32.mrf.mxu0
    %v6594 = vpop.f32.mrf.mxu0
    %v6595 = vadd.f32 %v6530, %v6594
    %v6596 = vpop.f32.mrf.mxu0
    %6597 = vmatprep.mubr.bf16.mxu0 %v6001
    %6598 = vmatmul.mubr.bf16.gmra.mxu0 %v6000
    %v6599 = vpop.f32.mrf.mxu0
    %v6600 = vadd.f32 %v6535, %v6599
    %v6601 = vpop.f32.mrf.mxu0
    %v6602 = vpop.f32.mrf.mxu0
    %v6603 = vadd.f32 %v6538, %v6602
    %v6604 = vpop.f32.mrf.mxu0
    %6605 = vmatprep.mubr.bf16.mxu0 %v6010
    %6606 = vmatmul.mubr.bf16.gmra.mxu0 %v6009
    %v6607 = vpop.f32.mrf.mxu0
    %v6608 = vadd.f32 %v6543, %v6607
    %v6609 = vpop.f32.mrf.mxu0
    %v6610 = vpop.f32.mrf.mxu0
    %v6611 = vadd.f32 %v6546, %v6610
    %v6612 = vpop.f32.mrf.mxu0
    %6613 = vdwg.mxu0
    %6614 = vmatprep.subr.bf16.mxu0 0
    %6615 = vmatpush1.bf16.msra.mxu0 %v6379
    %6616 = vmatprep.subr.bf16.mxu0 0
    %6617 = vmatpush1.bf16.msra.mxu0 %v6378
    %6618 = vmatprep.subr.bf16.mxu0 0
    %6619 = vmatpush1.bf16.msra.mxu0 %v6377
    %6620 = vmatprep.subr.bf16.mxu0 0
    %6621 = vmatpush1.bf16.msra.mxu0 %v6376
    %6622 = vmatprep.subr.bf16.mxu0 0
    %6623 = vmatpush1.bf16.msra.mxu0 %v6375
    %6624 = vmatprep.subr.bf16.mxu0 0
    %6625 = vmatpush1.bf16.msra.mxu0 %v6374
    %6626 = vmatprep.subr.bf16.mxu0 0
    %6627 = vmatpush1.bf16.msra.mxu0 %v6373
    %6628 = vmatprep.subr.bf16.mxu0 0
    %6629 = vmatpush1.bf16.msra.mxu0 %v6372
    %6630 = vmatprep.subr.bf16.mxu0 0
    %6631 = vmatpush2.bf16.msra.mxu0 %v6387
    %6632 = vmatprep.subr.bf16.mxu0 0
    %6633 = vmatpush2.bf16.msra.mxu0 %v6386
    %6634 = vmatprep.subr.bf16.mxu0 0
    %6635 = vmatpush2.bf16.msra.mxu0 %v6385
    %6636 = vmatprep.subr.bf16.mxu0 0
    %6637 = vmatpush2.bf16.msra.mxu0 %v6384
    %6638 = vmatprep.subr.bf16.mxu0 0
    %6639 = vmatpush2.bf16.msra.mxu0 %v6383
    %6640 = vmatprep.subr.bf16.mxu0 0
    %6641 = vmatpush2.bf16.msra.mxu0 %v6382
    %6642 = vmatprep.subr.bf16.mxu0 0
    %6643 = vmatpush2.bf16.msra.mxu0 %v6381
    %6644 = vmatprep.subr.bf16.mxu0 0
    %6645 = vmatpush2.bf16.msra.mxu0 %v6380
    %6646 = vmatprep.mubr.bf16.mxu0 %v5985
    %6647 = vmatmul.mubr.bf16.gmra.mxu0 %v5984
    %v6648 = vpop.f32.mrf.mxu0
    %v6649 = vadd.f32 %v6584, %v6648
    %v6650 = vpop.f32.mrf.mxu0
    %v6651 = vpop.f32.mrf.mxu0
    %v6652 = vadd.f32 %v6587, %v6651
    %v6653 = vpop.f32.mrf.mxu0
    %6654 = vmatprep.mubr.bf16.mxu0 %v5994
    %6655 = vmatmul.mubr.bf16.gmra.mxu0 %v5993
    %v6656 = vpop.f32.mrf.mxu0
    %v6657 = vadd.f32 %v6592, %v6656
    %v6658 = vpop.f32.mrf.mxu0
    %v6659 = vpop.f32.mrf.mxu0
    %v6660 = vadd.f32 %v6595, %v6659
    %v6661 = vpop.f32.mrf.mxu0
    %6662 = vmatprep.mubr.bf16.mxu0 %v6003
    %6663 = vmatmul.mubr.bf16.gmra.mxu0 %v6002
    %v6664 = vpop.f32.mrf.mxu0
    %v6665 = vadd.f32 %v6600, %v6664
    %v6666 = vpop.f32.mrf.mxu0
    %v6667 = vpop.f32.mrf.mxu0
    %v6668 = vadd.f32 %v6603, %v6667
    %v6669 = vpop.f32.mrf.mxu0
    %6670 = vmatprep.mubr.bf16.mxu0 %v6012
    %6671 = vmatmul.mubr.bf16.gmra.mxu0 %v6011
    %v6672 = vpop.f32.mrf.mxu0
    %v6673 = vadd.f32 %v6608, %v6672
    %v6674 = vpop.f32.mrf.mxu0
    %v6675 = vpop.f32.mrf.mxu0
    %v6676 = vadd.f32 %v6611, %v6675
    %v6677 = vpop.f32.mrf.mxu0
    %6678 = vdwg.mxu0
    %6679 = vmatprep.subr.bf16.mxu0 0
    %6680 = vmatpush1.bf16.msra.mxu0 %v6395
    %6681 = vmatprep.subr.bf16.mxu0 0
    %6682 = vmatpush1.bf16.msra.mxu0 %v6394
    %6683 = vmatprep.subr.bf16.mxu0 0
    %6684 = vmatpush1.bf16.msra.mxu0 %v6393
    %6685 = vmatprep.subr.bf16.mxu0 0
    %6686 = vmatpush1.bf16.msra.mxu0 %v6392
    %6687 = vmatprep.subr.bf16.mxu0 0
    %6688 = vmatpush1.bf16.msra.mxu0 %v6391
    %6689 = vmatprep.subr.bf16.mxu0 0
    %6690 = vmatpush1.bf16.msra.mxu0 %v6390
    %6691 = vmatprep.subr.bf16.mxu0 0
    %6692 = vmatpush1.bf16.msra.mxu0 %v6389
    %6693 = vmatprep.subr.bf16.mxu0 0
    %6694 = vmatpush1.bf16.msra.mxu0 %v6388
    %6695 = vmatprep.subr.bf16.mxu0 0
    %6696 = vmatpush2.bf16.msra.mxu0 %v6403
    %6697 = vmatprep.subr.bf16.mxu0 0
    %6698 = vmatpush2.bf16.msra.mxu0 %v6402
    %6699 = vmatprep.subr.bf16.mxu0 0
    %6700 = vmatpush2.bf16.msra.mxu0 %v6401
    %6701 = vmatprep.subr.bf16.mxu0 0
    %6702 = vmatpush2.bf16.msra.mxu0 %v6400
    %6703 = vmatprep.subr.bf16.mxu0 0
    %6704 = vmatpush2.bf16.msra.mxu0 %v6399
    %6705 = vmatprep.subr.bf16.mxu0 0
    %6706 = vmatpush2.bf16.msra.mxu0 %v6398
    %6707 = vmatprep.subr.bf16.mxu0 0
    %6708 = vmatpush2.bf16.msra.mxu0 %v6397
    %6709 = vmatprep.subr.bf16.mxu0 0
    %6710 = vmatpush2.bf16.msra.mxu0 %v6396
    %6711 = vmatprep.mubr.bf16.mxu0 %v5987
    %6712 = vmatmul.mubr.bf16.gmra.mxu0 %v5986
    %v6713 = vpop.f32.mrf.mxu0
    %v6714 = vadd.f32 %v6649, %v6713
    %v6715 = vpop.f32.mrf.mxu0
    %v6716 = vpop.f32.mrf.mxu0
    %v6717 = vadd.f32 %v6652, %v6716
    %v6718 = vpop.f32.mrf.mxu0
    %6719 = vmatprep.mubr.bf16.mxu0 %v5996
    %6720 = vmatmul.mubr.bf16.gmra.mxu0 %v5995
    %v6721 = vpop.f32.mrf.mxu0
    %v6722 = vadd.f32 %v6657, %v6721
    %v6723 = vpop.f32.mrf.mxu0
    %v6724 = vpop.f32.mrf.mxu0
    %v6725 = vadd.f32 %v6660, %v6724
    %v6726 = vpop.f32.mrf.mxu0
    %6727 = vmatprep.mubr.bf16.mxu0 %v6005
    %6728 = vmatmul.mubr.bf16.gmra.mxu0 %v6004
    %v6729 = vpop.f32.mrf.mxu0
    %v6730 = vadd.f32 %v6665, %v6729
    %v6731 = vpop.f32.mrf.mxu0
    %v6732 = vpop.f32.mrf.mxu0
    %v6733 = vadd.f32 %v6668, %v6732
    %v6734 = vpop.f32.mrf.mxu0
    %6735 = vmatprep.mubr.bf16.mxu0 %v6014
    %6736 = vmatmul.mubr.bf16.gmra.mxu0 %v6013
    %v6737 = vpop.f32.mrf.mxu0
    %v6738 = vadd.f32 %v6673, %v6737
    %v6739 = vpop.f32.mrf.mxu0
    %v6740 = vpop.f32.mrf.mxu0
    %v6741 = vadd.f32 %v6676, %v6740
    %v6742 = vpop.f32.mrf.mxu0
    %6743 = vdwg.mxu0
    %6744 = vmatprep.subr.bf16.mxu0 0
    %6745 = vmatpush1.bf16.msra.mxu0 %v6411
    %6746 = vmatprep.subr.bf16.mxu0 0
    %6747 = vmatpush1.bf16.msra.mxu0 %v6410
    %6748 = vmatprep.subr.bf16.mxu0 0
    %6749 = vmatpush1.bf16.msra.mxu0 %v6409
    %6750 = vmatprep.subr.bf16.mxu0 0
    %6751 = vmatpush1.bf16.msra.mxu0 %v6408
    %6752 = vmatprep.subr.bf16.mxu0 0
    %6753 = vmatpush1.bf16.msra.mxu0 %v6407
    %6754 = vmatprep.subr.bf16.mxu0 0
    %6755 = vmatpush1.bf16.msra.mxu0 %v6406
    %6756 = vmatprep.subr.bf16.mxu0 0
    %6757 = vmatpush1.bf16.msra.mxu0 %v6405
    %6758 = vmatprep.subr.bf16.mxu0 0
    %6759 = vmatpush1.bf16.msra.mxu0 %v6404
    %6760 = vmatprep.subr.bf16.mxu0 0
    %6761 = vmatpush2.bf16.msra.mxu0 0
    %6762 = vmatprep.subr.bf16.mxu0 0
    %6763 = vmatpush2.bf16.msra.mxu0 0
    %6764 = vmatprep.subr.bf16.mxu0 0
    %6765 = vmatpush2.bf16.msra.mxu0 0
    %6766 = vmatprep.subr.bf16.mxu0 0
    %6767 = vmatpush2.bf16.msra.mxu0 0
    %6768 = vmatprep.subr.bf16.mxu0 0
    %6769 = vmatpush2.bf16.msra.mxu0 0
    %6770 = vmatprep.subr.bf16.mxu0 0
    %6771 = vmatpush2.bf16.msra.mxu0 0
    %6772 = vmatprep.subr.bf16.mxu0 0
    %6773 = vmatpush2.bf16.msra.mxu0 0
    %6774 = vmatprep.subr.bf16.mxu0 0
    %6775 = vmatpush2.bf16.msra.mxu0 0
    %6776 = vmatprep.mubr.bf16.mxu0 0
    %6777 = vmatmul.mubr.bf16.gmra.mxu0 %v5988
    %v6778 = vpop.f32.mrf.mxu0
    %v6779 = vadd.f32 %v6714, %v6778
    %v6780 = vpop.f32.mrf.mxu0
    %v6781 = vpop.f32.mrf.mxu0
    %v6782 = vadd.f32 %v6717, %v6781
    %v6783 = vpop.f32.mrf.mxu0
    %6784 = vmatprep.mubr.bf16.mxu0 0
    %6785 = vmatmul.mubr.bf16.gmra.mxu0 %v5997
    %v6786 = vpop.f32.mrf.mxu0
    %v6787 = vadd.f32 %v6722, %v6786
    %v6788 = vpop.f32.mrf.mxu0
    %v6789 = vpop.f32.mrf.mxu0
    %v6790 = vadd.f32 %v6725, %v6789
    %v6791 = vpop.f32.mrf.mxu0
    %6792 = vmatprep.mubr.bf16.mxu0 0
    %6793 = vmatmul.mubr.bf16.gmra.mxu0 %v6006
    %v6794 = vpop.f32.mrf.mxu0
    %v6795 = vadd.f32 %v6730, %v6794
    %v6796 = vpop.f32.mrf.mxu0
    %v6797 = vpop.f32.mrf.mxu0
    %v6798 = vadd.f32 %v6733, %v6797
    %v6799 = vpop.f32.mrf.mxu0
    %6800 = vmatprep.mubr.bf16.mxu0 0
    %6801 = vmatmul.mubr.bf16.gmra.mxu0 %v6015
    %v6802 = vpop.f32.mrf.mxu0
    %v6803 = vadd.f32 %v6738, %v6802
    %v6804 = vpop.f32.mrf.mxu0
    %v6805 = vpop.f32.mrf.mxu0
    %v6806 = vadd.f32 %v6741, %v6805
    %v6807 = vpop.f32.mrf.mxu0
    %6808 = vdwg.mxu0
    %vm6809 = vcmp.ge.f32.partialorder %v6779, 0.0
    %vm6810 = vcmp.ge.f32.partialorder %v6782, 0.0
    %vm6811 = vcmp.ge.f32.partialorder %v6787, 0.0
    %vm6812 = vcmp.ge.f32.partialorder %v6790, 0.0
    %vm6813 = vcmp.ge.f32.partialorder %v6795, 0.0
    %vm6814 = vcmp.ge.f32.partialorder %v6798, 0.0
    %vm6815 = vcmp.ge.f32.partialorder %v6803, 0.0
    %vm6816 = vcmp.ge.f32.partialorder %v6806, 0.0
    %v6817 = vmul.f32 %v6779, 0.1
    %v6818 = vmul.f32 %v6782, 0.1
    %v6819 = vmul.f32 %v6787, 0.1
    %v6820 = vmul.f32 %v6790, 0.1
    %v6821 = vmul.f32 %v6795, 0.1
    %v6822 = vmul.f32 %v6798, 0.1
    %v6823 = vmul.f32 %v6803, 0.1
    %v6824 = vmul.f32 %v6806, 0.1
    %v6825 = vsel %vm6809, %v6779, %v6817
    %v6826 = vsel %vm6810, %v6782, %v6818
    %v6827 = vsel %vm6811, %v6787, %v6819
    %v6828 = vsel %vm6812, %v6790, %v6820
    %v6829 = vsel %vm6813, %v6795, %v6821
    %v6830 = vsel %vm6814, %v6798, %v6822
    %v6831 = vsel %vm6815, %v6803, %v6823
    %v6832 = vsel %vm6816, %v6806, %v6824
    %6833 = vst [vmem:[%s206] sm:$0xff] %v6825
    %6834 = vst [vmem:[%s206 + $0x8] sm:$0xff] %v6826
    %6835 = vst [vmem:[%s206 + $0x10] sm:$0xff] %v6827
    %6836 = vst [vmem:[%s206 + $0x18] sm:$0xff] %v6828
    %6837 = vst [vmem:[%s206 + $0x30] sm:$0xff] %v6829
    %6838 = vst [vmem:[%s206 + $0x38] sm:$0xff] %v6830
    %6839 = vst [vmem:[%s206 + $0x40] sm:$0xff] %v6831
    %6840 = vst [vmem:[%s206 + $0x48] sm:$0xff] %v6832
    %v6841 = vrot.slane %v6825, 7
    %v6842 = vrot.slane %v6826, 7
    %v6843 = vrot.slane %v6827, 7
    %v6844 = vrot.slane %v6828, 7
    %v6845 = vrot.slane %v6829, 7
    %v6846 = vrot.slane %v6830, 7
    %v6847 = vrot.slane %v6831, 7
    %v6848 = vrot.slane %v6832, 7
    %v6849 = vsel %vm223, %v6847, %v6848
    %v6850 = vsel %vm223, %v6846, %v6847
    %v6851 = vsel %vm223, %v6845, %v6846
    %v6852 = vsel %vm223, %v6844, %v6845
    %v6853 = vsel %vm223, %v6843, %v6844
    %v6854 = vsel %vm223, %v6842, %v6843
    %v6855 = vsel %vm223, %v6841, %v6842
    %v6856 = vsel %vm223, %v6848, %v6841
    %v6857 = vsel %vm182, 0.0, %v6856
    %v6858 = vsel %vm183, 0.0, %v6855
    %v6859 = vsel %vm184, 0.0, %v6854
    %v6860 = vsel %vm185, 0.0, %v6853
    %v6861 = vsel %vm186, 0.0, %v6852
    %v6862 = vsel %vm187, 0.0, %v6851
    %v6863 = vsel %vm188, 0.0, %v6850
    %v6864 = vsel %vm189, 0.0, %v6849
    %6865 = vst [vmem:[%s240] sm:$0xff] %v6857
    %6866 = vst [vmem:[%s240 + $0x8] sm:$0xff] %v6858
    %6867 = vst [vmem:[%s240 + $0x10] sm:$0xff] %v6859
    %6868 = vst [vmem:[%s240 + $0x18] sm:$0xff] %v6860
    %6869 = vst [vmem:[%s240 + $0x30] sm:$0xff] %v6861
    %6870 = vst [vmem:[%s240 + $0x38] sm:$0xff] %v6862
    %6871 = vst [vmem:[%s240 + $0x40] sm:$0xff] %v6863
    %6872 = vst [vmem:[%s240 + $0x48] sm:$0xff] %v6864
    %v6873 = vrot.slane %v6825, 1
    %v6874 = vrot.slane %v6826, 1
    %v6875 = vrot.slane %v6827, 1
    %v6876 = vrot.slane %v6828, 1
    %v6877 = vrot.slane %v6829, 1
    %v6878 = vrot.slane %v6830, 1
    %v6879 = vrot.slane %v6831, 1
    %v6880 = vrot.slane %v6832, 1
    %v6881 = vsel %vm257, %v6879, %v6880
    %v6882 = vsel %vm257, %v6878, %v6879
    %v6883 = vsel %vm257, %v6877, %v6878
    %v6884 = vsel %vm257, %v6876, %v6877
    %v6885 = vsel %vm257, %v6875, %v6876
    %v6886 = vsel %vm257, %v6874, %v6875
    %v6887 = vsel %vm257, %v6873, %v6874
    %v6888 = vsel %vm257, %v6880, %v6873
    %v6889 = vsel %vm190, 0.0, %v6887
    %v6890 = vsel %vm191, 0.0, %v6886
    %v6891 = vsel %vm192, 0.0, %v6885
    %v6892 = vsel %vm193, 0.0, %v6884
    %v6893 = vsel %vm194, 0.0, %v6883
    %v6894 = vsel %vm195, 0.0, %v6882
    %v6895 = vsel %vm196, 0.0, %v6881
    %v6896 = vsel %vm197, 0.0, %v6888
    %6897 = vst [vmem:[%s274] sm:$0xff] %v6889
    %6898 = vst [vmem:[%s274 + $0x8] sm:$0xff] %v6890
    %6899 = vst [vmem:[%s274 + $0x10] sm:$0xff] %v6891
    %6900 = vst [vmem:[%s274 + $0x18] sm:$0xff] %v6892
    %6901 = vst [vmem:[%s274 + $0x30] sm:$0xff] %v6893
    %6902 = vst [vmem:[%s274 + $0x38] sm:$0xff] %v6894
    %6903 = vst [vmem:[%s274 + $0x40] sm:$0xff] %v6895
    %6904 = vst [vmem:[%s274 + $0x48] sm:$0xff] %v6896
    %v6905 = vld [vmem:[#allocation2] sm:$0xff]
    %v6906 = vld [vmem:[#allocation2 + $0x8] sm:$0xff]
    %v6907 = vld [vmem:[#allocation2 + $0x10] sm:$0xff]
    %v6908 = vld [vmem:[#allocation2 + $0x18] sm:$0xff]
    %v6909 = vld [vmem:[#allocation2 + $0x30] sm:$0xff]
    %v6910 = vld [vmem:[#allocation2 + $0x38] sm:$0xff]
    %v6911 = vld [vmem:[#allocation2 + $0x40] sm:$0xff]
    %v6912 = vld [vmem:[#allocation2 + $0x48] sm:$0xff]
    %v6913 = vpack.c.bf16 %v6906, %v6905
    %v6914 = vpack.c.bf16 %v6908, %v6907
    %v6915 = vpack.c.bf16 %v6910, %v6909
    %v6916 = vpack.c.bf16 %v6912, %v6911
    %v6921 = vunpack.c.l.b16 %v6913
    %v6922 = vunpack.c.h.b16 %v6913
    %v6923 = vunpack.c.l.b16 %v6914
    %v6924 = vunpack.c.h.b16 %v6914
    %v6925 = vunpack.c.l.b16 %v6915
    %v6926 = vunpack.c.h.b16 %v6915
    %v6927 = vunpack.c.l.b16 %v6916
    %v6928 = vunpack.c.h.b16 %v6916
    %v6929 = vpack.c.b16 %v6921, %v6921
    %v6930 = vpack.c.b16 %v6922, %v6922
    %v6931 = vpack.c.b16 %v6923, %v6923
    %v6932 = vpack.c.b16 %v6924, %v6924
    %v6933 = vpack.c.b16 %v6925, %v6925
    %v6934 = vpack.c.b16 %v6926, %v6926
    %v6935 = vpack.c.b16 %v6927, %v6927
    %v6936 = vpack.c.b16 %v6928, %v6928
    %6945 = vst [vmem:[#allocation5] sm:$0xf] %v6929
    %6946 = vst [vmem:[#allocation5 + $0x24] sm:$0xf] %v6930
    %6947 = vst [vmem:[#allocation5 + $0x48] sm:$0xf] %v6931
    %6948 = vst [vmem:[#allocation5 + $0x6c] sm:$0xf] %v6932
    %6949 = vst [vmem:[#allocation5 + $0x90] sm:$0xf] %v6933
    %6950 = vst [vmem:[#allocation5 + $0xb4] sm:$0xf] %v6934
    %6951 = vst [vmem:[#allocation5 + $0xd8] sm:$0xf] %v6935
    %6952 = vst [vmem:[#allocation5 + $0xfc] sm:$0xf] %v6936
    %v6953 = vld [vmem:[#allocation3] sm:$0xff]
    %v6954 = vld [vmem:[#allocation3 + $0x8] sm:$0xff]
    %v6955 = vld [vmem:[#allocation3 + $0x10] sm:$0xff]
    %v6956 = vld [vmem:[#allocation3 + $0x18] sm:$0xff]
    %v6957 = vld [vmem:[#allocation3 + $0x30] sm:$0xff]
    %v6958 = vld [vmem:[#allocation3 + $0x38] sm:$0xff]
    %v6959 = vld [vmem:[#allocation3 + $0x40] sm:$0xff]
    %v6960 = vld [vmem:[#allocation3 + $0x48] sm:$0xff]
    %v6961 = vpack.c.bf16 %v6954, %v6953
    %v6962 = vpack.c.bf16 %v6956, %v6955
    %v6963 = vpack.c.bf16 %v6958, %v6957
    %v6964 = vpack.c.bf16 %v6960, %v6959
    %v6969 = vunpack.c.l.b16 %v6961
    %v6970 = vunpack.c.h.b16 %v6961
    %v6971 = vunpack.c.l.b16 %v6962
    %v6972 = vunpack.c.h.b16 %v6962
    %v6973 = vunpack.c.l.b16 %v6963
    %v6974 = vunpack.c.h.b16 %v6963
    %v6975 = vunpack.c.l.b16 %v6964
    %v6976 = vunpack.c.h.b16 %v6964
    %v6977 = vpack.c.b16 %v6969, %v6969
    %v6978 = vpack.c.b16 %v6970, %v6970
    %v6979 = vpack.c.b16 %v6971, %v6971
    %v6980 = vpack.c.b16 %v6972, %v6972
    %v6981 = vpack.c.b16 %v6973, %v6973
    %v6982 = vpack.c.b16 %v6974, %v6974
    %v6983 = vpack.c.b16 %v6975, %v6975
    %v6984 = vpack.c.b16 %v6976, %v6976
    %6993 = vst [vmem:[#allocation5 + $0x4] sm:$0xf] %v6977
    %6994 = vst [vmem:[#allocation5 + $0x28] sm:$0xf] %v6978
    %6995 = vst [vmem:[#allocation5 + $0x4c] sm:$0xf] %v6979
    %6996 = vst [vmem:[#allocation5 + $0x70] sm:$0xf] %v6980
    %6997 = vst [vmem:[#allocation5 + $0x94] sm:$0xf] %v6981
    %6998 = vst [vmem:[#allocation5 + $0xb8] sm:$0xf] %v6982
    %6999 = vst [vmem:[#allocation5 + $0xdc] sm:$0xf] %v6983
    %7000 = vst [vmem:[#allocation5 + $0x100] sm:$0xf] %v6984
    %v7001 = vld [vmem:[#allocation4] sm:$0xff]
    %v7002 = vld [vmem:[#allocation4 + $0x8] sm:$0xff]
    %v7003 = vld [vmem:[#allocation4 + $0x10] sm:$0xff]
    %v7004 = vld [vmem:[#allocation4 + $0x18] sm:$0xff]
    %v7005 = vld [vmem:[#allocation4 + $0x30] sm:$0xff]
    %v7006 = vld [vmem:[#allocation4 + $0x38] sm:$0xff]
    %v7007 = vld [vmem:[#allocation4 + $0x40] sm:$0xff]
    %v7008 = vld [vmem:[#allocation4 + $0x48] sm:$0xff]
    %v7009 = vpack.c.bf16 %v7002, %v7001
    %v7010 = vpack.c.bf16 %v7004, %v7003
    %v7011 = vpack.c.bf16 %v7006, %v7005
    %v7012 = vpack.c.bf16 %v7008, %v7007
    %v7017 = vunpack.c.l.b16 %v7009
    %v7018 = vunpack.c.h.b16 %v7009
    %v7019 = vunpack.c.l.b16 %v7010
    %v7020 = vunpack.c.h.b16 %v7010
    %v7021 = vunpack.c.l.b16 %v7011
    %v7022 = vunpack.c.h.b16 %v7011
    %v7023 = vunpack.c.l.b16 %v7012
    %v7024 = vunpack.c.h.b16 %v7012
    %v7025 = vpack.c.b16 %v7017, %v7017
    %v7026 = vpack.c.b16 %v7018, %v7018
    %v7027 = vpack.c.b16 %v7019, %v7019
    %v7028 = vpack.c.b16 %v7020, %v7020
    %v7029 = vpack.c.b16 %v7021, %v7021
    %v7030 = vpack.c.b16 %v7022, %v7022
    %v7031 = vpack.c.b16 %v7023, %v7023
    %v7032 = vpack.c.b16 %v7024, %v7024
    %7041 = vst [vmem:[#allocation5 + $0x8] sm:$0xf] %v7025
    %7042 = vst [vmem:[#allocation5 + $0x2c] sm:$0xf] %v7026
    %7043 = vst [vmem:[#allocation5 + $0x50] sm:$0xf] %v7027
    %7044 = vst [vmem:[#allocation5 + $0x74] sm:$0xf] %v7028
    %7045 = vst [vmem:[#allocation5 + $0x98] sm:$0xf] %v7029
    %7046 = vst [vmem:[#allocation5 + $0xbc] sm:$0xf] %v7030
    %7047 = vst [vmem:[#allocation5 + $0xe0] sm:$0xf] %v7031
    %7048 = vst [vmem:[#allocation5 + $0x104] sm:$0xf] %v7032
    %v7049 = vld [vmem:[%s240] sm:$0xff]
    %v7050 = vld [vmem:[%s240 + $0x8] sm:$0xff]
    %v7051 = vld [vmem:[%s240 + $0x10] sm:$0xff]
    %v7052 = vld [vmem:[%s240 + $0x18] sm:$0xff]
    %v7053 = vld [vmem:[%s240 + $0x30] sm:$0xff]
    %v7054 = vld [vmem:[%s240 + $0x38] sm:$0xff]
    %v7055 = vld [vmem:[%s240 + $0x40] sm:$0xff]
    %v7056 = vld [vmem:[%s240 + $0x48] sm:$0xff]
    %v7057 = vpack.c.bf16 %v7050, %v7049
    %v7058 = vpack.c.bf16 %v7052, %v7051
    %v7059 = vpack.c.bf16 %v7054, %v7053
    %v7060 = vpack.c.bf16 %v7056, %v7055
    %v7065 = vunpack.c.l.b16 %v7057
    %v7066 = vunpack.c.h.b16 %v7057
    %v7067 = vunpack.c.l.b16 %v7058
    %v7068 = vunpack.c.h.b16 %v7058
    %v7069 = vunpack.c.l.b16 %v7059
    %v7070 = vunpack.c.h.b16 %v7059
    %v7071 = vunpack.c.l.b16 %v7060
    %v7072 = vunpack.c.h.b16 %v7060
    %v7073 = vpack.c.b16 %v7065, %v7065
    %v7074 = vpack.c.b16 %v7066, %v7066
    %v7075 = vpack.c.b16 %v7067, %v7067
    %v7076 = vpack.c.b16 %v7068, %v7068
    %v7077 = vpack.c.b16 %v7069, %v7069
    %v7078 = vpack.c.b16 %v7070, %v7070
    %v7079 = vpack.c.b16 %v7071, %v7071
    %v7080 = vpack.c.b16 %v7072, %v7072
    %7089 = vst [vmem:[#allocation5 + $0xc] sm:$0xf] %v7073
    %7090 = vst [vmem:[#allocation5 + $0x30] sm:$0xf] %v7074
    %7091 = vst [vmem:[#allocation5 + $0x54] sm:$0xf] %v7075
    %7092 = vst [vmem:[#allocation5 + $0x78] sm:$0xf] %v7076
    %7093 = vst [vmem:[#allocation5 + $0x9c] sm:$0xf] %v7077
    %7094 = vst [vmem:[#allocation5 + $0xc0] sm:$0xf] %v7078
    %7095 = vst [vmem:[#allocation5 + $0xe4] sm:$0xf] %v7079
    %7096 = vst [vmem:[#allocation5 + $0x108] sm:$0xf] %v7080
    %v7097 = vld [vmem:[%s206] sm:$0xff]
    %v7098 = vld [vmem:[%s206 + $0x8] sm:$0xff]
    %v7099 = vld [vmem:[%s206 + $0x10] sm:$0xff]
    %v7100 = vld [vmem:[%s206 + $0x18] sm:$0xff]
    %v7101 = vld [vmem:[%s206 + $0x30] sm:$0xff]
    %v7102 = vld [vmem:[%s206 + $0x38] sm:$0xff]
    %v7103 = vld [vmem:[%s206 + $0x40] sm:$0xff]
    %v7104 = vld [vmem:[%s206 + $0x48] sm:$0xff]
    %v7105 = vpack.c.bf16 %v7098, %v7097
    %v7106 = vpack.c.bf16 %v7100, %v7099
    %v7107 = vpack.c.bf16 %v7102, %v7101
    %v7108 = vpack.c.bf16 %v7104, %v7103
    %v7113 = vunpack.c.l.b16 %v7105
    %v7114 = vunpack.c.h.b16 %v7105
    %v7115 = vunpack.c.l.b16 %v7106
    %v7116 = vunpack.c.h.b16 %v7106
    %v7117 = vunpack.c.l.b16 %v7107
    %v7118 = vunpack.c.h.b16 %v7107
    %v7119 = vunpack.c.l.b16 %v7108
    %v7120 = vunpack.c.h.b16 %v7108
    %v7121 = vpack.c.b16 %v7113, %v7113
    %v7122 = vpack.c.b16 %v7114, %v7114
    %v7123 = vpack.c.b16 %v7115, %v7115
    %v7124 = vpack.c.b16 %v7116, %v7116
    %v7125 = vpack.c.b16 %v7117, %v7117
    %v7126 = vpack.c.b16 %v7118, %v7118
    %v7127 = vpack.c.b16 %v7119, %v7119
    %v7128 = vpack.c.b16 %v7120, %v7120
    %7137 = vst [vmem:[#allocation5 + $0x10] sm:$0xf] %v7121
    %7138 = vst [vmem:[#allocation5 + $0x34] sm:$0xf] %v7122
    %7139 = vst [vmem:[#allocation5 + $0x58] sm:$0xf] %v7123
    %7140 = vst [vmem:[#allocation5 + $0x7c] sm:$0xf] %v7124
    %7141 = vst [vmem:[#allocation5 + $0xa0] sm:$0xf] %v7125
    %7142 = vst [vmem:[#allocation5 + $0xc4] sm:$0xf] %v7126
    %7143 = vst [vmem:[#allocation5 + $0xe8] sm:$0xf] %v7127
    %7144 = vst [vmem:[#allocation5 + $0x10c] sm:$0xf] %v7128
    %v7145 = vld [vmem:[%s274] sm:$0xff]
    %v7146 = vld [vmem:[%s274 + $0x8] sm:$0xff]
    %v7147 = vld [vmem:[%s274 + $0x10] sm:$0xff]
    %v7148 = vld [vmem:[%s274 + $0x18] sm:$0xff]
    %v7149 = vld [vmem:[%s274 + $0x30] sm:$0xff]
    %v7150 = vld [vmem:[%s274 + $0x38] sm:$0xff]
    %v7151 = vld [vmem:[%s274 + $0x40] sm:$0xff]
    %v7152 = vld [vmem:[%s274 + $0x48] sm:$0xff]
    %v7153 = vpack.c.bf16 %v7146, %v7145
    %v7154 = vpack.c.bf16 %v7148, %v7147
    %v7155 = vpack.c.bf16 %v7150, %v7149
    %v7156 = vpack.c.bf16 %v7152, %v7151
    %v7161 = vunpack.c.l.b16 %v7153
    %v7162 = vunpack.c.h.b16 %v7153
    %v7163 = vunpack.c.l.b16 %v7154
    %v7164 = vunpack.c.h.b16 %v7154
    %v7165 = vunpack.c.l.b16 %v7155
    %v7166 = vunpack.c.h.b16 %v7155
    %v7167 = vunpack.c.l.b16 %v7156
    %v7168 = vunpack.c.h.b16 %v7156
    %v7169 = vpack.c.b16 %v7161, %v7161
    %v7170 = vpack.c.b16 %v7162, %v7162
    %v7171 = vpack.c.b16 %v7163, %v7163
    %v7172 = vpack.c.b16 %v7164, %v7164
    %v7173 = vpack.c.b16 %v7165, %v7165
    %v7174 = vpack.c.b16 %v7166, %v7166
    %v7175 = vpack.c.b16 %v7167, %v7167
    %v7176 = vpack.c.b16 %v7168, %v7168
    %7185 = vst [vmem:[#allocation5 + $0x14] sm:$0xf] %v7169
    %7186 = vst [vmem:[#allocation5 + $0x38] sm:$0xf] %v7170
    %7187 = vst [vmem:[#allocation5 + $0x5c] sm:$0xf] %v7171
    %7188 = vst [vmem:[#allocation5 + $0x80] sm:$0xf] %v7172
    %7189 = vst [vmem:[#allocation5 + $0xa4] sm:$0xf] %v7173
    %7190 = vst [vmem:[#allocation5 + $0xc8] sm:$0xf] %v7174
    %7191 = vst [vmem:[#allocation5 + $0xec] sm:$0xf] %v7175
    %7192 = vst [vmem:[#allocation5 + $0x110] sm:$0xf] %v7176
    %v7193 = vld [vmem:[%s571] sm:$0xff]
    %v7194 = vld [vmem:[%s571 + $0x8] sm:$0xff]
    %v7195 = vld [vmem:[%s571 + $0x10] sm:$0xff]
    %v7196 = vld [vmem:[%s571 + $0x18] sm:$0xff]
    %v7197 = vld [vmem:[%s571 + $0x30] sm:$0xff]
    %v7198 = vld [vmem:[%s571 + $0x38] sm:$0xff]
    %v7199 = vld [vmem:[%s571 + $0x40] sm:$0xff]
    %v7200 = vld [vmem:[%s571 + $0x48] sm:$0xff]
    %v7201 = vpack.c.bf16 %v7194, %v7193
    %v7202 = vpack.c.bf16 %v7196, %v7195
    %v7203 = vpack.c.bf16 %v7198, %v7197
    %v7204 = vpack.c.bf16 %v7200, %v7199
    %v7209 = vunpack.c.l.b16 %v7201
    %v7210 = vunpack.c.h.b16 %v7201
    %v7211 = vunpack.c.l.b16 %v7202
    %v7212 = vunpack.c.h.b16 %v7202
    %v7213 = vunpack.c.l.b16 %v7203
    %v7214 = vunpack.c.h.b16 %v7203
    %v7215 = vunpack.c.l.b16 %v7204
    %v7216 = vunpack.c.h.b16 %v7204
    %v7217 = vpack.c.b16 %v7209, %v7209
    %v7218 = vpack.c.b16 %v7210, %v7210
    %v7219 = vpack.c.b16 %v7211, %v7211
    %v7220 = vpack.c.b16 %v7212, %v7212
    %v7221 = vpack.c.b16 %v7213, %v7213
    %v7222 = vpack.c.b16 %v7214, %v7214
    %v7223 = vpack.c.b16 %v7215, %v7215
    %v7224 = vpack.c.b16 %v7216, %v7216
    %7233 = vst [vmem:[#allocation5 + $0x18] sm:$0xf] %v7217
    %7234 = vst [vmem:[#allocation5 + $0x3c] sm:$0xf] %v7218
    %7235 = vst [vmem:[#allocation5 + $0x60] sm:$0xf] %v7219
    %7236 = vst [vmem:[#allocation5 + $0x84] sm:$0xf] %v7220
    %7237 = vst [vmem:[#allocation5 + $0xa8] sm:$0xf] %v7221
    %7238 = vst [vmem:[#allocation5 + $0xcc] sm:$0xf] %v7222
    %7239 = vst [vmem:[#allocation5 + $0xf0] sm:$0xf] %v7223
    %7240 = vst [vmem:[#allocation5 + $0x114] sm:$0xf] %v7224
    %v7241 = vld [vmem:[%s620] sm:$0xff]
    %v7242 = vld [vmem:[%s620 + $0x8] sm:$0xff]
    %v7243 = vld [vmem:[%s620 + $0x10] sm:$0xff]
    %v7244 = vld [vmem:[%s620 + $0x18] sm:$0xff]
    %v7245 = vld [vmem:[%s620 + $0x30] sm:$0xff]
    %v7246 = vld [vmem:[%s620 + $0x38] sm:$0xff]
    %v7247 = vld [vmem:[%s620 + $0x40] sm:$0xff]
    %v7248 = vld [vmem:[%s620 + $0x48] sm:$0xff]
    %v7249 = vpack.c.bf16 %v7242, %v7241
    %v7250 = vpack.c.bf16 %v7244, %v7243
    %v7251 = vpack.c.bf16 %v7246, %v7245
    %v7252 = vpack.c.bf16 %v7248, %v7247
    %v7257 = vunpack.c.l.b16 %v7249
    %v7258 = vunpack.c.h.b16 %v7249
    %v7259 = vunpack.c.l.b16 %v7250
    %v7260 = vunpack.c.h.b16 %v7250
    %v7261 = vunpack.c.l.b16 %v7251
    %v7262 = vunpack.c.h.b16 %v7251
    %v7263 = vunpack.c.l.b16 %v7252
    %v7264 = vunpack.c.h.b16 %v7252
    %v7265 = vpack.c.b16 %v7257, %v7257
    %v7266 = vpack.c.b16 %v7258, %v7258
    %v7267 = vpack.c.b16 %v7259, %v7259
    %v7268 = vpack.c.b16 %v7260, %v7260
    %v7269 = vpack.c.b16 %v7261, %v7261
    %v7270 = vpack.c.b16 %v7262, %v7262
    %v7271 = vpack.c.b16 %v7263, %v7263
    %v7272 = vpack.c.b16 %v7264, %v7264
    %7281 = vst [vmem:[#allocation5 + $0x1c] sm:$0xf] %v7265
    %7282 = vst [vmem:[#allocation5 + $0x40] sm:$0xf] %v7266
    %7283 = vst [vmem:[#allocation5 + $0x64] sm:$0xf] %v7267
    %7284 = vst [vmem:[#allocation5 + $0x88] sm:$0xf] %v7268
    %7285 = vst [vmem:[#allocation5 + $0xac] sm:$0xf] %v7269
    %7286 = vst [vmem:[#allocation5 + $0xd0] sm:$0xf] %v7270
    %7287 = vst [vmem:[#allocation5 + $0xf4] sm:$0xf] %v7271
    %7288 = vst [vmem:[#allocation5 + $0x118] sm:$0xf] %v7272
    %v7289 = vld [vmem:[%s669] sm:$0xff]
    %v7290 = vld [vmem:[%s669 + $0x8] sm:$0xff]
    %v7291 = vld [vmem:[%s669 + $0x10] sm:$0xff]
    %v7292 = vld [vmem:[%s669 + $0x18] sm:$0xff]
    %v7293 = vld [vmem:[%s669 + $0x30] sm:$0xff]
    %v7294 = vld [vmem:[%s669 + $0x38] sm:$0xff]
    %v7295 = vld [vmem:[%s669 + $0x40] sm:$0xff]
    %v7296 = vld [vmem:[%s669 + $0x48] sm:$0xff]
    %v7297 = vpack.c.bf16 %v7290, %v7289
    %v7298 = vpack.c.bf16 %v7292, %v7291
    %v7299 = vpack.c.bf16 %v7294, %v7293
    %v7300 = vpack.c.bf16 %v7296, %v7295
    %v7305 = vunpack.c.l.b16 %v7297
    %v7306 = vunpack.c.h.b16 %v7297
    %v7307 = vunpack.c.l.b16 %v7298
    %v7308 = vunpack.c.h.b16 %v7298
    %v7309 = vunpack.c.l.b16 %v7299
    %v7310 = vunpack.c.h.b16 %v7299
    %v7311 = vunpack.c.l.b16 %v7300
    %v7312 = vunpack.c.h.b16 %v7300
    %v7313 = vpack.c.b16 %v7305, %v7305
    %v7314 = vpack.c.b16 %v7306, %v7306
    %v7315 = vpack.c.b16 %v7307, %v7307
    %v7316 = vpack.c.b16 %v7308, %v7308
    %v7317 = vpack.c.b16 %v7309, %v7309
    %v7318 = vpack.c.b16 %v7310, %v7310
    %v7319 = vpack.c.b16 %v7311, %v7311
    %v7320 = vpack.c.b16 %v7312, %v7312
    %7329 = vst [vmem:[#allocation5 + $0x20] sm:$0xf] %v7313
    %7330 = vst [vmem:[#allocation5 + $0x44] sm:$0xf] %v7314
    %7331 = vst [vmem:[#allocation5 + $0x68] sm:$0xf] %v7315
    %7332 = vst [vmem:[#allocation5 + $0x8c] sm:$0xf] %v7316
    %7333 = vst [vmem:[#allocation5 + $0xb0] sm:$0xf] %v7317
    %7334 = vst [vmem:[#allocation5 + $0xd4] sm:$0xf] %v7318
    %7335 = vst [vmem:[#allocation5 + $0xf8] sm:$0xf] %v7319
    %7336 = vst [vmem:[#allocation5 + $0x11c] sm:$0xf] %v7320
    %v7337 = vld [vmem:[#allocation5] sm:$0xff]
    %v7338 = vld [vmem:[#allocation5 + $0x8] sm:$0xff]
    %v7339 = vld [vmem:[#allocation5 + $0x10] sm:$0xff]
    %v7340 = vld [vmem:[#allocation5 + $0x18] sm:$0xff]
    %v7341 = vld [vmem:[#allocation5 + $0x20] sm:$0xf]
    %v7342 = vld [vmem:[#allocation5 + $0x24] sm:$0xff]
    %v7343 = vld [vmem:[#allocation5 + $0x2c] sm:$0xff]
    %v7344 = vld [vmem:[#allocation5 + $0x34] sm:$0xff]
    %v7345 = vld [vmem:[#allocation5 + $0x3c] sm:$0xff]
    %v7346 = vld [vmem:[#allocation5 + $0x44] sm:$0xf]
    %v7347 = vld [vmem:[#allocation5 + $0x48] sm:$0xff]
    %v7348 = vld [vmem:[#allocation5 + $0x50] sm:$0xff]
    %v7349 = vld [vmem:[#allocation5 + $0x58] sm:$0xff]
    %v7350 = vld [vmem:[#allocation5 + $0x60] sm:$0xff]
    %v7351 = vld [vmem:[#allocation5 + $0x68] sm:$0xf]
    %v7352 = vld [vmem:[#allocation5 + $0x6c] sm:$0xff]
    %v7353 = vld [vmem:[#allocation5 + $0x74] sm:$0xff]
    %v7354 = vld [vmem:[#allocation5 + $0x7c] sm:$0xff]
    %v7355 = vld [vmem:[#allocation5 + $0x84] sm:$0xff]
    %v7356 = vld [vmem:[#allocation5 + $0x8c] sm:$0xf]
    %v7357 = vld [vmem:[#allocation5 + $0x90] sm:$0xff]
    %v7358 = vld [vmem:[#allocation5 + $0x98] sm:$0xff]
    %v7359 = vld [vmem:[#allocation5 + $0xa0] sm:$0xff]
    %v7360 = vld [vmem:[#allocation5 + $0xa8] sm:$0xff]
    %v7361 = vld [vmem:[#allocation5 + $0xb0] sm:$0xf]
    %v7362 = vld [vmem:[#allocation5 + $0xb4] sm:$0xff]
    %v7363 = vld [vmem:[#allocation5 + $0xbc] sm:$0xff]
    %v7364 = vld [vmem:[#allocation5 + $0xc4] sm:$0xff]
    %v7365 = vld [vmem:[#allocation5 + $0xcc] sm:$0xff]
    %v7366 = vld [vmem:[#allocation5 + $0xd4] sm:$0xf]
    %v7367 = vld [vmem:[#allocation5 + $0xd8] sm:$0xff]
    %v7368 = vld [vmem:[#allocation5 + $0xe0] sm:$0xff]
    %v7369 = vld [vmem:[#allocation5 + $0xe8] sm:$0xff]
    %v7370 = vld [vmem:[#allocation5 + $0xf0] sm:$0xff]
    %v7371 = vld [vmem:[#allocation5 + $0xf8] sm:$0xf]
    %v7372 = vld [vmem:[#allocation5 + $0xfc] sm:$0xff]
    %v7373 = vld [vmem:[#allocation5 + $0x104] sm:$0xff]
    %v7374 = vld [vmem:[#allocation5 + $0x10c] sm:$0xff]
    %v7375 = vld [vmem:[#allocation5 + $0x114] sm:$0xff]
    %v7376 = vld [vmem:[#allocation5 + $0x11c] sm:$0xf]
    %s7377 = scalar_lea.vmem [#allocation6], 2304
    %v7378 = vld [vmem:[%s7377] sm:$0xf]
    %v7379 = vld [vmem:[%s7377 + $0x4] sm:$0xf]
    %v7380 = vld [vmem:[%s7377 + $0x8] sm:$0xf]
    %v7381 = vld [vmem:[%s7377 + $0xc] sm:$0xf]
    %v7382 = vld [vmem:[%s7377 + $0x10] sm:$0xf]
    %v7383 = vld [vmem:[%s7377 + $0x14] sm:$0xf]
    %v7384 = vld [vmem:[%s7377 + $0x18] sm:$0xf]
    %v7385 = vld [vmem:[%s7377 + $0x1c] sm:$0xf]
    %v7386 = vld [vmem:[%s7377 + $0x20] sm:$0xf]
    %v7387 = vld [vmem:[%s7377 + $0x24] sm:$0xf]
    %v7388 = vld [vmem:[%s7377 + $0x28] sm:$0xf]
    %v7389 = vld [vmem:[%s7377 + $0x2c] sm:$0xf]
    %v7390 = vld [vmem:[%s7377 + $0x30] sm:$0xf]
    %v7391 = vld [vmem:[%s7377 + $0x34] sm:$0xf]
    %v7392 = vld [vmem:[%s7377 + $0x38] sm:$0xf]
    %v7393 = vld [vmem:[%s7377 + $0x3c] sm:$0xf]
    %v7394 = vld [vmem:[%s7377 + $0x40] sm:$0xf]
    %v7395 = vld [vmem:[%s7377 + $0x44] sm:$0xf]
    %v7396 = vld [vmem:[%s7377 + $0x48] sm:$0xf]
    %v7397 = vld [vmem:[%s7377 + $0x4c] sm:$0xf]
    %v7398 = vld [vmem:[%s7377 + $0x50] sm:$0xf]
    %v7399 = vld [vmem:[%s7377 + $0x54] sm:$0xf]
    %v7400 = vld [vmem:[%s7377 + $0x58] sm:$0xf]
    %v7401 = vld [vmem:[%s7377 + $0x5c] sm:$0xf]
    %v7402 = vld [vmem:[%s7377 + $0x60] sm:$0xf]
    %v7403 = vld [vmem:[%s7377 + $0x64] sm:$0xf]
    %v7404 = vld [vmem:[%s7377 + $0x68] sm:$0xf]
    %v7405 = vld [vmem:[%s7377 + $0x6c] sm:$0xf]
    %v7406 = vld [vmem:[%s7377 + $0x70] sm:$0xf]
    %v7407 = vld [vmem:[%s7377 + $0x74] sm:$0xf]
    %v7408 = vld [vmem:[%s7377 + $0x78] sm:$0xf]
    %v7409 = vld [vmem:[%s7377 + $0x7c] sm:$0xf]
    %v7410 = vld [vmem:[%s7377 + $0x80] sm:$0xf]
    %v7411 = vld [vmem:[%s7377 + $0x84] sm:$0xf]
    %v7412 = vld [vmem:[%s7377 + $0x88] sm:$0xf]
    %v7413 = vld [vmem:[%s7377 + $0x8c] sm:$0xf]
    %v7414 = vld [vmem:[%s7377 + $0x90] sm:$0xf]
    %v7415 = vld [vmem:[%s7377 + $0x94] sm:$0xf]
    %v7416 = vld [vmem:[%s7377 + $0x98] sm:$0xf]
    %v7417 = vld [vmem:[%s7377 + $0x9c] sm:$0xf]
    %v7418 = vld [vmem:[%s7377 + $0xa0] sm:$0xf]
    %v7419 = vld [vmem:[%s7377 + $0xa4] sm:$0xf]
    %v7420 = vld [vmem:[%s7377 + $0xa8] sm:$0xf]
    %v7421 = vld [vmem:[%s7377 + $0xac] sm:$0xf]
    %v7422 = vld [vmem:[%s7377 + $0xb0] sm:$0xf]
    %v7423 = vld [vmem:[%s7377 + $0xb4] sm:$0xf]
    %v7424 = vld [vmem:[%s7377 + $0xb8] sm:$0xf]
    %v7425 = vld [vmem:[%s7377 + $0xbc] sm:$0xf]
    %v7426 = vld [vmem:[%s7377 + $0xc0] sm:$0xf]
    %v7427 = vld [vmem:[%s7377 + $0xc4] sm:$0xf]
    %v7428 = vld [vmem:[%s7377 + $0xc8] sm:$0xf]
    %v7429 = vld [vmem:[%s7377 + $0xcc] sm:$0xf]
    %v7430 = vld [vmem:[%s7377 + $0xd0] sm:$0xf]
    %v7431 = vld [vmem:[%s7377 + $0xd4] sm:$0xf]
    %v7432 = vld [vmem:[%s7377 + $0xd8] sm:$0xf]
    %v7433 = vld [vmem:[%s7377 + $0xdc] sm:$0xf]
    %v7434 = vld [vmem:[%s7377 + $0xe0] sm:$0xf]
    %v7435 = vld [vmem:[%s7377 + $0xe4] sm:$0xf]
    %v7436 = vld [vmem:[%s7377 + $0xe8] sm:$0xf]
    %v7437 = vld [vmem:[%s7377 + $0xec] sm:$0xf]
    %v7438 = vld [vmem:[%s7377 + $0xf0] sm:$0xf]
    %v7439 = vld [vmem:[%s7377 + $0xf4] sm:$0xf]
    %v7440 = vld [vmem:[%s7377 + $0xf8] sm:$0xf]
    %v7441 = vld [vmem:[%s7377 + $0xfc] sm:$0xf]
    %v7442 = vld [vmem:[%s7377 + $0x100] sm:$0xf]
    %v7443 = vld [vmem:[%s7377 + $0x104] sm:$0xf]
    %v7444 = vld [vmem:[%s7377 + $0x108] sm:$0xf]
    %v7445 = vld [vmem:[%s7377 + $0x10c] sm:$0xf]
    %v7446 = vld [vmem:[%s7377 + $0x110] sm:$0xf]
    %v7447 = vld [vmem:[%s7377 + $0x114] sm:$0xf]
    %v7448 = vld [vmem:[%s7377 + $0x118] sm:$0xf]
    %v7449 = vld [vmem:[%s7377 + $0x11c] sm:$0xf]
    %v7450 = vld [vmem:[%s7377 + $0x120] sm:$0xf]
    %v7451 = vld [vmem:[%s7377 + $0x124] sm:$0xf]
    %v7452 = vld [vmem:[%s7377 + $0x128] sm:$0xf]
    %v7453 = vld [vmem:[%s7377 + $0x12c] sm:$0xf]
    %v7454 = vld [vmem:[%s7377 + $0x130] sm:$0xf]
    %v7455 = vld [vmem:[%s7377 + $0x134] sm:$0xf]
    %v7456 = vld [vmem:[%s7377 + $0x138] sm:$0xf]
    %v7457 = vld [vmem:[%s7377 + $0x13c] sm:$0xf]
    %v7458 = vld [vmem:[%s7377 + $0x140] sm:$0xf]
    %v7459 = vld [vmem:[%s7377 + $0x144] sm:$0xf]
    %v7460 = vld [vmem:[%s7377 + $0x148] sm:$0xf]
    %v7461 = vld [vmem:[%s7377 + $0x14c] sm:$0xf]
    %v7462 = vld [vmem:[%s7377 + $0x150] sm:$0xf]
    %v7463 = vld [vmem:[%s7377 + $0x154] sm:$0xf]
    %v7464 = vld [vmem:[%s7377 + $0x158] sm:$0xf]
    %v7465 = vld [vmem:[%s7377 + $0x15c] sm:$0xf]
    %v7466 = vld [vmem:[%s7377 + $0x160] sm:$0xf]
    %v7467 = vld [vmem:[%s7377 + $0x164] sm:$0xf]
    %v7468 = vld [vmem:[%s7377 + $0x168] sm:$0xf]
    %v7469 = vld [vmem:[%s7377 + $0x16c] sm:$0xf]
    %v7470 = vld [vmem:[%s7377 + $0x170] sm:$0xf]
    %v7471 = vld [vmem:[%s7377 + $0x174] sm:$0xf]
    %v7472 = vld [vmem:[%s7377 + $0x178] sm:$0xf]
    %v7473 = vld [vmem:[%s7377 + $0x17c] sm:$0xf]
    %v7474 = vld [vmem:[%s7377 + $0x180] sm:$0xf]
    %v7475 = vld [vmem:[%s7377 + $0x184] sm:$0xf]
    %v7476 = vld [vmem:[%s7377 + $0x188] sm:$0xf]
    %v7477 = vld [vmem:[%s7377 + $0x18c] sm:$0xf]
    %v7478 = vld [vmem:[%s7377 + $0x190] sm:$0xf]
    %v7479 = vld [vmem:[%s7377 + $0x194] sm:$0xf]
    %v7480 = vld [vmem:[%s7377 + $0x198] sm:$0xf]
    %v7481 = vld [vmem:[%s7377 + $0x19c] sm:$0xf]
    %v7482 = vld [vmem:[%s7377 + $0x1a0] sm:$0xf]
    %v7483 = vld [vmem:[%s7377 + $0x1a4] sm:$0xf]
    %v7484 = vld [vmem:[%s7377 + $0x1a8] sm:$0xf]
    %v7485 = vld [vmem:[%s7377 + $0x1ac] sm:$0xf]
    %v7486 = vld [vmem:[%s7377 + $0x1b0] sm:$0xf]
    %v7487 = vld [vmem:[%s7377 + $0x1b4] sm:$0xf]
    %v7488 = vld [vmem:[%s7377 + $0x1b8] sm:$0xf]
    %v7489 = vld [vmem:[%s7377 + $0x1bc] sm:$0xf]
    %v7490 = vld [vmem:[%s7377 + $0x1c0] sm:$0xf]
    %v7491 = vld [vmem:[%s7377 + $0x1c4] sm:$0xf]
    %v7492 = vld [vmem:[%s7377 + $0x1c8] sm:$0xf]
    %v7493 = vld [vmem:[%s7377 + $0x1cc] sm:$0xf]
    %v7494 = vld [vmem:[%s7377 + $0x1d0] sm:$0xf]
    %v7495 = vld [vmem:[%s7377 + $0x1d4] sm:$0xf]
    %v7496 = vld [vmem:[%s7377 + $0x1d8] sm:$0xf]
    %v7497 = vld [vmem:[%s7377 + $0x1dc] sm:$0xf]
    %v7498 = vld [vmem:[%s7377 + $0x1e0] sm:$0xf]
    %v7499 = vld [vmem:[%s7377 + $0x1e4] sm:$0xf]
    %v7500 = vld [vmem:[%s7377 + $0x1e8] sm:$0xf]
    %v7501 = vld [vmem:[%s7377 + $0x1ec] sm:$0xf]
    %v7502 = vld [vmem:[%s7377 + $0x1f0] sm:$0xf]
    %v7503 = vld [vmem:[%s7377 + $0x1f4] sm:$0xf]
    %v7504 = vld [vmem:[%s7377 + $0x1f8] sm:$0xf]
    %v7505 = vld [vmem:[%s7377 + $0x1fc] sm:$0xf]
    %v7506 = vld [vmem:[%s7377 + $0x200] sm:$0xf]
    %v7507 = vld [vmem:[%s7377 + $0x204] sm:$0xf]
    %v7508 = vld [vmem:[%s7377 + $0x208] sm:$0xf]
    %v7509 = vld [vmem:[%s7377 + $0x20c] sm:$0xf]
    %v7510 = vld [vmem:[%s7377 + $0x210] sm:$0xf]
    %v7511 = vld [vmem:[%s7377 + $0x214] sm:$0xf]
    %v7512 = vld [vmem:[%s7377 + $0x218] sm:$0xf]
    %v7513 = vld [vmem:[%s7377 + $0x21c] sm:$0xf]
    %v7514 = vld [vmem:[%s7377 + $0x220] sm:$0xf]
    %v7515 = vld [vmem:[%s7377 + $0x224] sm:$0xf]
    %v7516 = vld [vmem:[%s7377 + $0x228] sm:$0xf]
    %v7517 = vld [vmem:[%s7377 + $0x22c] sm:$0xf]
    %v7518 = vld [vmem:[%s7377 + $0x230] sm:$0xf]
    %v7519 = vld [vmem:[%s7377 + $0x234] sm:$0xf]
    %v7520 = vld [vmem:[%s7377 + $0x238] sm:$0xf]
    %v7521 = vld [vmem:[%s7377 + $0x23c] sm:$0xf]
    %v7522 = vld [vmem:[#allocation8 + $0x4] sm:$0x1]
    %v7523 = vlaneseq
    %v7524 = vshrl.u32 %v7523, 7
    %v7525 = vsub.s32 0, %v7524
    %v7526 = vrot.slane %v7522, %v7525
    %v7567 = vunpack.c.l.b16 %v7337
    %v7568 = vunpack.c.h.b16 %v7337
    %v7569 = vunpack.c.l.b16 %v7338
    %v7570 = vunpack.c.h.b16 %v7338
    %v7571 = vunpack.c.l.b16 %v7339
    %v7572 = vunpack.c.h.b16 %v7339
    %v7573 = vunpack.c.l.b16 %v7340
    %v7574 = vunpack.c.h.b16 %v7340
    %v7575 = vunpack.c.l.b16 %v7341
    %v7576 = vunpack.c.l.b16 %v7342
    %v7577 = vunpack.c.h.b16 %v7342
    %v7578 = vunpack.c.l.b16 %v7343
    %v7579 = vunpack.c.h.b16 %v7343
    %v7580 = vunpack.c.l.b16 %v7344
    %v7581 = vunpack.c.h.b16 %v7344
    %v7582 = vunpack.c.l.b16 %v7345
    %v7583 = vunpack.c.h.b16 %v7345
    %v7584 = vunpack.c.l.b16 %v7346
    %v7585 = vunpack.c.l.b16 %v7347
    %v7586 = vunpack.c.h.b16 %v7347
    %v7587 = vunpack.c.l.b16 %v7348
    %v7588 = vunpack.c.h.b16 %v7348
    %v7589 = vunpack.c.l.b16 %v7349
    %v7590 = vunpack.c.h.b16 %v7349
    %v7591 = vunpack.c.l.b16 %v7350
    %v7592 = vunpack.c.h.b16 %v7350
    %v7593 = vunpack.c.l.b16 %v7351
    %v7594 = vunpack.c.l.b16 %v7352
    %v7595 = vunpack.c.h.b16 %v7352
    %v7596 = vunpack.c.l.b16 %v7353
    %v7597 = vunpack.c.h.b16 %v7353
    %v7598 = vunpack.c.l.b16 %v7354
    %v7599 = vunpack.c.h.b16 %v7354
    %v7600 = vunpack.c.l.b16 %v7355
    %v7601 = vunpack.c.h.b16 %v7355
    %v7602 = vunpack.c.l.b16 %v7356
    %v7603 = vunpack.c.l.b16 %v7357
    %v7604 = vunpack.c.h.b16 %v7357
    %v7605 = vunpack.c.l.b16 %v7358
    %v7606 = vunpack.c.h.b16 %v7358
    %v7607 = vunpack.c.l.b16 %v7359
    %v7608 = vunpack.c.h.b16 %v7359
    %v7609 = vunpack.c.l.b16 %v7360
    %v7610 = vunpack.c.h.b16 %v7360
    %v7611 = vunpack.c.l.b16 %v7361
    %v7612 = vunpack.c.l.b16 %v7362
    %v7613 = vunpack.c.h.b16 %v7362
    %v7614 = vunpack.c.l.b16 %v7363
    %v7615 = vunpack.c.h.b16 %v7363
    %v7616 = vunpack.c.l.b16 %v7364
    %v7617 = vunpack.c.h.b16 %v7364
    %v7618 = vunpack.c.l.b16 %v7365
    %v7619 = vunpack.c.h.b16 %v7365
    %v7620 = vunpack.c.l.b16 %v7366
    %v7621 = vunpack.c.l.b16 %v7367
    %v7622 = vunpack.c.h.b16 %v7367
    %v7623 = vunpack.c.l.b16 %v7368
    %v7624 = vunpack.c.h.b16 %v7368
    %v7625 = vunpack.c.l.b16 %v7369
    %v7626 = vunpack.c.h.b16 %v7369
    %v7627 = vunpack.c.l.b16 %v7370
    %v7628 = vunpack.c.h.b16 %v7370
    %v7629 = vunpack.c.l.b16 %v7371
    %v7630 = vunpack.c.l.b16 %v7372
    %v7631 = vunpack.c.h.b16 %v7372
    %v7632 = vunpack.c.l.b16 %v7373
    %v7633 = vunpack.c.h.b16 %v7373
    %v7634 = vunpack.c.l.b16 %v7374
    %v7635 = vunpack.c.h.b16 %v7374
    %v7636 = vunpack.c.l.b16 %v7375
    %v7637 = vunpack.c.h.b16 %v7375
    %v7638 = vunpack.c.l.b16 %v7376
    %v7639 = vpack.c.b16 %v7576, %v7567
    %v7640 = vpack.c.b16 %v7577, %v7568
    %v7641 = vpack.c.b16 %v7578, %v7569
    %v7642 = vpack.c.b16 %v7579, %v7570
    %v7643 = vpack.c.b16 %v7580, %v7571
    %v7644 = vpack.c.b16 %v7581, %v7572
    %v7645 = vpack.c.b16 %v7582, %v7573
    %v7646 = vpack.c.b16 %v7583, %v7574
    %v7647 = vpack.c.b16 %v7584, %v7575
    %v7648 = vpack.c.b16 %v7594, %v7585
    %v7649 = vpack.c.b16 %v7595, %v7586
    %v7650 = vpack.c.b16 %v7596, %v7587
    %v7651 = vpack.c.b16 %v7597, %v7588
    %v7652 = vpack.c.b16 %v7598, %v7589
    %v7653 = vpack.c.b16 %v7599, %v7590
    %v7654 = vpack.c.b16 %v7600, %v7591
    %v7655 = vpack.c.b16 %v7601, %v7592
    %v7656 = vpack.c.b16 %v7602, %v7593
    %v7657 = vpack.c.b16 %v7612, %v7603
    %v7658 = vpack.c.b16 %v7613, %v7604
    %v7659 = vpack.c.b16 %v7614, %v7605
    %v7660 = vpack.c.b16 %v7615, %v7606
    %v7661 = vpack.c.b16 %v7616, %v7607
    %v7662 = vpack.c.b16 %v7617, %v7608
    %v7663 = vpack.c.b16 %v7618, %v7609
    %v7664 = vpack.c.b16 %v7619, %v7610
    %v7665 = vpack.c.b16 %v7620, %v7611
    %v7666 = vpack.c.b16 %v7630, %v7621
    %v7667 = vpack.c.b16 %v7631, %v7622
    %v7668 = vpack.c.b16 %v7632, %v7623
    %v7669 = vpack.c.b16 %v7633, %v7624
    %v7670 = vpack.c.b16 %v7634, %v7625
    %v7671 = vpack.c.b16 %v7635, %v7626
    %v7672 = vpack.c.b16 %v7636, %v7627
    %v7673 = vpack.c.b16 %v7637, %v7628
    %v7674 = vpack.c.b16 %v7638, %v7629
    %v7855 = vunpack.c.l.b16 %v7378
    %v7856 = vunpack.c.l.b16 %v7379
    %v7857 = vunpack.c.l.b16 %v7380
    %v7858 = vunpack.c.l.b16 %v7381
    %v7859 = vunpack.c.l.b16 %v7382
    %v7860 = vunpack.c.l.b16 %v7383
    %v7861 = vunpack.c.l.b16 %v7384
    %v7862 = vunpack.c.l.b16 %v7385
    %v7863 = vunpack.c.l.b16 %v7386
    %v7864 = vunpack.c.l.b16 %v7387
    %v7865 = vunpack.c.l.b16 %v7388
    %v7866 = vunpack.c.l.b16 %v7389
    %v7867 = vunpack.c.l.b16 %v7390
    %v7868 = vunpack.c.l.b16 %v7391
    %v7869 = vunpack.c.l.b16 %v7392
    %v7870 = vunpack.c.l.b16 %v7393
    %v7871 = vunpack.c.l.b16 %v7394
    %v7872 = vunpack.c.l.b16 %v7395
    %v7873 = vunpack.c.l.b16 %v7396
    %v7874 = vunpack.c.l.b16 %v7397
    %v7875 = vunpack.c.l.b16 %v7398
    %v7876 = vunpack.c.l.b16 %v7399
    %v7877 = vunpack.c.l.b16 %v7400
    %v7878 = vunpack.c.l.b16 %v7401
    %v7879 = vunpack.c.l.b16 %v7402
    %v7880 = vunpack.c.l.b16 %v7403
    %v7881 = vunpack.c.l.b16 %v7404
    %v7882 = vunpack.c.l.b16 %v7405
    %v7883 = vunpack.c.l.b16 %v7406
    %v7884 = vunpack.c.l.b16 %v7407
    %v7885 = vunpack.c.l.b16 %v7408
    %v7886 = vunpack.c.l.b16 %v7409
    %v7887 = vunpack.c.l.b16 %v7410
    %v7888 = vunpack.c.l.b16 %v7411
    %v7889 = vunpack.c.l.b16 %v7412
    %v7890 = vunpack.c.l.b16 %v7413
    %v7891 = vunpack.c.l.b16 %v7414
    %v7892 = vunpack.c.l.b16 %v7415
    %v7893 = vunpack.c.l.b16 %v7416
    %v7894 = vunpack.c.l.b16 %v7417
    %v7895 = vunpack.c.l.b16 %v7418
    %v7896 = vunpack.c.l.b16 %v7419
    %v7897 = vunpack.c.l.b16 %v7420
    %v7898 = vunpack.c.l.b16 %v7421
    %v7899 = vunpack.c.l.b16 %v7422
    %v7900 = vunpack.c.l.b16 %v7423
    %v7901 = vunpack.c.l.b16 %v7424
    %v7902 = vunpack.c.l.b16 %v7425
    %v7903 = vunpack.c.l.b16 %v7426
    %v7904 = vunpack.c.l.b16 %v7427
    %v7905 = vunpack.c.l.b16 %v7428
    %v7906 = vunpack.c.l.b16 %v7429
    %v7907 = vunpack.c.l.b16 %v7430
    %v7908 = vunpack.c.l.b16 %v7431
    %v7909 = vunpack.c.l.b16 %v7432
    %v7910 = vunpack.c.l.b16 %v7433
    %v7911 = vunpack.c.l.b16 %v7434
    %v7912 = vunpack.c.l.b16 %v7435
    %v7913 = vunpack.c.l.b16 %v7436
    %v7914 = vunpack.c.l.b16 %v7437
    %v7915 = vunpack.c.l.b16 %v7438
    %v7916 = vunpack.c.l.b16 %v7439
    %v7917 = vunpack.c.l.b16 %v7440
    %v7918 = vunpack.c.l.b16 %v7441
    %v7919 = vunpack.c.l.b16 %v7442
    %v7920 = vunpack.c.l.b16 %v7443
    %v7921 = vunpack.c.l.b16 %v7444
    %v7922 = vunpack.c.l.b16 %v7445
    %v7923 = vunpack.c.l.b16 %v7446
    %v7924 = vunpack.c.l.b16 %v7447
    %v7925 = vunpack.c.l.b16 %v7448
    %v7926 = vunpack.c.l.b16 %v7449
    %v7927 = vunpack.c.l.b16 %v7450
    %v7928 = vunpack.c.l.b16 %v7451
    %v7929 = vunpack.c.l.b16 %v7452
    %v7930 = vunpack.c.l.b16 %v7453
    %v7931 = vunpack.c.l.b16 %v7454
    %v7932 = vunpack.c.l.b16 %v7455
    %v7933 = vunpack.c.l.b16 %v7456
    %v7934 = vunpack.c.l.b16 %v7457
    %v7935 = vunpack.c.l.b16 %v7458
    %v7936 = vunpack.c.l.b16 %v7459
    %v7937 = vunpack.c.l.b16 %v7460
    %v7938 = vunpack.c.l.b16 %v7461
    %v7939 = vunpack.c.l.b16 %v7462
    %v7940 = vunpack.c.l.b16 %v7463
    %v7941 = vunpack.c.l.b16 %v7464
    %v7942 = vunpack.c.l.b16 %v7465
    %v7943 = vunpack.c.l.b16 %v7466
    %v7944 = vunpack.c.l.b16 %v7467
    %v7945 = vunpack.c.l.b16 %v7468
    %v7946 = vunpack.c.l.b16 %v7469
    %v7947 = vunpack.c.l.b16 %v7470
    %v7948 = vunpack.c.l.b16 %v7471
    %v7949 = vunpack.c.l.b16 %v7472
    %v7950 = vunpack.c.l.b16 %v7473
    %v7951 = vunpack.c.l.b16 %v7474
    %v7952 = vunpack.c.l.b16 %v7475
    %v7953 = vunpack.c.l.b16 %v7476
    %v7954 = vunpack.c.l.b16 %v7477
    %v7955 = vunpack.c.l.b16 %v7478
    %v7956 = vunpack.c.l.b16 %v7479
    %v7957 = vunpack.c.l.b16 %v7480
    %v7958 = vunpack.c.l.b16 %v7481
    %v7959 = vunpack.c.l.b16 %v7482
    %v7960 = vunpack.c.l.b16 %v7483
    %v7961 = vunpack.c.l.b16 %v7484
    %v7962 = vunpack.c.l.b16 %v7485
    %v7963 = vunpack.c.l.b16 %v7486
    %v7964 = vunpack.c.l.b16 %v7487
    %v7965 = vunpack.c.l.b16 %v7488
    %v7966 = vunpack.c.l.b16 %v7489
    %v7967 = vunpack.c.l.b16 %v7490
    %v7968 = vunpack.c.l.b16 %v7491
    %v7969 = vunpack.c.l.b16 %v7492
    %v7970 = vunpack.c.l.b16 %v7493
    %v7971 = vunpack.c.l.b16 %v7494
    %v7972 = vunpack.c.l.b16 %v7495
    %v7973 = vunpack.c.l.b16 %v7496
    %v7974 = vunpack.c.l.b16 %v7497
    %v7975 = vunpack.c.l.b16 %v7498
    %v7976 = vunpack.c.l.b16 %v7499
    %v7977 = vunpack.c.l.b16 %v7500
    %v7978 = vunpack.c.l.b16 %v7501
    %v7979 = vunpack.c.l.b16 %v7502
    %v7980 = vunpack.c.l.b16 %v7503
    %v7981 = vunpack.c.l.b16 %v7504
    %v7982 = vunpack.c.l.b16 %v7505
    %v7983 = vunpack.c.l.b16 %v7506
    %v7984 = vunpack.c.l.b16 %v7507
    %v7985 = vunpack.c.l.b16 %v7508
    %v7986 = vunpack.c.l.b16 %v7509
    %v7987 = vunpack.c.l.b16 %v7510
    %v7988 = vunpack.c.l.b16 %v7511
    %v7989 = vunpack.c.l.b16 %v7512
    %v7990 = vunpack.c.l.b16 %v7513
    %v7991 = vunpack.c.l.b16 %v7514
    %v7992 = vunpack.c.l.b16 %v7515
    %v7993 = vunpack.c.l.b16 %v7516
    %v7994 = vunpack.c.l.b16 %v7517
    %v7995 = vunpack.c.l.b16 %v7518
    %v7996 = vunpack.c.l.b16 %v7519
    %v7997 = vunpack.c.l.b16 %v7520
    %v7998 = vunpack.c.l.b16 %v7521
    %v7999 = vpack.c.b16 %v7856, %v7855
    %v8000 = vpack.c.b16 %v7858, %v7857
    %v8001 = vpack.c.b16 %v7860, %v7859
    %v8002 = vpack.c.b16 %v7862, %v7861
    %v8003 = vpack.c.b16 %v7864, %v7863
    %v8004 = vpack.c.b16 %v7866, %v7865
    %v8005 = vpack.c.b16 %v7868, %v7867
    %v8006 = vpack.c.b16 %v7870, %v7869
    %v8007 = vpack.c.b16 %v7872, %v7871
    %v8008 = vpack.c.b16 %v7874, %v7873
    %v8009 = vpack.c.b16 %v7876, %v7875
    %v8010 = vpack.c.b16 %v7878, %v7877
    %v8011 = vpack.c.b16 %v7880, %v7879
    %v8012 = vpack.c.b16 %v7882, %v7881
    %v8013 = vpack.c.b16 %v7884, %v7883
    %v8014 = vpack.c.b16 %v7886, %v7885
    %v8015 = vpack.c.b16 %v7888, %v7887
    %v8016 = vpack.c.b16 %v7890, %v7889
    %v8017 = vpack.c.b16 %v7892, %v7891
    %v8018 = vpack.c.b16 %v7894, %v7893
    %v8019 = vpack.c.b16 %v7896, %v7895
    %v8020 = vpack.c.b16 %v7898, %v7897
    %v8021 = vpack.c.b16 %v7900, %v7899
    %v8022 = vpack.c.b16 %v7902, %v7901
    %v8023 = vpack.c.b16 %v7904, %v7903
    %v8024 = vpack.c.b16 %v7906, %v7905
    %v8025 = vpack.c.b16 %v7908, %v7907
    %v8026 = vpack.c.b16 %v7910, %v7909
    %v8027 = vpack.c.b16 %v7912, %v7911
    %v8028 = vpack.c.b16 %v7914, %v7913
    %v8029 = vpack.c.b16 %v7916, %v7915
    %v8030 = vpack.c.b16 %v7918, %v7917
    %v8031 = vpack.c.b16 %v7920, %v7919
    %v8032 = vpack.c.b16 %v7922, %v7921
    %v8033 = vpack.c.b16 %v7924, %v7923
    %v8034 = vpack.c.b16 %v7926, %v7925
    %v8035 = vpack.c.b16 %v7928, %v7927
    %v8036 = vpack.c.b16 %v7930, %v7929
    %v8037 = vpack.c.b16 %v7932, %v7931
    %v8038 = vpack.c.b16 %v7934, %v7933
    %v8039 = vpack.c.b16 %v7936, %v7935
    %v8040 = vpack.c.b16 %v7938, %v7937
    %v8041 = vpack.c.b16 %v7940, %v7939
    %v8042 = vpack.c.b16 %v7942, %v7941
    %v8043 = vpack.c.b16 %v7944, %v7943
    %v8044 = vpack.c.b16 %v7946, %v7945
    %v8045 = vpack.c.b16 %v7948, %v7947
    %v8046 = vpack.c.b16 %v7950, %v7949
    %v8047 = vpack.c.b16 %v7952, %v7951
    %v8048 = vpack.c.b16 %v7954, %v7953
    %v8049 = vpack.c.b16 %v7956, %v7955
    %v8050 = vpack.c.b16 %v7958, %v7957
    %v8051 = vpack.c.b16 %v7960, %v7959
    %v8052 = vpack.c.b16 %v7962, %v7961
    %v8053 = vpack.c.b16 %v7964, %v7963
    %v8054 = vpack.c.b16 %v7966, %v7965
    %v8055 = vpack.c.b16 %v7968, %v7967
    %v8056 = vpack.c.b16 %v7970, %v7969
    %v8057 = vpack.c.b16 %v7972, %v7971
    %v8058 = vpack.c.b16 %v7974, %v7973
    %v8059 = vpack.c.b16 %v7976, %v7975
    %v8060 = vpack.c.b16 %v7978, %v7977
    %v8061 = vpack.c.b16 %v7980, %v7979
    %v8062 = vpack.c.b16 %v7982, %v7981
    %v8063 = vpack.c.b16 %v7984, %v7983
    %v8064 = vpack.c.b16 %v7986, %v7985
    %v8065 = vpack.c.b16 %v7988, %v7987
    %v8066 = vpack.c.b16 %v7990, %v7989
    %v8067 = vpack.c.b16 %v7992, %v7991
    %v8068 = vpack.c.b16 %v7994, %v7993
    %v8069 = vpack.c.b16 %v7996, %v7995
    %v8070 = vpack.c.b16 %v7998, %v7997
    %8143 = vmatprep.subr.bf16.mxu0 0
    %8144 = vmatpush1.bf16.msra.mxu0 %v8006
    %8145 = vmatprep.subr.bf16.mxu0 0
    %8146 = vmatpush1.bf16.msra.mxu0 %v8005
    %8147 = vmatprep.subr.bf16.mxu0 0
    %8148 = vmatpush1.bf16.msra.mxu0 %v8004
    %8149 = vmatprep.subr.bf16.mxu0 0
    %8150 = vmatpush1.bf16.msra.mxu0 %v8003
    %8151 = vmatprep.subr.bf16.mxu0 0
    %8152 = vmatpush1.bf16.msra.mxu0 %v8002
    %8153 = vmatprep.subr.bf16.mxu0 0
    %8154 = vmatpush1.bf16.msra.mxu0 %v8001
    %8155 = vmatprep.subr.bf16.mxu0 0
    %8156 = vmatpush1.bf16.msra.mxu0 %v8000
    %8157 = vmatprep.subr.bf16.mxu0 0
    %8158 = vmatpush1.bf16.msra.mxu0 %v7999
    %8159 = vmatprep.subr.bf16.mxu0 0
    %8160 = vmatpush2.bf16.msra.mxu0 %v8014
    %8161 = vmatprep.subr.bf16.mxu0 0
    %8162 = vmatpush2.bf16.msra.mxu0 %v8013
    %8163 = vmatprep.subr.bf16.mxu0 0
    %8164 = vmatpush2.bf16.msra.mxu0 %v8012
    %8165 = vmatprep.subr.bf16.mxu0 0
    %8166 = vmatpush2.bf16.msra.mxu0 %v8011
    %8167 = vmatprep.subr.bf16.mxu0 0
    %8168 = vmatpush2.bf16.msra.mxu0 %v8010
    %8169 = vmatprep.subr.bf16.mxu0 0
    %8170 = vmatpush2.bf16.msra.mxu0 %v8009
    %8171 = vmatprep.subr.bf16.mxu0 0
    %8172 = vmatpush2.bf16.msra.mxu0 %v8008
    %8173 = vmatprep.subr.bf16.mxu0 0
    %8174 = vmatpush2.bf16.msra.mxu0 %v8007
    %8175 = vmatprep.mubr.bf16.mxu0 %v7640
    %8176 = vmatmul.mubr.bf16.gmra.mxu0 %v7639
    %v8177 = vpop.f32.mrf.mxu0
    %v8178 = vadd.f32 %v7526, %v8177
    %v8179 = vpop.f32.mrf.mxu0
    %v8180 = vpop.f32.mrf.mxu0
    %v8181 = vadd.f32 %v7526, %v8180
    %v8182 = vpop.f32.mrf.mxu0
    %8183 = vmatprep.mubr.bf16.mxu0 %v7649
    %8184 = vmatmul.mubr.bf16.gmra.mxu0 %v7648
    %v8185 = vpop.f32.mrf.mxu0
    %v8186 = vadd.f32 %v7526, %v8185
    %v8187 = vpop.f32.mrf.mxu0
    %v8188 = vpop.f32.mrf.mxu0
    %v8189 = vadd.f32 %v7526, %v8188
    %v8190 = vpop.f32.mrf.mxu0
    %8191 = vmatprep.mubr.bf16.mxu0 %v7658
    %8192 = vmatmul.mubr.bf16.gmra.mxu0 %v7657
    %v8193 = vpop.f32.mrf.mxu0
    %v8194 = vadd.f32 %v7526, %v8193
    %v8195 = vpop.f32.mrf.mxu0
    %v8196 = vpop.f32.mrf.mxu0
    %v8197 = vadd.f32 %v7526, %v8196
    %v8198 = vpop.f32.mrf.mxu0
    %8199 = vmatprep.mubr.bf16.mxu0 %v7667
    %8200 = vmatmul.mubr.bf16.gmra.mxu0 %v7666
    %v8201 = vpop.f32.mrf.mxu0
    %v8202 = vadd.f32 %v7526, %v8201
    %v8203 = vpop.f32.mrf.mxu0
    %v8204 = vpop.f32.mrf.mxu0
    %v8205 = vadd.f32 %v7526, %v8204
    %v8206 = vpop.f32.mrf.mxu0
    %8207 = vdwg.mxu0
    %8208 = vmatprep.subr.bf16.mxu0 0
    %8209 = vmatpush1.bf16.msra.mxu0 %v8022
    %8210 = vmatprep.subr.bf16.mxu0 0
    %8211 = vmatpush1.bf16.msra.mxu0 %v8021
    %8212 = vmatprep.subr.bf16.mxu0 0
    %8213 = vmatpush1.bf16.msra.mxu0 %v8020
    %8214 = vmatprep.subr.bf16.mxu0 0
    %8215 = vmatpush1.bf16.msra.mxu0 %v8019
    %8216 = vmatprep.subr.bf16.mxu0 0
    %8217 = vmatpush1.bf16.msra.mxu0 %v8018
    %8218 = vmatprep.subr.bf16.mxu0 0
    %8219 = vmatpush1.bf16.msra.mxu0 %v8017
    %8220 = vmatprep.subr.bf16.mxu0 0
    %8221 = vmatpush1.bf16.msra.mxu0 %v8016
    %8222 = vmatprep.subr.bf16.mxu0 0
    %8223 = vmatpush1.bf16.msra.mxu0 %v8015
    %8224 = vmatprep.subr.bf16.mxu0 0
    %8225 = vmatpush2.bf16.msra.mxu0 %v8030
    %8226 = vmatprep.subr.bf16.mxu0 0
    %8227 = vmatpush2.bf16.msra.mxu0 %v8029
    %8228 = vmatprep.subr.bf16.mxu0 0
    %8229 = vmatpush2.bf16.msra.mxu0 %v8028
    %8230 = vmatprep.subr.bf16.mxu0 0
    %8231 = vmatpush2.bf16.msra.mxu0 %v8027
    %8232 = vmatprep.subr.bf16.mxu0 0
    %8233 = vmatpush2.bf16.msra.mxu0 %v8026
    %8234 = vmatprep.subr.bf16.mxu0 0
    %8235 = vmatpush2.bf16.msra.mxu0 %v8025
    %8236 = vmatprep.subr.bf16.mxu0 0
    %8237 = vmatpush2.bf16.msra.mxu0 %v8024
    %8238 = vmatprep.subr.bf16.mxu0 0
    %8239 = vmatpush2.bf16.msra.mxu0 %v8023
    %8240 = vmatprep.mubr.bf16.mxu0 %v7642
    %8241 = vmatmul.mubr.bf16.gmra.mxu0 %v7641
    %v8242 = vpop.f32.mrf.mxu0
    %v8243 = vadd.f32 %v8178, %v8242
    %v8244 = vpop.f32.mrf.mxu0
    %v8245 = vpop.f32.mrf.mxu0
    %v8246 = vadd.f32 %v8181, %v8245
    %v8247 = vpop.f32.mrf.mxu0
    %8248 = vmatprep.mubr.bf16.mxu0 %v7651
    %8249 = vmatmul.mubr.bf16.gmra.mxu0 %v7650
    %v8250 = vpop.f32.mrf.mxu0
    %v8251 = vadd.f32 %v8186, %v8250
    %v8252 = vpop.f32.mrf.mxu0
    %v8253 = vpop.f32.mrf.mxu0
    %v8254 = vadd.f32 %v8189, %v8253
    %v8255 = vpop.f32.mrf.mxu0
    %8256 = vmatprep.mubr.bf16.mxu0 %v7660
    %8257 = vmatmul.mubr.bf16.gmra.mxu0 %v7659
    %v8258 = vpop.f32.mrf.mxu0
    %v8259 = vadd.f32 %v8194, %v8258
    %v8260 = vpop.f32.mrf.mxu0
    %v8261 = vpop.f32.mrf.mxu0
    %v8262 = vadd.f32 %v8197, %v8261
    %v8263 = vpop.f32.mrf.mxu0
    %8264 = vmatprep.mubr.bf16.mxu0 %v7669
    %8265 = vmatmul.mubr.bf16.gmra.mxu0 %v7668
    %v8266 = vpop.f32.mrf.mxu0
    %v8267 = vadd.f32 %v8202, %v8266
    %v8268 = vpop.f32.mrf.mxu0
    %v8269 = vpop.f32.mrf.mxu0
    %v8270 = vadd.f32 %v8205, %v8269
    %v8271 = vpop.f32.mrf.mxu0
    %8272 = vdwg.mxu0
    %8273 = vmatprep.subr.bf16.mxu0 0
    %8274 = vmatpush1.bf16.msra.mxu0 %v8038
    %8275 = vmatprep.subr.bf16.mxu0 0
    %8276 = vmatpush1.bf16.msra.mxu0 %v8037
    %8277 = vmatprep.subr.bf16.mxu0 0
    %8278 = vmatpush1.bf16.msra.mxu0 %v8036
    %8279 = vmatprep.subr.bf16.mxu0 0
    %8280 = vmatpush1.bf16.msra.mxu0 %v8035
    %8281 = vmatprep.subr.bf16.mxu0 0
    %8282 = vmatpush1.bf16.msra.mxu0 %v8034
    %8283 = vmatprep.subr.bf16.mxu0 0
    %8284 = vmatpush1.bf16.msra.mxu0 %v8033
    %8285 = vmatprep.subr.bf16.mxu0 0
    %8286 = vmatpush1.bf16.msra.mxu0 %v8032
    %8287 = vmatprep.subr.bf16.mxu0 0
    %8288 = vmatpush1.bf16.msra.mxu0 %v8031
    %8289 = vmatprep.subr.bf16.mxu0 0
    %8290 = vmatpush2.bf16.msra.mxu0 %v8046
    %8291 = vmatprep.subr.bf16.mxu0 0
    %8292 = vmatpush2.bf16.msra.mxu0 %v8045
    %8293 = vmatprep.subr.bf16.mxu0 0
    %8294 = vmatpush2.bf16.msra.mxu0 %v8044
    %8295 = vmatprep.subr.bf16.mxu0 0
    %8296 = vmatpush2.bf16.msra.mxu0 %v8043
    %8297 = vmatprep.subr.bf16.mxu0 0
    %8298 = vmatpush2.bf16.msra.mxu0 %v8042
    %8299 = vmatprep.subr.bf16.mxu0 0
    %8300 = vmatpush2.bf16.msra.mxu0 %v8041
    %8301 = vmatprep.subr.bf16.mxu0 0
    %8302 = vmatpush2.bf16.msra.mxu0 %v8040
    %8303 = vmatprep.subr.bf16.mxu0 0
    %8304 = vmatpush2.bf16.msra.mxu0 %v8039
    %8305 = vmatprep.mubr.bf16.mxu0 %v7644
    %8306 = vmatmul.mubr.bf16.gmra.mxu0 %v7643
    %v8307 = vpop.f32.mrf.mxu0
    %v8308 = vadd.f32 %v8243, %v8307
    %v8309 = vpop.f32.mrf.mxu0
    %v8310 = vpop.f32.mrf.mxu0
    %v8311 = vadd.f32 %v8246, %v8310
    %v8312 = vpop.f32.mrf.mxu0
    %8313 = vmatprep.mubr.bf16.mxu0 %v7653
    %8314 = vmatmul.mubr.bf16.gmra.mxu0 %v7652
    %v8315 = vpop.f32.mrf.mxu0
    %v8316 = vadd.f32 %v8251, %v8315
    %v8317 = vpop.f32.mrf.mxu0
    %v8318 = vpop.f32.mrf.mxu0
    %v8319 = vadd.f32 %v8254, %v8318
    %v8320 = vpop.f32.mrf.mxu0
    %8321 = vmatprep.mubr.bf16.mxu0 %v7662
    %8322 = vmatmul.mubr.bf16.gmra.mxu0 %v7661
    %v8323 = vpop.f32.mrf.mxu0
    %v8324 = vadd.f32 %v8259, %v8323
    %v8325 = vpop.f32.mrf.mxu0
    %v8326 = vpop.f32.mrf.mxu0
    %v8327 = vadd.f32 %v8262, %v8326
    %v8328 = vpop.f32.mrf.mxu0
    %8329 = vmatprep.mubr.bf16.mxu0 %v7671
    %8330 = vmatmul.mubr.bf16.gmra.mxu0 %v7670
    %v8331 = vpop.f32.mrf.mxu0
    %v8332 = vadd.f32 %v8267, %v8331
    %v8333 = vpop.f32.mrf.mxu0
    %v8334 = vpop.f32.mrf.mxu0
    %v8335 = vadd.f32 %v8270, %v8334
    %v8336 = vpop.f32.mrf.mxu0
    %8337 = vdwg.mxu0
    %8338 = vmatprep.subr.bf16.mxu0 0
    %8339 = vmatpush1.bf16.msra.mxu0 %v8054
    %8340 = vmatprep.subr.bf16.mxu0 0
    %8341 = vmatpush1.bf16.msra.mxu0 %v8053
    %8342 = vmatprep.subr.bf16.mxu0 0
    %8343 = vmatpush1.bf16.msra.mxu0 %v8052
    %8344 = vmatprep.subr.bf16.mxu0 0
    %8345 = vmatpush1.bf16.msra.mxu0 %v8051
    %8346 = vmatprep.subr.bf16.mxu0 0
    %8347 = vmatpush1.bf16.msra.mxu0 %v8050
    %8348 = vmatprep.subr.bf16.mxu0 0
    %8349 = vmatpush1.bf16.msra.mxu0 %v8049
    %8350 = vmatprep.subr.bf16.mxu0 0
    %8351 = vmatpush1.bf16.msra.mxu0 %v8048
    %8352 = vmatprep.subr.bf16.mxu0 0
    %8353 = vmatpush1.bf16.msra.mxu0 %v8047
    %8354 = vmatprep.subr.bf16.mxu0 0
    %8355 = vmatpush2.bf16.msra.mxu0 %v8062
    %8356 = vmatprep.subr.bf16.mxu0 0
    %8357 = vmatpush2.bf16.msra.mxu0 %v8061
    %8358 = vmatprep.subr.bf16.mxu0 0
    %8359 = vmatpush2.bf16.msra.mxu0 %v8060
    %8360 = vmatprep.subr.bf16.mxu0 0
    %8361 = vmatpush2.bf16.msra.mxu0 %v8059
    %8362 = vmatprep.subr.bf16.mxu0 0
    %8363 = vmatpush2.bf16.msra.mxu0 %v8058
    %8364 = vmatprep.subr.bf16.mxu0 0
    %8365 = vmatpush2.bf16.msra.mxu0 %v8057
    %8366 = vmatprep.subr.bf16.mxu0 0
    %8367 = vmatpush2.bf16.msra.mxu0 %v8056
    %8368 = vmatprep.subr.bf16.mxu0 0
    %8369 = vmatpush2.bf16.msra.mxu0 %v8055
    %8370 = vmatprep.mubr.bf16.mxu0 %v7646
    %8371 = vmatmul.mubr.bf16.gmra.mxu0 %v7645
    %v8372 = vpop.f32.mrf.mxu0
    %v8373 = vadd.f32 %v8308, %v8372
    %v8374 = vpop.f32.mrf.mxu0
    %v8375 = vpop.f32.mrf.mxu0
    %v8376 = vadd.f32 %v8311, %v8375
    %v8377 = vpop.f32.mrf.mxu0
    %8378 = vmatprep.mubr.bf16.mxu0 %v7655
    %8379 = vmatmul.mubr.bf16.gmra.mxu0 %v7654
    %v8380 = vpop.f32.mrf.mxu0
    %v8381 = vadd.f32 %v8316, %v8380
    %v8382 = vpop.f32.mrf.mxu0
    %v8383 = vpop.f32.mrf.mxu0
    %v8384 = vadd.f32 %v8319, %v8383
    %v8385 = vpop.f32.mrf.mxu0
    %8386 = vmatprep.mubr.bf16.mxu0 %v7664
    %8387 = vmatmul.mubr.bf16.gmra.mxu0 %v7663
    %v8388 = vpop.f32.mrf.mxu0
    %v8389 = vadd.f32 %v8324, %v8388
    %v8390 = vpop.f32.mrf.mxu0
    %v8391 = vpop.f32.mrf.mxu0
    %v8392 = vadd.f32 %v8327, %v8391
    %v8393 = vpop.f32.mrf.mxu0
    %8394 = vmatprep.mubr.bf16.mxu0 %v7673
    %8395 = vmatmul.mubr.bf16.gmra.mxu0 %v7672
    %v8396 = vpop.f32.mrf.mxu0
    %v8397 = vadd.f32 %v8332, %v8396
    %v8398 = vpop.f32.mrf.mxu0
    %v8399 = vpop.f32.mrf.mxu0
    %v8400 = vadd.f32 %v8335, %v8399
    %v8401 = vpop.f32.mrf.mxu0
    %8402 = vdwg.mxu0
    %8403 = vmatprep.subr.bf16.mxu0 0
    %8404 = vmatpush1.bf16.msra.mxu0 %v8070
    %8405 = vmatprep.subr.bf16.mxu0 0
    %8406 = vmatpush1.bf16.msra.mxu0 %v8069
    %8407 = vmatprep.subr.bf16.mxu0 0
    %8408 = vmatpush1.bf16.msra.mxu0 %v8068
    %8409 = vmatprep.subr.bf16.mxu0 0
    %8410 = vmatpush1.bf16.msra.mxu0 %v8067
    %8411 = vmatprep.subr.bf16.mxu0 0
    %8412 = vmatpush1.bf16.msra.mxu0 %v8066
    %8413 = vmatprep.subr.bf16.mxu0 0
    %8414 = vmatpush1.bf16.msra.mxu0 %v8065
    %8415 = vmatprep.subr.bf16.mxu0 0
    %8416 = vmatpush1.bf16.msra.mxu0 %v8064
    %8417 = vmatprep.subr.bf16.mxu0 0
    %8418 = vmatpush1.bf16.msra.mxu0 %v8063
    %8419 = vmatprep.subr.bf16.mxu0 0
    %8420 = vmatpush2.bf16.msra.mxu0 0
    %8421 = vmatprep.subr.bf16.mxu0 0
    %8422 = vmatpush2.bf16.msra.mxu0 0
    %8423 = vmatprep.subr.bf16.mxu0 0
    %8424 = vmatpush2.bf16.msra.mxu0 0
    %8425 = vmatprep.subr.bf16.mxu0 0
    %8426 = vmatpush2.bf16.msra.mxu0 0
    %8427 = vmatprep.subr.bf16.mxu0 0
    %8428 = vmatpush2.bf16.msra.mxu0 0
    %8429 = vmatprep.subr.bf16.mxu0 0
    %8430 = vmatpush2.bf16.msra.mxu0 0
    %8431 = vmatprep.subr.bf16.mxu0 0
    %8432 = vmatpush2.bf16.msra.mxu0 0
    %8433 = vmatprep.subr.bf16.mxu0 0
    %8434 = vmatpush2.bf16.msra.mxu0 0
    %8435 = vmatprep.mubr.bf16.mxu0 0
    %8436 = vmatmul.mubr.bf16.gmra.mxu0 %v7647
    %v8437 = vpop.f32.mrf.mxu0
    %v8438 = vadd.f32 %v8373, %v8437
    %v8439 = vpop.f32.mrf.mxu0
    %v8440 = vpop.f32.mrf.mxu0
    %v8441 = vadd.f32 %v8376, %v8440
    %v8442 = vpop.f32.mrf.mxu0
    %8443 = vmatprep.mubr.bf16.mxu0 0
    %8444 = vmatmul.mubr.bf16.gmra.mxu0 %v7656
    %v8445 = vpop.f32.mrf.mxu0
    %v8446 = vadd.f32 %v8381, %v8445
    %v8447 = vpop.f32.mrf.mxu0
    %v8448 = vpop.f32.mrf.mxu0
    %v8449 = vadd.f32 %v8384, %v8448
    %v8450 = vpop.f32.mrf.mxu0
    %8451 = vmatprep.mubr.bf16.mxu0 0
    %8452 = vmatmul.mubr.bf16.gmra.mxu0 %v7665
    %v8453 = vpop.f32.mrf.mxu0
    %v8454 = vadd.f32 %v8389, %v8453
    %v8455 = vpop.f32.mrf.mxu0
    %v8456 = vpop.f32.mrf.mxu0
    %v8457 = vadd.f32 %v8392, %v8456
    %v8458 = vpop.f32.mrf.mxu0
    %8459 = vmatprep.mubr.bf16.mxu0 0
    %8460 = vmatmul.mubr.bf16.gmra.mxu0 %v7674
    %v8461 = vpop.f32.mrf.mxu0
    %v8462 = vadd.f32 %v8397, %v8461
    %v8463 = vpop.f32.mrf.mxu0
    %v8464 = vpop.f32.mrf.mxu0
    %v8465 = vadd.f32 %v8400, %v8464
    %v8466 = vpop.f32.mrf.mxu0
    %8467 = vdwg.mxu0
    %v8468 = vadd.f32 %v8438, %v5166
    %v8469 = vadd.f32 %v8441, %v5167
    %v8470 = vadd.f32 %v8446, %v5168
    %v8471 = vadd.f32 %v8449, %v5169
    %v8472 = vadd.f32 %v8454, %v5170
    %v8473 = vadd.f32 %v8457, %v5171
    %v8474 = vadd.f32 %v8462, %v5172
    %v8475 = vadd.f32 %v8465, %v5173
    %8476 = vst [vmem:[%s206] sm:$0xff] %v8468
    %8477 = vst [vmem:[%s206 + $0x8] sm:$0xff] %v8469
    %8478 = vst [vmem:[%s206 + $0x10] sm:$0xff] %v8470
    %8479 = vst [vmem:[%s206 + $0x18] sm:$0xff] %v8471
    %8480 = vst [vmem:[%s206 + $0x30] sm:$0xff] %v8472
    %8481 = vst [vmem:[%s206 + $0x38] sm:$0xff] %v8473
    %8482 = vst [vmem:[%s206 + $0x40] sm:$0xff] %v8474
    %8483 = vst [vmem:[%s206 + $0x48] sm:$0xff] %v8475
    %v8484 = vrot.slane %v8468, 7
    %v8485 = vrot.slane %v8469, 7
    %v8486 = vrot.slane %v8470, 7
    %v8487 = vrot.slane %v8471, 7
    %v8488 = vrot.slane %v8472, 7
    %v8489 = vrot.slane %v8473, 7
    %v8490 = vrot.slane %v8474, 7
    %v8491 = vrot.slane %v8475, 7
    %v8492 = vsel %vm223, %v8490, %v8491
    %v8493 = vsel %vm223, %v8489, %v8490
    %v8494 = vsel %vm223, %v8488, %v8489
    %v8495 = vsel %vm223, %v8487, %v8488
    %v8496 = vsel %vm223, %v8486, %v8487
    %v8497 = vsel %vm223, %v8485, %v8486
    %v8498 = vsel %vm223, %v8484, %v8485
    %v8499 = vsel %vm223, %v8491, %v8484
    %v8500 = vsel %vm182, 0.0, %v8499
    %v8501 = vsel %vm183, 0.0, %v8498
    %v8502 = vsel %vm184, 0.0, %v8497
    %v8503 = vsel %vm185, 0.0, %v8496
    %v8504 = vsel %vm186, 0.0, %v8495
    %v8505 = vsel %vm187, 0.0, %v8494
    %v8506 = vsel %vm188, 0.0, %v8493
    %v8507 = vsel %vm189, 0.0, %v8492
    %8508 = vst [vmem:[%s240] sm:$0xff] %v8500
    %8509 = vst [vmem:[%s240 + $0x8] sm:$0xff] %v8501
    %8510 = vst [vmem:[%s240 + $0x10] sm:$0xff] %v8502
    %8511 = vst [vmem:[%s240 + $0x18] sm:$0xff] %v8503
    %8512 = vst [vmem:[%s240 + $0x30] sm:$0xff] %v8504
    %8513 = vst [vmem:[%s240 + $0x38] sm:$0xff] %v8505
    %8514 = vst [vmem:[%s240 + $0x40] sm:$0xff] %v8506
    %8515 = vst [vmem:[%s240 + $0x48] sm:$0xff] %v8507
    %v8516 = vrot.slane %v8468, 1
    %v8517 = vrot.slane %v8469, 1
    %v8518 = vrot.slane %v8470, 1
    %v8519 = vrot.slane %v8471, 1
    %v8520 = vrot.slane %v8472, 1
    %v8521 = vrot.slane %v8473, 1
    %v8522 = vrot.slane %v8474, 1
    %v8523 = vrot.slane %v8475, 1
    %v8524 = vsel %vm257, %v8522, %v8523
    %v8525 = vsel %vm257, %v8521, %v8522
    %v8526 = vsel %vm257, %v8520, %v8521
    %v8527 = vsel %vm257, %v8519, %v8520
    %v8528 = vsel %vm257, %v8518, %v8519
    %v8529 = vsel %vm257, %v8517, %v8518
    %v8530 = vsel %vm257, %v8516, %v8517
    %v8531 = vsel %vm257, %v8523, %v8516
    %v8532 = vsel %vm190, 0.0, %v8530
    %v8533 = vsel %vm191, 0.0, %v8529
    %v8534 = vsel %vm192, 0.0, %v8528
    %v8535 = vsel %vm193, 0.0, %v8527
    %v8536 = vsel %vm194, 0.0, %v8526
    %v8537 = vsel %vm195, 0.0, %v8525
    %v8538 = vsel %vm196, 0.0, %v8524
    %v8539 = vsel %vm197, 0.0, %v8531
    %8540 = vst [vmem:[%s274] sm:$0xff] %v8532
    %8541 = vst [vmem:[%s274 + $0x8] sm:$0xff] %v8533
    %8542 = vst [vmem:[%s274 + $0x10] sm:$0xff] %v8534
    %8543 = vst [vmem:[%s274 + $0x18] sm:$0xff] %v8535
    %8544 = vst [vmem:[%s274 + $0x30] sm:$0xff] %v8536
    %8545 = vst [vmem:[%s274 + $0x38] sm:$0xff] %v8537
    %8546 = vst [vmem:[%s274 + $0x40] sm:$0xff] %v8538
    %8547 = vst [vmem:[%s274 + $0x48] sm:$0xff] %v8539
    %v8548 = vld [vmem:[#allocation2] sm:$0xff]
    %v8549 = vld [vmem:[#allocation2 + $0x8] sm:$0xff]
    %v8550 = vld [vmem:[#allocation2 + $0x10] sm:$0xff]
    %v8551 = vld [vmem:[#allocation2 + $0x18] sm:$0xff]
    %v8552 = vld [vmem:[#allocation2 + $0x30] sm:$0xff]
    %v8553 = vld [vmem:[#allocation2 + $0x38] sm:$0xff]
    %v8554 = vld [vmem:[#allocation2 + $0x40] sm:$0xff]
    %v8555 = vld [vmem:[#allocation2 + $0x48] sm:$0xff]
    %v8556 = vpack.c.bf16 %v8549, %v8548
    %v8557 = vpack.c.bf16 %v8551, %v8550
    %v8558 = vpack.c.bf16 %v8553, %v8552
    %v8559 = vpack.c.bf16 %v8555, %v8554
    %v8564 = vunpack.c.l.b16 %v8556
    %v8565 = vunpack.c.h.b16 %v8556
    %v8566 = vunpack.c.l.b16 %v8557
    %v8567 = vunpack.c.h.b16 %v8557
    %v8568 = vunpack.c.l.b16 %v8558
    %v8569 = vunpack.c.h.b16 %v8558
    %v8570 = vunpack.c.l.b16 %v8559
    %v8571 = vunpack.c.h.b16 %v8559
    %v8572 = vpack.c.b16 %v8564, %v8564
    %v8573 = vpack.c.b16 %v8565, %v8565
    %v8574 = vpack.c.b16 %v8566, %v8566
    %v8575 = vpack.c.b16 %v8567, %v8567
    %v8576 = vpack.c.b16 %v8568, %v8568
    %v8577 = vpack.c.b16 %v8569, %v8569
    %v8578 = vpack.c.b16 %v8570, %v8570
    %v8579 = vpack.c.b16 %v8571, %v8571
    %8588 = vst [vmem:[#allocation5] sm:$0xf] %v8572
    %8589 = vst [vmem:[#allocation5 + $0x24] sm:$0xf] %v8573
    %8590 = vst [vmem:[#allocation5 + $0x48] sm:$0xf] %v8574
    %8591 = vst [vmem:[#allocation5 + $0x6c] sm:$0xf] %v8575
    %8592 = vst [vmem:[#allocation5 + $0x90] sm:$0xf] %v8576
    %8593 = vst [vmem:[#allocation5 + $0xb4] sm:$0xf] %v8577
    %8594 = vst [vmem:[#allocation5 + $0xd8] sm:$0xf] %v8578
    %8595 = vst [vmem:[#allocation5 + $0xfc] sm:$0xf] %v8579
    %v8596 = vld [vmem:[#allocation3] sm:$0xff]
    %v8597 = vld [vmem:[#allocation3 + $0x8] sm:$0xff]
    %v8598 = vld [vmem:[#allocation3 + $0x10] sm:$0xff]
    %v8599 = vld [vmem:[#allocation3 + $0x18] sm:$0xff]
    %v8600 = vld [vmem:[#allocation3 + $0x30] sm:$0xff]
    %v8601 = vld [vmem:[#allocation3 + $0x38] sm:$0xff]
    %v8602 = vld [vmem:[#allocation3 + $0x40] sm:$0xff]
    %v8603 = vld [vmem:[#allocation3 + $0x48] sm:$0xff]
    %v8604 = vpack.c.bf16 %v8597, %v8596
    %v8605 = vpack.c.bf16 %v8599, %v8598
    %v8606 = vpack.c.bf16 %v8601, %v8600
    %v8607 = vpack.c.bf16 %v8603, %v8602
    %v8612 = vunpack.c.l.b16 %v8604
    %v8613 = vunpack.c.h.b16 %v8604
    %v8614 = vunpack.c.l.b16 %v8605
    %v8615 = vunpack.c.h.b16 %v8605
    %v8616 = vunpack.c.l.b16 %v8606
    %v8617 = vunpack.c.h.b16 %v8606
    %v8618 = vunpack.c.l.b16 %v8607
    %v8619 = vunpack.c.h.b16 %v8607
    %v8620 = vpack.c.b16 %v8612, %v8612
    %v8621 = vpack.c.b16 %v8613, %v8613
    %v8622 = vpack.c.b16 %v8614, %v8614
    %v8623 = vpack.c.b16 %v8615, %v8615
    %v8624 = vpack.c.b16 %v8616, %v8616
    %v8625 = vpack.c.b16 %v8617, %v8617
    %v8626 = vpack.c.b16 %v8618, %v8618
    %v8627 = vpack.c.b16 %v8619, %v8619
    %8636 = vst [vmem:[#allocation5 + $0x4] sm:$0xf] %v8620
    %8637 = vst [vmem:[#allocation5 + $0x28] sm:$0xf] %v8621
    %8638 = vst [vmem:[#allocation5 + $0x4c] sm:$0xf] %v8622
    %8639 = vst [vmem:[#allocation5 + $0x70] sm:$0xf] %v8623
    %8640 = vst [vmem:[#allocation5 + $0x94] sm:$0xf] %v8624
    %8641 = vst [vmem:[#allocation5 + $0xb8] sm:$0xf] %v8625
    %8642 = vst [vmem:[#allocation5 + $0xdc] sm:$0xf] %v8626
    %8643 = vst [vmem:[#allocation5 + $0x100] sm:$0xf] %v8627
    %v8644 = vld [vmem:[#allocation4] sm:$0xff]
    %v8645 = vld [vmem:[#allocation4 + $0x8] sm:$0xff]
    %v8646 = vld [vmem:[#allocation4 + $0x10] sm:$0xff]
    %v8647 = vld [vmem:[#allocation4 + $0x18] sm:$0xff]
    %v8648 = vld [vmem:[#allocation4 + $0x30] sm:$0xff]
    %v8649 = vld [vmem:[#allocation4 + $0x38] sm:$0xff]
    %v8650 = vld [vmem:[#allocation4 + $0x40] sm:$0xff]
    %v8651 = vld [vmem:[#allocation4 + $0x48] sm:$0xff]
    %v8652 = vpack.c.bf16 %v8645, %v8644
    %v8653 = vpack.c.bf16 %v8647, %v8646
    %v8654 = vpack.c.bf16 %v8649, %v8648
    %v8655 = vpack.c.bf16 %v8651, %v8650
    %v8660 = vunpack.c.l.b16 %v8652
    %v8661 = vunpack.c.h.b16 %v8652
    %v8662 = vunpack.c.l.b16 %v8653
    %v8663 = vunpack.c.h.b16 %v8653
    %v8664 = vunpack.c.l.b16 %v8654
    %v8665 = vunpack.c.h.b16 %v8654
    %v8666 = vunpack.c.l.b16 %v8655
    %v8667 = vunpack.c.h.b16 %v8655
    %v8668 = vpack.c.b16 %v8660, %v8660
    %v8669 = vpack.c.b16 %v8661, %v8661
    %v8670 = vpack.c.b16 %v8662, %v8662
    %v8671 = vpack.c.b16 %v8663, %v8663
    %v8672 = vpack.c.b16 %v8664, %v8664
    %v8673 = vpack.c.b16 %v8665, %v8665
    %v8674 = vpack.c.b16 %v8666, %v8666
    %v8675 = vpack.c.b16 %v8667, %v8667
    %8684 = vst [vmem:[#allocation5 + $0x8] sm:$0xf] %v8668
    %8685 = vst [vmem:[#allocation5 + $0x2c] sm:$0xf] %v8669
    %8686 = vst [vmem:[#allocation5 + $0x50] sm:$0xf] %v8670
    %8687 = vst [vmem:[#allocation5 + $0x74] sm:$0xf] %v8671
    %8688 = vst [vmem:[#allocation5 + $0x98] sm:$0xf] %v8672
    %8689 = vst [vmem:[#allocation5 + $0xbc] sm:$0xf] %v8673
    %8690 = vst [vmem:[#allocation5 + $0xe0] sm:$0xf] %v8674
    %8691 = vst [vmem:[#allocation5 + $0x104] sm:$0xf] %v8675
    %v8692 = vld [vmem:[%s240] sm:$0xff]
    %v8693 = vld [vmem:[%s240 + $0x8] sm:$0xff]
    %v8694 = vld [vmem:[%s240 + $0x10] sm:$0xff]
    %v8695 = vld [vmem:[%s240 + $0x18] sm:$0xff]
    %v8696 = vld [vmem:[%s240 + $0x30] sm:$0xff]
    %v8697 = vld [vmem:[%s240 + $0x38] sm:$0xff]
    %v8698 = vld [vmem:[%s240 + $0x40] sm:$0xff]
    %v8699 = vld [vmem:[%s240 + $0x48] sm:$0xff]
    %v8700 = vpack.c.bf16 %v8693, %v8692
    %v8701 = vpack.c.bf16 %v8695, %v8694
    %v8702 = vpack.c.bf16 %v8697, %v8696
    %v8703 = vpack.c.bf16 %v8699, %v8698
    %v8708 = vunpack.c.l.b16 %v8700
    %v8709 = vunpack.c.h.b16 %v8700
    %v8710 = vunpack.c.l.b16 %v8701
    %v8711 = vunpack.c.h.b16 %v8701
    %v8712 = vunpack.c.l.b16 %v8702
    %v8713 = vunpack.c.h.b16 %v8702
    %v8714 = vunpack.c.l.b16 %v8703
    %v8715 = vunpack.c.h.b16 %v8703
    %v8716 = vpack.c.b16 %v8708, %v8708
    %v8717 = vpack.c.b16 %v8709, %v8709
    %v8718 = vpack.c.b16 %v8710, %v8710
    %v8719 = vpack.c.b16 %v8711, %v8711
    %v8720 = vpack.c.b16 %v8712, %v8712
    %v8721 = vpack.c.b16 %v8713, %v8713
    %v8722 = vpack.c.b16 %v8714, %v8714
    %v8723 = vpack.c.b16 %v8715, %v8715
    %8732 = vst [vmem:[#allocation5 + $0xc] sm:$0xf] %v8716
    %8733 = vst [vmem:[#allocation5 + $0x30] sm:$0xf] %v8717
    %8734 = vst [vmem:[#allocation5 + $0x54] sm:$0xf] %v8718
    %8735 = vst [vmem:[#allocation5 + $0x78] sm:$0xf] %v8719
    %8736 = vst [vmem:[#allocation5 + $0x9c] sm:$0xf] %v8720
    %8737 = vst [vmem:[#allocation5 + $0xc0] sm:$0xf] %v8721
    %8738 = vst [vmem:[#allocation5 + $0xe4] sm:$0xf] %v8722
    %8739 = vst [vmem:[#allocation5 + $0x108] sm:$0xf] %v8723
    %v8740 = vld [vmem:[%s206] sm:$0xff]
    %v8741 = vld [vmem:[%s206 + $0x8] sm:$0xff]
    %v8742 = vld [vmem:[%s206 + $0x10] sm:$0xff]
    %v8743 = vld [vmem:[%s206 + $0x18] sm:$0xff]
    %v8744 = vld [vmem:[%s206 + $0x30] sm:$0xff]
    %v8745 = vld [vmem:[%s206 + $0x38] sm:$0xff]
    %v8746 = vld [vmem:[%s206 + $0x40] sm:$0xff]
    %v8747 = vld [vmem:[%s206 + $0x48] sm:$0xff]
    %v8748 = vpack.c.bf16 %v8741, %v8740
    %v8749 = vpack.c.bf16 %v8743, %v8742
    %v8750 = vpack.c.bf16 %v8745, %v8744
    %v8751 = vpack.c.bf16 %v8747, %v8746
    %v8756 = vunpack.c.l.b16 %v8748
    %v8757 = vunpack.c.h.b16 %v8748
    %v8758 = vunpack.c.l.b16 %v8749
    %v8759 = vunpack.c.h.b16 %v8749
    %v8760 = vunpack.c.l.b16 %v8750
    %v8761 = vunpack.c.h.b16 %v8750
    %v8762 = vunpack.c.l.b16 %v8751
    %v8763 = vunpack.c.h.b16 %v8751
    %v8764 = vpack.c.b16 %v8756, %v8756
    %v8765 = vpack.c.b16 %v8757, %v8757
    %v8766 = vpack.c.b16 %v8758, %v8758
    %v8767 = vpack.c.b16 %v8759, %v8759
    %v8768 = vpack.c.b16 %v8760, %v8760
    %v8769 = vpack.c.b16 %v8761, %v8761
    %v8770 = vpack.c.b16 %v8762, %v8762
    %v8771 = vpack.c.b16 %v8763, %v8763
    %8780 = vst [vmem:[#allocation5 + $0x10] sm:$0xf] %v8764
    %8781 = vst [vmem:[#allocation5 + $0x34] sm:$0xf] %v8765
    %8782 = vst [vmem:[#allocation5 + $0x58] sm:$0xf] %v8766
    %8783 = vst [vmem:[#allocation5 + $0x7c] sm:$0xf] %v8767
    %8784 = vst [vmem:[#allocation5 + $0xa0] sm:$0xf] %v8768
    %8785 = vst [vmem:[#allocation5 + $0xc4] sm:$0xf] %v8769
    %8786 = vst [vmem:[#allocation5 + $0xe8] sm:$0xf] %v8770
    %8787 = vst [vmem:[#allocation5 + $0x10c] sm:$0xf] %v8771
    %v8788 = vld [vmem:[%s274] sm:$0xff]
    %v8789 = vld [vmem:[%s274 + $0x8] sm:$0xff]
    %v8790 = vld [vmem:[%s274 + $0x10] sm:$0xff]
    %v8791 = vld [vmem:[%s274 + $0x18] sm:$0xff]
    %v8792 = vld [vmem:[%s274 + $0x30] sm:$0xff]
    %v8793 = vld [vmem:[%s274 + $0x38] sm:$0xff]
    %v8794 = vld [vmem:[%s274 + $0x40] sm:$0xff]
    %v8795 = vld [vmem:[%s274 + $0x48] sm:$0xff]
    %v8796 = vpack.c.bf16 %v8789, %v8788
    %v8797 = vpack.c.bf16 %v8791, %v8790
    %v8798 = vpack.c.bf16 %v8793, %v8792
    %v8799 = vpack.c.bf16 %v8795, %v8794
    %v8804 = vunpack.c.l.b16 %v8796
    %v8805 = vunpack.c.h.b16 %v8796
    %v8806 = vunpack.c.l.b16 %v8797
    %v8807 = vunpack.c.h.b16 %v8797
    %v8808 = vunpack.c.l.b16 %v8798
    %v8809 = vunpack.c.h.b16 %v8798
    %v8810 = vunpack.c.l.b16 %v8799
    %v8811 = vunpack.c.h.b16 %v8799
    %v8812 = vpack.c.b16 %v8804, %v8804
    %v8813 = vpack.c.b16 %v8805, %v8805
    %v8814 = vpack.c.b16 %v8806, %v8806
    %v8815 = vpack.c.b16 %v8807, %v8807
    %v8816 = vpack.c.b16 %v8808, %v8808
    %v8817 = vpack.c.b16 %v8809, %v8809
    %v8818 = vpack.c.b16 %v8810, %v8810
    %v8819 = vpack.c.b16 %v8811, %v8811
    %8828 = vst [vmem:[#allocation5 + $0x14] sm:$0xf] %v8812
    %8829 = vst [vmem:[#allocation5 + $0x38] sm:$0xf] %v8813
    %8830 = vst [vmem:[#allocation5 + $0x5c] sm:$0xf] %v8814
    %8831 = vst [vmem:[#allocation5 + $0x80] sm:$0xf] %v8815
    %8832 = vst [vmem:[#allocation5 + $0xa4] sm:$0xf] %v8816
    %8833 = vst [vmem:[#allocation5 + $0xc8] sm:$0xf] %v8817
    %8834 = vst [vmem:[#allocation5 + $0xec] sm:$0xf] %v8818
    %8835 = vst [vmem:[#allocation5 + $0x110] sm:$0xf] %v8819
    %v8836 = vld [vmem:[%s571] sm:$0xff]
    %v8837 = vld [vmem:[%s571 + $0x8] sm:$0xff]
    %v8838 = vld [vmem:[%s571 + $0x10] sm:$0xff]
    %v8839 = vld [vmem:[%s571 + $0x18] sm:$0xff]
    %v8840 = vld [vmem:[%s571 + $0x30] sm:$0xff]
    %v8841 = vld [vmem:[%s571 + $0x38] sm:$0xff]
    %v8842 = vld [vmem:[%s571 + $0x40] sm:$0xff]
    %v8843 = vld [vmem:[%s571 + $0x48] sm:$0xff]
    %v8844 = vpack.c.bf16 %v8837, %v8836
    %v8845 = vpack.c.bf16 %v8839, %v8838
    %v8846 = vpack.c.bf16 %v8841, %v8840
    %v8847 = vpack.c.bf16 %v8843, %v8842
    %v8852 = vunpack.c.l.b16 %v8844
    %v8853 = vunpack.c.h.b16 %v8844
    %v8854 = vunpack.c.l.b16 %v8845
    %v8855 = vunpack.c.h.b16 %v8845
    %v8856 = vunpack.c.l.b16 %v8846
    %v8857 = vunpack.c.h.b16 %v8846
    %v8858 = vunpack.c.l.b16 %v8847
    %v8859 = vunpack.c.h.b16 %v8847
    %v8860 = vpack.c.b16 %v8852, %v8852
    %v8861 = vpack.c.b16 %v8853, %v8853
    %v8862 = vpack.c.b16 %v8854, %v8854
    %v8863 = vpack.c.b16 %v8855, %v8855
    %v8864 = vpack.c.b16 %v8856, %v8856
    %v8865 = vpack.c.b16 %v8857, %v8857
    %v8866 = vpack.c.b16 %v8858, %v8858
    %v8867 = vpack.c.b16 %v8859, %v8859
    %8876 = vst [vmem:[#allocation5 + $0x18] sm:$0xf] %v8860
    %8877 = vst [vmem:[#allocation5 + $0x3c] sm:$0xf] %v8861
    %8878 = vst [vmem:[#allocation5 + $0x60] sm:$0xf] %v8862
    %8879 = vst [vmem:[#allocation5 + $0x84] sm:$0xf] %v8863
    %8880 = vst [vmem:[#allocation5 + $0xa8] sm:$0xf] %v8864
    %8881 = vst [vmem:[#allocation5 + $0xcc] sm:$0xf] %v8865
    %8882 = vst [vmem:[#allocation5 + $0xf0] sm:$0xf] %v8866
    %8883 = vst [vmem:[#allocation5 + $0x114] sm:$0xf] %v8867
    %v8884 = vld [vmem:[%s620] sm:$0xff]
    %v8885 = vld [vmem:[%s620 + $0x8] sm:$0xff]
    %v8886 = vld [vmem:[%s620 + $0x10] sm:$0xff]
    %v8887 = vld [vmem:[%s620 + $0x18] sm:$0xff]
    %v8888 = vld [vmem:[%s620 + $0x30] sm:$0xff]
    %v8889 = vld [vmem:[%s620 + $0x38] sm:$0xff]
    %v8890 = vld [vmem:[%s620 + $0x40] sm:$0xff]
    %v8891 = vld [vmem:[%s620 + $0x48] sm:$0xff]
    %v8892 = vpack.c.bf16 %v8885, %v8884
    %v8893 = vpack.c.bf16 %v8887, %v8886
    %v8894 = vpack.c.bf16 %v8889, %v8888
    %v8895 = vpack.c.bf16 %v8891, %v8890
    %v8900 = vunpack.c.l.b16 %v8892
    %v8901 = vunpack.c.h.b16 %v8892
    %v8902 = vunpack.c.l.b16 %v8893
    %v8903 = vunpack.c.h.b16 %v8893
    %v8904 = vunpack.c.l.b16 %v8894
    %v8905 = vunpack.c.h.b16 %v8894
    %v8906 = vunpack.c.l.b16 %v8895
    %v8907 = vunpack.c.h.b16 %v8895
    %v8908 = vpack.c.b16 %v8900, %v8900
    %v8909 = vpack.c.b16 %v8901, %v8901
    %v8910 = vpack.c.b16 %v8902, %v8902
    %v8911 = vpack.c.b16 %v8903, %v8903
    %v8912 = vpack.c.b16 %v8904, %v8904
    %v8913 = vpack.c.b16 %v8905, %v8905
    %v8914 = vpack.c.b16 %v8906, %v8906
    %v8915 = vpack.c.b16 %v8907, %v8907
    %8924 = vst [vmem:[#allocation5 + $0x1c] sm:$0xf] %v8908
    %8925 = vst [vmem:[#allocation5 + $0x40] sm:$0xf] %v8909
    %8926 = vst [vmem:[#allocation5 + $0x64] sm:$0xf] %v8910
    %8927 = vst [vmem:[#allocation5 + $0x88] sm:$0xf] %v8911
    %8928 = vst [vmem:[#allocation5 + $0xac] sm:$0xf] %v8912
    %8929 = vst [vmem:[#allocation5 + $0xd0] sm:$0xf] %v8913
    %8930 = vst [vmem:[#allocation5 + $0xf4] sm:$0xf] %v8914
    %8931 = vst [vmem:[#allocation5 + $0x118] sm:$0xf] %v8915
    %v8932 = vld [vmem:[%s669] sm:$0xff]
    %v8933 = vld [vmem:[%s669 + $0x8] sm:$0xff]
    %v8934 = vld [vmem:[%s669 + $0x10] sm:$0xff]
    %v8935 = vld [vmem:[%s669 + $0x18] sm:$0xff]
    %v8936 = vld [vmem:[%s669 + $0x30] sm:$0xff]
    %v8937 = vld [vmem:[%s669 + $0x38] sm:$0xff]
    %v8938 = vld [vmem:[%s669 + $0x40] sm:$0xff]
    %v8939 = vld [vmem:[%s669 + $0x48] sm:$0xff]
    %v8940 = vpack.c.bf16 %v8933, %v8932
    %v8941 = vpack.c.bf16 %v8935, %v8934
    %v8942 = vpack.c.bf16 %v8937, %v8936
    %v8943 = vpack.c.bf16 %v8939, %v8938
    %v8948 = vunpack.c.l.b16 %v8940
    %v8949 = vunpack.c.h.b16 %v8940
    %v8950 = vunpack.c.l.b16 %v8941
    %v8951 = vunpack.c.h.b16 %v8941
    %v8952 = vunpack.c.l.b16 %v8942
    %v8953 = vunpack.c.h.b16 %v8942
    %v8954 = vunpack.c.l.b16 %v8943
    %v8955 = vunpack.c.h.b16 %v8943
    %v8956 = vpack.c.b16 %v8948, %v8948
    %v8957 = vpack.c.b16 %v8949, %v8949
    %v8958 = vpack.c.b16 %v8950, %v8950
    %v8959 = vpack.c.b16 %v8951, %v8951
    %v8960 = vpack.c.b16 %v8952, %v8952
    %v8961 = vpack.c.b16 %v8953, %v8953
    %v8962 = vpack.c.b16 %v8954, %v8954
    %v8963 = vpack.c.b16 %v8955, %v8955
    %8972 = vst [vmem:[#allocation5 + $0x20] sm:$0xf] %v8956
    %8973 = vst [vmem:[#allocation5 + $0x44] sm:$0xf] %v8957
    %8974 = vst [vmem:[#allocation5 + $0x68] sm:$0xf] %v8958
    %8975 = vst [vmem:[#allocation5 + $0x8c] sm:$0xf] %v8959
    %8976 = vst [vmem:[#allocation5 + $0xb0] sm:$0xf] %v8960
    %8977 = vst [vmem:[#allocation5 + $0xd4] sm:$0xf] %v8961
    %8978 = vst [vmem:[#allocation5 + $0xf8] sm:$0xf] %v8962
    %8979 = vst [vmem:[#allocation5 + $0x11c] sm:$0xf] %v8963
    %v8980 = vld [vmem:[#allocation5] sm:$0xff]
    %v8981 = vld [vmem:[#allocation5 + $0x8] sm:$0xff]
    %v8982 = vld [vmem:[#allocation5 + $0x10] sm:$0xff]
    %v8983 = vld [vmem:[#allocation5 + $0x18] sm:$0xff]
    %v8984 = vld [vmem:[#allocation5 + $0x20] sm:$0xf]
    %v8985 = vld [vmem:[#allocation5 + $0x24] sm:$0xff]
    %v8986 = vld [vmem:[#allocation5 + $0x2c] sm:$0xff]
    %v8987 = vld [vmem:[#allocation5 + $0x34] sm:$0xff]
    %v8988 = vld [vmem:[#allocation5 + $0x3c] sm:$0xff]
    %v8989 = vld [vmem:[#allocation5 + $0x44] sm:$0xf]
    %v8990 = vld [vmem:[#allocation5 + $0x48] sm:$0xff]
    %v8991 = vld [vmem:[#allocation5 + $0x50] sm:$0xff]
    %v8992 = vld [vmem:[#allocation5 + $0x58] sm:$0xff]
    %v8993 = vld [vmem:[#allocation5 + $0x60] sm:$0xff]
    %v8994 = vld [vmem:[#allocation5 + $0x68] sm:$0xf]
    %v8995 = vld [vmem:[#allocation5 + $0x6c] sm:$0xff]
    %v8996 = vld [vmem:[#allocation5 + $0x74] sm:$0xff]
    %v8997 = vld [vmem:[#allocation5 + $0x7c] sm:$0xff]
    %v8998 = vld [vmem:[#allocation5 + $0x84] sm:$0xff]
    %v8999 = vld [vmem:[#allocation5 + $0x8c] sm:$0xf]
    %v9000 = vld [vmem:[#allocation5 + $0x90] sm:$0xff]
    %v9001 = vld [vmem:[#allocation5 + $0x98] sm:$0xff]
    %v9002 = vld [vmem:[#allocation5 + $0xa0] sm:$0xff]
    %v9003 = vld [vmem:[#allocation5 + $0xa8] sm:$0xff]
    %v9004 = vld [vmem:[#allocation5 + $0xb0] sm:$0xf]
    %v9005 = vld [vmem:[#allocation5 + $0xb4] sm:$0xff]
    %v9006 = vld [vmem:[#allocation5 + $0xbc] sm:$0xff]
    %v9007 = vld [vmem:[#allocation5 + $0xc4] sm:$0xff]
    %v9008 = vld [vmem:[#allocation5 + $0xcc] sm:$0xff]
    %v9009 = vld [vmem:[#allocation5 + $0xd4] sm:$0xf]
    %v9010 = vld [vmem:[#allocation5 + $0xd8] sm:$0xff]
    %v9011 = vld [vmem:[#allocation5 + $0xe0] sm:$0xff]
    %v9012 = vld [vmem:[#allocation5 + $0xe8] sm:$0xff]
    %v9013 = vld [vmem:[#allocation5 + $0xf0] sm:$0xff]
    %v9014 = vld [vmem:[#allocation5 + $0xf8] sm:$0xf]
    %v9015 = vld [vmem:[#allocation5 + $0xfc] sm:$0xff]
    %v9016 = vld [vmem:[#allocation5 + $0x104] sm:$0xff]
    %v9017 = vld [vmem:[#allocation5 + $0x10c] sm:$0xff]
    %v9018 = vld [vmem:[#allocation5 + $0x114] sm:$0xff]
    %v9019 = vld [vmem:[#allocation5 + $0x11c] sm:$0xf]
    %s9020 = scalar_lea.vmem [#allocation6], 2880
    %v9021 = vld [vmem:[%s9020] sm:$0xf]
    %v9022 = vld [vmem:[%s9020 + $0x4] sm:$0xf]
    %v9023 = vld [vmem:[%s9020 + $0x8] sm:$0xf]
    %v9024 = vld [vmem:[%s9020 + $0xc] sm:$0xf]
    %v9025 = vld [vmem:[%s9020 + $0x10] sm:$0xf]
    %v9026 = vld [vmem:[%s9020 + $0x14] sm:$0xf]
    %v9027 = vld [vmem:[%s9020 + $0x18] sm:$0xf]
    %v9028 = vld [vmem:[%s9020 + $0x1c] sm:$0xf]
    %v9029 = vld [vmem:[%s9020 + $0x20] sm:$0xf]
    %v9030 = vld [vmem:[%s9020 + $0x24] sm:$0xf]
    %v9031 = vld [vmem:[%s9020 + $0x28] sm:$0xf]
    %v9032 = vld [vmem:[%s9020 + $0x2c] sm:$0xf]
    %v9033 = vld [vmem:[%s9020 + $0x30] sm:$0xf]
    %v9034 = vld [vmem:[%s9020 + $0x34] sm:$0xf]
    %v9035 = vld [vmem:[%s9020 + $0x38] sm:$0xf]
    %v9036 = vld [vmem:[%s9020 + $0x3c] sm:$0xf]
    %v9037 = vld [vmem:[%s9020 + $0x40] sm:$0xf]
    %v9038 = vld [vmem:[%s9020 + $0x44] sm:$0xf]
    %v9039 = vld [vmem:[%s9020 + $0x48] sm:$0xf]
    %v9040 = vld [vmem:[%s9020 + $0x4c] sm:$0xf]
    %v9041 = vld [vmem:[%s9020 + $0x50] sm:$0xf]
    %v9042 = vld [vmem:[%s9020 + $0x54] sm:$0xf]
    %v9043 = vld [vmem:[%s9020 + $0x58] sm:$0xf]
    %v9044 = vld [vmem:[%s9020 + $0x5c] sm:$0xf]
    %v9045 = vld [vmem:[%s9020 + $0x60] sm:$0xf]
    %v9046 = vld [vmem:[%s9020 + $0x64] sm:$0xf]
    %v9047 = vld [vmem:[%s9020 + $0x68] sm:$0xf]
    %v9048 = vld [vmem:[%s9020 + $0x6c] sm:$0xf]
    %v9049 = vld [vmem:[%s9020 + $0x70] sm:$0xf]
    %v9050 = vld [vmem:[%s9020 + $0x74] sm:$0xf]
    %v9051 = vld [vmem:[%s9020 + $0x78] sm:$0xf]
    %v9052 = vld [vmem:[%s9020 + $0x7c] sm:$0xf]
    %v9053 = vld [vmem:[%s9020 + $0x80] sm:$0xf]
    %v9054 = vld [vmem:[%s9020 + $0x84] sm:$0xf]
    %v9055 = vld [vmem:[%s9020 + $0x88] sm:$0xf]
    %v9056 = vld [vmem:[%s9020 + $0x8c] sm:$0xf]
    %v9057 = vld [vmem:[%s9020 + $0x90] sm:$0xf]
    %v9058 = vld [vmem:[%s9020 + $0x94] sm:$0xf]
    %v9059 = vld [vmem:[%s9020 + $0x98] sm:$0xf]
    %v9060 = vld [vmem:[%s9020 + $0x9c] sm:$0xf]
    %v9061 = vld [vmem:[%s9020 + $0xa0] sm:$0xf]
    %v9062 = vld [vmem:[%s9020 + $0xa4] sm:$0xf]
    %v9063 = vld [vmem:[%s9020 + $0xa8] sm:$0xf]
    %v9064 = vld [vmem:[%s9020 + $0xac] sm:$0xf]
    %v9065 = vld [vmem:[%s9020 + $0xb0] sm:$0xf]
    %v9066 = vld [vmem:[%s9020 + $0xb4] sm:$0xf]
    %v9067 = vld [vmem:[%s9020 + $0xb8] sm:$0xf]
    %v9068 = vld [vmem:[%s9020 + $0xbc] sm:$0xf]
    %v9069 = vld [vmem:[%s9020 + $0xc0] sm:$0xf]
    %v9070 = vld [vmem:[%s9020 + $0xc4] sm:$0xf]
    %v9071 = vld [vmem:[%s9020 + $0xc8] sm:$0xf]
    %v9072 = vld [vmem:[%s9020 + $0xcc] sm:$0xf]
    %v9073 = vld [vmem:[%s9020 + $0xd0] sm:$0xf]
    %v9074 = vld [vmem:[%s9020 + $0xd4] sm:$0xf]
    %v9075 = vld [vmem:[%s9020 + $0xd8] sm:$0xf]
    %v9076 = vld [vmem:[%s9020 + $0xdc] sm:$0xf]
    %v9077 = vld [vmem:[%s9020 + $0xe0] sm:$0xf]
    %v9078 = vld [vmem:[%s9020 + $0xe4] sm:$0xf]
    %v9079 = vld [vmem:[%s9020 + $0xe8] sm:$0xf]
    %v9080 = vld [vmem:[%s9020 + $0xec] sm:$0xf]
    %v9081 = vld [vmem:[%s9020 + $0xf0] sm:$0xf]
    %v9082 = vld [vmem:[%s9020 + $0xf4] sm:$0xf]
    %v9083 = vld [vmem:[%s9020 + $0xf8] sm:$0xf]
    %v9084 = vld [vmem:[%s9020 + $0xfc] sm:$0xf]
    %v9085 = vld [vmem:[%s9020 + $0x100] sm:$0xf]
    %v9086 = vld [vmem:[%s9020 + $0x104] sm:$0xf]
    %v9087 = vld [vmem:[%s9020 + $0x108] sm:$0xf]
    %v9088 = vld [vmem:[%s9020 + $0x10c] sm:$0xf]
    %v9089 = vld [vmem:[%s9020 + $0x110] sm:$0xf]
    %v9090 = vld [vmem:[%s9020 + $0x114] sm:$0xf]
    %v9091 = vld [vmem:[%s9020 + $0x118] sm:$0xf]
    %v9092 = vld [vmem:[%s9020 + $0x11c] sm:$0xf]
    %v9093 = vld [vmem:[%s9020 + $0x120] sm:$0xf]
    %v9094 = vld [vmem:[%s9020 + $0x124] sm:$0xf]
    %v9095 = vld [vmem:[%s9020 + $0x128] sm:$0xf]
    %v9096 = vld [vmem:[%s9020 + $0x12c] sm:$0xf]
    %v9097 = vld [vmem:[%s9020 + $0x130] sm:$0xf]
    %v9098 = vld [vmem:[%s9020 + $0x134] sm:$0xf]
    %v9099 = vld [vmem:[%s9020 + $0x138] sm:$0xf]
    %v9100 = vld [vmem:[%s9020 + $0x13c] sm:$0xf]
    %v9101 = vld [vmem:[%s9020 + $0x140] sm:$0xf]
    %v9102 = vld [vmem:[%s9020 + $0x144] sm:$0xf]
    %v9103 = vld [vmem:[%s9020 + $0x148] sm:$0xf]
    %v9104 = vld [vmem:[%s9020 + $0x14c] sm:$0xf]
    %v9105 = vld [vmem:[%s9020 + $0x150] sm:$0xf]
    %v9106 = vld [vmem:[%s9020 + $0x154] sm:$0xf]
    %v9107 = vld [vmem:[%s9020 + $0x158] sm:$0xf]
    %v9108 = vld [vmem:[%s9020 + $0x15c] sm:$0xf]
    %v9109 = vld [vmem:[%s9020 + $0x160] sm:$0xf]
    %v9110 = vld [vmem:[%s9020 + $0x164] sm:$0xf]
    %v9111 = vld [vmem:[%s9020 + $0x168] sm:$0xf]
    %v9112 = vld [vmem:[%s9020 + $0x16c] sm:$0xf]
    %v9113 = vld [vmem:[%s9020 + $0x170] sm:$0xf]
    %v9114 = vld [vmem:[%s9020 + $0x174] sm:$0xf]
    %v9115 = vld [vmem:[%s9020 + $0x178] sm:$0xf]
    %v9116 = vld [vmem:[%s9020 + $0x17c] sm:$0xf]
    %v9117 = vld [vmem:[%s9020 + $0x180] sm:$0xf]
    %v9118 = vld [vmem:[%s9020 + $0x184] sm:$0xf]
    %v9119 = vld [vmem:[%s9020 + $0x188] sm:$0xf]
    %v9120 = vld [vmem:[%s9020 + $0x18c] sm:$0xf]
    %v9121 = vld [vmem:[%s9020 + $0x190] sm:$0xf]
    %v9122 = vld [vmem:[%s9020 + $0x194] sm:$0xf]
    %v9123 = vld [vmem:[%s9020 + $0x198] sm:$0xf]
    %v9124 = vld [vmem:[%s9020 + $0x19c] sm:$0xf]
    %v9125 = vld [vmem:[%s9020 + $0x1a0] sm:$0xf]
    %v9126 = vld [vmem:[%s9020 + $0x1a4] sm:$0xf]
    %v9127 = vld [vmem:[%s9020 + $0x1a8] sm:$0xf]
    %v9128 = vld [vmem:[%s9020 + $0x1ac] sm:$0xf]
    %v9129 = vld [vmem:[%s9020 + $0x1b0] sm:$0xf]
    %v9130 = vld [vmem:[%s9020 + $0x1b4] sm:$0xf]
    %v9131 = vld [vmem:[%s9020 + $0x1b8] sm:$0xf]
    %v9132 = vld [vmem:[%s9020 + $0x1bc] sm:$0xf]
    %v9133 = vld [vmem:[%s9020 + $0x1c0] sm:$0xf]
    %v9134 = vld [vmem:[%s9020 + $0x1c4] sm:$0xf]
    %v9135 = vld [vmem:[%s9020 + $0x1c8] sm:$0xf]
    %v9136 = vld [vmem:[%s9020 + $0x1cc] sm:$0xf]
    %v9137 = vld [vmem:[%s9020 + $0x1d0] sm:$0xf]
    %v9138 = vld [vmem:[%s9020 + $0x1d4] sm:$0xf]
    %v9139 = vld [vmem:[%s9020 + $0x1d8] sm:$0xf]
    %v9140 = vld [vmem:[%s9020 + $0x1dc] sm:$0xf]
    %v9141 = vld [vmem:[%s9020 + $0x1e0] sm:$0xf]
    %v9142 = vld [vmem:[%s9020 + $0x1e4] sm:$0xf]
    %v9143 = vld [vmem:[%s9020 + $0x1e8] sm:$0xf]
    %v9144 = vld [vmem:[%s9020 + $0x1ec] sm:$0xf]
    %v9145 = vld [vmem:[%s9020 + $0x1f0] sm:$0xf]
    %v9146 = vld [vmem:[%s9020 + $0x1f4] sm:$0xf]
    %v9147 = vld [vmem:[%s9020 + $0x1f8] sm:$0xf]
    %v9148 = vld [vmem:[%s9020 + $0x1fc] sm:$0xf]
    %v9149 = vld [vmem:[%s9020 + $0x200] sm:$0xf]
    %v9150 = vld [vmem:[%s9020 + $0x204] sm:$0xf]
    %v9151 = vld [vmem:[%s9020 + $0x208] sm:$0xf]
    %v9152 = vld [vmem:[%s9020 + $0x20c] sm:$0xf]
    %v9153 = vld [vmem:[%s9020 + $0x210] sm:$0xf]
    %v9154 = vld [vmem:[%s9020 + $0x214] sm:$0xf]
    %v9155 = vld [vmem:[%s9020 + $0x218] sm:$0xf]
    %v9156 = vld [vmem:[%s9020 + $0x21c] sm:$0xf]
    %v9157 = vld [vmem:[%s9020 + $0x220] sm:$0xf]
    %v9158 = vld [vmem:[%s9020 + $0x224] sm:$0xf]
    %v9159 = vld [vmem:[%s9020 + $0x228] sm:$0xf]
    %v9160 = vld [vmem:[%s9020 + $0x22c] sm:$0xf]
    %v9161 = vld [vmem:[%s9020 + $0x230] sm:$0xf]
    %v9162 = vld [vmem:[%s9020 + $0x234] sm:$0xf]
    %v9163 = vld [vmem:[%s9020 + $0x238] sm:$0xf]
    %v9164 = vld [vmem:[%s9020 + $0x23c] sm:$0xf]
    %v9165 = vld [vmem:[#allocation8 + $0x5] sm:$0x1]
    %v9166 = vlaneseq
    %v9167 = vshrl.u32 %v9166, 7
    %v9168 = vsub.s32 0, %v9167
    %v9169 = vrot.slane %v9165, %v9168
    %v9210 = vunpack.c.l.b16 %v8980
    %v9211 = vunpack.c.h.b16 %v8980
    %v9212 = vunpack.c.l.b16 %v8981
    %v9213 = vunpack.c.h.b16 %v8981
    %v9214 = vunpack.c.l.b16 %v8982
    %v9215 = vunpack.c.h.b16 %v8982
    %v9216 = vunpack.c.l.b16 %v8983
    %v9217 = vunpack.c.h.b16 %v8983
    %v9218 = vunpack.c.l.b16 %v8984
    %v9219 = vunpack.c.l.b16 %v8985
    %v9220 = vunpack.c.h.b16 %v8985
    %v9221 = vunpack.c.l.b16 %v8986
    %v9222 = vunpack.c.h.b16 %v8986
    %v9223 = vunpack.c.l.b16 %v8987
    %v9224 = vunpack.c.h.b16 %v8987
    %v9225 = vunpack.c.l.b16 %v8988
    %v9226 = vunpack.c.h.b16 %v8988
    %v9227 = vunpack.c.l.b16 %v8989
    %v9228 = vunpack.c.l.b16 %v8990
    %v9229 = vunpack.c.h.b16 %v8990
    %v9230 = vunpack.c.l.b16 %v8991
    %v9231 = vunpack.c.h.b16 %v8991
    %v9232 = vunpack.c.l.b16 %v8992
    %v9233 = vunpack.c.h.b16 %v8992
    %v9234 = vunpack.c.l.b16 %v8993
    %v9235 = vunpack.c.h.b16 %v8993
    %v9236 = vunpack.c.l.b16 %v8994
    %v9237 = vunpack.c.l.b16 %v8995
    %v9238 = vunpack.c.h.b16 %v8995
    %v9239 = vunpack.c.l.b16 %v8996
    %v9240 = vunpack.c.h.b16 %v8996
    %v9241 = vunpack.c.l.b16 %v8997
    %v9242 = vunpack.c.h.b16 %v8997
    %v9243 = vunpack.c.l.b16 %v8998
    %v9244 = vunpack.c.h.b16 %v8998
    %v9245 = vunpack.c.l.b16 %v8999
    %v9246 = vunpack.c.l.b16 %v9000
    %v9247 = vunpack.c.h.b16 %v9000
    %v9248 = vunpack.c.l.b16 %v9001
    %v9249 = vunpack.c.h.b16 %v9001
    %v9250 = vunpack.c.l.b16 %v9002
    %v9251 = vunpack.c.h.b16 %v9002
    %v9252 = vunpack.c.l.b16 %v9003
    %v9253 = vunpack.c.h.b16 %v9003
    %v9254 = vunpack.c.l.b16 %v9004
    %v9255 = vunpack.c.l.b16 %v9005
    %v9256 = vunpack.c.h.b16 %v9005
    %v9257 = vunpack.c.l.b16 %v9006
    %v9258 = vunpack.c.h.b16 %v9006
    %v9259 = vunpack.c.l.b16 %v9007
    %v9260 = vunpack.c.h.b16 %v9007
    %v9261 = vunpack.c.l.b16 %v9008
    %v9262 = vunpack.c.h.b16 %v9008
    %v9263 = vunpack.c.l.b16 %v9009
    %v9264 = vunpack.c.l.b16 %v9010
    %v9265 = vunpack.c.h.b16 %v9010
    %v9266 = vunpack.c.l.b16 %v9011
    %v9267 = vunpack.c.h.b16 %v9011
    %v9268 = vunpack.c.l.b16 %v9012
    %v9269 = vunpack.c.h.b16 %v9012
    %v9270 = vunpack.c.l.b16 %v9013
    %v9271 = vunpack.c.h.b16 %v9013
    %v9272 = vunpack.c.l.b16 %v9014
    %v9273 = vunpack.c.l.b16 %v9015
    %v9274 = vunpack.c.h.b16 %v9015
    %v9275 = vunpack.c.l.b16 %v9016
    %v9276 = vunpack.c.h.b16 %v9016
    %v9277 = vunpack.c.l.b16 %v9017
    %v9278 = vunpack.c.h.b16 %v9017
    %v9279 = vunpack.c.l.b16 %v9018
    %v9280 = vunpack.c.h.b16 %v9018
    %v9281 = vunpack.c.l.b16 %v9019
    %v9282 = vpack.c.b16 %v9219, %v9210
    %v9283 = vpack.c.b16 %v9220, %v9211
    %v9284 = vpack.c.b16 %v9221, %v9212
    %v9285 = vpack.c.b16 %v9222, %v9213
    %v9286 = vpack.c.b16 %v9223, %v9214
    %v9287 = vpack.c.b16 %v9224, %v9215
    %v9288 = vpack.c.b16 %v9225, %v9216
    %v9289 = vpack.c.b16 %v9226, %v9217
    %v9290 = vpack.c.b16 %v9227, %v9218
    %v9291 = vpack.c.b16 %v9237, %v9228
    %v9292 = vpack.c.b16 %v9238, %v9229
    %v9293 = vpack.c.b16 %v9239, %v9230
    %v9294 = vpack.c.b16 %v9240, %v9231
    %v9295 = vpack.c.b16 %v9241, %v9232
    %v9296 = vpack.c.b16 %v9242, %v9233
    %v9297 = vpack.c.b16 %v9243, %v9234
    %v9298 = vpack.c.b16 %v9244, %v9235
    %v9299 = vpack.c.b16 %v9245, %v9236
    %v9300 = vpack.c.b16 %v9255, %v9246
    %v9301 = vpack.c.b16 %v9256, %v9247
    %v9302 = vpack.c.b16 %v9257, %v9248
    %v9303 = vpack.c.b16 %v9258, %v9249
    %v9304 = vpack.c.b16 %v9259, %v9250
    %v9305 = vpack.c.b16 %v9260, %v9251
    %v9306 = vpack.c.b16 %v9261, %v9252
    %v9307 = vpack.c.b16 %v9262, %v9253
    %v9308 = vpack.c.b16 %v9263, %v9254
    %v9309 = vpack.c.b16 %v9273, %v9264
    %v9310 = vpack.c.b16 %v9274, %v9265
    %v9311 = vpack.c.b16 %v9275, %v9266
    %v9312 = vpack.c.b16 %v9276, %v9267
    %v9313 = vpack.c.b16 %v9277, %v9268
    %v9314 = vpack.c.b16 %v9278, %v9269
    %v9315 = vpack.c.b16 %v9279, %v9270
    %v9316 = vpack.c.b16 %v9280, %v9271
    %v9317 = vpack.c.b16 %v9281, %v9272
    %v9498 = vunpack.c.l.b16 %v9021
    %v9499 = vunpack.c.l.b16 %v9022
    %v9500 = vunpack.c.l.b16 %v9023
    %v9501 = vunpack.c.l.b16 %v9024
    %v9502 = vunpack.c.l.b16 %v9025
    %v9503 = vunpack.c.l.b16 %v9026
    %v9504 = vunpack.c.l.b16 %v9027
    %v9505 = vunpack.c.l.b16 %v9028
    %v9506 = vunpack.c.l.b16 %v9029
    %v9507 = vunpack.c.l.b16 %v9030
    %v9508 = vunpack.c.l.b16 %v9031
    %v9509 = vunpack.c.l.b16 %v9032
    %v9510 = vunpack.c.l.b16 %v9033
    %v9511 = vunpack.c.l.b16 %v9034
    %v9512 = vunpack.c.l.b16 %v9035
    %v9513 = vunpack.c.l.b16 %v9036
    %v9514 = vunpack.c.l.b16 %v9037
    %v9515 = vunpack.c.l.b16 %v9038
    %v9516 = vunpack.c.l.b16 %v9039
    %v9517 = vunpack.c.l.b16 %v9040
    %v9518 = vunpack.c.l.b16 %v9041
    %v9519 = vunpack.c.l.b16 %v9042
    %v9520 = vunpack.c.l.b16 %v9043
    %v9521 = vunpack.c.l.b16 %v9044
    %v9522 = vunpack.c.l.b16 %v9045
    %v9523 = vunpack.c.l.b16 %v9046
    %v9524 = vunpack.c.l.b16 %v9047
    %v9525 = vunpack.c.l.b16 %v9048
    %v9526 = vunpack.c.l.b16 %v9049
    %v9527 = vunpack.c.l.b16 %v9050
    %v9528 = vunpack.c.l.b16 %v9051
    %v9529 = vunpack.c.l.b16 %v9052
    %v9530 = vunpack.c.l.b16 %v9053
    %v9531 = vunpack.c.l.b16 %v9054
    %v9532 = vunpack.c.l.b16 %v9055
    %v9533 = vunpack.c.l.b16 %v9056
    %v9534 = vunpack.c.l.b16 %v9057
    %v9535 = vunpack.c.l.b16 %v9058
    %v9536 = vunpack.c.l.b16 %v9059
    %v9537 = vunpack.c.l.b16 %v9060
    %v9538 = vunpack.c.l.b16 %v9061
    %v9539 = vunpack.c.l.b16 %v9062
    %v9540 = vunpack.c.l.b16 %v9063
    %v9541 = vunpack.c.l.b16 %v9064
    %v9542 = vunpack.c.l.b16 %v9065
    %v9543 = vunpack.c.l.b16 %v9066
    %v9544 = vunpack.c.l.b16 %v9067
    %v9545 = vunpack.c.l.b16 %v9068
    %v9546 = vunpack.c.l.b16 %v9069
    %v9547 = vunpack.c.l.b16 %v9070
    %v9548 = vunpack.c.l.b16 %v9071
    %v9549 = vunpack.c.l.b16 %v9072
    %v9550 = vunpack.c.l.b16 %v9073
    %v9551 = vunpack.c.l.b16 %v9074
    %v9552 = vunpack.c.l.b16 %v9075
    %v9553 = vunpack.c.l.b16 %v9076
    %v9554 = vunpack.c.l.b16 %v9077
    %v9555 = vunpack.c.l.b16 %v9078
    %v9556 = vunpack.c.l.b16 %v9079
    %v9557 = vunpack.c.l.b16 %v9080
    %v9558 = vunpack.c.l.b16 %v9081
    %v9559 = vunpack.c.l.b16 %v9082
    %v9560 = vunpack.c.l.b16 %v9083
    %v9561 = vunpack.c.l.b16 %v9084
    %v9562 = vunpack.c.l.b16 %v9085
    %v9563 = vunpack.c.l.b16 %v9086
    %v9564 = vunpack.c.l.b16 %v9087
    %v9565 = vunpack.c.l.b16 %v9088
    %v9566 = vunpack.c.l.b16 %v9089
    %v9567 = vunpack.c.l.b16 %v9090
    %v9568 = vunpack.c.l.b16 %v9091
    %v9569 = vunpack.c.l.b16 %v9092
    %v9570 = vunpack.c.l.b16 %v9093
    %v9571 = vunpack.c.l.b16 %v9094
    %v9572 = vunpack.c.l.b16 %v9095
    %v9573 = vunpack.c.l.b16 %v9096
    %v9574 = vunpack.c.l.b16 %v9097
    %v9575 = vunpack.c.l.b16 %v9098
    %v9576 = vunpack.c.l.b16 %v9099
    %v9577 = vunpack.c.l.b16 %v9100
    %v9578 = vunpack.c.l.b16 %v9101
    %v9579 = vunpack.c.l.b16 %v9102
    %v9580 = vunpack.c.l.b16 %v9103
    %v9581 = vunpack.c.l.b16 %v9104
    %v9582 = vunpack.c.l.b16 %v9105
    %v9583 = vunpack.c.l.b16 %v9106
    %v9584 = vunpack.c.l.b16 %v9107
    %v9585 = vunpack.c.l.b16 %v9108
    %v9586 = vunpack.c.l.b16 %v9109
    %v9587 = vunpack.c.l.b16 %v9110
    %v9588 = vunpack.c.l.b16 %v9111
    %v9589 = vunpack.c.l.b16 %v9112
    %v9590 = vunpack.c.l.b16 %v9113
    %v9591 = vunpack.c.l.b16 %v9114
    %v9592 = vunpack.c.l.b16 %v9115
    %v9593 = vunpack.c.l.b16 %v9116
    %v9594 = vunpack.c.l.b16 %v9117
    %v9595 = vunpack.c.l.b16 %v9118
    %v9596 = vunpack.c.l.b16 %v9119
    %v9597 = vunpack.c.l.b16 %v9120
    %v9598 = vunpack.c.l.b16 %v9121
    %v9599 = vunpack.c.l.b16 %v9122
    %v9600 = vunpack.c.l.b16 %v9123
    %v9601 = vunpack.c.l.b16 %v9124
    %v9602 = vunpack.c.l.b16 %v9125
    %v9603 = vunpack.c.l.b16 %v9126
    %v9604 = vunpack.c.l.b16 %v9127
    %v9605 = vunpack.c.l.b16 %v9128
    %v9606 = vunpack.c.l.b16 %v9129
    %v9607 = vunpack.c.l.b16 %v9130
    %v9608 = vunpack.c.l.b16 %v9131
    %v9609 = vunpack.c.l.b16 %v9132
    %v9610 = vunpack.c.l.b16 %v9133
    %v9611 = vunpack.c.l.b16 %v9134
    %v9612 = vunpack.c.l.b16 %v9135
    %v9613 = vunpack.c.l.b16 %v9136
    %v9614 = vunpack.c.l.b16 %v9137
    %v9615 = vunpack.c.l.b16 %v9138
    %v9616 = vunpack.c.l.b16 %v9139
    %v9617 = vunpack.c.l.b16 %v9140
    %v9618 = vunpack.c.l.b16 %v9141
    %v9619 = vunpack.c.l.b16 %v9142
    %v9620 = vunpack.c.l.b16 %v9143
    %v9621 = vunpack.c.l.b16 %v9144
    %v9622 = vunpack.c.l.b16 %v9145
    %v9623 = vunpack.c.l.b16 %v9146
    %v9624 = vunpack.c.l.b16 %v9147
    %v9625 = vunpack.c.l.b16 %v9148
    %v9626 = vunpack.c.l.b16 %v9149
    %v9627 = vunpack.c.l.b16 %v9150
    %v9628 = vunpack.c.l.b16 %v9151
    %v9629 = vunpack.c.l.b16 %v9152
    %v9630 = vunpack.c.l.b16 %v9153
    %v9631 = vunpack.c.l.b16 %v9154
    %v9632 = vunpack.c.l.b16 %v9155
    %v9633 = vunpack.c.l.b16 %v9156
    %v9634 = vunpack.c.l.b16 %v9157
    %v9635 = vunpack.c.l.b16 %v9158
    %v9636 = vunpack.c.l.b16 %v9159
    %v9637 = vunpack.c.l.b16 %v9160
    %v9638 = vunpack.c.l.b16 %v9161
    %v9639 = vunpack.c.l.b16 %v9162
    %v9640 = vunpack.c.l.b16 %v9163
    %v9641 = vunpack.c.l.b16 %v9164
    %v9642 = vpack.c.b16 %v9499, %v9498
    %v9643 = vpack.c.b16 %v9501, %v9500
    %v9644 = vpack.c.b16 %v9503, %v9502
    %v9645 = vpack.c.b16 %v9505, %v9504
    %v9646 = vpack.c.b16 %v9507, %v9506
    %v9647 = vpack.c.b16 %v9509, %v9508
    %v9648 = vpack.c.b16 %v9511, %v9510
    %v9649 = vpack.c.b16 %v9513, %v9512
    %v9650 = vpack.c.b16 %v9515, %v9514
    %v9651 = vpack.c.b16 %v9517, %v9516
    %v9652 = vpack.c.b16 %v9519, %v9518
    %v9653 = vpack.c.b16 %v9521, %v9520
    %v9654 = vpack.c.b16 %v9523, %v9522
    %v9655 = vpack.c.b16 %v9525, %v9524
    %v9656 = vpack.c.b16 %v9527, %v9526
    %v9657 = vpack.c.b16 %v9529, %v9528
    %v9658 = vpack.c.b16 %v9531, %v9530
    %v9659 = vpack.c.b16 %v9533, %v9532
    %v9660 = vpack.c.b16 %v9535, %v9534
    %v9661 = vpack.c.b16 %v9537, %v9536
    %v9662 = vpack.c.b16 %v9539, %v9538
    %v9663 = vpack.c.b16 %v9541, %v9540
    %v9664 = vpack.c.b16 %v9543, %v9542
    %v9665 = vpack.c.b16 %v9545, %v9544
    %v9666 = vpack.c.b16 %v9547, %v9546
    %v9667 = vpack.c.b16 %v9549, %v9548
    %v9668 = vpack.c.b16 %v9551, %v9550
    %v9669 = vpack.c.b16 %v9553, %v9552
    %v9670 = vpack.c.b16 %v9555, %v9554
    %v9671 = vpack.c.b16 %v9557, %v9556
    %v9672 = vpack.c.b16 %v9559, %v9558
    %v9673 = vpack.c.b16 %v9561, %v9560
    %v9674 = vpack.c.b16 %v9563, %v9562
    %v9675 = vpack.c.b16 %v9565, %v9564
    %v9676 = vpack.c.b16 %v9567, %v9566
    %v9677 = vpack.c.b16 %v9569, %v9568
    %v9678 = vpack.c.b16 %v9571, %v9570
    %v9679 = vpack.c.b16 %v9573, %v9572
    %v9680 = vpack.c.b16 %v9575, %v9574
    %v9681 = vpack.c.b16 %v9577, %v9576
    %v9682 = vpack.c.b16 %v9579, %v9578
    %v9683 = vpack.c.b16 %v9581, %v9580
    %v9684 = vpack.c.b16 %v9583, %v9582
    %v9685 = vpack.c.b16 %v9585, %v9584
    %v9686 = vpack.c.b16 %v9587, %v9586
    %v9687 = vpack.c.b16 %v9589, %v9588
    %v9688 = vpack.c.b16 %v9591, %v9590
    %v9689 = vpack.c.b16 %v9593, %v9592
    %v9690 = vpack.c.b16 %v9595, %v9594
    %v9691 = vpack.c.b16 %v9597, %v9596
    %v9692 = vpack.c.b16 %v9599, %v9598
    %v9693 = vpack.c.b16 %v9601, %v9600
    %v9694 = vpack.c.b16 %v9603, %v9602
    %v9695 = vpack.c.b16 %v9605, %v9604
    %v9696 = vpack.c.b16 %v9607, %v9606
    %v9697 = vpack.c.b16 %v9609, %v9608
    %v9698 = vpack.c.b16 %v9611, %v9610
    %v9699 = vpack.c.b16 %v9613, %v9612
    %v9700 = vpack.c.b16 %v9615, %v9614
    %v9701 = vpack.c.b16 %v9617, %v9616
    %v9702 = vpack.c.b16 %v9619, %v9618
    %v9703 = vpack.c.b16 %v9621, %v9620
    %v9704 = vpack.c.b16 %v9623, %v9622
    %v9705 = vpack.c.b16 %v9625, %v9624
    %v9706 = vpack.c.b16 %v9627, %v9626
    %v9707 = vpack.c.b16 %v9629, %v9628
    %v9708 = vpack.c.b16 %v9631, %v9630
    %v9709 = vpack.c.b16 %v9633, %v9632
    %v9710 = vpack.c.b16 %v9635, %v9634
    %v9711 = vpack.c.b16 %v9637, %v9636
    %v9712 = vpack.c.b16 %v9639, %v9638
    %v9713 = vpack.c.b16 %v9641, %v9640
    %9786 = vmatprep.subr.bf16.mxu0 0
    %9787 = vmatpush1.bf16.msra.mxu0 %v9649
    %9788 = vmatprep.subr.bf16.mxu0 0
    %9789 = vmatpush1.bf16.msra.mxu0 %v9648
    %9790 = vmatprep.subr.bf16.mxu0 0
    %9791 = vmatpush1.bf16.msra.mxu0 %v9647
    %9792 = vmatprep.subr.bf16.mxu0 0
    %9793 = vmatpush1.bf16.msra.mxu0 %v9646
    %9794 = vmatprep.subr.bf16.mxu0 0
    %9795 = vmatpush1.bf16.msra.mxu0 %v9645
    %9796 = vmatprep.subr.bf16.mxu0 0
    %9797 = vmatpush1.bf16.msra.mxu0 %v9644
    %9798 = vmatprep.subr.bf16.mxu0 0
    %9799 = vmatpush1.bf16.msra.mxu0 %v9643
    %9800 = vmatprep.subr.bf16.mxu0 0
    %9801 = vmatpush1.bf16.msra.mxu0 %v9642
    %9802 = vmatprep.subr.bf16.mxu0 0
    %9803 = vmatpush2.bf16.msra.mxu0 %v9657
    %9804 = vmatprep.subr.bf16.mxu0 0
    %9805 = vmatpush2.bf16.msra.mxu0 %v9656
    %9806 = vmatprep.subr.bf16.mxu0 0
    %9807 = vmatpush2.bf16.msra.mxu0 %v9655
    %9808 = vmatprep.subr.bf16.mxu0 0
    %9809 = vmatpush2.bf16.msra.mxu0 %v9654
    %9810 = vmatprep.subr.bf16.mxu0 0
    %9811 = vmatpush2.bf16.msra.mxu0 %v9653
    %9812 = vmatprep.subr.bf16.mxu0 0
    %9813 = vmatpush2.bf16.msra.mxu0 %v9652
    %9814 = vmatprep.subr.bf16.mxu0 0
    %9815 = vmatpush2.bf16.msra.mxu0 %v9651
    %9816 = vmatprep.subr.bf16.mxu0 0
    %9817 = vmatpush2.bf16.msra.mxu0 %v9650
    %9818 = vmatprep.mubr.bf16.mxu0 %v9283
    %9819 = vmatmul.mubr.bf16.gmra.mxu0 %v9282
    %v9820 = vpop.f32.mrf.mxu0
    %v9821 = vadd.f32 %v9169, %v9820
    %v9822 = vpop.f32.mrf.mxu0
    %v9823 = vpop.f32.mrf.mxu0
    %v9824 = vadd.f32 %v9169, %v9823
    %v9825 = vpop.f32.mrf.mxu0
    %9826 = vmatprep.mubr.bf16.mxu0 %v9292
    %9827 = vmatmul.mubr.bf16.gmra.mxu0 %v9291
    %v9828 = vpop.f32.mrf.mxu0
    %v9829 = vadd.f32 %v9169, %v9828
    %v9830 = vpop.f32.mrf.mxu0
    %v9831 = vpop.f32.mrf.mxu0
    %v9832 = vadd.f32 %v9169, %v9831
    %v9833 = vpop.f32.mrf.mxu0
    %9834 = vmatprep.mubr.bf16.mxu0 %v9301
    %9835 = vmatmul.mubr.bf16.gmra.mxu0 %v9300
    %v9836 = vpop.f32.mrf.mxu0
    %v9837 = vadd.f32 %v9169, %v9836
    %v9838 = vpop.f32.mrf.mxu0
    %v9839 = vpop.f32.mrf.mxu0
    %v9840 = vadd.f32 %v9169, %v9839
    %v9841 = vpop.f32.mrf.mxu0
    %9842 = vmatprep.mubr.bf16.mxu0 %v9310
    %9843 = vmatmul.mubr.bf16.gmra.mxu0 %v9309
    %v9844 = vpop.f32.mrf.mxu0
    %v9845 = vadd.f32 %v9169, %v9844
    %v9846 = vpop.f32.mrf.mxu0
    %v9847 = vpop.f32.mrf.mxu0
    %v9848 = vadd.f32 %v9169, %v9847
    %v9849 = vpop.f32.mrf.mxu0
    %9850 = vdwg.mxu0
    %9851 = vmatprep.subr.bf16.mxu0 0
    %9852 = vmatpush1.bf16.msra.mxu0 %v9665
    %9853 = vmatprep.subr.bf16.mxu0 0
    %9854 = vmatpush1.bf16.msra.mxu0 %v9664
    %9855 = vmatprep.subr.bf16.mxu0 0
    %9856 = vmatpush1.bf16.msra.mxu0 %v9663
    %9857 = vmatprep.subr.bf16.mxu0 0
    %9858 = vmatpush1.bf16.msra.mxu0 %v9662
    %9859 = vmatprep.subr.bf16.mxu0 0
    %9860 = vmatpush1.bf16.msra.mxu0 %v9661
    %9861 = vmatprep.subr.bf16.mxu0 0
    %9862 = vmatpush1.bf16.msra.mxu0 %v9660
    %9863 = vmatprep.subr.bf16.mxu0 0
    %9864 = vmatpush1.bf16.msra.mxu0 %v9659
    %9865 = vmatprep.subr.bf16.mxu0 0
    %9866 = vmatpush1.bf16.msra.mxu0 %v9658
    %9867 = vmatprep.subr.bf16.mxu0 0
    %9868 = vmatpush2.bf16.msra.mxu0 %v9673
    %9869 = vmatprep.subr.bf16.mxu0 0
    %9870 = vmatpush2.bf16.msra.mxu0 %v9672
    %9871 = vmatprep.subr.bf16.mxu0 0
    %9872 = vmatpush2.bf16.msra.mxu0 %v9671
    %9873 = vmatprep.subr.bf16.mxu0 0
    %9874 = vmatpush2.bf16.msra.mxu0 %v9670
    %9875 = vmatprep.subr.bf16.mxu0 0
    %9876 = vmatpush2.bf16.msra.mxu0 %v9669
    %9877 = vmatprep.subr.bf16.mxu0 0
    %9878 = vmatpush2.bf16.msra.mxu0 %v9668
    %9879 = vmatprep.subr.bf16.mxu0 0
    %9880 = vmatpush2.bf16.msra.mxu0 %v9667
    %9881 = vmatprep.subr.bf16.mxu0 0
    %9882 = vmatpush2.bf16.msra.mxu0 %v9666
    %9883 = vmatprep.mubr.bf16.mxu0 %v9285
    %9884 = vmatmul.mubr.bf16.gmra.mxu0 %v9284
    %v9885 = vpop.f32.mrf.mxu0
    %v9886 = vadd.f32 %v9821, %v9885
    %v9887 = vpop.f32.mrf.mxu0
    %v9888 = vpop.f32.mrf.mxu0
    %v9889 = vadd.f32 %v9824, %v9888
    %v9890 = vpop.f32.mrf.mxu0
    %9891 = vmatprep.mubr.bf16.mxu0 %v9294
    %9892 = vmatmul.mubr.bf16.gmra.mxu0 %v9293
    %v9893 = vpop.f32.mrf.mxu0
    %v9894 = vadd.f32 %v9829, %v9893
    %v9895 = vpop.f32.mrf.mxu0
    %v9896 = vpop.f32.mrf.mxu0
    %v9897 = vadd.f32 %v9832, %v9896
    %v9898 = vpop.f32.mrf.mxu0
    %9899 = vmatprep.mubr.bf16.mxu0 %v9303
    %9900 = vmatmul.mubr.bf16.gmra.mxu0 %v9302
    %v9901 = vpop.f32.mrf.mxu0
    %v9902 = vadd.f32 %v9837, %v9901
    %v9903 = vpop.f32.mrf.mxu0
    %v9904 = vpop.f32.mrf.mxu0
    %v9905 = vadd.f32 %v9840, %v9904
    %v9906 = vpop.f32.mrf.mxu0
    %9907 = vmatprep.mubr.bf16.mxu0 %v9312
    %9908 = vmatmul.mubr.bf16.gmra.mxu0 %v9311
    %v9909 = vpop.f32.mrf.mxu0
    %v9910 = vadd.f32 %v9845, %v9909
    %v9911 = vpop.f32.mrf.mxu0
    %v9912 = vpop.f32.mrf.mxu0
    %v9913 = vadd.f32 %v9848, %v9912
    %v9914 = vpop.f32.mrf.mxu0
    %9915 = vdwg.mxu0
    %9916 = vmatprep.subr.bf16.mxu0 0
    %9917 = vmatpush1.bf16.msra.mxu0 %v9681
    %9918 = vmatprep.subr.bf16.mxu0 0
    %9919 = vmatpush1.bf16.msra.mxu0 %v9680
    %9920 = vmatprep.subr.bf16.mxu0 0
    %9921 = vmatpush1.bf16.msra.mxu0 %v9679
    %9922 = vmatprep.subr.bf16.mxu0 0
    %9923 = vmatpush1.bf16.msra.mxu0 %v9678
    %9924 = vmatprep.subr.bf16.mxu0 0
    %9925 = vmatpush1.bf16.msra.mxu0 %v9677
    %9926 = vmatprep.subr.bf16.mxu0 0
    %9927 = vmatpush1.bf16.msra.mxu0 %v9676
    %9928 = vmatprep.subr.bf16.mxu0 0
    %9929 = vmatpush1.bf16.msra.mxu0 %v9675
    %9930 = vmatprep.subr.bf16.mxu0 0
    %9931 = vmatpush1.bf16.msra.mxu0 %v9674
    %9932 = vmatprep.subr.bf16.mxu0 0
    %9933 = vmatpush2.bf16.msra.mxu0 %v9689
    %9934 = vmatprep.subr.bf16.mxu0 0
    %9935 = vmatpush2.bf16.msra.mxu0 %v9688
    %9936 = vmatprep.subr.bf16.mxu0 0
    %9937 = vmatpush2.bf16.msra.mxu0 %v9687
    %9938 = vmatprep.subr.bf16.mxu0 0
    %9939 = vmatpush2.bf16.msra.mxu0 %v9686
    %9940 = vmatprep.subr.bf16.mxu0 0
    %9941 = vmatpush2.bf16.msra.mxu0 %v9685
    %9942 = vmatprep.subr.bf16.mxu0 0
    %9943 = vmatpush2.bf16.msra.mxu0 %v9684
    %9944 = vmatprep.subr.bf16.mxu0 0
    %9945 = vmatpush2.bf16.msra.mxu0 %v9683
    %9946 = vmatprep.subr.bf16.mxu0 0
    %9947 = vmatpush2.bf16.msra.mxu0 %v9682
    %9948 = vmatprep.mubr.bf16.mxu0 %v9287
    %9949 = vmatmul.mubr.bf16.gmra.mxu0 %v9286
    %v9950 = vpop.f32.mrf.mxu0
    %v9951 = vadd.f32 %v9886, %v9950
    %v9952 = vpop.f32.mrf.mxu0
    %v9953 = vpop.f32.mrf.mxu0
    %v9954 = vadd.f32 %v9889, %v9953
    %v9955 = vpop.f32.mrf.mxu0
    %9956 = vmatprep.mubr.bf16.mxu0 %v9296
    %9957 = vmatmul.mubr.bf16.gmra.mxu0 %v9295
    %v9958 = vpop.f32.mrf.mxu0
    %v9959 = vadd.f32 %v9894, %v9958
    %v9960 = vpop.f32.mrf.mxu0
    %v9961 = vpop.f32.mrf.mxu0
    %v9962 = vadd.f32 %v9897, %v9961
    %v9963 = vpop.f32.mrf.mxu0
    %9964 = vmatprep.mubr.bf16.mxu0 %v9305
    %9965 = vmatmul.mubr.bf16.gmra.mxu0 %v9304
    %v9966 = vpop.f32.mrf.mxu0
    %v9967 = vadd.f32 %v9902, %v9966
    %v9968 = vpop.f32.mrf.mxu0
    %v9969 = vpop.f32.mrf.mxu0
    %v9970 = vadd.f32 %v9905, %v9969
    %v9971 = vpop.f32.mrf.mxu0
    %9972 = vmatprep.mubr.bf16.mxu0 %v9314
    %9973 = vmatmul.mubr.bf16.gmra.mxu0 %v9313
    %v9974 = vpop.f32.mrf.mxu0
    %v9975 = vadd.f32 %v9910, %v9974
    %v9976 = vpop.f32.mrf.mxu0
    %v9977 = vpop.f32.mrf.mxu0
    %v9978 = vadd.f32 %v9913, %v9977
    %v9979 = vpop.f32.mrf.mxu0
    %9980 = vdwg.mxu0
    %9981 = vmatprep.subr.bf16.mxu0 0
    %9982 = vmatpush1.bf16.msra.mxu0 %v9697
    %9983 = vmatprep.subr.bf16.mxu0 0
    %9984 = vmatpush1.bf16.msra.mxu0 %v9696
    %9985 = vmatprep.subr.bf16.mxu0 0
    %9986 = vmatpush1.bf16.msra.mxu0 %v9695
    %9987 = vmatprep.subr.bf16.mxu0 0
    %9988 = vmatpush1.bf16.msra.mxu0 %v9694
    %9989 = vmatprep.subr.bf16.mxu0 0
    %9990 = vmatpush1.bf16.msra.mxu0 %v9693
    %9991 = vmatprep.subr.bf16.mxu0 0
    %9992 = vmatpush1.bf16.msra.mxu0 %v9692
    %9993 = vmatprep.subr.bf16.mxu0 0
    %9994 = vmatpush1.bf16.msra.mxu0 %v9691
    %9995 = vmatprep.subr.bf16.mxu0 0
    %9996 = vmatpush1.bf16.msra.mxu0 %v9690
    %9997 = vmatprep.subr.bf16.mxu0 0
    %9998 = vmatpush2.bf16.msra.mxu0 %v9705
    %9999 = vmatprep.subr.bf16.mxu0 0
    %10000 = vmatpush2.bf16.msra.mxu0 %v9704
    %10001 = vmatprep.subr.bf16.mxu0 0
    %10002 = vmatpush2.bf16.msra.mxu0 %v9703
    %10003 = vmatprep.subr.bf16.mxu0 0
    %10004 = vmatpush2.bf16.msra.mxu0 %v9702
    %10005 = vmatprep.subr.bf16.mxu0 0
    %10006 = vmatpush2.bf16.msra.mxu0 %v9701
    %10007 = vmatprep.subr.bf16.mxu0 0
    %10008 = vmatpush2.bf16.msra.mxu0 %v9700
    %10009 = vmatprep.subr.bf16.mxu0 0
    %10010 = vmatpush2.bf16.msra.mxu0 %v9699
    %10011 = vmatprep.subr.bf16.mxu0 0
    %10012 = vmatpush2.bf16.msra.mxu0 %v9698
    %10013 = vmatprep.mubr.bf16.mxu0 %v9289
    %10014 = vmatmul.mubr.bf16.gmra.mxu0 %v9288
    %v10015 = vpop.f32.mrf.mxu0
    %v10016 = vadd.f32 %v9951, %v10015
    %v10017 = vpop.f32.mrf.mxu0
    %v10018 = vpop.f32.mrf.mxu0
    %v10019 = vadd.f32 %v9954, %v10018
    %v10020 = vpop.f32.mrf.mxu0
    %10021 = vmatprep.mubr.bf16.mxu0 %v9298
    %10022 = vmatmul.mubr.bf16.gmra.mxu0 %v9297
    %v10023 = vpop.f32.mrf.mxu0
    %v10024 = vadd.f32 %v9959, %v10023
    %v10025 = vpop.f32.mrf.mxu0
    %v10026 = vpop.f32.mrf.mxu0
    %v10027 = vadd.f32 %v9962, %v10026
    %v10028 = vpop.f32.mrf.mxu0
    %10029 = vmatprep.mubr.bf16.mxu0 %v9307
    %10030 = vmatmul.mubr.bf16.gmra.mxu0 %v9306
    %v10031 = vpop.f32.mrf.mxu0
    %v10032 = vadd.f32 %v9967, %v10031
    %v10033 = vpop.f32.mrf.mxu0
    %v10034 = vpop.f32.mrf.mxu0
    %v10035 = vadd.f32 %v9970, %v10034
    %v10036 = vpop.f32.mrf.mxu0
    %10037 = vmatprep.mubr.bf16.mxu0 %v9316
    %10038 = vmatmul.mubr.bf16.gmra.mxu0 %v9315
    %v10039 = vpop.f32.mrf.mxu0
    %v10040 = vadd.f32 %v9975, %v10039
    %v10041 = vpop.f32.mrf.mxu0
    %v10042 = vpop.f32.mrf.mxu0
    %v10043 = vadd.f32 %v9978, %v10042
    %v10044 = vpop.f32.mrf.mxu0
    %10045 = vdwg.mxu0
    %10046 = vmatprep.subr.bf16.mxu0 0
    %10047 = vmatpush1.bf16.msra.mxu0 %v9713
    %10048 = vmatprep.subr.bf16.mxu0 0
    %10049 = vmatpush1.bf16.msra.mxu0 %v9712
    %10050 = vmatprep.subr.bf16.mxu0 0
    %10051 = vmatpush1.bf16.msra.mxu0 %v9711
    %10052 = vmatprep.subr.bf16.mxu0 0
    %10053 = vmatpush1.bf16.msra.mxu0 %v9710
    %10054 = vmatprep.subr.bf16.mxu0 0
    %10055 = vmatpush1.bf16.msra.mxu0 %v9709
    %10056 = vmatprep.subr.bf16.mxu0 0
    %10057 = vmatpush1.bf16.msra.mxu0 %v9708
    %10058 = vmatprep.subr.bf16.mxu0 0
    %10059 = vmatpush1.bf16.msra.mxu0 %v9707
    %10060 = vmatprep.subr.bf16.mxu0 0
    %10061 = vmatpush1.bf16.msra.mxu0 %v9706
    %10062 = vmatprep.subr.bf16.mxu0 0
    %10063 = vmatpush2.bf16.msra.mxu0 0
    %10064 = vmatprep.subr.bf16.mxu0 0
    %10065 = vmatpush2.bf16.msra.mxu0 0
    %10066 = vmatprep.subr.bf16.mxu0 0
    %10067 = vmatpush2.bf16.msra.mxu0 0
    %10068 = vmatprep.subr.bf16.mxu0 0
    %10069 = vmatpush2.bf16.msra.mxu0 0
    %10070 = vmatprep.subr.bf16.mxu0 0
    %10071 = vmatpush2.bf16.msra.mxu0 0
    %10072 = vmatprep.subr.bf16.mxu0 0
    %10073 = vmatpush2.bf16.msra.mxu0 0
    %10074 = vmatprep.subr.bf16.mxu0 0
    %10075 = vmatpush2.bf16.msra.mxu0 0
    %10076 = vmatprep.subr.bf16.mxu0 0
    %10077 = vmatpush2.bf16.msra.mxu0 0
    %10078 = vmatprep.mubr.bf16.mxu0 0
    %10079 = vmatmul.mubr.bf16.gmra.mxu0 %v9290
    %v10080 = vpop.f32.mrf.mxu0
    %v10081 = vadd.f32 %v10016, %v10080
    %v10082 = vpop.f32.mrf.mxu0
    %v10083 = vpop.f32.mrf.mxu0
    %v10084 = vadd.f32 %v10019, %v10083
    %v10085 = vpop.f32.mrf.mxu0
    %10086 = vmatprep.mubr.bf16.mxu0 0
    %10087 = vmatmul.mubr.bf16.gmra.mxu0 %v9299
    %v10088 = vpop.f32.mrf.mxu0
    %v10089 = vadd.f32 %v10024, %v10088
    %v10090 = vpop.f32.mrf.mxu0
    %v10091 = vpop.f32.mrf.mxu0
    %v10092 = vadd.f32 %v10027, %v10091
    %v10093 = vpop.f32.mrf.mxu0
    %10094 = vmatprep.mubr.bf16.mxu0 0
    %10095 = vmatmul.mubr.bf16.gmra.mxu0 %v9308
    %v10096 = vpop.f32.mrf.mxu0
    %v10097 = vadd.f32 %v10032, %v10096
    %v10098 = vpop.f32.mrf.mxu0
    %v10099 = vpop.f32.mrf.mxu0
    %v10100 = vadd.f32 %v10035, %v10099
    %v10101 = vpop.f32.mrf.mxu0
    %10102 = vmatprep.mubr.bf16.mxu0 0
    %10103 = vmatmul.mubr.bf16.gmra.mxu0 %v9317
    %v10104 = vpop.f32.mrf.mxu0
    %v10105 = vadd.f32 %v10040, %v10104
    %v10106 = vpop.f32.mrf.mxu0
    %v10107 = vpop.f32.mrf.mxu0
    %v10108 = vadd.f32 %v10043, %v10107
    %v10109 = vpop.f32.mrf.mxu0
    %10110 = vdwg.mxu0
    %10111 = vst [vmem:[%s3] sm:$0xff] %v10081
    %10112 = vst [vmem:[%s3 + $0x8] sm:$0xff] %v10084
    %10113 = vst [vmem:[%s3 + $0x10] sm:$0xff] %v10089
    %10114 = vst [vmem:[%s3 + $0x18] sm:$0xff] %v10092
    %10115 = vst [vmem:[%s3 + $0x20] sm:$0xff] %v10097
    %10116 = vst [vmem:[%s3 + $0x28] sm:$0xff] %v10100
    %10117 = vst [vmem:[%s3 + $0x30] sm:$0xff] %v10105
    %10118 = vst [vmem:[%s3 + $0x38] sm:$0xff] %v10108
    // Predicated region
    $region22: #{d3drir_forward.1} parent=1 // pred_check
      _
    $region23: #{d3drir_forward.1} parent=1 // pred_check_branch
      %10120 = sbr.rel (0) target = $region25
    $region24: #{d3drir_forward.1} parent=1 // pred_region
      _
    $region25: #{d3drir_forward.1} parent=1 // pred_fallthru
      _
    // Predicated region
    $region26: #{d3drir_forward.1} parent=1 // pred_check
      _
    $region27: #{d3drir_forward.1} parent=1 // pred_check_branch
      %10122 = sbr.rel (0) target = $region29
    $region28: #{d3drir_forward.1} parent=1 // pred_region
      _
    $region29: #{d3drir_forward.1} parent=1 // pred_fallthru
      _
    %10123 = vsyncpa [#allocation7], 1
    %10124 = vsyncpa [#allocation9], 1

</llo_original>
